<compile_context>
chip_gen: v7x
topology: tpu7x:2x2x1
jax: 0.10.0
libtpu: 0.0.40
codegen_flags: <defaults>
</compile_context>

<pallas_src>
import functools

import jax
import jax.numpy as jnp
from jax.experimental import pallas as pl
from jax.experimental.pallas import tpu as pltpu


# --------------------------------------------------------------------------
# VMEM sizing helpers
# --------------------------------------------------------------------------
def _vmem_capacity():
    try:
        info = pltpu.get_tpu_info()
        cap = getattr(info, "vmem_capacity_bytes", None)
        if cap:
            return int(cap)
    except Exception:
        pass
    return 64 * 1024 * 1024  # conservative default (v7x per-TC VMEM)


def _live_bytes(HW, H, W, T, Cin, Cout, KK):
    f = 4  # f32
    return f * (2 * Cin * HW            # x tile (double-buffered)
                + 2 * 3 * KK * T        # fused offset/mask tile
                + 2 * Cout * T          # output tile
                + 2 * Cout * KK * Cin   # folded weight
                + KK * Cin * T          # gathered-samples scratch
                + 2 * HW * T            # S_k + outer-product temporaries
                + 8 * (H + W) * T)      # row/col one-hots & misc (1,T) temps


def _pick_tile(ohw, H, W, Cin, Cout, KK, budget):
    """Largest lane tile that keeps the in-kernel live set under `budget`."""
    HW = H * W
    cap = max(128, min(1024, pl.next_power_of_2(max(ohw, 1))))
    for t in (1024, 512, 256, 128):
        if t > cap:
            continue
        if _live_bytes(HW, H, W, t, Cin, Cout, KK) <= budget:
            return t
    return 128


# --------------------------------------------------------------------------
# Kernel
# --------------------------------------------------------------------------
def _dcn_relu6_kernel(x_ref, om_ref, w_ref, b_ref, o_ref, xs_ref, *,
                      H, W, KH, KW, Cin, Cout, OW, stride, padding,
                      dilation, T):
    f32 = jnp.float32
    KK = KH * KW
    HW = H * W

    x = x_ref[0]            # (Cin, HW)
    om = om_ref[0]          # (3*KK, T): rows = [dy taps | dx taps | mask taps]

    # Output flat-pixel coordinates for this tile, computed in-kernel (no DMA).
    p = (pl.program_id(1) * T
         + jax.lax.broadcasted_iota(jnp.int32, (1, T), 1))          # (1, T)
    # p // OW done in f32 (exact for realistic OH/OW; avoids vector int div).
    oh = jnp.floor((p.astype(f32) + 0.5) * (1.0 / OW)).astype(jnp.int32)
    ow = p - oh * OW
    oy = (oh * stride).astype(f32)
    ox = (ow * stride).astype(f32)

    hrow = jax.lax.broadcasted_iota(jnp.int32, (H, T), 0)
    wcol = jax.lax.broadcasted_iota(jnp.int32, (W, T), 0)

    for k in range(KK):                       # static unroll (KK = 9 for 3x3)
        kh, kw = k // KW, k % KW
        offy = om[k:k + 1, :]                 # (1, T)
        offx = om[KK + k:KK + k + 1, :]       # (1, T)
        g = om[2 * KK + k:2 * KK + k + 1, :]  # modulation mask (1, T)

        py = oy + float(kh * dilation - padding) + offy
        px = ox + float(kw * dilation - padding) + offx

        # torchvision bilinear: whole sample is 0 outside (-1, H) x (-1, W).
        inside = ((py > -1.0) & (py < float(H)) &
                  (px > -1.0) & (px < float(W))).astype(f32)
        g = g * inside

        y0f = jnp.floor(py)
        x0f = jnp.floor(px)
        ly = py - y0f
        lx = px - x0f
        y0 = y0f.astype(jnp.int32)
        x0 = x0f.astype(jnp.int32)
        y1 = y0 + 1
        x1 = x0 + 1

        # Separable bilinear weights; mask/inside folded into the row factor.
        wy0 = (1.0 - ly) * ((y0 >= 0) & (y0 <= H - 1)).astype(f32) * g
        wy1 = ly * ((y1 >= 0) & (y1 <= H - 1)).astype(f32) * g
        wx0 = (1.0 - lx) * ((x0 >= 0) & (x0 <= W - 1)).astype(f32)
        wx1 = lx * ((x1 >= 0) & (x1 <= W - 1)).astype(f32)

        y0c = jnp.clip(y0, 0, H - 1)
        y1c = jnp.clip(y1, 0, H - 1)
        x0c = jnp.clip(x0, 0, W - 1)
        x1c = jnp.clip(x1, 0, W - 1)

        ry = (jnp.where(hrow == y0c, wy0, 0.0) +
              jnp.where(hrow == y1c, wy1, 0.0))            # (H, T)
        cx = (jnp.where(wcol == x0c, wx0, 0.0) +
              jnp.where(wcol == x1c, wx1, 0.0))            # (W, T)

        # Full sampling matrix for this tap via separable outer product.
        s_k = (ry[:, None, :] * cx[None, :, :]).reshape(HW, T)   # (HW, T)

        # Gather (bilinear sample) all input channels with one MXU matmul.
        xs_ref[k * Cin:(k + 1) * Cin, :] = jnp.dot(
            x, s_k, preferred_element_type=f32)                   # (Cin, T)

    # Single deep matmul for the conv, then bias + ReLU6 epilogue.
    acc = jnp.dot(w_ref[...], xs_ref[...], preferred_element_type=f32)
    out = acc + b_ref[...]                                        # (Cout, T)
    o_ref[0] = jnp.clip(out, 0.0, 6.0).astype(o_ref.dtype)


# --------------------------------------------------------------------------
# Wrapper
# --------------------------------------------------------------------------
def deform_conv2d_relu6(x, offset, weight, bias=None, mask=None, *,
                        stride=1, padding=0, dilation=1):
    """torchvision.ops.deform_conv2d (+ optional mask) followed by ReLU6."""
    N, Cin, H, W = x.shape
    Cout, Cin_w, KH, KW = weight.shape
    assert Cin_w == Cin, "groups != 1 not supported"   # TODO(synk): groups
    KK = KH * KW
    assert offset.shape[1] == 2 * KK, "offset_groups != 1 not supported"
    OH = (H + 2 * padding - dilation * (KH - 1) - 1) // stride + 1
    OW = (W + 2 * padding - dilation * (KW - 1) - 1) // stride + 1
    OHW, HW = OH * OW, H * W
    f32 = jnp.float32

    vmem_cap = _vmem_capacity()
    T = _pick_tile(OHW, H, W, Cin, Cout, KK, budget=vmem_cap // 2)
    OHW_pad = pl.cdiv(OHW, T) * T
    num_t = OHW_pad // T

    # ---- plain-JAX layout glue (reshape / concat / pad only) ----
    x_flat = x.reshape(N, Cin, HW).astype(f32)
    off = offset.reshape(N, KK, 2, OHW).astype(f32)
    msk = (jnp.ones((N, KK, OHW), f32) if mask is None
           else mask.reshape(N, KK, OHW).astype(f32))
    # One fused input: [dy taps | dx taps | mask taps] -> (N, 3*KK, OHW_pad)
    om = jnp.concatenate([off[:, :, 0, :], off[:, :, 1, :], msk], axis=1)
    if OHW_pad != OHW:
        om = jnp.pad(om, ((0, 0), (0, 0), (0, OHW_pad - OHW)))
    b = (jnp.zeros((Cout, 1), f32) if bias is None
         else bias.reshape(Cout, 1).astype(f32))
    # (Cout, Cin, KH, KW) -> (Cout, KK*Cin), tap-major rows matching xs scratch
    w2 = jnp.transpose(weight, (0, 2, 3, 1)).reshape(Cout, KK * Cin).astype(f32)

    est = _live_bytes(HW, H, W, T, Cin, Cout, KK)
    vmem_limit = int(min(vmem_cap * 9 // 10,
                         max(32 * 1024 * 1024, est * 2)))

    kernel = functools.partial(
        _dcn_relu6_kernel, H=H, W=W, KH=KH, KW=KW, Cin=Cin, Cout=Cout,
        OW=OW, stride=stride, padding=padding, dilation=dilation, T=T)

    out = pl.pallas_call(
        kernel,
        out_shape=jax.ShapeDtypeStruct((N, Cout, OHW_pad), x.dtype),
        grid=(N, num_t),
        in_specs=[
            pl.BlockSpec((1, Cin, HW), lambda n, t: (n, 0, 0)),
            pl.BlockSpec((1, 3 * KK, T), lambda n, t: (n, 0, t)),
            pl.BlockSpec((Cout, KK * Cin), lambda n, t: (0, 0)),
            pl.BlockSpec((Cout, 1), lambda n, t: (0, 0)),
        ],
        out_specs=pl.BlockSpec((1, Cout, T), lambda n, t: (n, 0, t)),
        scratch_shapes=[pltpu.VMEM((KK * Cin, T), jnp.float32)],
        compiler_params=pltpu.CompilerParams(
            dimension_semantics=("parallel", "parallel"),
            vmem_limit_bytes=vmem_limit),
    )(x_flat, om, w2, b)

    return out[:, :, :OHW].reshape(N, Cout, OH, OW)


# --------------------------------------------------------------------------
# Independent plain-JAX reference (gather-based)
# --------------------------------------------------------------------------
def _deform_conv2d_relu6_ref(x, offset, weight, bias, mask, *,
                             stride, padding, dilation):
    N, Cin, H, W = x.shape
    Cout, _, KH, KW = weight.shape
    KK = KH * KW
    OH = (H + 2 * padding - dilation * (KH - 1) - 1) // stride + 1
    OW = (W + 2 * padding - dilation * (KW - 1) - 1) // stride + 1

    off = offset.reshape(N, KK, 2, OH, OW)
    dy, dx = off[:, :, 0], off[:, :, 1]
    k = jnp.arange(KK)
    kh, kw = k // KW, k % KW
    base_y = ((kh * dilation - padding)[:, None, None]
              + (jnp.arange(OH) * stride)[None, :, None]
              + jnp.zeros((1, 1, OW)))
    base_x = ((kw * dilation - padding)[:, None, None]
              + jnp.zeros((1, OH, 1))
              + (jnp.arange(OW) * stride)[None, None, :])
    py = base_y[None].astype(x.dtype) + dy          # (N, KK, OH, OW)
    px = base_x[None].astype(x.dtype) + dx

    valid = ((py > -1) & (py < H) & (px > -1) & (px < W)).astype(x.dtype)
    y0 = jnp.floor(py); x0 = jnp.floor(px)
    ly, lx = py - y0, px - x0
    y0i, x0i = y0.astype(jnp.int32), x0.astype(jnp.int32)
    x_flat = x.reshape(N, Cin, H * W)

    def corner(yi, xi, wgt):
        ok = ((yi >= 0) & (yi <= H - 1) & (xi >= 0) & (xi <= W - 1)).astype(x.dtype)
        yc = jnp.clip(yi, 0, H - 1)
        xc = jnp.clip(xi, 0, W - 1)
        flat = (yc * W + xc).reshape(N, -1)
        v = jax.vmap(lambda xb, ib: xb[:, ib])(x_flat, flat)
        v = v.reshape(N, Cin, KK, OH, OW)
        return v * (ok * wgt)[:, None]

    val = (corner(y0i, x0i, (1 - ly) * (1 - lx)) +
           corner(y0i, x0i + 1, (1 - ly) * lx) +
           corner(y0i + 1, x0i, ly * (1 - lx)) +
           corner(y0i + 1, x0i + 1, ly * lx))
    val = val * valid[:, None]
    if mask is not None:
        val = val * mask.reshape(N, 1, KK, OH, OW)

    wt = weight.reshape(Cout, Cin, KK)
    out = jnp.sum(val[:, None] * wt[None, :, :, :, None, None], axis=(2, 3))
    if bias is not None:
        out = out + bias[None, :, None, None]
    return jnp.clip(out, 0.0, 6.0)


if __name__ == "__main__":
    N, Cin, H, W = 2, 4, 16, 16
    Cout, K = 8, 3
    stride, padding, dilation = 1, 1, 1
    KK = K * K
    OH = (H + 2 * padding - dilation * (K - 1) - 1) // stride + 1
    OW = (W + 2 * padding - dilation * (K - 1) - 1) // stride + 1

    key = jax.random.PRNGKey(0)
    k1, k2, k3, k4, k5 = jax.random.split(key, 5)
    x = jax.random.normal(k1, (N, Cin, H, W), jnp.float32)
    offset = jax.random.normal(k2, (N, 2 * KK, OH, OW), jnp.float32) * 2.0
    mask = jax.nn.sigmoid(jax.random.normal(k3, (N, KK, OH, OW), jnp.float32))
    weight = jax.random.normal(k4, (Cout, Cin, K, K), jnp.float32) * 0.3
    bias = jax.random.normal(k5, (Cout,), jnp.float32) * 0.5

    out = deform_conv2d_relu6(x, offset, weight, bias, mask,
                              stride=stride, padding=padding, dilation=dilation)
    out = jax.block_until_ready(out)

    ref = _deform_conv2d_relu6_ref(x, offset, weight, bias, mask,
                                   stride=stride, padding=padding,
                                   dilation=dilation)

    assert out.shape == (N, Cout, OH, OW), out.shape
    err = float(jnp.max(jnp.abs(out - ref)))
    assert jnp.allclose(out, ref, atol=2e-3, rtol=2e-3), f"max abs err {err}"
    print("KERNEL_OK")
</pallas_src>

<mosaic_0001>
module attributes {stable_mosaic.version = 11 : i64} {
  func.func @_dcn_relu6_kernel(%arg0: i32, %arg1: i32, %arg2: memref<1x4x256xf32, #tpu.memory_space<vmem>>, %arg3: memref<1x27x256xf32, #tpu.memory_space<vmem>>, %arg4: memref<8x36xf32, #tpu.memory_space<vmem>>, %arg5: memref<8x1xf32, #tpu.memory_space<vmem>>, %arg6: memref<1x8x256xf32, #tpu.memory_space<vmem>>, %arg7: memref<36x256xf32, #tpu.memory_space<vmem>>) attributes {dimension_semantics = [#tpu.dimension_semantics<parallel>, #tpu.dimension_semantics<parallel>], iteration_bounds = array<i64: 2, 1>, scalar_prefetch = 0 : i64, scratch_operands = 1 : i64, tpu.core_type = #tpu.core_type<tc>, window_params = [{transform_indices = @transform_0, window_bounds = array<i64: 1, 4, 256>}, {transform_indices = @transform_1, window_bounds = array<i64: 1, 27, 256>}, {pipeline_mode = #tpu.pipeline_mode<synchronous>, transform_indices = @transform_2, window_bounds = array<i64: 8, 36>}, {pipeline_mode = #tpu.pipeline_mode<synchronous>, transform_indices = @transform_3, window_bounds = array<i64: 8, 1>}, {transform_indices = @transform_4, window_bounds = array<i64: 1, 8, 256>}]} {
    %c0 = arith.constant 0 : index
    %c0_0 = arith.constant 0 : index
    %c0_1 = arith.constant 0 : index
    %0 = vector.load %arg2[%c0, %c0_0, %c0_1] : memref<1x4x256xf32, #tpu.memory_space<vmem>>, vector<1x4x256xf32>
    %1 = vector.shape_cast %0 : vector<1x4x256xf32> to vector<4x256xf32>
    %c0_2 = arith.constant 0 : index
    %c0_3 = arith.constant 0 : index
    %c0_4 = arith.constant 0 : index
    %2 = vector.load %arg3[%c0_2, %c0_3, %c0_4] : memref<1x27x256xf32, #tpu.memory_space<vmem>>, vector<1x27x256xf32>
    %3 = vector.shape_cast %2 : vector<1x27x256xf32> to vector<27x256xf32>
    %c256_i32 = arith.constant 256 : i32
    %4 = arith.muli %arg1, %c256_i32 : i32
    %5 = tpu.iota {dimensions = array<i32: 1>} : vector<1x256xi32>
    %6 = vector.broadcast %4 : i32 to vector<1x256xi32>
    %7 = arith.addi %6, %5 : vector<1x256xi32>
    %8 = arith.sitofp %7 : vector<1x256xi32> to vector<1x256xf32>
    %cst = arith.constant 5.000000e-01 : f32
    %9 = vector.broadcast %cst : f32 to vector<1x256xf32>
    %10 = arith.addf %8, %9 : vector<1x256xf32>
    %cst_5 = arith.constant 6.250000e-02 : f32
    %11 = vector.broadcast %cst_5 : f32 to vector<1x256xf32>
    %12 = arith.mulf %10, %11 : vector<1x256xf32>
    %13 = math.floor %12 : vector<1x256xf32>
    %14 = arith.fptosi %13 : vector<1x256xf32> to vector<1x256xi32>
    %c16_i32 = arith.constant 16 : i32
    %15 = vector.broadcast %c16_i32 : i32 to vector<1x256xi32>
    %16 = arith.muli %14, %15 : vector<1x256xi32>
    %17 = arith.subi %7, %16 : vector<1x256xi32>
    %c1_i32 = arith.constant 1 : i32
    %18 = vector.broadcast %c1_i32 : i32 to vector<1x256xi32>
    %19 = arith.muli %14, %18 : vector<1x256xi32>
    %20 = arith.sitofp %19 : vector<1x256xi32> to vector<1x256xf32>
    %c1_i32_6 = arith.constant 1 : i32
    %21 = vector.broadcast %c1_i32_6 : i32 to vector<1x256xi32>
    %22 = arith.muli %17, %21 : vector<1x256xi32>
    %23 = arith.sitofp %22 : vector<1x256xi32> to vector<1x256xf32>
    %24 = tpu.iota {dimensions = array<i32: 0>} : vector<16x256xi32>
    %25 = tpu.iota {dimensions = array<i32: 0>} : vector<16x256xi32>
    %26 = vector.extract_strided_slice %3 {offsets = [0, 0], sizes = [1, 256], strides = [1, 1]} : vector<27x256xf32> to vector<1x256xf32>
    %27 = vector.extract_strided_slice %3 {offsets = [9, 0], sizes = [1, 256], strides = [1, 1]} : vector<27x256xf32> to vector<1x256xf32>
    %28 = vector.extract_strided_slice %3 {offsets = [18, 0], sizes = [1, 256], strides = [1, 1]} : vector<27x256xf32> to vector<1x256xf32>
    %cst_7 = arith.constant -1.000000e+00 : f32
    %29 = vector.broadcast %cst_7 : f32 to vector<1x256xf32>
    %30 = arith.addf %20, %29 : vector<1x256xf32>
    %31 = arith.addf %30, %26 : vector<1x256xf32>
    %cst_8 = arith.constant -1.000000e+00 : f32
    %32 = vector.broadcast %cst_8 : f32 to vector<1x256xf32>
    %33 = arith.addf %23, %32 : vector<1x256xf32>
    %34 = arith.addf %33, %27 : vector<1x256xf32>
    %cst_9 = arith.constant -1.000000e+00 : f32
    %35 = vector.broadcast %cst_9 : f32 to vector<1x256xf32>
    %36 = arith.cmpf ogt, %31, %35 : vector<1x256xf32>
    %cst_10 = arith.constant 1.600000e+01 : f32
    %37 = vector.broadcast %cst_10 : f32 to vector<1x256xf32>
    %38 = arith.cmpf olt, %31, %37 : vector<1x256xf32>
    %39 = arith.andi %36, %38 : vector<1x256xi1>
    %cst_11 = arith.constant -1.000000e+00 : f32
    %40 = vector.broadcast %cst_11 : f32 to vector<1x256xf32>
    %41 = arith.cmpf ogt, %34, %40 : vector<1x256xf32>
    %42 = arith.andi %39, %41 : vector<1x256xi1>
    %cst_12 = arith.constant 1.600000e+01 : f32
    %43 = vector.broadcast %cst_12 : f32 to vector<1x256xf32>
    %44 = arith.cmpf olt, %34, %43 : vector<1x256xf32>
    %45 = arith.andi %42, %44 : vector<1x256xi1>
    %46 = arith.extui %45 : vector<1x256xi1> to vector<1x256xi32>
    %47 = arith.sitofp %46 : vector<1x256xi32> to vector<1x256xf32>
    %48 = arith.mulf %28, %47 : vector<1x256xf32>
    %49 = math.floor %31 : vector<1x256xf32>
    %50 = math.floor %34 : vector<1x256xf32>
    %51 = arith.subf %31, %49 : vector<1x256xf32>
    %52 = arith.subf %34, %50 : vector<1x256xf32>
    %53 = arith.fptosi %49 : vector<1x256xf32> to vector<1x256xi32>
    %54 = arith.fptosi %50 : vector<1x256xf32> to vector<1x256xi32>
    %c1_i32_13 = arith.constant 1 : i32
    %55 = vector.broadcast %c1_i32_13 : i32 to vector<1x256xi32>
    %56 = arith.addi %53, %55 : vector<1x256xi32>
    %c1_i32_14 = arith.constant 1 : i32
    %57 = vector.broadcast %c1_i32_14 : i32 to vector<1x256xi32>
    %58 = arith.addi %54, %57 : vector<1x256xi32>
    %cst_15 = arith.constant 1.000000e+00 : f32
    %59 = vector.broadcast %cst_15 : f32 to vector<1x256xf32>
    %60 = arith.subf %59, %51 : vector<1x256xf32>
    %c0_i32 = arith.constant 0 : i32
    %61 = vector.broadcast %c0_i32 : i32 to vector<1x256xi32>
    %62 = arith.cmpi sge, %53, %61 : vector<1x256xi32>
    %c15_i32 = arith.constant 15 : i32
    %63 = vector.broadcast %c15_i32 : i32 to vector<1x256xi32>
    %64 = arith.cmpi sle, %53, %63 : vector<1x256xi32>
    %65 = arith.andi %62, %64 : vector<1x256xi1>
    %66 = arith.extui %65 : vector<1x256xi1> to vector<1x256xi32>
    %67 = arith.sitofp %66 : vector<1x256xi32> to vector<1x256xf32>
    %68 = arith.mulf %60, %67 : vector<1x256xf32>
    %69 = arith.mulf %68, %48 : vector<1x256xf32>
    %c0_i32_16 = arith.constant 0 : i32
    %70 = vector.broadcast %c0_i32_16 : i32 to vector<1x256xi32>
    %71 = arith.cmpi sge, %56, %70 : vector<1x256xi32>
    %c15_i32_17 = arith.constant 15 : i32
    %72 = vector.broadcast %c15_i32_17 : i32 to vector<1x256xi32>
    %73 = arith.cmpi sle, %56, %72 : vector<1x256xi32>
    %74 = arith.andi %71, %73 : vector<1x256xi1>
    %75 = arith.extui %74 : vector<1x256xi1> to vector<1x256xi32>
    %76 = arith.sitofp %75 : vector<1x256xi32> to vector<1x256xf32>
    %77 = arith.mulf %51, %76 : vector<1x256xf32>
    %78 = arith.mulf %77, %48 : vector<1x256xf32>
    %cst_18 = arith.constant 1.000000e+00 : f32
    %79 = vector.broadcast %cst_18 : f32 to vector<1x256xf32>
    %80 = arith.subf %79, %52 : vector<1x256xf32>
    %c0_i32_19 = arith.constant 0 : i32
    %81 = vector.broadcast %c0_i32_19 : i32 to vector<1x256xi32>
    %82 = arith.cmpi sge, %54, %81 : vector<1x256xi32>
    %c15_i32_20 = arith.constant 15 : i32
    %83 = vector.broadcast %c15_i32_20 : i32 to vector<1x256xi32>
    %84 = arith.cmpi sle, %54, %83 : vector<1x256xi32>
    %85 = arith.andi %82, %84 : vector<1x256xi1>
    %86 = arith.extui %85 : vector<1x256xi1> to vector<1x256xi32>
    %87 = arith.sitofp %86 : vector<1x256xi32> to vector<1x256xf32>
    %88 = arith.mulf %80, %87 : vector<1x256xf32>
    %c0_i32_21 = arith.constant 0 : i32
    %89 = vector.broadcast %c0_i32_21 : i32 to vector<1x256xi32>
    %90 = arith.cmpi sge, %58, %89 : vector<1x256xi32>
    %c15_i32_22 = arith.constant 15 : i32
    %91 = vector.broadcast %c15_i32_22 : i32 to vector<1x256xi32>
    %92 = arith.cmpi sle, %58, %91 : vector<1x256xi32>
    %93 = arith.andi %90, %92 : vector<1x256xi1>
    %94 = arith.extui %93 : vector<1x256xi1> to vector<1x256xi32>
    %95 = arith.sitofp %94 : vector<1x256xi32> to vector<1x256xf32>
    %96 = arith.mulf %52, %95 : vector<1x256xf32>
    %c0_i32_23 = arith.constant 0 : i32
    %c15_i32_24 = arith.constant 15 : i32
    %97 = vector.broadcast %c0_i32_23 : i32 to vector<1x256xi32>
    %98 = arith.maxsi %97, %53 : vector<1x256xi32>
    %99 = vector.broadcast %c15_i32_24 : i32 to vector<1x256xi32>
    %100 = arith.minsi %99, %98 : vector<1x256xi32>
    %c0_i32_25 = arith.constant 0 : i32
    %c15_i32_26 = arith.constant 15 : i32
    %101 = vector.broadcast %c0_i32_25 : i32 to vector<1x256xi32>
    %102 = arith.maxsi %101, %56 : vector<1x256xi32>
    %103 = vector.broadcast %c15_i32_26 : i32 to vector<1x256xi32>
    %104 = arith.minsi %103, %102 : vector<1x256xi32>
    %c0_i32_27 = arith.constant 0 : i32
    %c15_i32_28 = arith.constant 15 : i32
    %105 = vector.broadcast %c0_i32_27 : i32 to vector<1x256xi32>
    %106 = arith.maxsi %105, %54 : vector<1x256xi32>
    %107 = vector.broadcast %c15_i32_28 : i32 to vector<1x256xi32>
    %108 = arith.minsi %107, %106 : vector<1x256xi32>
    %c0_i32_29 = arith.constant 0 : i32
    %c15_i32_30 = arith.constant 15 : i32
    %109 = vector.broadcast %c0_i32_29 : i32 to vector<1x256xi32>
    %110 = arith.maxsi %109, %58 : vector<1x256xi32>
    %111 = vector.broadcast %c15_i32_30 : i32 to vector<1x256xi32>
    %112 = arith.minsi %111, %110 : vector<1x256xi32>
    %113 = vector.broadcast %100 : vector<1x256xi32> to vector<16x256xi32>
    %114 = arith.cmpi eq, %24, %113 : vector<16x256xi32>
    %cst_31 = arith.constant 0.000000e+00 : f32
    %115 = vector.shape_cast %69 : vector<1x256xf32> to vector<1x256xf32>
    %116 = vector.broadcast %115 : vector<1x256xf32> to vector<16x256xf32>
    %117 = vector.broadcast %cst_31 : f32 to vector<16x256xf32>
    %118 = arith.select %114, %116, %117 : vector<16x256xi1>, vector<16x256xf32>
    %119 = vector.broadcast %104 : vector<1x256xi32> to vector<16x256xi32>
    %120 = arith.cmpi eq, %24, %119 : vector<16x256xi32>
    %cst_32 = arith.constant 0.000000e+00 : f32
    %121 = vector.shape_cast %78 : vector<1x256xf32> to vector<1x256xf32>
    %122 = vector.broadcast %121 : vector<1x256xf32> to vector<16x256xf32>
    %123 = vector.broadcast %cst_32 : f32 to vector<16x256xf32>
    %124 = arith.select %120, %122, %123 : vector<16x256xi1>, vector<16x256xf32>
    %125 = arith.addf %118, %124 : vector<16x256xf32>
    %126 = vector.broadcast %108 : vector<1x256xi32> to vector<16x256xi32>
    %127 = arith.cmpi eq, %25, %126 : vector<16x256xi32>
    %cst_33 = arith.constant 0.000000e+00 : f32
    %128 = vector.shape_cast %88 : vector<1x256xf32> to vector<1x256xf32>
    %129 = vector.broadcast %128 : vector<1x256xf32> to vector<16x256xf32>
    %130 = vector.broadcast %cst_33 : f32 to vector<16x256xf32>
    %131 = arith.select %127, %129, %130 : vector<16x256xi1>, vector<16x256xf32>
    %132 = vector.broadcast %112 : vector<1x256xi32> to vector<16x256xi32>
    %133 = arith.cmpi eq, %25, %132 : vector<16x256xi32>
    %cst_34 = arith.constant 0.000000e+00 : f32
    %134 = vector.shape_cast %96 : vector<1x256xf32> to vector<1x256xf32>
    %135 = vector.broadcast %134 : vector<1x256xf32> to vector<16x256xf32>
    %136 = vector.broadcast %cst_34 : f32 to vector<16x256xf32>
    %137 = arith.select %133, %135, %136 : vector<16x256xi1>, vector<16x256xf32>
    %138 = arith.addf %131, %137 : vector<16x256xf32>
    %139 = vector.shape_cast %125 : vector<16x256xf32> to vector<16x1x256xf32>
    %140 = vector.shape_cast %138 : vector<16x256xf32> to vector<1x16x256xf32>
    %141 = vector.broadcast %139 : vector<16x1x256xf32> to vector<16x16x256xf32>
    %142 = vector.broadcast %140 : vector<1x16x256xf32> to vector<16x16x256xf32>
    %143 = arith.mulf %141, %142 : vector<16x16x256xf32>
    %144 = vector.shape_cast %143 : vector<16x16x256xf32> to vector<256x256xf32>
    %cst_35 = arith.constant dense<0.000000e+00> : vector<4x256xf32>
    %145 = tpu.matmul %1, %144, %cst_35 {dimension_numbers = #tpu.dot_dimension_numbers<[1], [0], [0], [1], [0, 0, 1, 1], [], []>} : vector<4x256xf32>, vector<256x256xf32>, vector<4x256xf32> -> vector<4x256xf32>
    %c0_36 = arith.constant 0 : index
    %c0_37 = arith.constant 0 : index
    %146 = vector.load %arg7[%c0_36, %c0_37] : memref<36x256xf32, #tpu.memory_space<vmem>>, vector<4x256xf32>
    tpu.vector_store %arg7[%c0_36, %c0_37], %145 {strides = array<i32>} : memref<36x256xf32, #tpu.memory_space<vmem>>, vector<4x256xf32>,
    %147 = vector.extract_strided_slice %3 {offsets = [1, 0], sizes = [1, 256], strides = [1, 1]} : vector<27x256xf32> to vector<1x256xf32>
    %148 = vector.extract_strided_slice %3 {offsets = [10, 0], sizes = [1, 256], strides = [1, 1]} : vector<27x256xf32> to vector<1x256xf32>
    %149 = vector.extract_strided_slice %3 {offsets = [19, 0], sizes = [1, 256], strides = [1, 1]} : vector<27x256xf32> to vector<1x256xf32>
    %cst_38 = arith.constant -1.000000e+00 : f32
    %150 = vector.broadcast %cst_38 : f32 to vector<1x256xf32>
    %151 = arith.addf %20, %150 : vector<1x256xf32>
    %152 = arith.addf %151, %147 : vector<1x256xf32>
    %cst_39 = arith.constant 0.000000e+00 : f32
    %153 = vector.broadcast %cst_39 : f32 to vector<1x256xf32>
    %154 = arith.addf %23, %153 : vector<1x256xf32>
    %155 = arith.addf %154, %148 : vector<1x256xf32>
    %cst_40 = arith.constant -1.000000e+00 : f32
    %156 = vector.broadcast %cst_40 : f32 to vector<1x256xf32>
    %157 = arith.cmpf ogt, %152, %156 : vector<1x256xf32>
    %cst_41 = arith.constant 1.600000e+01 : f32
    %158 = vector.broadcast %cst_41 : f32 to vector<1x256xf32>
    %159 = arith.cmpf olt, %152, %158 : vector<1x256xf32>
    %160 = arith.andi %157, %159 : vector<1x256xi1>
    %cst_42 = arith.constant -1.000000e+00 : f32
    %161 = vector.broadcast %cst_42 : f32 to vector<1x256xf32>
    %162 = arith.cmpf ogt, %155, %161 : vector<1x256xf32>
    %163 = arith.andi %160, %162 : vector<1x256xi1>
    %cst_43 = arith.constant 1.600000e+01 : f32
    %164 = vector.broadcast %cst_43 : f32 to vector<1x256xf32>
    %165 = arith.cmpf olt, %155, %164 : vector<1x256xf32>
    %166 = arith.andi %163, %165 : vector<1x256xi1>
    %167 = arith.extui %166 : vector<1x256xi1> to vector<1x256xi32>
    %168 = arith.sitofp %167 : vector<1x256xi32> to vector<1x256xf32>
    %169 = arith.mulf %149, %168 : vector<1x256xf32>
    %170 = math.floor %152 : vector<1x256xf32>
    %171 = math.floor %155 : vector<1x256xf32>
    %172 = arith.subf %152, %170 : vector<1x256xf32>
    %173 = arith.subf %155, %171 : vector<1x256xf32>
    %174 = arith.fptosi %170 : vector<1x256xf32> to vector<1x256xi32>
    %175 = arith.fptosi %171 : vector<1x256xf32> to vector<1x256xi32>
    %c1_i32_44 = arith.constant 1 : i32
    %176 = vector.broadcast %c1_i32_44 : i32 to vector<1x256xi32>
    %177 = arith.addi %174, %176 : vector<1x256xi32>
    %c1_i32_45 = arith.constant 1 : i32
    %178 = vector.broadcast %c1_i32_45 : i32 to vector<1x256xi32>
    %179 = arith.addi %175, %178 : vector<1x256xi32>
    %cst_46 = arith.constant 1.000000e+00 : f32
    %180 = vector.broadcast %cst_46 : f32 to vector<1x256xf32>
    %181 = arith.subf %180, %172 : vector<1x256xf32>
    %c0_i32_47 = arith.constant 0 : i32
    %182 = vector.broadcast %c0_i32_47 : i32 to vector<1x256xi32>
    %183 = arith.cmpi sge, %174, %182 : vector<1x256xi32>
    %c15_i32_48 = arith.constant 15 : i32
    %184 = vector.broadcast %c15_i32_48 : i32 to vector<1x256xi32>
    %185 = arith.cmpi sle, %174, %184 : vector<1x256xi32>
    %186 = arith.andi %183, %185 : vector<1x256xi1>
    %187 = arith.extui %186 : vector<1x256xi1> to vector<1x256xi32>
    %188 = arith.sitofp %187 : vector<1x256xi32> to vector<1x256xf32>
    %189 = arith.mulf %181, %188 : vector<1x256xf32>
    %190 = arith.mulf %189, %169 : vector<1x256xf32>
    %c0_i32_49 = arith.constant 0 : i32
    %191 = vector.broadcast %c0_i32_49 : i32 to vector<1x256xi32>
    %192 = arith.cmpi sge, %177, %191 : vector<1x256xi32>
    %c15_i32_50 = arith.constant 15 : i32
    %193 = vector.broadcast %c15_i32_50 : i32 to vector<1x256xi32>
    %194 = arith.cmpi sle, %177, %193 : vector<1x256xi32>
    %195 = arith.andi %192, %194 : vector<1x256xi1>
    %196 = arith.extui %195 : vector<1x256xi1> to vector<1x256xi32>
    %197 = arith.sitofp %196 : vector<1x256xi32> to vector<1x256xf32>
    %198 = arith.mulf %172, %197 : vector<1x256xf32>
    %199 = arith.mulf %198, %169 : vector<1x256xf32>
    %cst_51 = arith.constant 1.000000e+00 : f32
    %200 = vector.broadcast %cst_51 : f32 to vector<1x256xf32>
    %201 = arith.subf %200, %173 : vector<1x256xf32>
    %c0_i32_52 = arith.constant 0 : i32
    %202 = vector.broadcast %c0_i32_52 : i32 to vector<1x256xi32>
    %203 = arith.cmpi sge, %175, %202 : vector<1x256xi32>
    %c15_i32_53 = arith.constant 15 : i32
    %204 = vector.broadcast %c15_i32_53 : i32 to vector<1x256xi32>
    %205 = arith.cmpi sle, %175, %204 : vector<1x256xi32>
    %206 = arith.andi %203, %205 : vector<1x256xi1>
    %207 = arith.extui %206 : vector<1x256xi1> to vector<1x256xi32>
    %208 = arith.sitofp %207 : vector<1x256xi32> to vector<1x256xf32>
    %209 = arith.mulf %201, %208 : vector<1x256xf32>
    %c0_i32_54 = arith.constant 0 : i32
    %210 = vector.broadcast %c0_i32_54 : i32 to vector<1x256xi32>
    %211 = arith.cmpi sge, %179, %210 : vector<1x256xi32>
    %c15_i32_55 = arith.constant 15 : i32
    %212 = vector.broadcast %c15_i32_55 : i32 to vector<1x256xi32>
    %213 = arith.cmpi sle, %179, %212 : vector<1x256xi32>
    %214 = arith.andi %211, %213 : vector<1x256xi1>
    %215 = arith.extui %214 : vector<1x256xi1> to vector<1x256xi32>
    %216 = arith.sitofp %215 : vector<1x256xi32> to vector<1x256xf32>
    %217 = arith.mulf %173, %216 : vector<1x256xf32>
    %c0_i32_56 = arith.constant 0 : i32
    %c15_i32_57 = arith.constant 15 : i32
    %218 = vector.broadcast %c0_i32_56 : i32 to vector<1x256xi32>
    %219 = arith.maxsi %218, %174 : vector<1x256xi32>
    %220 = vector.broadcast %c15_i32_57 : i32 to vector<1x256xi32>
    %221 = arith.minsi %220, %219 : vector<1x256xi32>
    %c0_i32_58 = arith.constant 0 : i32
    %c15_i32_59 = arith.constant 15 : i32
    %222 = vector.broadcast %c0_i32_58 : i32 to vector<1x256xi32>
    %223 = arith.maxsi %222, %177 : vector<1x256xi32>
    %224 = vector.broadcast %c15_i32_59 : i32 to vector<1x256xi32>
    %225 = arith.minsi %224, %223 : vector<1x256xi32>
    %c0_i32_60 = arith.constant 0 : i32
    %c15_i32_61 = arith.constant 15 : i32
    %226 = vector.broadcast %c0_i32_60 : i32 to vector<1x256xi32>
    %227 = arith.maxsi %226, %175 : vector<1x256xi32>
    %228 = vector.broadcast %c15_i32_61 : i32 to vector<1x256xi32>
    %229 = arith.minsi %228, %227 : vector<1x256xi32>
    %c0_i32_62 = arith.constant 0 : i32
    %c15_i32_63 = arith.constant 15 : i32
    %230 = vector.broadcast %c0_i32_62 : i32 to vector<1x256xi32>
    %231 = arith.maxsi %230, %179 : vector<1x256xi32>
    %232 = vector.broadcast %c15_i32_63 : i32 to vector<1x256xi32>
    %233 = arith.minsi %232, %231 : vector<1x256xi32>
    %234 = vector.broadcast %221 : vector<1x256xi32> to vector<16x256xi32>
    %235 = arith.cmpi eq, %24, %234 : vector<16x256xi32>
    %cst_64 = arith.constant 0.000000e+00 : f32
    %236 = vector.shape_cast %190 : vector<1x256xf32> to vector<1x256xf32>
    %237 = vector.broadcast %236 : vector<1x256xf32> to vector<16x256xf32>
    %238 = vector.broadcast %cst_64 : f32 to vector<16x256xf32>
    %239 = arith.select %235, %237, %238 : vector<16x256xi1>, vector<16x256xf32>
    %240 = vector.broadcast %225 : vector<1x256xi32> to vector<16x256xi32>
    %241 = arith.cmpi eq, %24, %240 : vector<16x256xi32>
    %cst_65 = arith.constant 0.000000e+00 : f32
    %242 = vector.shape_cast %199 : vector<1x256xf32> to vector<1x256xf32>
    %243 = vector.broadcast %242 : vector<1x256xf32> to vector<16x256xf32>
    %244 = vector.broadcast %cst_65 : f32 to vector<16x256xf32>
    %245 = arith.select %241, %243, %244 : vector<16x256xi1>, vector<16x256xf32>
    %246 = arith.addf %239, %245 : vector<16x256xf32>
    %247 = vector.broadcast %229 : vector<1x256xi32> to vector<16x256xi32>
    %248 = arith.cmpi eq, %25, %247 : vector<16x256xi32>
    %cst_66 = arith.constant 0.000000e+00 : f32
    %249 = vector.shape_cast %209 : vector<1x256xf32> to vector<1x256xf32>
    %250 = vector.broadcast %249 : vector<1x256xf32> to vector<16x256xf32>
    %251 = vector.broadcast %cst_66 : f32 to vector<16x256xf32>
    %252 = arith.select %248, %250, %251 : vector<16x256xi1>, vector<16x256xf32>
    %253 = vector.broadcast %233 : vector<1x256xi32> to vector<16x256xi32>
    %254 = arith.cmpi eq, %25, %253 : vector<16x256xi32>
    %cst_67 = arith.constant 0.000000e+00 : f32
    %255 = vector.shape_cast %217 : vector<1x256xf32> to vector<1x256xf32>
    %256 = vector.broadcast %255 : vector<1x256xf32> to vector<16x256xf32>
    %257 = vector.broadcast %cst_67 : f32 to vector<16x256xf32>
    %258 = arith.select %254, %256, %257 : vector<16x256xi1>, vector<16x256xf32>
    %259 = arith.addf %252, %258 : vector<16x256xf32>
    %260 = vector.shape_cast %246 : vector<16x256xf32> to vector<16x1x256xf32>
    %261 = vector.shape_cast %259 : vector<16x256xf32> to vector<1x16x256xf32>
    %262 = vector.broadcast %260 : vector<16x1x256xf32> to vector<16x16x256xf32>
    %263 = vector.broadcast %261 : vector<1x16x256xf32> to vector<16x16x256xf32>
    %264 = arith.mulf %262, %263 : vector<16x16x256xf32>
    %265 = vector.shape_cast %264 : vector<16x16x256xf32> to vector<256x256xf32>
    %cst_68 = arith.constant dense<0.000000e+00> : vector<4x256xf32>
    %266 = tpu.matmul %1, %265, %cst_68 {dimension_numbers = #tpu.dot_dimension_numbers<[1], [0], [0], [1], [0, 0, 1, 1], [], []>} : vector<4x256xf32>, vector<256x256xf32>, vector<4x256xf32> -> vector<4x256xf32>
    %c4 = arith.constant 4 : index
    %c0_69 = arith.constant 0 : index
    %267 = vector.load %arg7[%c4, %c0_69] : memref<36x256xf32, #tpu.memory_space<vmem>>, vector<4x256xf32>
    tpu.vector_store %arg7[%c4, %c0_69], %266 {strides = array<i32>} : memref<36x256xf32, #tpu.memory_space<vmem>>, vector<4x256xf32>,
    %268 = vector.extract_strided_slice %3 {offsets = [2, 0], sizes = [1, 256], strides = [1, 1]} : vector<27x256xf32> to vector<1x256xf32>
    %269 = vector.extract_strided_slice %3 {offsets = [11, 0], sizes = [1, 256], strides = [1, 1]} : vector<27x256xf32> to vector<1x256xf32>
    %270 = vector.extract_strided_slice %3 {offsets = [20, 0], sizes = [1, 256], strides = [1, 1]} : vector<27x256xf32> to vector<1x256xf32>
    %cst_70 = arith.constant -1.000000e+00 : f32
    %271 = vector.broadcast %cst_70 : f32 to vector<1x256xf32>
    %272 = arith.addf %20, %271 : vector<1x256xf32>
    %273 = arith.addf %272, %268 : vector<1x256xf32>
    %cst_71 = arith.constant 1.000000e+00 : f32
    %274 = vector.broadcast %cst_71 : f32 to vector<1x256xf32>
    %275 = arith.addf %23, %274 : vector<1x256xf32>
    %276 = arith.addf %275, %269 : vector<1x256xf32>
    %cst_72 = arith.constant -1.000000e+00 : f32
    %277 = vector.broadcast %cst_72 : f32 to vector<1x256xf32>
    %278 = arith.cmpf ogt, %273, %277 : vector<1x256xf32>
    %cst_73 = arith.constant 1.600000e+01 : f32
    %279 = vector.broadcast %cst_73 : f32 to vector<1x256xf32>
    %280 = arith.cmpf olt, %273, %279 : vector<1x256xf32>
    %281 = arith.andi %278, %280 : vector<1x256xi1>
    %cst_74 = arith.constant -1.000000e+00 : f32
    %282 = vector.broadcast %cst_74 : f32 to vector<1x256xf32>
    %283 = arith.cmpf ogt, %276, %282 : vector<1x256xf32>
    %284 = arith.andi %281, %283 : vector<1x256xi1>
    %cst_75 = arith.constant 1.600000e+01 : f32
    %285 = vector.broadcast %cst_75 : f32 to vector<1x256xf32>
    %286 = arith.cmpf olt, %276, %285 : vector<1x256xf32>
    %287 = arith.andi %284, %286 : vector<1x256xi1>
    %288 = arith.extui %287 : vector<1x256xi1> to vector<1x256xi32>
    %289 = arith.sitofp %288 : vector<1x256xi32> to vector<1x256xf32>
    %290 = arith.mulf %270, %289 : vector<1x256xf32>
    %291 = math.floor %273 : vector<1x256xf32>
    %292 = math.floor %276 : vector<1x256xf32>
    %293 = arith.subf %273, %291 : vector<1x256xf32>
    %294 = arith.subf %276, %292 : vector<1x256xf32>
    %295 = arith.fptosi %291 : vector<1x256xf32> to vector<1x256xi32>
    %296 = arith.fptosi %292 : vector<1x256xf32> to vector<1x256xi32>
    %c1_i32_76 = arith.constant 1 : i32
    %297 = vector.broadcast %c1_i32_76 : i32 to vector<1x256xi32>
    %298 = arith.addi %295, %297 : vector<1x256xi32>
    %c1_i32_77 = arith.constant 1 : i32
    %299 = vector.broadcast %c1_i32_77 : i32 to vector<1x256xi32>
    %300 = arith.addi %296, %299 : vector<1x256xi32>
    %cst_78 = arith.constant 1.000000e+00 : f32
    %301 = vector.broadcast %cst_78 : f32 to vector<1x256xf32>
    %302 = arith.subf %301, %293 : vector<1x256xf32>
    %c0_i32_79 = arith.constant 0 : i32
    %303 = vector.broadcast %c0_i32_79 : i32 to vector<1x256xi32>
    %304 = arith.cmpi sge, %295, %303 : vector<1x256xi32>
    %c15_i32_80 = arith.constant 15 : i32
    %305 = vector.broadcast %c15_i32_80 : i32 to vector<1x256xi32>
    %306 = arith.cmpi sle, %295, %305 : vector<1x256xi32>
    %307 = arith.andi %304, %306 : vector<1x256xi1>
    %308 = arith.extui %307 : vector<1x256xi1> to vector<1x256xi32>
    %309 = arith.sitofp %308 : vector<1x256xi32> to vector<1x256xf32>
    %310 = arith.mulf %302, %309 : vector<1x256xf32>
    %311 = arith.mulf %310, %290 : vector<1x256xf32>
    %c0_i32_81 = arith.constant 0 : i32
    %312 = vector.broadcast %c0_i32_81 : i32 to vector<1x256xi32>
    %313 = arith.cmpi sge, %298, %312 : vector<1x256xi32>
    %c15_i32_82 = arith.constant 15 : i32
    %314 = vector.broadcast %c15_i32_82 : i32 to vector<1x256xi32>
    %315 = arith.cmpi sle, %298, %314 : vector<1x256xi32>
    %316 = arith.andi %313, %315 : vector<1x256xi1>
    %317 = arith.extui %316 : vector<1x256xi1> to vector<1x256xi32>
    %318 = arith.sitofp %317 : vector<1x256xi32> to vector<1x256xf32>
    %319 = arith.mulf %293, %318 : vector<1x256xf32>
    %320 = arith.mulf %319, %290 : vector<1x256xf32>
    %cst_83 = arith.constant 1.000000e+00 : f32
    %321 = vector.broadcast %cst_83 : f32 to vector<1x256xf32>
    %322 = arith.subf %321, %294 : vector<1x256xf32>
    %c0_i32_84 = arith.constant 0 : i32
    %323 = vector.broadcast %c0_i32_84 : i32 to vector<1x256xi32>
    %324 = arith.cmpi sge, %296, %323 : vector<1x256xi32>
    %c15_i32_85 = arith.constant 15 : i32
    %325 = vector.broadcast %c15_i32_85 : i32 to vector<1x256xi32>
    %326 = arith.cmpi sle, %296, %325 : vector<1x256xi32>
    %327 = arith.andi %324, %326 : vector<1x256xi1>
    %328 = arith.extui %327 : vector<1x256xi1> to vector<1x256xi32>
    %329 = arith.sitofp %328 : vector<1x256xi32> to vector<1x256xf32>
    %330 = arith.mulf %322, %329 : vector<1x256xf32>
    %c0_i32_86 = arith.constant 0 : i32
    %331 = vector.broadcast %c0_i32_86 : i32 to vector<1x256xi32>
    %332 = arith.cmpi sge, %300, %331 : vector<1x256xi32>
    %c15_i32_87 = arith.constant 15 : i32
    %333 = vector.broadcast %c15_i32_87 : i32 to vector<1x256xi32>
    %334 = arith.cmpi sle, %300, %333 : vector<1x256xi32>
    %335 = arith.andi %332, %334 : vector<1x256xi1>
    %336 = arith.extui %335 : vector<1x256xi1> to vector<1x256xi32>
    %337 = arith.sitofp %336 : vector<1x256xi32> to vector<1x256xf32>
    %338 = arith.mulf %294, %337 : vector<1x256xf32>
    %c0_i32_88 = arith.constant 0 : i32
    %c15_i32_89 = arith.constant 15 : i32
    %339 = vector.broadcast %c0_i32_88 : i32 to vector<1x256xi32>
    %340 = arith.maxsi %339, %295 : vector<1x256xi32>
    %341 = vector.broadcast %c15_i32_89 : i32 to vector<1x256xi32>
    %342 = arith.minsi %341, %340 : vector<1x256xi32>
    %c0_i32_90 = arith.constant 0 : i32
    %c15_i32_91 = arith.constant 15 : i32
    %343 = vector.broadcast %c0_i32_90 : i32 to vector<1x256xi32>
    %344 = arith.maxsi %343, %298 : vector<1x256xi32>
    %345 = vector.broadcast %c15_i32_91 : i32 to vector<1x256xi32>
    %346 = arith.minsi %345, %344 : vector<1x256xi32>
    %c0_i32_92 = arith.constant 0 : i32
    %c15_i32_93 = arith.constant 15 : i32
    %347 = vector.broadcast %c0_i32_92 : i32 to vector<1x256xi32>
    %348 = arith.maxsi %347, %296 : vector<1x256xi32>
    %349 = vector.broadcast %c15_i32_93 : i32 to vector<1x256xi32>
    %350 = arith.minsi %349, %348 : vector<1x256xi32>
    %c0_i32_94 = arith.constant 0 : i32
    %c15_i32_95 = arith.constant 15 : i32
    %351 = vector.broadcast %c0_i32_94 : i32 to vector<1x256xi32>
    %352 = arith.maxsi %351, %300 : vector<1x256xi32>
    %353 = vector.broadcast %c15_i32_95 : i32 to vector<1x256xi32>
    %354 = arith.minsi %353, %352 : vector<1x256xi32>
    %355 = vector.broadcast %342 : vector<1x256xi32> to vector<16x256xi32>
    %356 = arith.cmpi eq, %24, %355 : vector<16x256xi32>
    %cst_96 = arith.constant 0.000000e+00 : f32
    %357 = vector.shape_cast %311 : vector<1x256xf32> to vector<1x256xf32>
    %358 = vector.broadcast %357 : vector<1x256xf32> to vector<16x256xf32>
    %359 = vector.broadcast %cst_96 : f32 to vector<16x256xf32>
    %360 = arith.select %356, %358, %359 : vector<16x256xi1>, vector<16x256xf32>
    %361 = vector.broadcast %346 : vector<1x256xi32> to vector<16x256xi32>
    %362 = arith.cmpi eq, %24, %361 : vector<16x256xi32>
    %cst_97 = arith.constant 0.000000e+00 : f32
    %363 = vector.shape_cast %320 : vector<1x256xf32> to vector<1x256xf32>
    %364 = vector.broadcast %363 : vector<1x256xf32> to vector<16x256xf32>
    %365 = vector.broadcast %cst_97 : f32 to vector<16x256xf32>
    %366 = arith.select %362, %364, %365 : vector<16x256xi1>, vector<16x256xf32>
    %367 = arith.addf %360, %366 : vector<16x256xf32>
    %368 = vector.broadcast %350 : vector<1x256xi32> to vector<16x256xi32>
    %369 = arith.cmpi eq, %25, %368 : vector<16x256xi32>
    %cst_98 = arith.constant 0.000000e+00 : f32
    %370 = vector.shape_cast %330 : vector<1x256xf32> to vector<1x256xf32>
    %371 = vector.broadcast %370 : vector<1x256xf32> to vector<16x256xf32>
    %372 = vector.broadcast %cst_98 : f32 to vector<16x256xf32>
    %373 = arith.select %369, %371, %372 : vector<16x256xi1>, vector<16x256xf32>
    %374 = vector.broadcast %354 : vector<1x256xi32> to vector<16x256xi32>
    %375 = arith.cmpi eq, %25, %374 : vector<16x256xi32>
    %cst_99 = arith.constant 0.000000e+00 : f32
    %376 = vector.shape_cast %338 : vector<1x256xf32> to vector<1x256xf32>
    %377 = vector.broadcast %376 : vector<1x256xf32> to vector<16x256xf32>
    %378 = vector.broadcast %cst_99 : f32 to vector<16x256xf32>
    %379 = arith.select %375, %377, %378 : vector<16x256xi1>, vector<16x256xf32>
    %380 = arith.addf %373, %379 : vector<16x256xf32>
    %381 = vector.shape_cast %367 : vector<16x256xf32> to vector<16x1x256xf32>
    %382 = vector.shape_cast %380 : vector<16x256xf32> to vector<1x16x256xf32>
    %383 = vector.broadcast %381 : vector<16x1x256xf32> to vector<16x16x256xf32>
    %384 = vector.broadcast %382 : vector<1x16x256xf32> to vector<16x16x256xf32>
    %385 = arith.mulf %383, %384 : vector<16x16x256xf32>
    %386 = vector.shape_cast %385 : vector<16x16x256xf32> to vector<256x256xf32>
    %cst_100 = arith.constant dense<0.000000e+00> : vector<4x256xf32>
    %387 = tpu.matmul %1, %386, %cst_100 {dimension_numbers = #tpu.dot_dimension_numbers<[1], [0], [0], [1], [0, 0, 1, 1], [], []>} : vector<4x256xf32>, vector<256x256xf32>, vector<4x256xf32> -> vector<4x256xf32>
    %c8 = arith.constant 8 : index
    %c0_101 = arith.constant 0 : index
    %388 = vector.load %arg7[%c8, %c0_101] : memref<36x256xf32, #tpu.memory_space<vmem>>, vector<4x256xf32>
    tpu.vector_store %arg7[%c8, %c0_101], %387 {strides = array<i32>} : memref<36x256xf32, #tpu.memory_space<vmem>>, vector<4x256xf32>,
    %389 = vector.extract_strided_slice %3 {offsets = [3, 0], sizes = [1, 256], strides = [1, 1]} : vector<27x256xf32> to vector<1x256xf32>
    %390 = vector.extract_strided_slice %3 {offsets = [12, 0], sizes = [1, 256], strides = [1, 1]} : vector<27x256xf32> to vector<1x256xf32>
    %391 = vector.extract_strided_slice %3 {offsets = [21, 0], sizes = [1, 256], strides = [1, 1]} : vector<27x256xf32> to vector<1x256xf32>
    %cst_102 = arith.constant 0.000000e+00 : f32
    %392 = vector.broadcast %cst_102 : f32 to vector<1x256xf32>
    %393 = arith.addf %20, %392 : vector<1x256xf32>
    %394 = arith.addf %393, %389 : vector<1x256xf32>
    %cst_103 = arith.constant -1.000000e+00 : f32
    %395 = vector.broadcast %cst_103 : f32 to vector<1x256xf32>
    %396 = arith.addf %23, %395 : vector<1x256xf32>
    %397 = arith.addf %396, %390 : vector<1x256xf32>
    %cst_104 = arith.constant -1.000000e+00 : f32
    %398 = vector.broadcast %cst_104 : f32 to vector<1x256xf32>
    %399 = arith.cmpf ogt, %394, %398 : vector<1x256xf32>
    %cst_105 = arith.constant 1.600000e+01 : f32
    %400 = vector.broadcast %cst_105 : f32 to vector<1x256xf32>
    %401 = arith.cmpf olt, %394, %400 : vector<1x256xf32>
    %402 = arith.andi %399, %401 : vector<1x256xi1>
    %cst_106 = arith.constant -1.000000e+00 : f32
    %403 = vector.broadcast %cst_106 : f32 to vector<1x256xf32>
    %404 = arith.cmpf ogt, %397, %403 : vector<1x256xf32>
    %405 = arith.andi %402, %404 : vector<1x256xi1>
    %cst_107 = arith.constant 1.600000e+01 : f32
    %406 = vector.broadcast %cst_107 : f32 to vector<1x256xf32>
    %407 = arith.cmpf olt, %397, %406 : vector<1x256xf32>
    %408 = arith.andi %405, %407 : vector<1x256xi1>
    %409 = arith.extui %408 : vector<1x256xi1> to vector<1x256xi32>
    %410 = arith.sitofp %409 : vector<1x256xi32> to vector<1x256xf32>
    %411 = arith.mulf %391, %410 : vector<1x256xf32>
    %412 = math.floor %394 : vector<1x256xf32>
    %413 = math.floor %397 : vector<1x256xf32>
    %414 = arith.subf %394, %412 : vector<1x256xf32>
    %415 = arith.subf %397, %413 : vector<1x256xf32>
    %416 = arith.fptosi %412 : vector<1x256xf32> to vector<1x256xi32>
    %417 = arith.fptosi %413 : vector<1x256xf32> to vector<1x256xi32>
    %c1_i32_108 = arith.constant 1 : i32
    %418 = vector.broadcast %c1_i32_108 : i32 to vector<1x256xi32>
    %419 = arith.addi %416, %418 : vector<1x256xi32>
    %c1_i32_109 = arith.constant 1 : i32
    %420 = vector.broadcast %c1_i32_109 : i32 to vector<1x256xi32>
    %421 = arith.addi %417, %420 : vector<1x256xi32>
    %cst_110 = arith.constant 1.000000e+00 : f32
    %422 = vector.broadcast %cst_110 : f32 to vector<1x256xf32>
    %423 = arith.subf %422, %414 : vector<1x256xf32>
    %c0_i32_111 = arith.constant 0 : i32
    %424 = vector.broadcast %c0_i32_111 : i32 to vector<1x256xi32>
    %425 = arith.cmpi sge, %416, %424 : vector<1x256xi32>
    %c15_i32_112 = arith.constant 15 : i32
    %426 = vector.broadcast %c15_i32_112 : i32 to vector<1x256xi32>
    %427 = arith.cmpi sle, %416, %426 : vector<1x256xi32>
    %428 = arith.andi %425, %427 : vector<1x256xi1>
    %429 = arith.extui %428 : vector<1x256xi1> to vector<1x256xi32>
    %430 = arith.sitofp %429 : vector<1x256xi32> to vector<1x256xf32>
    %431 = arith.mulf %423, %430 : vector<1x256xf32>
    %432 = arith.mulf %431, %411 : vector<1x256xf32>
    %c0_i32_113 = arith.constant 0 : i32
    %433 = vector.broadcast %c0_i32_113 : i32 to vector<1x256xi32>
    %434 = arith.cmpi sge, %419, %433 : vector<1x256xi32>
    %c15_i32_114 = arith.constant 15 : i32
    %435 = vector.broadcast %c15_i32_114 : i32 to vector<1x256xi32>
    %436 = arith.cmpi sle, %419, %435 : vector<1x256xi32>
    %437 = arith.andi %434, %436 : vector<1x256xi1>
    %438 = arith.extui %437 : vector<1x256xi1> to vector<1x256xi32>
    %439 = arith.sitofp %438 : vector<1x256xi32> to vector<1x256xf32>
    %440 = arith.mulf %414, %439 : vector<1x256xf32>
    %441 = arith.mulf %440, %411 : vector<1x256xf32>
    %cst_115 = arith.constant 1.000000e+00 : f32
    %442 = vector.broadcast %cst_115 : f32 to vector<1x256xf32>
    %443 = arith.subf %442, %415 : vector<1x256xf32>
    %c0_i32_116 = arith.constant 0 : i32
    %444 = vector.broadcast %c0_i32_116 : i32 to vector<1x256xi32>
    %445 = arith.cmpi sge, %417, %444 : vector<1x256xi32>
    %c15_i32_117 = arith.constant 15 : i32
    %446 = vector.broadcast %c15_i32_117 : i32 to vector<1x256xi32>
    %447 = arith.cmpi sle, %417, %446 : vector<1x256xi32>
    %448 = arith.andi %445, %447 : vector<1x256xi1>
    %449 = arith.extui %448 : vector<1x256xi1> to vector<1x256xi32>
    %450 = arith.sitofp %449 : vector<1x256xi32> to vector<1x256xf32>
    %451 = arith.mulf %443, %450 : vector<1x256xf32>
    %c0_i32_118 = arith.constant 0 : i32
    %452 = vector.broadcast %c0_i32_118 : i32 to vector<1x256xi32>
    %453 = arith.cmpi sge, %421, %452 : vector<1x256xi32>
    %c15_i32_119 = arith.constant 15 : i32
    %454 = vector.broadcast %c15_i32_119 : i32 to vector<1x256xi32>
    %455 = arith.cmpi sle, %421, %454 : vector<1x256xi32>
    %456 = arith.andi %453, %455 : vector<1x256xi1>
    %457 = arith.extui %456 : vector<1x256xi1> to vector<1x256xi32>
    %458 = arith.sitofp %457 : vector<1x256xi32> to vector<1x256xf32>
    %459 = arith.mulf %415, %458 : vector<1x256xf32>
    %c0_i32_120 = arith.constant 0 : i32
    %c15_i32_121 = arith.constant 15 : i32
    %460 = vector.broadcast %c0_i32_120 : i32 to vector<1x256xi32>
    %461 = arith.maxsi %460, %416 : vector<1x256xi32>
    %462 = vector.broadcast %c15_i32_121 : i32 to vector<1x256xi32>
    %463 = arith.minsi %462, %461 : vector<1x256xi32>
    %c0_i32_122 = arith.constant 0 : i32
    %c15_i32_123 = arith.constant 15 : i32
    %464 = vector.broadcast %c0_i32_122 : i32 to vector<1x256xi32>
    %465 = arith.maxsi %464, %419 : vector<1x256xi32>
    %466 = vector.broadcast %c15_i32_123 : i32 to vector<1x256xi32>
    %467 = arith.minsi %466, %465 : vector<1x256xi32>
    %c0_i32_124 = arith.constant 0 : i32
    %c15_i32_125 = arith.constant 15 : i32
    %468 = vector.broadcast %c0_i32_124 : i32 to vector<1x256xi32>
    %469 = arith.maxsi %468, %417 : vector<1x256xi32>
    %470 = vector.broadcast %c15_i32_125 : i32 to vector<1x256xi32>
    %471 = arith.minsi %470, %469 : vector<1x256xi32>
    %c0_i32_126 = arith.constant 0 : i32
    %c15_i32_127 = arith.constant 15 : i32
    %472 = vector.broadcast %c0_i32_126 : i32 to vector<1x256xi32>
    %473 = arith.maxsi %472, %421 : vector<1x256xi32>
    %474 = vector.broadcast %c15_i32_127 : i32 to vector<1x256xi32>
    %475 = arith.minsi %474, %473 : vector<1x256xi32>
    %476 = vector.broadcast %463 : vector<1x256xi32> to vector<16x256xi32>
    %477 = arith.cmpi eq, %24, %476 : vector<16x256xi32>
    %cst_128 = arith.constant 0.000000e+00 : f32
    %478 = vector.shape_cast %432 : vector<1x256xf32> to vector<1x256xf32>
    %479 = vector.broadcast %478 : vector<1x256xf32> to vector<16x256xf32>
    %480 = vector.broadcast %cst_128 : f32 to vector<16x256xf32>
    %481 = arith.select %477, %479, %480 : vector<16x256xi1>, vector<16x256xf32>
    %482 = vector.broadcast %467 : vector<1x256xi32> to vector<16x256xi32>
    %483 = arith.cmpi eq, %24, %482 : vector<16x256xi32>
    %cst_129 = arith.constant 0.000000e+00 : f32
    %484 = vector.shape_cast %441 : vector<1x256xf32> to vector<1x256xf32>
    %485 = vector.broadcast %484 : vector<1x256xf32> to vector<16x256xf32>
    %486 = vector.broadcast %cst_129 : f32 to vector<16x256xf32>
    %487 = arith.select %483, %485, %486 : vector<16x256xi1>, vector<16x256xf32>
    %488 = arith.addf %481, %487 : vector<16x256xf32>
    %489 = vector.broadcast %471 : vector<1x256xi32> to vector<16x256xi32>
    %490 = arith.cmpi eq, %25, %489 : vector<16x256xi32>
    %cst_130 = arith.constant 0.000000e+00 : f32
    %491 = vector.shape_cast %451 : vector<1x256xf32> to vector<1x256xf32>
    %492 = vector.broadcast %491 : vector<1x256xf32> to vector<16x256xf32>
    %493 = vector.broadcast %cst_130 : f32 to vector<16x256xf32>
    %494 = arith.select %490, %492, %493 : vector<16x256xi1>, vector<16x256xf32>
    %495 = vector.broadcast %475 : vector<1x256xi32> to vector<16x256xi32>
    %496 = arith.cmpi eq, %25, %495 : vector<16x256xi32>
    %cst_131 = arith.constant 0.000000e+00 : f32
    %497 = vector.shape_cast %459 : vector<1x256xf32> to vector<1x256xf32>
    %498 = vector.broadcast %497 : vector<1x256xf32> to vector<16x256xf32>
    %499 = vector.broadcast %cst_131 : f32 to vector<16x256xf32>
    %500 = arith.select %496, %498, %499 : vector<16x256xi1>, vector<16x256xf32>
    %501 = arith.addf %494, %500 : vector<16x256xf32>
    %502 = vector.shape_cast %488 : vector<16x256xf32> to vector<16x1x256xf32>
    %503 = vector.shape_cast %501 : vector<16x256xf32> to vector<1x16x256xf32>
    %504 = vector.broadcast %502 : vector<16x1x256xf32> to vector<16x16x256xf32>
    %505 = vector.broadcast %503 : vector<1x16x256xf32> to vector<16x16x256xf32>
    %506 = arith.mulf %504, %505 : vector<16x16x256xf32>
    %507 = vector.shape_cast %506 : vector<16x16x256xf32> to vector<256x256xf32>
    %cst_132 = arith.constant dense<0.000000e+00> : vector<4x256xf32>
    %508 = tpu.matmul %1, %507, %cst_132 {dimension_numbers = #tpu.dot_dimension_numbers<[1], [0], [0], [1], [0, 0, 1, 1], [], []>} : vector<4x256xf32>, vector<256x256xf32>, vector<4x256xf32> -> vector<4x256xf32>
    %c12 = arith.constant 12 : index
    %c0_133 = arith.constant 0 : index
    %509 = vector.load %arg7[%c12, %c0_133] : memref<36x256xf32, #tpu.memory_space<vmem>>, vector<4x256xf32>
    tpu.vector_store %arg7[%c12, %c0_133], %508 {strides = array<i32>} : memref<36x256xf32, #tpu.memory_space<vmem>>, vector<4x256xf32>,
    %510 = vector.extract_strided_slice %3 {offsets = [4, 0], sizes = [1, 256], strides = [1, 1]} : vector<27x256xf32> to vector<1x256xf32>
    %511 = vector.extract_strided_slice %3 {offsets = [13, 0], sizes = [1, 256], strides = [1, 1]} : vector<27x256xf32> to vector<1x256xf32>
    %512 = vector.extract_strided_slice %3 {offsets = [22, 0], sizes = [1, 256], strides = [1, 1]} : vector<27x256xf32> to vector<1x256xf32>
    %cst_134 = arith.constant 0.000000e+00 : f32
    %513 = vector.broadcast %cst_134 : f32 to vector<1x256xf32>
    %514 = arith.addf %20, %513 : vector<1x256xf32>
    %515 = arith.addf %514, %510 : vector<1x256xf32>
    %cst_135 = arith.constant 0.000000e+00 : f32
    %516 = vector.broadcast %cst_135 : f32 to vector<1x256xf32>
    %517 = arith.addf %23, %516 : vector<1x256xf32>
    %518 = arith.addf %517, %511 : vector<1x256xf32>
    %cst_136 = arith.constant -1.000000e+00 : f32
    %519 = vector.broadcast %cst_136 : f32 to vector<1x256xf32>
    %520 = arith.cmpf ogt, %515, %519 : vector<1x256xf32>
    %cst_137 = arith.constant 1.600000e+01 : f32
    %521 = vector.broadcast %cst_137 : f32 to vector<1x256xf32>
    %522 = arith.cmpf olt, %515, %521 : vector<1x256xf32>
    %523 = arith.andi %520, %522 : vector<1x256xi1>
    %cst_138 = arith.constant -1.000000e+00 : f32
    %524 = vector.broadcast %cst_138 : f32 to vector<1x256xf32>
    %525 = arith.cmpf ogt, %518, %524 : vector<1x256xf32>
    %526 = arith.andi %523, %525 : vector<1x256xi1>
    %cst_139 = arith.constant 1.600000e+01 : f32
    %527 = vector.broadcast %cst_139 : f32 to vector<1x256xf32>
    %528 = arith.cmpf olt, %518, %527 : vector<1x256xf32>
    %529 = arith.andi %526, %528 : vector<1x256xi1>
    %530 = arith.extui %529 : vector<1x256xi1> to vector<1x256xi32>
    %531 = arith.sitofp %530 : vector<1x256xi32> to vector<1x256xf32>
    %532 = arith.mulf %512, %531 : vector<1x256xf32>
    %533 = math.floor %515 : vector<1x256xf32>
    %534 = math.floor %518 : vector<1x256xf32>
    %535 = arith.subf %515, %533 : vector<1x256xf32>
    %536 = arith.subf %518, %534 : vector<1x256xf32>
    %537 = arith.fptosi %533 : vector<1x256xf32> to vector<1x256xi32>
    %538 = arith.fptosi %534 : vector<1x256xf32> to vector<1x256xi32>
    %c1_i32_140 = arith.constant 1 : i32
    %539 = vector.broadcast %c1_i32_140 : i32 to vector<1x256xi32>
    %540 = arith.addi %537, %539 : vector<1x256xi32>
    %c1_i32_141 = arith.constant 1 : i32
    %541 = vector.broadcast %c1_i32_141 : i32 to vector<1x256xi32>
    %542 = arith.addi %538, %541 : vector<1x256xi32>
    %cst_142 = arith.constant 1.000000e+00 : f32
    %543 = vector.broadcast %cst_142 : f32 to vector<1x256xf32>
    %544 = arith.subf %543, %535 : vector<1x256xf32>
    %c0_i32_143 = arith.constant 0 : i32
    %545 = vector.broadcast %c0_i32_143 : i32 to vector<1x256xi32>
    %546 = arith.cmpi sge, %537, %545 : vector<1x256xi32>
    %c15_i32_144 = arith.constant 15 : i32
    %547 = vector.broadcast %c15_i32_144 : i32 to vector<1x256xi32>
    %548 = arith.cmpi sle, %537, %547 : vector<1x256xi32>
    %549 = arith.andi %546, %548 : vector<1x256xi1>
    %550 = arith.extui %549 : vector<1x256xi1> to vector<1x256xi32>
    %551 = arith.sitofp %550 : vector<1x256xi32> to vector<1x256xf32>
    %552 = arith.mulf %544, %551 : vector<1x256xf32>
    %553 = arith.mulf %552, %532 : vector<1x256xf32>
    %c0_i32_145 = arith.constant 0 : i32
    %554 = vector.broadcast %c0_i32_145 : i32 to vector<1x256xi32>
    %555 = arith.cmpi sge, %540, %554 : vector<1x256xi32>
    %c15_i32_146 = arith.constant 15 : i32
    %556 = vector.broadcast %c15_i32_146 : i32 to vector<1x256xi32>
    %557 = arith.cmpi sle, %540, %556 : vector<1x256xi32>
    %558 = arith.andi %555, %557 : vector<1x256xi1>
    %559 = arith.extui %558 : vector<1x256xi1> to vector<1x256xi32>
    %560 = arith.sitofp %559 : vector<1x256xi32> to vector<1x256xf32>
    %561 = arith.mulf %535, %560 : vector<1x256xf32>
    %562 = arith.mulf %561, %532 : vector<1x256xf32>
    %cst_147 = arith.constant 1.000000e+00 : f32
    %563 = vector.broadcast %cst_147 : f32 to vector<1x256xf32>
    %564 = arith.subf %563, %536 : vector<1x256xf32>
    %c0_i32_148 = arith.constant 0 : i32
    %565 = vector.broadcast %c0_i32_148 : i32 to vector<1x256xi32>
    %566 = arith.cmpi sge, %538, %565 : vector<1x256xi32>
    %c15_i32_149 = arith.constant 15 : i32
    %567 = vector.broadcast %c15_i32_149 : i32 to vector<1x256xi32>
    %568 = arith.cmpi sle, %538, %567 : vector<1x256xi32>
    %569 = arith.andi %566, %568 : vector<1x256xi1>
    %570 = arith.extui %569 : vector<1x256xi1> to vector<1x256xi32>
    %571 = arith.sitofp %570 : vector<1x256xi32> to vector<1x256xf32>
    %572 = arith.mulf %564, %571 : vector<1x256xf32>
    %c0_i32_150 = arith.constant 0 : i32
    %573 = vector.broadcast %c0_i32_150 : i32 to vector<1x256xi32>
    %574 = arith.cmpi sge, %542, %573 : vector<1x256xi32>
    %c15_i32_151 = arith.constant 15 : i32
    %575 = vector.broadcast %c15_i32_151 : i32 to vector<1x256xi32>
    %576 = arith.cmpi sle, %542, %575 : vector<1x256xi32>
    %577 = arith.andi %574, %576 : vector<1x256xi1>
    %578 = arith.extui %577 : vector<1x256xi1> to vector<1x256xi32>
    %579 = arith.sitofp %578 : vector<1x256xi32> to vector<1x256xf32>
    %580 = arith.mulf %536, %579 : vector<1x256xf32>
    %c0_i32_152 = arith.constant 0 : i32
    %c15_i32_153 = arith.constant 15 : i32
    %581 = vector.broadcast %c0_i32_152 : i32 to vector<1x256xi32>
    %582 = arith.maxsi %581, %537 : vector<1x256xi32>
    %583 = vector.broadcast %c15_i32_153 : i32 to vector<1x256xi32>
    %584 = arith.minsi %583, %582 : vector<1x256xi32>
    %c0_i32_154 = arith.constant 0 : i32
    %c15_i32_155 = arith.constant 15 : i32
    %585 = vector.broadcast %c0_i32_154 : i32 to vector<1x256xi32>
    %586 = arith.maxsi %585, %540 : vector<1x256xi32>
    %587 = vector.broadcast %c15_i32_155 : i32 to vector<1x256xi32>
    %588 = arith.minsi %587, %586 : vector<1x256xi32>
    %c0_i32_156 = arith.constant 0 : i32
    %c15_i32_157 = arith.constant 15 : i32
    %589 = vector.broadcast %c0_i32_156 : i32 to vector<1x256xi32>
    %590 = arith.maxsi %589, %538 : vector<1x256xi32>
    %591 = vector.broadcast %c15_i32_157 : i32 to vector<1x256xi32>
    %592 = arith.minsi %591, %590 : vector<1x256xi32>
    %c0_i32_158 = arith.constant 0 : i32
    %c15_i32_159 = arith.constant 15 : i32
    %593 = vector.broadcast %c0_i32_158 : i32 to vector<1x256xi32>
    %594 = arith.maxsi %593, %542 : vector<1x256xi32>
    %595 = vector.broadcast %c15_i32_159 : i32 to vector<1x256xi32>
    %596 = arith.minsi %595, %594 : vector<1x256xi32>
    %597 = vector.broadcast %584 : vector<1x256xi32> to vector<16x256xi32>
    %598 = arith.cmpi eq, %24, %597 : vector<16x256xi32>
    %cst_160 = arith.constant 0.000000e+00 : f32
    %599 = vector.shape_cast %553 : vector<1x256xf32> to vector<1x256xf32>
    %600 = vector.broadcast %599 : vector<1x256xf32> to vector<16x256xf32>
    %601 = vector.broadcast %cst_160 : f32 to vector<16x256xf32>
    %602 = arith.select %598, %600, %601 : vector<16x256xi1>, vector<16x256xf32>
    %603 = vector.broadcast %588 : vector<1x256xi32> to vector<16x256xi32>
    %604 = arith.cmpi eq, %24, %603 : vector<16x256xi32>
    %cst_161 = arith.constant 0.000000e+00 : f32
    %605 = vector.shape_cast %562 : vector<1x256xf32> to vector<1x256xf32>
    %606 = vector.broadcast %605 : vector<1x256xf32> to vector<16x256xf32>
    %607 = vector.broadcast %cst_161 : f32 to vector<16x256xf32>
    %608 = arith.select %604, %606, %607 : vector<16x256xi1>, vector<16x256xf32>
    %609 = arith.addf %602, %608 : vector<16x256xf32>
    %610 = vector.broadcast %592 : vector<1x256xi32> to vector<16x256xi32>
    %611 = arith.cmpi eq, %25, %610 : vector<16x256xi32>
    %cst_162 = arith.constant 0.000000e+00 : f32
    %612 = vector.shape_cast %572 : vector<1x256xf32> to vector<1x256xf32>
    %613 = vector.broadcast %612 : vector<1x256xf32> to vector<16x256xf32>
    %614 = vector.broadcast %cst_162 : f32 to vector<16x256xf32>
    %615 = arith.select %611, %613, %614 : vector<16x256xi1>, vector<16x256xf32>
    %616 = vector.broadcast %596 : vector<1x256xi32> to vector<16x256xi32>
    %617 = arith.cmpi eq, %25, %616 : vector<16x256xi32>
    %cst_163 = arith.constant 0.000000e+00 : f32
    %618 = vector.shape_cast %580 : vector<1x256xf32> to vector<1x256xf32>
    %619 = vector.broadcast %618 : vector<1x256xf32> to vector<16x256xf32>
    %620 = vector.broadcast %cst_163 : f32 to vector<16x256xf32>
    %621 = arith.select %617, %619, %620 : vector<16x256xi1>, vector<16x256xf32>
    %622 = arith.addf %615, %621 : vector<16x256xf32>
    %623 = vector.shape_cast %609 : vector<16x256xf32> to vector<16x1x256xf32>
    %624 = vector.shape_cast %622 : vector<16x256xf32> to vector<1x16x256xf32>
    %625 = vector.broadcast %623 : vector<16x1x256xf32> to vector<16x16x256xf32>
    %626 = vector.broadcast %624 : vector<1x16x256xf32> to vector<16x16x256xf32>
    %627 = arith.mulf %625, %626 : vector<16x16x256xf32>
    %628 = vector.shape_cast %627 : vector<16x16x256xf32> to vector<256x256xf32>
    %cst_164 = arith.constant dense<0.000000e+00> : vector<4x256xf32>
    %629 = tpu.matmul %1, %628, %cst_164 {dimension_numbers = #tpu.dot_dimension_numbers<[1], [0], [0], [1], [0, 0, 1, 1], [], []>} : vector<4x256xf32>, vector<256x256xf32>, vector<4x256xf32> -> vector<4x256xf32>
    %c16 = arith.constant 16 : index
    %c0_165 = arith.constant 0 : index
    %630 = vector.load %arg7[%c16, %c0_165] : memref<36x256xf32, #tpu.memory_space<vmem>>, vector<4x256xf32>
    tpu.vector_store %arg7[%c16, %c0_165], %629 {strides = array<i32>} : memref<36x256xf32, #tpu.memory_space<vmem>>, vector<4x256xf32>,
    %631 = vector.extract_strided_slice %3 {offsets = [5, 0], sizes = [1, 256], strides = [1, 1]} : vector<27x256xf32> to vector<1x256xf32>
    %632 = vector.extract_strided_slice %3 {offsets = [14, 0], sizes = [1, 256], strides = [1, 1]} : vector<27x256xf32> to vector<1x256xf32>
    %633 = vector.extract_strided_slice %3 {offsets = [23, 0], sizes = [1, 256], strides = [1, 1]} : vector<27x256xf32> to vector<1x256xf32>
    %cst_166 = arith.constant 0.000000e+00 : f32
    %634 = vector.broadcast %cst_166 : f32 to vector<1x256xf32>
    %635 = arith.addf %20, %634 : vector<1x256xf32>
    %636 = arith.addf %635, %631 : vector<1x256xf32>
    %cst_167 = arith.constant 1.000000e+00 : f32
    %637 = vector.broadcast %cst_167 : f32 to vector<1x256xf32>
    %638 = arith.addf %23, %637 : vector<1x256xf32>
    %639 = arith.addf %638, %632 : vector<1x256xf32>
    %cst_168 = arith.constant -1.000000e+00 : f32
    %640 = vector.broadcast %cst_168 : f32 to vector<1x256xf32>
    %641 = arith.cmpf ogt, %636, %640 : vector<1x256xf32>
    %cst_169 = arith.constant 1.600000e+01 : f32
    %642 = vector.broadcast %cst_169 : f32 to vector<1x256xf32>
    %643 = arith.cmpf olt, %636, %642 : vector<1x256xf32>
    %644 = arith.andi %641, %643 : vector<1x256xi1>
    %cst_170 = arith.constant -1.000000e+00 : f32
    %645 = vector.broadcast %cst_170 : f32 to vector<1x256xf32>
    %646 = arith.cmpf ogt, %639, %645 : vector<1x256xf32>
    %647 = arith.andi %644, %646 : vector<1x256xi1>
    %cst_171 = arith.constant 1.600000e+01 : f32
    %648 = vector.broadcast %cst_171 : f32 to vector<1x256xf32>
    %649 = arith.cmpf olt, %639, %648 : vector<1x256xf32>
    %650 = arith.andi %647, %649 : vector<1x256xi1>
    %651 = arith.extui %650 : vector<1x256xi1> to vector<1x256xi32>
    %652 = arith.sitofp %651 : vector<1x256xi32> to vector<1x256xf32>
    %653 = arith.mulf %633, %652 : vector<1x256xf32>
    %654 = math.floor %636 : vector<1x256xf32>
    %655 = math.floor %639 : vector<1x256xf32>
    %656 = arith.subf %636, %654 : vector<1x256xf32>
    %657 = arith.subf %639, %655 : vector<1x256xf32>
    %658 = arith.fptosi %654 : vector<1x256xf32> to vector<1x256xi32>
    %659 = arith.fptosi %655 : vector<1x256xf32> to vector<1x256xi32>
    %c1_i32_172 = arith.constant 1 : i32
    %660 = vector.broadcast %c1_i32_172 : i32 to vector<1x256xi32>
    %661 = arith.addi %658, %660 : vector<1x256xi32>
    %c1_i32_173 = arith.constant 1 : i32
    %662 = vector.broadcast %c1_i32_173 : i32 to vector<1x256xi32>
    %663 = arith.addi %659, %662 : vector<1x256xi32>
    %cst_174 = arith.constant 1.000000e+00 : f32
    %664 = vector.broadcast %cst_174 : f32 to vector<1x256xf32>
    %665 = arith.subf %664, %656 : vector<1x256xf32>
    %c0_i32_175 = arith.constant 0 : i32
    %666 = vector.broadcast %c0_i32_175 : i32 to vector<1x256xi32>
    %667 = arith.cmpi sge, %658, %666 : vector<1x256xi32>
    %c15_i32_176 = arith.constant 15 : i32
    %668 = vector.broadcast %c15_i32_176 : i32 to vector<1x256xi32>
    %669 = arith.cmpi sle, %658, %668 : vector<1x256xi32>
    %670 = arith.andi %667, %669 : vector<1x256xi1>
    %671 = arith.extui %670 : vector<1x256xi1> to vector<1x256xi32>
    %672 = arith.sitofp %671 : vector<1x256xi32> to vector<1x256xf32>
    %673 = arith.mulf %665, %672 : vector<1x256xf32>
    %674 = arith.mulf %673, %653 : vector<1x256xf32>
    %c0_i32_177 = arith.constant 0 : i32
    %675 = vector.broadcast %c0_i32_177 : i32 to vector<1x256xi32>
    %676 = arith.cmpi sge, %661, %675 : vector<1x256xi32>
    %c15_i32_178 = arith.constant 15 : i32
    %677 = vector.broadcast %c15_i32_178 : i32 to vector<1x256xi32>
    %678 = arith.cmpi sle, %661, %677 : vector<1x256xi32>
    %679 = arith.andi %676, %678 : vector<1x256xi1>
    %680 = arith.extui %679 : vector<1x256xi1> to vector<1x256xi32>
    %681 = arith.sitofp %680 : vector<1x256xi32> to vector<1x256xf32>
    %682 = arith.mulf %656, %681 : vector<1x256xf32>
    %683 = arith.mulf %682, %653 : vector<1x256xf32>
    %cst_179 = arith.constant 1.000000e+00 : f32
    %684 = vector.broadcast %cst_179 : f32 to vector<1x256xf32>
    %685 = arith.subf %684, %657 : vector<1x256xf32>
    %c0_i32_180 = arith.constant 0 : i32
    %686 = vector.broadcast %c0_i32_180 : i32 to vector<1x256xi32>
    %687 = arith.cmpi sge, %659, %686 : vector<1x256xi32>
    %c15_i32_181 = arith.constant 15 : i32
    %688 = vector.broadcast %c15_i32_181 : i32 to vector<1x256xi32>
    %689 = arith.cmpi sle, %659, %688 : vector<1x256xi32>
    %690 = arith.andi %687, %689 : vector<1x256xi1>
    %691 = arith.extui %690 : vector<1x256xi1> to vector<1x256xi32>
    %692 = arith.sitofp %691 : vector<1x256xi32> to vector<1x256xf32>
    %693 = arith.mulf %685, %692 : vector<1x256xf32>
    %c0_i32_182 = arith.constant 0 : i32
    %694 = vector.broadcast %c0_i32_182 : i32 to vector<1x256xi32>
    %695 = arith.cmpi sge, %663, %694 : vector<1x256xi32>
    %c15_i32_183 = arith.constant 15 : i32
    %696 = vector.broadcast %c15_i32_183 : i32 to vector<1x256xi32>
    %697 = arith.cmpi sle, %663, %696 : vector<1x256xi32>
    %698 = arith.andi %695, %697 : vector<1x256xi1>
    %699 = arith.extui %698 : vector<1x256xi1> to vector<1x256xi32>
    %700 = arith.sitofp %699 : vector<1x256xi32> to vector<1x256xf32>
    %701 = arith.mulf %657, %700 : vector<1x256xf32>
    %c0_i32_184 = arith.constant 0 : i32
    %c15_i32_185 = arith.constant 15 : i32
    %702 = vector.broadcast %c0_i32_184 : i32 to vector<1x256xi32>
    %703 = arith.maxsi %702, %658 : vector<1x256xi32>
    %704 = vector.broadcast %c15_i32_185 : i32 to vector<1x256xi32>
    %705 = arith.minsi %704, %703 : vector<1x256xi32>
    %c0_i32_186 = arith.constant 0 : i32
    %c15_i32_187 = arith.constant 15 : i32
    %706 = vector.broadcast %c0_i32_186 : i32 to vector<1x256xi32>
    %707 = arith.maxsi %706, %661 : vector<1x256xi32>
    %708 = vector.broadcast %c15_i32_187 : i32 to vector<1x256xi32>
    %709 = arith.minsi %708, %707 : vector<1x256xi32>
    %c0_i32_188 = arith.constant 0 : i32
    %c15_i32_189 = arith.constant 15 : i32
    %710 = vector.broadcast %c0_i32_188 : i32 to vector<1x256xi32>
    %711 = arith.maxsi %710, %659 : vector<1x256xi32>
    %712 = vector.broadcast %c15_i32_189 : i32 to vector<1x256xi32>
    %713 = arith.minsi %712, %711 : vector<1x256xi32>
    %c0_i32_190 = arith.constant 0 : i32
    %c15_i32_191 = arith.constant 15 : i32
    %714 = vector.broadcast %c0_i32_190 : i32 to vector<1x256xi32>
    %715 = arith.maxsi %714, %663 : vector<1x256xi32>
    %716 = vector.broadcast %c15_i32_191 : i32 to vector<1x256xi32>
    %717 = arith.minsi %716, %715 : vector<1x256xi32>
    %718 = vector.broadcast %705 : vector<1x256xi32> to vector<16x256xi32>
    %719 = arith.cmpi eq, %24, %718 : vector<16x256xi32>
    %cst_192 = arith.constant 0.000000e+00 : f32
    %720 = vector.shape_cast %674 : vector<1x256xf32> to vector<1x256xf32>
    %721 = vector.broadcast %720 : vector<1x256xf32> to vector<16x256xf32>
    %722 = vector.broadcast %cst_192 : f32 to vector<16x256xf32>
    %723 = arith.select %719, %721, %722 : vector<16x256xi1>, vector<16x256xf32>
    %724 = vector.broadcast %709 : vector<1x256xi32> to vector<16x256xi32>
    %725 = arith.cmpi eq, %24, %724 : vector<16x256xi32>
    %cst_193 = arith.constant 0.000000e+00 : f32
    %726 = vector.shape_cast %683 : vector<1x256xf32> to vector<1x256xf32>
    %727 = vector.broadcast %726 : vector<1x256xf32> to vector<16x256xf32>
    %728 = vector.broadcast %cst_193 : f32 to vector<16x256xf32>
    %729 = arith.select %725, %727, %728 : vector<16x256xi1>, vector<16x256xf32>
    %730 = arith.addf %723, %729 : vector<16x256xf32>
    %731 = vector.broadcast %713 : vector<1x256xi32> to vector<16x256xi32>
    %732 = arith.cmpi eq, %25, %731 : vector<16x256xi32>
    %cst_194 = arith.constant 0.000000e+00 : f32
    %733 = vector.shape_cast %693 : vector<1x256xf32> to vector<1x256xf32>
    %734 = vector.broadcast %733 : vector<1x256xf32> to vector<16x256xf32>
    %735 = vector.broadcast %cst_194 : f32 to vector<16x256xf32>
    %736 = arith.select %732, %734, %735 : vector<16x256xi1>, vector<16x256xf32>
    %737 = vector.broadcast %717 : vector<1x256xi32> to vector<16x256xi32>
    %738 = arith.cmpi eq, %25, %737 : vector<16x256xi32>
    %cst_195 = arith.constant 0.000000e+00 : f32
    %739 = vector.shape_cast %701 : vector<1x256xf32> to vector<1x256xf32>
    %740 = vector.broadcast %739 : vector<1x256xf32> to vector<16x256xf32>
    %741 = vector.broadcast %cst_195 : f32 to vector<16x256xf32>
    %742 = arith.select %738, %740, %741 : vector<16x256xi1>, vector<16x256xf32>
    %743 = arith.addf %736, %742 : vector<16x256xf32>
    %744 = vector.shape_cast %730 : vector<16x256xf32> to vector<16x1x256xf32>
    %745 = vector.shape_cast %743 : vector<16x256xf32> to vector<1x16x256xf32>
    %746 = vector.broadcast %744 : vector<16x1x256xf32> to vector<16x16x256xf32>
    %747 = vector.broadcast %745 : vector<1x16x256xf32> to vector<16x16x256xf32>
    %748 = arith.mulf %746, %747 : vector<16x16x256xf32>
    %749 = vector.shape_cast %748 : vector<16x16x256xf32> to vector<256x256xf32>
    %cst_196 = arith.constant dense<0.000000e+00> : vector<4x256xf32>
    %750 = tpu.matmul %1, %749, %cst_196 {dimension_numbers = #tpu.dot_dimension_numbers<[1], [0], [0], [1], [0, 0, 1, 1], [], []>} : vector<4x256xf32>, vector<256x256xf32>, vector<4x256xf32> -> vector<4x256xf32>
    %c20 = arith.constant 20 : index
    %c0_197 = arith.constant 0 : index
    %751 = vector.load %arg7[%c20, %c0_197] : memref<36x256xf32, #tpu.memory_space<vmem>>, vector<4x256xf32>
    tpu.vector_store %arg7[%c20, %c0_197], %750 {strides = array<i32>} : memref<36x256xf32, #tpu.memory_space<vmem>>, vector<4x256xf32>,
    %752 = vector.extract_strided_slice %3 {offsets = [6, 0], sizes = [1, 256], strides = [1, 1]} : vector<27x256xf32> to vector<1x256xf32>
    %753 = vector.extract_strided_slice %3 {offsets = [15, 0], sizes = [1, 256], strides = [1, 1]} : vector<27x256xf32> to vector<1x256xf32>
    %754 = vector.extract_strided_slice %3 {offsets = [24, 0], sizes = [1, 256], strides = [1, 1]} : vector<27x256xf32> to vector<1x256xf32>
    %cst_198 = arith.constant 1.000000e+00 : f32
    %755 = vector.broadcast %cst_198 : f32 to vector<1x256xf32>
    %756 = arith.addf %20, %755 : vector<1x256xf32>
    %757 = arith.addf %756, %752 : vector<1x256xf32>
    %cst_199 = arith.constant -1.000000e+00 : f32
    %758 = vector.broadcast %cst_199 : f32 to vector<1x256xf32>
    %759 = arith.addf %23, %758 : vector<1x256xf32>
    %760 = arith.addf %759, %753 : vector<1x256xf32>
    %cst_200 = arith.constant -1.000000e+00 : f32
    %761 = vector.broadcast %cst_200 : f32 to vector<1x256xf32>
    %762 = arith.cmpf ogt, %757, %761 : vector<1x256xf32>
    %cst_201 = arith.constant 1.600000e+01 : f32
    %763 = vector.broadcast %cst_201 : f32 to vector<1x256xf32>
    %764 = arith.cmpf olt, %757, %763 : vector<1x256xf32>
    %765 = arith.andi %762, %764 : vector<1x256xi1>
    %cst_202 = arith.constant -1.000000e+00 : f32
    %766 = vector.broadcast %cst_202 : f32 to vector<1x256xf32>
    %767 = arith.cmpf ogt, %760, %766 : vector<1x256xf32>
    %768 = arith.andi %765, %767 : vector<1x256xi1>
    %cst_203 = arith.constant 1.600000e+01 : f32
    %769 = vector.broadcast %cst_203 : f32 to vector<1x256xf32>
    %770 = arith.cmpf olt, %760, %769 : vector<1x256xf32>
    %771 = arith.andi %768, %770 : vector<1x256xi1>
    %772 = arith.extui %771 : vector<1x256xi1> to vector<1x256xi32>
    %773 = arith.sitofp %772 : vector<1x256xi32> to vector<1x256xf32>
    %774 = arith.mulf %754, %773 : vector<1x256xf32>
    %775 = math.floor %757 : vector<1x256xf32>
    %776 = math.floor %760 : vector<1x256xf32>
    %777 = arith.subf %757, %775 : vector<1x256xf32>
    %778 = arith.subf %760, %776 : vector<1x256xf32>
    %779 = arith.fptosi %775 : vector<1x256xf32> to vector<1x256xi32>
    %780 = arith.fptosi %776 : vector<1x256xf32> to vector<1x256xi32>
    %c1_i32_204 = arith.constant 1 : i32
    %781 = vector.broadcast %c1_i32_204 : i32 to vector<1x256xi32>
    %782 = arith.addi %779, %781 : vector<1x256xi32>
    %c1_i32_205 = arith.constant 1 : i32
    %783 = vector.broadcast %c1_i32_205 : i32 to vector<1x256xi32>
    %784 = arith.addi %780, %783 : vector<1x256xi32>
    %cst_206 = arith.constant 1.000000e+00 : f32
    %785 = vector.broadcast %cst_206 : f32 to vector<1x256xf32>
    %786 = arith.subf %785, %777 : vector<1x256xf32>
    %c0_i32_207 = arith.constant 0 : i32
    %787 = vector.broadcast %c0_i32_207 : i32 to vector<1x256xi32>
    %788 = arith.cmpi sge, %779, %787 : vector<1x256xi32>
    %c15_i32_208 = arith.constant 15 : i32
    %789 = vector.broadcast %c15_i32_208 : i32 to vector<1x256xi32>
    %790 = arith.cmpi sle, %779, %789 : vector<1x256xi32>
    %791 = arith.andi %788, %790 : vector<1x256xi1>
    %792 = arith.extui %791 : vector<1x256xi1> to vector<1x256xi32>
    %793 = arith.sitofp %792 : vector<1x256xi32> to vector<1x256xf32>
    %794 = arith.mulf %786, %793 : vector<1x256xf32>
    %795 = arith.mulf %794, %774 : vector<1x256xf32>
    %c0_i32_209 = arith.constant 0 : i32
    %796 = vector.broadcast %c0_i32_209 : i32 to vector<1x256xi32>
    %797 = arith.cmpi sge, %782, %796 : vector<1x256xi32>
    %c15_i32_210 = arith.constant 15 : i32
    %798 = vector.broadcast %c15_i32_210 : i32 to vector<1x256xi32>
    %799 = arith.cmpi sle, %782, %798 : vector<1x256xi32>
    %800 = arith.andi %797, %799 : vector<1x256xi1>
    %801 = arith.extui %800 : vector<1x256xi1> to vector<1x256xi32>
    %802 = arith.sitofp %801 : vector<1x256xi32> to vector<1x256xf32>
    %803 = arith.mulf %777, %802 : vector<1x256xf32>
    %804 = arith.mulf %803, %774 : vector<1x256xf32>
    %cst_211 = arith.constant 1.000000e+00 : f32
    %805 = vector.broadcast %cst_211 : f32 to vector<1x256xf32>
    %806 = arith.subf %805, %778 : vector<1x256xf32>
    %c0_i32_212 = arith.constant 0 : i32
    %807 = vector.broadcast %c0_i32_212 : i32 to vector<1x256xi32>
    %808 = arith.cmpi sge, %780, %807 : vector<1x256xi32>
    %c15_i32_213 = arith.constant 15 : i32
    %809 = vector.broadcast %c15_i32_213 : i32 to vector<1x256xi32>
    %810 = arith.cmpi sle, %780, %809 : vector<1x256xi32>
    %811 = arith.andi %808, %810 : vector<1x256xi1>
    %812 = arith.extui %811 : vector<1x256xi1> to vector<1x256xi32>
    %813 = arith.sitofp %812 : vector<1x256xi32> to vector<1x256xf32>
    %814 = arith.mulf %806, %813 : vector<1x256xf32>
    %c0_i32_214 = arith.constant 0 : i32
    %815 = vector.broadcast %c0_i32_214 : i32 to vector<1x256xi32>
    %816 = arith.cmpi sge, %784, %815 : vector<1x256xi32>
    %c15_i32_215 = arith.constant 15 : i32
    %817 = vector.broadcast %c15_i32_215 : i32 to vector<1x256xi32>
    %818 = arith.cmpi sle, %784, %817 : vector<1x256xi32>
    %819 = arith.andi %816, %818 : vector<1x256xi1>
    %820 = arith.extui %819 : vector<1x256xi1> to vector<1x256xi32>
    %821 = arith.sitofp %820 : vector<1x256xi32> to vector<1x256xf32>
    %822 = arith.mulf %778, %821 : vector<1x256xf32>
    %c0_i32_216 = arith.constant 0 : i32
    %c15_i32_217 = arith.constant 15 : i32
    %823 = vector.broadcast %c0_i32_216 : i32 to vector<1x256xi32>
    %824 = arith.maxsi %823, %779 : vector<1x256xi32>
    %825 = vector.broadcast %c15_i32_217 : i32 to vector<1x256xi32>
    %826 = arith.minsi %825, %824 : vector<1x256xi32>
    %c0_i32_218 = arith.constant 0 : i32
    %c15_i32_219 = arith.constant 15 : i32
    %827 = vector.broadcast %c0_i32_218 : i32 to vector<1x256xi32>
    %828 = arith.maxsi %827, %782 : vector<1x256xi32>
    %829 = vector.broadcast %c15_i32_219 : i32 to vector<1x256xi32>
    %830 = arith.minsi %829, %828 : vector<1x256xi32>
    %c0_i32_220 = arith.constant 0 : i32
    %c15_i32_221 = arith.constant 15 : i32
    %831 = vector.broadcast %c0_i32_220 : i32 to vector<1x256xi32>
    %832 = arith.maxsi %831, %780 : vector<1x256xi32>
    %833 = vector.broadcast %c15_i32_221 : i32 to vector<1x256xi32>
    %834 = arith.minsi %833, %832 : vector<1x256xi32>
    %c0_i32_222 = arith.constant 0 : i32
    %c15_i32_223 = arith.constant 15 : i32
    %835 = vector.broadcast %c0_i32_222 : i32 to vector<1x256xi32>
    %836 = arith.maxsi %835, %784 : vector<1x256xi32>
    %837 = vector.broadcast %c15_i32_223 : i32 to vector<1x256xi32>
    %838 = arith.minsi %837, %836 : vector<1x256xi32>
    %839 = vector.broadcast %826 : vector<1x256xi32> to vector<16x256xi32>
    %840 = arith.cmpi eq, %24, %839 : vector<16x256xi32>
    %cst_224 = arith.constant 0.000000e+00 : f32
    %841 = vector.shape_cast %795 : vector<1x256xf32> to vector<1x256xf32>
    %842 = vector.broadcast %841 : vector<1x256xf32> to vector<16x256xf32>
    %843 = vector.broadcast %cst_224 : f32 to vector<16x256xf32>
    %844 = arith.select %840, %842, %843 : vector<16x256xi1>, vector<16x256xf32>
    %845 = vector.broadcast %830 : vector<1x256xi32> to vector<16x256xi32>
    %846 = arith.cmpi eq, %24, %845 : vector<16x256xi32>
    %cst_225 = arith.constant 0.000000e+00 : f32
    %847 = vector.shape_cast %804 : vector<1x256xf32> to vector<1x256xf32>
    %848 = vector.broadcast %847 : vector<1x256xf32> to vector<16x256xf32>
    %849 = vector.broadcast %cst_225 : f32 to vector<16x256xf32>
    %850 = arith.select %846, %848, %849 : vector<16x256xi1>, vector<16x256xf32>
    %851 = arith.addf %844, %850 : vector<16x256xf32>
    %852 = vector.broadcast %834 : vector<1x256xi32> to vector<16x256xi32>
    %853 = arith.cmpi eq, %25, %852 : vector<16x256xi32>
    %cst_226 = arith.constant 0.000000e+00 : f32
    %854 = vector.shape_cast %814 : vector<1x256xf32> to vector<1x256xf32>
    %855 = vector.broadcast %854 : vector<1x256xf32> to vector<16x256xf32>
    %856 = vector.broadcast %cst_226 : f32 to vector<16x256xf32>
    %857 = arith.select %853, %855, %856 : vector<16x256xi1>, vector<16x256xf32>
    %858 = vector.broadcast %838 : vector<1x256xi32> to vector<16x256xi32>
    %859 = arith.cmpi eq, %25, %858 : vector<16x256xi32>
    %cst_227 = arith.constant 0.000000e+00 : f32
    %860 = vector.shape_cast %822 : vector<1x256xf32> to vector<1x256xf32>
    %861 = vector.broadcast %860 : vector<1x256xf32> to vector<16x256xf32>
    %862 = vector.broadcast %cst_227 : f32 to vector<16x256xf32>
    %863 = arith.select %859, %861, %862 : vector<16x256xi1>, vector<16x256xf32>
    %864 = arith.addf %857, %863 : vector<16x256xf32>
    %865 = vector.shape_cast %851 : vector<16x256xf32> to vector<16x1x256xf32>
    %866 = vector.shape_cast %864 : vector<16x256xf32> to vector<1x16x256xf32>
    %867 = vector.broadcast %865 : vector<16x1x256xf32> to vector<16x16x256xf32>
    %868 = vector.broadcast %866 : vector<1x16x256xf32> to vector<16x16x256xf32>
    %869 = arith.mulf %867, %868 : vector<16x16x256xf32>
    %870 = vector.shape_cast %869 : vector<16x16x256xf32> to vector<256x256xf32>
    %cst_228 = arith.constant dense<0.000000e+00> : vector<4x256xf32>
    %871 = tpu.matmul %1, %870, %cst_228 {dimension_numbers = #tpu.dot_dimension_numbers<[1], [0], [0], [1], [0, 0, 1, 1], [], []>} : vector<4x256xf32>, vector<256x256xf32>, vector<4x256xf32> -> vector<4x256xf32>
    %c24 = arith.constant 24 : index
    %c0_229 = arith.constant 0 : index
    %872 = vector.load %arg7[%c24, %c0_229] : memref<36x256xf32, #tpu.memory_space<vmem>>, vector<4x256xf32>
    tpu.vector_store %arg7[%c24, %c0_229], %871 {strides = array<i32>} : memref<36x256xf32, #tpu.memory_space<vmem>>, vector<4x256xf32>,
    %873 = vector.extract_strided_slice %3 {offsets = [7, 0], sizes = [1, 256], strides = [1, 1]} : vector<27x256xf32> to vector<1x256xf32>
    %874 = vector.extract_strided_slice %3 {offsets = [16, 0], sizes = [1, 256], strides = [1, 1]} : vector<27x256xf32> to vector<1x256xf32>
    %875 = vector.extract_strided_slice %3 {offsets = [25, 0], sizes = [1, 256], strides = [1, 1]} : vector<27x256xf32> to vector<1x256xf32>
    %cst_230 = arith.constant 1.000000e+00 : f32
    %876 = vector.broadcast %cst_230 : f32 to vector<1x256xf32>
    %877 = arith.addf %20, %876 : vector<1x256xf32>
    %878 = arith.addf %877, %873 : vector<1x256xf32>
    %cst_231 = arith.constant 0.000000e+00 : f32
    %879 = vector.broadcast %cst_231 : f32 to vector<1x256xf32>
    %880 = arith.addf %23, %879 : vector<1x256xf32>
    %881 = arith.addf %880, %874 : vector<1x256xf32>
    %cst_232 = arith.constant -1.000000e+00 : f32
    %882 = vector.broadcast %cst_232 : f32 to vector<1x256xf32>
    %883 = arith.cmpf ogt, %878, %882 : vector<1x256xf32>
    %cst_233 = arith.constant 1.600000e+01 : f32
    %884 = vector.broadcast %cst_233 : f32 to vector<1x256xf32>
    %885 = arith.cmpf olt, %878, %884 : vector<1x256xf32>
    %886 = arith.andi %883, %885 : vector<1x256xi1>
    %cst_234 = arith.constant -1.000000e+00 : f32
    %887 = vector.broadcast %cst_234 : f32 to vector<1x256xf32>
    %888 = arith.cmpf ogt, %881, %887 : vector<1x256xf32>
    %889 = arith.andi %886, %888 : vector<1x256xi1>
    %cst_235 = arith.constant 1.600000e+01 : f32
    %890 = vector.broadcast %cst_235 : f32 to vector<1x256xf32>
    %891 = arith.cmpf olt, %881, %890 : vector<1x256xf32>
    %892 = arith.andi %889, %891 : vector<1x256xi1>
    %893 = arith.extui %892 : vector<1x256xi1> to vector<1x256xi32>
    %894 = arith.sitofp %893 : vector<1x256xi32> to vector<1x256xf32>
    %895 = arith.mulf %875, %894 : vector<1x256xf32>
    %896 = math.floor %878 : vector<1x256xf32>
    %897 = math.floor %881 : vector<1x256xf32>
    %898 = arith.subf %878, %896 : vector<1x256xf32>
    %899 = arith.subf %881, %897 : vector<1x256xf32>
    %900 = arith.fptosi %896 : vector<1x256xf32> to vector<1x256xi32>
    %901 = arith.fptosi %897 : vector<1x256xf32> to vector<1x256xi32>
    %c1_i32_236 = arith.constant 1 : i32
    %902 = vector.broadcast %c1_i32_236 : i32 to vector<1x256xi32>
    %903 = arith.addi %900, %902 : vector<1x256xi32>
    %c1_i32_237 = arith.constant 1 : i32
    %904 = vector.broadcast %c1_i32_237 : i32 to vector<1x256xi32>
    %905 = arith.addi %901, %904 : vector<1x256xi32>
    %cst_238 = arith.constant 1.000000e+00 : f32
    %906 = vector.broadcast %cst_238 : f32 to vector<1x256xf32>
    %907 = arith.subf %906, %898 : vector<1x256xf32>
    %c0_i32_239 = arith.constant 0 : i32
    %908 = vector.broadcast %c0_i32_239 : i32 to vector<1x256xi32>
    %909 = arith.cmpi sge, %900, %908 : vector<1x256xi32>
    %c15_i32_240 = arith.constant 15 : i32
    %910 = vector.broadcast %c15_i32_240 : i32 to vector<1x256xi32>
    %911 = arith.cmpi sle, %900, %910 : vector<1x256xi32>
    %912 = arith.andi %909, %911 : vector<1x256xi1>
    %913 = arith.extui %912 : vector<1x256xi1> to vector<1x256xi32>
    %914 = arith.sitofp %913 : vector<1x256xi32> to vector<1x256xf32>
    %915 = arith.mulf %907, %914 : vector<1x256xf32>
    %916 = arith.mulf %915, %895 : vector<1x256xf32>
    %c0_i32_241 = arith.constant 0 : i32
    %917 = vector.broadcast %c0_i32_241 : i32 to vector<1x256xi32>
    %918 = arith.cmpi sge, %903, %917 : vector<1x256xi32>
    %c15_i32_242 = arith.constant 15 : i32
    %919 = vector.broadcast %c15_i32_242 : i32 to vector<1x256xi32>
    %920 = arith.cmpi sle, %903, %919 : vector<1x256xi32>
    %921 = arith.andi %918, %920 : vector<1x256xi1>
    %922 = arith.extui %921 : vector<1x256xi1> to vector<1x256xi32>
    %923 = arith.sitofp %922 : vector<1x256xi32> to vector<1x256xf32>
    %924 = arith.mulf %898, %923 : vector<1x256xf32>
    %925 = arith.mulf %924, %895 : vector<1x256xf32>
    %cst_243 = arith.constant 1.000000e+00 : f32
    %926 = vector.broadcast %cst_243 : f32 to vector<1x256xf32>
    %927 = arith.subf %926, %899 : vector<1x256xf32>
    %c0_i32_244 = arith.constant 0 : i32
    %928 = vector.broadcast %c0_i32_244 : i32 to vector<1x256xi32>
    %929 = arith.cmpi sge, %901, %928 : vector<1x256xi32>
    %c15_i32_245 = arith.constant 15 : i32
    %930 = vector.broadcast %c15_i32_245 : i32 to vector<1x256xi32>
    %931 = arith.cmpi sle, %901, %930 : vector<1x256xi32>
    %932 = arith.andi %929, %931 : vector<1x256xi1>
    %933 = arith.extui %932 : vector<1x256xi1> to vector<1x256xi32>
    %934 = arith.sitofp %933 : vector<1x256xi32> to vector<1x256xf32>
    %935 = arith.mulf %927, %934 : vector<1x256xf32>
    %c0_i32_246 = arith.constant 0 : i32
    %936 = vector.broadcast %c0_i32_246 : i32 to vector<1x256xi32>
    %937 = arith.cmpi sge, %905, %936 : vector<1x256xi32>
    %c15_i32_247 = arith.constant 15 : i32
    %938 = vector.broadcast %c15_i32_247 : i32 to vector<1x256xi32>
    %939 = arith.cmpi sle, %905, %938 : vector<1x256xi32>
    %940 = arith.andi %937, %939 : vector<1x256xi1>
    %941 = arith.extui %940 : vector<1x256xi1> to vector<1x256xi32>
    %942 = arith.sitofp %941 : vector<1x256xi32> to vector<1x256xf32>
    %943 = arith.mulf %899, %942 : vector<1x256xf32>
    %c0_i32_248 = arith.constant 0 : i32
    %c15_i32_249 = arith.constant 15 : i32
    %944 = vector.broadcast %c0_i32_248 : i32 to vector<1x256xi32>
    %945 = arith.maxsi %944, %900 : vector<1x256xi32>
    %946 = vector.broadcast %c15_i32_249 : i32 to vector<1x256xi32>
    %947 = arith.minsi %946, %945 : vector<1x256xi32>
    %c0_i32_250 = arith.constant 0 : i32
    %c15_i32_251 = arith.constant 15 : i32
    %948 = vector.broadcast %c0_i32_250 : i32 to vector<1x256xi32>
    %949 = arith.maxsi %948, %903 : vector<1x256xi32>
    %950 = vector.broadcast %c15_i32_251 : i32 to vector<1x256xi32>
    %951 = arith.minsi %950, %949 : vector<1x256xi32>
    %c0_i32_252 = arith.constant 0 : i32
    %c15_i32_253 = arith.constant 15 : i32
    %952 = vector.broadcast %c0_i32_252 : i32 to vector<1x256xi32>
    %953 = arith.maxsi %952, %901 : vector<1x256xi32>
    %954 = vector.broadcast %c15_i32_253 : i32 to vector<1x256xi32>
    %955 = arith.minsi %954, %953 : vector<1x256xi32>
    %c0_i32_254 = arith.constant 0 : i32
    %c15_i32_255 = arith.constant 15 : i32
    %956 = vector.broadcast %c0_i32_254 : i32 to vector<1x256xi32>
    %957 = arith.maxsi %956, %905 : vector<1x256xi32>
    %958 = vector.broadcast %c15_i32_255 : i32 to vector<1x256xi32>
    %959 = arith.minsi %958, %957 : vector<1x256xi32>
    %960 = vector.broadcast %947 : vector<1x256xi32> to vector<16x256xi32>
    %961 = arith.cmpi eq, %24, %960 : vector<16x256xi32>
    %cst_256 = arith.constant 0.000000e+00 : f32
    %962 = vector.shape_cast %916 : vector<1x256xf32> to vector<1x256xf32>
    %963 = vector.broadcast %962 : vector<1x256xf32> to vector<16x256xf32>
    %964 = vector.broadcast %cst_256 : f32 to vector<16x256xf32>
    %965 = arith.select %961, %963, %964 : vector<16x256xi1>, vector<16x256xf32>
    %966 = vector.broadcast %951 : vector<1x256xi32> to vector<16x256xi32>
    %967 = arith.cmpi eq, %24, %966 : vector<16x256xi32>
    %cst_257 = arith.constant 0.000000e+00 : f32
    %968 = vector.shape_cast %925 : vector<1x256xf32> to vector<1x256xf32>
    %969 = vector.broadcast %968 : vector<1x256xf32> to vector<16x256xf32>
    %970 = vector.broadcast %cst_257 : f32 to vector<16x256xf32>
    %971 = arith.select %967, %969, %970 : vector<16x256xi1>, vector<16x256xf32>
    %972 = arith.addf %965, %971 : vector<16x256xf32>
    %973 = vector.broadcast %955 : vector<1x256xi32> to vector<16x256xi32>
    %974 = arith.cmpi eq, %25, %973 : vector<16x256xi32>
    %cst_258 = arith.constant 0.000000e+00 : f32
    %975 = vector.shape_cast %935 : vector<1x256xf32> to vector<1x256xf32>
    %976 = vector.broadcast %975 : vector<1x256xf32> to vector<16x256xf32>
    %977 = vector.broadcast %cst_258 : f32 to vector<16x256xf32>
    %978 = arith.select %974, %976, %977 : vector<16x256xi1>, vector<16x256xf32>
    %979 = vector.broadcast %959 : vector<1x256xi32> to vector<16x256xi32>
    %980 = arith.cmpi eq, %25, %979 : vector<16x256xi32>
    %cst_259 = arith.constant 0.000000e+00 : f32
    %981 = vector.shape_cast %943 : vector<1x256xf32> to vector<1x256xf32>
    %982 = vector.broadcast %981 : vector<1x256xf32> to vector<16x256xf32>
    %983 = vector.broadcast %cst_259 : f32 to vector<16x256xf32>
    %984 = arith.select %980, %982, %983 : vector<16x256xi1>, vector<16x256xf32>
    %985 = arith.addf %978, %984 : vector<16x256xf32>
    %986 = vector.shape_cast %972 : vector<16x256xf32> to vector<16x1x256xf32>
    %987 = vector.shape_cast %985 : vector<16x256xf32> to vector<1x16x256xf32>
    %988 = vector.broadcast %986 : vector<16x1x256xf32> to vector<16x16x256xf32>
    %989 = vector.broadcast %987 : vector<1x16x256xf32> to vector<16x16x256xf32>
    %990 = arith.mulf %988, %989 : vector<16x16x256xf32>
    %991 = vector.shape_cast %990 : vector<16x16x256xf32> to vector<256x256xf32>
    %cst_260 = arith.constant dense<0.000000e+00> : vector<4x256xf32>
    %992 = tpu.matmul %1, %991, %cst_260 {dimension_numbers = #tpu.dot_dimension_numbers<[1], [0], [0], [1], [0, 0, 1, 1], [], []>} : vector<4x256xf32>, vector<256x256xf32>, vector<4x256xf32> -> vector<4x256xf32>
    %c28 = arith.constant 28 : index
    %c0_261 = arith.constant 0 : index
    %993 = vector.load %arg7[%c28, %c0_261] : memref<36x256xf32, #tpu.memory_space<vmem>>, vector<4x256xf32>
    tpu.vector_store %arg7[%c28, %c0_261], %992 {strides = array<i32>} : memref<36x256xf32, #tpu.memory_space<vmem>>, vector<4x256xf32>,
    %994 = vector.extract_strided_slice %3 {offsets = [8, 0], sizes = [1, 256], strides = [1, 1]} : vector<27x256xf32> to vector<1x256xf32>
    %995 = vector.extract_strided_slice %3 {offsets = [17, 0], sizes = [1, 256], strides = [1, 1]} : vector<27x256xf32> to vector<1x256xf32>
    %996 = vector.extract_strided_slice %3 {offsets = [26, 0], sizes = [1, 256], strides = [1, 1]} : vector<27x256xf32> to vector<1x256xf32>
    %cst_262 = arith.constant 1.000000e+00 : f32
    %997 = vector.broadcast %cst_262 : f32 to vector<1x256xf32>
    %998 = arith.addf %20, %997 : vector<1x256xf32>
    %999 = arith.addf %998, %994 : vector<1x256xf32>
    %cst_263 = arith.constant 1.000000e+00 : f32
    %1000 = vector.broadcast %cst_263 : f32 to vector<1x256xf32>
    %1001 = arith.addf %23, %1000 : vector<1x256xf32>
    %1002 = arith.addf %1001, %995 : vector<1x256xf32>
    %cst_264 = arith.constant -1.000000e+00 : f32
    %1003 = vector.broadcast %cst_264 : f32 to vector<1x256xf32>
    %1004 = arith.cmpf ogt, %999, %1003 : vector<1x256xf32>
    %cst_265 = arith.constant 1.600000e+01 : f32
    %1005 = vector.broadcast %cst_265 : f32 to vector<1x256xf32>
    %1006 = arith.cmpf olt, %999, %1005 : vector<1x256xf32>
    %1007 = arith.andi %1004, %1006 : vector<1x256xi1>
    %cst_266 = arith.constant -1.000000e+00 : f32
    %1008 = vector.broadcast %cst_266 : f32 to vector<1x256xf32>
    %1009 = arith.cmpf ogt, %1002, %1008 : vector<1x256xf32>
    %1010 = arith.andi %1007, %1009 : vector<1x256xi1>
    %cst_267 = arith.constant 1.600000e+01 : f32
    %1011 = vector.broadcast %cst_267 : f32 to vector<1x256xf32>
    %1012 = arith.cmpf olt, %1002, %1011 : vector<1x256xf32>
    %1013 = arith.andi %1010, %1012 : vector<1x256xi1>
    %1014 = arith.extui %1013 : vector<1x256xi1> to vector<1x256xi32>
    %1015 = arith.sitofp %1014 : vector<1x256xi32> to vector<1x256xf32>
    %1016 = arith.mulf %996, %1015 : vector<1x256xf32>
    %1017 = math.floor %999 : vector<1x256xf32>
    %1018 = math.floor %1002 : vector<1x256xf32>
    %1019 = arith.subf %999, %1017 : vector<1x256xf32>
    %1020 = arith.subf %1002, %1018 : vector<1x256xf32>
    %1021 = arith.fptosi %1017 : vector<1x256xf32> to vector<1x256xi32>
    %1022 = arith.fptosi %1018 : vector<1x256xf32> to vector<1x256xi32>
    %c1_i32_268 = arith.constant 1 : i32
    %1023 = vector.broadcast %c1_i32_268 : i32 to vector<1x256xi32>
    %1024 = arith.addi %1021, %1023 : vector<1x256xi32>
    %c1_i32_269 = arith.constant 1 : i32
    %1025 = vector.broadcast %c1_i32_269 : i32 to vector<1x256xi32>
    %1026 = arith.addi %1022, %1025 : vector<1x256xi32>
    %cst_270 = arith.constant 1.000000e+00 : f32
    %1027 = vector.broadcast %cst_270 : f32 to vector<1x256xf32>
    %1028 = arith.subf %1027, %1019 : vector<1x256xf32>
    %c0_i32_271 = arith.constant 0 : i32
    %1029 = vector.broadcast %c0_i32_271 : i32 to vector<1x256xi32>
    %1030 = arith.cmpi sge, %1021, %1029 : vector<1x256xi32>
    %c15_i32_272 = arith.constant 15 : i32
    %1031 = vector.broadcast %c15_i32_272 : i32 to vector<1x256xi32>
    %1032 = arith.cmpi sle, %1021, %1031 : vector<1x256xi32>
    %1033 = arith.andi %1030, %1032 : vector<1x256xi1>
    %1034 = arith.extui %1033 : vector<1x256xi1> to vector<1x256xi32>
    %1035 = arith.sitofp %1034 : vector<1x256xi32> to vector<1x256xf32>
    %1036 = arith.mulf %1028, %1035 : vector<1x256xf32>
    %1037 = arith.mulf %1036, %1016 : vector<1x256xf32>
    %c0_i32_273 = arith.constant 0 : i32
    %1038 = vector.broadcast %c0_i32_273 : i32 to vector<1x256xi32>
    %1039 = arith.cmpi sge, %1024, %1038 : vector<1x256xi32>
    %c15_i32_274 = arith.constant 15 : i32
    %1040 = vector.broadcast %c15_i32_274 : i32 to vector<1x256xi32>
    %1041 = arith.cmpi sle, %1024, %1040 : vector<1x256xi32>
    %1042 = arith.andi %1039, %1041 : vector<1x256xi1>
    %1043 = arith.extui %1042 : vector<1x256xi1> to vector<1x256xi32>
    %1044 = arith.sitofp %1043 : vector<1x256xi32> to vector<1x256xf32>
    %1045 = arith.mulf %1019, %1044 : vector<1x256xf32>
    %1046 = arith.mulf %1045, %1016 : vector<1x256xf32>
    %cst_275 = arith.constant 1.000000e+00 : f32
    %1047 = vector.broadcast %cst_275 : f32 to vector<1x256xf32>
    %1048 = arith.subf %1047, %1020 : vector<1x256xf32>
    %c0_i32_276 = arith.constant 0 : i32
    %1049 = vector.broadcast %c0_i32_276 : i32 to vector<1x256xi32>
    %1050 = arith.cmpi sge, %1022, %1049 : vector<1x256xi32>
    %c15_i32_277 = arith.constant 15 : i32
    %1051 = vector.broadcast %c15_i32_277 : i32 to vector<1x256xi32>
    %1052 = arith.cmpi sle, %1022, %1051 : vector<1x256xi32>
    %1053 = arith.andi %1050, %1052 : vector<1x256xi1>
    %1054 = arith.extui %1053 : vector<1x256xi1> to vector<1x256xi32>
    %1055 = arith.sitofp %1054 : vector<1x256xi32> to vector<1x256xf32>
    %1056 = arith.mulf %1048, %1055 : vector<1x256xf32>
    %c0_i32_278 = arith.constant 0 : i32
    %1057 = vector.broadcast %c0_i32_278 : i32 to vector<1x256xi32>
    %1058 = arith.cmpi sge, %1026, %1057 : vector<1x256xi32>
    %c15_i32_279 = arith.constant 15 : i32
    %1059 = vector.broadcast %c15_i32_279 : i32 to vector<1x256xi32>
    %1060 = arith.cmpi sle, %1026, %1059 : vector<1x256xi32>
    %1061 = arith.andi %1058, %1060 : vector<1x256xi1>
    %1062 = arith.extui %1061 : vector<1x256xi1> to vector<1x256xi32>
    %1063 = arith.sitofp %1062 : vector<1x256xi32> to vector<1x256xf32>
    %1064 = arith.mulf %1020, %1063 : vector<1x256xf32>
    %c0_i32_280 = arith.constant 0 : i32
    %c15_i32_281 = arith.constant 15 : i32
    %1065 = vector.broadcast %c0_i32_280 : i32 to vector<1x256xi32>
    %1066 = arith.maxsi %1065, %1021 : vector<1x256xi32>
    %1067 = vector.broadcast %c15_i32_281 : i32 to vector<1x256xi32>
    %1068 = arith.minsi %1067, %1066 : vector<1x256xi32>
    %c0_i32_282 = arith.constant 0 : i32
    %c15_i32_283 = arith.constant 15 : i32
    %1069 = vector.broadcast %c0_i32_282 : i32 to vector<1x256xi32>
    %1070 = arith.maxsi %1069, %1024 : vector<1x256xi32>
    %1071 = vector.broadcast %c15_i32_283 : i32 to vector<1x256xi32>
    %1072 = arith.minsi %1071, %1070 : vector<1x256xi32>
    %c0_i32_284 = arith.constant 0 : i32
    %c15_i32_285 = arith.constant 15 : i32
    %1073 = vector.broadcast %c0_i32_284 : i32 to vector<1x256xi32>
    %1074 = arith.maxsi %1073, %1022 : vector<1x256xi32>
    %1075 = vector.broadcast %c15_i32_285 : i32 to vector<1x256xi32>
    %1076 = arith.minsi %1075, %1074 : vector<1x256xi32>
    %c0_i32_286 = arith.constant 0 : i32
    %c15_i32_287 = arith.constant 15 : i32
    %1077 = vector.broadcast %c0_i32_286 : i32 to vector<1x256xi32>
    %1078 = arith.maxsi %1077, %1026 : vector<1x256xi32>
    %1079 = vector.broadcast %c15_i32_287 : i32 to vector<1x256xi32>
    %1080 = arith.minsi %1079, %1078 : vector<1x256xi32>
    %1081 = vector.broadcast %1068 : vector<1x256xi32> to vector<16x256xi32>
    %1082 = arith.cmpi eq, %24, %1081 : vector<16x256xi32>
    %cst_288 = arith.constant 0.000000e+00 : f32
    %1083 = vector.shape_cast %1037 : vector<1x256xf32> to vector<1x256xf32>
    %1084 = vector.broadcast %1083 : vector<1x256xf32> to vector<16x256xf32>
    %1085 = vector.broadcast %cst_288 : f32 to vector<16x256xf32>
    %1086 = arith.select %1082, %1084, %1085 : vector<16x256xi1>, vector<16x256xf32>
    %1087 = vector.broadcast %1072 : vector<1x256xi32> to vector<16x256xi32>
    %1088 = arith.cmpi eq, %24, %1087 : vector<16x256xi32>
    %cst_289 = arith.constant 0.000000e+00 : f32
    %1089 = vector.shape_cast %1046 : vector<1x256xf32> to vector<1x256xf32>
    %1090 = vector.broadcast %1089 : vector<1x256xf32> to vector<16x256xf32>
    %1091 = vector.broadcast %cst_289 : f32 to vector<16x256xf32>
    %1092 = arith.select %1088, %1090, %1091 : vector<16x256xi1>, vector<16x256xf32>
    %1093 = arith.addf %1086, %1092 : vector<16x256xf32>
    %1094 = vector.broadcast %1076 : vector<1x256xi32> to vector<16x256xi32>
    %1095 = arith.cmpi eq, %25, %1094 : vector<16x256xi32>
    %cst_290 = arith.constant 0.000000e+00 : f32
    %1096 = vector.shape_cast %1056 : vector<1x256xf32> to vector<1x256xf32>
    %1097 = vector.broadcast %1096 : vector<1x256xf32> to vector<16x256xf32>
    %1098 = vector.broadcast %cst_290 : f32 to vector<16x256xf32>
    %1099 = arith.select %1095, %1097, %1098 : vector<16x256xi1>, vector<16x256xf32>
    %1100 = vector.broadcast %1080 : vector<1x256xi32> to vector<16x256xi32>
    %1101 = arith.cmpi eq, %25, %1100 : vector<16x256xi32>
    %cst_291 = arith.constant 0.000000e+00 : f32
    %1102 = vector.shape_cast %1064 : vector<1x256xf32> to vector<1x256xf32>
    %1103 = vector.broadcast %1102 : vector<1x256xf32> to vector<16x256xf32>
    %1104 = vector.broadcast %cst_291 : f32 to vector<16x256xf32>
    %1105 = arith.select %1101, %1103, %1104 : vector<16x256xi1>, vector<16x256xf32>
    %1106 = arith.addf %1099, %1105 : vector<16x256xf32>
    %1107 = vector.shape_cast %1093 : vector<16x256xf32> to vector<16x1x256xf32>
    %1108 = vector.shape_cast %1106 : vector<16x256xf32> to vector<1x16x256xf32>
    %1109 = vector.broadcast %1107 : vector<16x1x256xf32> to vector<16x16x256xf32>
    %1110 = vector.broadcast %1108 : vector<1x16x256xf32> to vector<16x16x256xf32>
    %1111 = arith.mulf %1109, %1110 : vector<16x16x256xf32>
    %1112 = vector.shape_cast %1111 : vector<16x16x256xf32> to vector<256x256xf32>
    %cst_292 = arith.constant dense<0.000000e+00> : vector<4x256xf32>
    %1113 = tpu.matmul %1, %1112, %cst_292 {dimension_numbers = #tpu.dot_dimension_numbers<[1], [0], [0], [1], [0, 0, 1, 1], [], []>} : vector<4x256xf32>, vector<256x256xf32>, vector<4x256xf32> -> vector<4x256xf32>
    %c32 = arith.constant 32 : index
    %c0_293 = arith.constant 0 : index
    %1114 = vector.load %arg7[%c32, %c0_293] : memref<36x256xf32, #tpu.memory_space<vmem>>, vector<4x256xf32>
    tpu.vector_store %arg7[%c32, %c0_293], %1113 {strides = array<i32>} : memref<36x256xf32, #tpu.memory_space<vmem>>, vector<4x256xf32>,
    %c0_294 = arith.constant 0 : index
    %c0_295 = arith.constant 0 : index
    %1115 = vector.load %arg4[%c0_294, %c0_295] : memref<8x36xf32, #tpu.memory_space<vmem>>, vector<8x36xf32>
    %c0_296 = arith.constant 0 : index
    %c0_297 = arith.constant 0 : index
    %1116 = vector.load %arg7[%c0_296, %c0_297] : memref<36x256xf32, #tpu.memory_space<vmem>>, vector<36x256xf32>
    %cst_298 = arith.constant dense<0.000000e+00> : vector<8x256xf32>
    %1117 = tpu.matmul %1115, %1116, %cst_298 {dimension_numbers = #tpu.dot_dimension_numbers<[1], [0], [0], [1], [0, 0, 1, 1], [], []>} : vector<8x36xf32>, vector<36x256xf32>, vector<8x256xf32> -> vector<8x256xf32>
    %c0_299 = arith.constant 0 : index
    %c0_300 = arith.constant 0 : index
    %1118 = vector.load %arg5[%c0_299, %c0_300] : memref<8x1xf32, #tpu.memory_space<vmem>>, vector<8x1xf32>
    %1119 = vector.broadcast %1118 : vector<8x1xf32> to vector<8x256xf32>
    %1120 = arith.addf %1117, %1119 : vector<8x256xf32>
    %cst_301 = arith.constant 0.000000e+00 : f32
    %cst_302 = arith.constant 6.000000e+00 : f32
    %1121 = vector.broadcast %cst_301 : f32 to vector<8x256xf32>
    %1122 = arith.maximumf %1121, %1120 : vector<8x256xf32>
    %1123 = vector.broadcast %cst_302 : f32 to vector<8x256xf32>
    %1124 = arith.minimumf %1123, %1122 : vector<8x256xf32>
    %c0_303 = arith.constant 0 : index
    %c0_304 = arith.constant 0 : index
    %c0_305 = arith.constant 0 : index
    %1125 = vector.load %arg6[%c0_303, %c0_304, %c0_305] : memref<1x8x256xf32, #tpu.memory_space<vmem>>, vector<1x8x256xf32>
    %1126 = vector.shape_cast %1125 : vector<1x8x256xf32> to vector<8x256xf32>
    %1127 = vector.shape_cast %1124 : vector<8x256xf32> to vector<1x8x256xf32>
    tpu.vector_store %arg6[%c0_303, %c0_304, %c0_305], %1127 {strides = array<i32>} : memref<1x8x256xf32, #tpu.memory_space<vmem>>, vector<1x8x256xf32>,
    return
  }
  func.func @transform_0(%arg0: i32, %arg1: i32) -> (i32, i32, i32) {
    %c0_i32 = arith.constant 0 : i32
    %c0_i32_0 = arith.constant 0 : i32
    %c0_i32_1 = arith.constant 0 : i32
    return %arg0, %c0_i32, %c0_i32_0 : i32, i32, i32
  }
  func.func @transform_1(%arg0: i32, %arg1: i32) -> (i32, i32, i32) {
    %c0_i32 = arith.constant 0 : i32
    %c0_i32_0 = arith.constant 0 : i32
    return %arg0, %c0_i32, %arg1 : i32, i32, i32
  }
  func.func @transform_2(%arg0: i32, %arg1: i32) -> (i32, i32) {
    %c0_i32 = arith.constant 0 : i32
    %c0_i32_0 = arith.constant 0 : i32
    %c0_i32_1 = arith.constant 0 : i32
    return %c0_i32, %c0_i32_0 : i32, i32
  }
  func.func @transform_3(%arg0: i32, %arg1: i32) -> (i32, i32) {
    %c0_i32 = arith.constant 0 : i32
    %c0_i32_0 = arith.constant 0 : i32
    %c0_i32_1 = arith.constant 0 : i32
    return %c0_i32, %c0_i32_0 : i32, i32
  }
  func.func @transform_4(%arg0: i32, %arg1: i32) -> (i32, i32, i32) {
    %c0_i32 = arith.constant 0 : i32
    %c0_i32_0 = arith.constant 0 : i32
    return %arg0, %c0_i32, %arg1 : i32, i32, i32
  }
}

</mosaic_0001>

<llo_original>
// kernel: tpu_custom_call.1
$region0: #{tpu_custom_call.1}
  #allocation0 [shape = 'u32[]', space=smem, size = 0x4, offset = 0x4, fixed_abs, tag = 'smem constant byte address 0x4 - core index']
  #allocation1 [shape = 'u32[144,128]{1,0:T(1,128)}', space=vmem, size = 0x12000, scoped, tag = 'internal scratch']
  #allocation2 [shape = 'f32[36,256]{1,0:T(8,128)}', space=vmem, size = 0xa000, scoped, tag = 'scratch operand']
  %s0 = inlined_call_operand.vmem [shape: f32[2,4,256], index: 0, kind: input, shape index: {}]
  %s1 = inlined_call_operand.vmem [shape: f32[2,27,256], index: 1, kind: input, shape index: {}]
  %s2 = inlined_call_operand.vmem [shape: f32[8,36], index: 2, kind: input, shape index: {}]
  %s3 = inlined_call_operand.vmem [shape: f32[8,1], index: 3, kind: input, shape index: {}]
  %s4 = inlined_call_operand.hbm [shape: f32[2,8,256], index: 4, kind: output, shape index: {}]
  %s5 = sld [smem:[#allocation0]]
  $region49: #{tpu_custom_call.1} parent=0
    _
  %s7 = ssub.s32 1, %s5
  %s8 = scalar_select 0, %s7, %s5
  $region1: #{tpu_custom_call.1} parent=0
    #allocation3 [shape = 'u8[16384]{0}', space=vmem, size = 0x4000, scoped, tag = 'output window, operand 0']
    #allocation4 [shape = 's32[2]{0}', space=sflag, size = 0x8, scoped, tag = 'scoped memory for tpu_custom_call.1']
    %9 = vsyncpa [#allocation4], 0
    %s10 = scalar_lea.sflag [#allocation4], 1
    %11 = vsyncpa %s10, 0
    loop: start=0, step=1, limit=4
    $region2: #{tpu_custom_call.1} parent=1 // loop_pre_header
      _
    $region3: #{tpu_custom_call.1} parent=1 // loop_header
      %s13 = sphi 0, %s17
      %p14 = scmp.ge.s32.totalorder %s13, 4
      %s20 = sphi 0, %s32
      %s21 = sphi 0, %s28
      %s22 = sphi 0, %s20
      %s23 = sphi 0, %s21
      %s24 = sphi 0, %s22
      %s25 = sphi 0, %s23
      %s35 = sphi 0, %s37
      %s38 = sphi 0, %s35
      %s39 = sphi 0, %s38
      %s55 = sphi 0, %s39
      %s63 = sphi 0, %s65
      %s66 = sphi 0, %s63
      %s67 = sphi 0, %s66
      %s83 = sphi 0, %s67
      %s87 = sphi 0, %s87
      %s89 = sphi 0, %s87
      %s90 = sphi 0, %s89
      %s104 = sphi 0, %s90
      %s108 = sphi 0, %s108
      %s110 = sphi 0, %s108
      %s111 = sphi 0, %s110
      %s125 = sphi 0, %s111
      %s133 = sphi 0, %s135
      %s136 = sphi 0, %s133
      %s137 = sphi 0, %s136
      %s153 = sphi 0, %s137
    $region4: #{tpu_custom_call.1} parent=1 // loop_header_branch
      %16 = sbr.rel (%p14) target = $region8
    $region5: #{tpu_custom_call.1} parent=1 // loop_body
      %s18 = ssub.s32 %s13, 1
      %s19 = ssub.s32 %s13, 2
      %s26 = sadd.s32 1, %s21
      %p27 = scmp.ge.s32.totalorder %s26, 1
      %s28 = scalar_select %p27, 0, %s26
      %s29 = sadd.s32 1, %s20
      %s30 = scalar_select %p27, %s29, %s20
      %p31 = scmp.ge.s32.totalorder %s30, 2
      %s32 = scalar_select %p31, 0, %s30
      %s33 = ssub.s32 %s20, %s32
      %p34 = scmp.eq.s32.totalorder %s33, 0
      %s36 = sadd.s32 %s35, 1
      %s37 = scalar_select %p34, %s35, %s36
      %p40 = pneg %p34
      %p41 = scmp.eq.s32.totalorder %s13, 1
      %p42 = por %p40, %p41
      %p43 = scmp.ne.s32.totalorder %s35, %s38
      %p44 = scmp.eq.s32.totalorder %s13, 0
      %p45 = por %p43, %p44
      %p46 = scmp.ne.s32.totalorder %s35, %s38
      %p47 = scmp.eq.s32.totalorder %s18, 1
      %p48 = por %p46, %p47
      %p49 = scmp.ne.s32.totalorder %s38, %s39
      %p50 = scmp.eq.s32.totalorder %s18, 0
      %p51 = por %p49, %p50
      %p52 = scmp.ne.s32.totalorder %s38, %s39
      %p53 = scmp.eq.s32.totalorder %s19, 1
      %p54 = por %p52, %p53
      %p56 = scmp.ne.s32.totalorder %s39, %s55
      %p57 = scmp.eq.s32.totalorder %s19, 0
      %p58 = por %p56, %p57
      %s59 = ssub.s32 %s20, %s32
      %s60 = ssub.s32 %s21, %s28
      %s61 = sor.u32 %s59, %s60
      %p62 = scmp.eq.s32.totalorder %s61, 0
      %s64 = sadd.s32 %s63, 1
      %s65 = scalar_select %p62, %s63, %s64
      %p68 = pneg %p62
      %p69 = scmp.eq.s32.totalorder %s13, 1
      %p70 = por %p68, %p69
      %p71 = scmp.ne.s32.totalorder %s63, %s66
      %p72 = scmp.eq.s32.totalorder %s13, 0
      %p73 = por %p71, %p72
      %p74 = scmp.ne.s32.totalorder %s63, %s66
      %p75 = scmp.eq.s32.totalorder %s18, 1
      %p76 = por %p74, %p75
      %p77 = scmp.ne.s32.totalorder %s66, %s67
      %p78 = scmp.eq.s32.totalorder %s18, 0
      %p79 = por %p77, %p78
      %p80 = scmp.ne.s32.totalorder %s66, %s67
      %p81 = scmp.eq.s32.totalorder %s19, 1
      %p82 = por %p80, %p81
      %p84 = scmp.ne.s32.totalorder %s67, %s83
      %p85 = scmp.eq.s32.totalorder %s19, 0
      %p86 = por %p84, %p85
      %s88 = sadd.s32 %s87, 1
      %p91 = scmp.eq.s32.totalorder %s13, 1
      %p92 = scmp.ne.s32.totalorder %s87, %s89
      %p93 = scmp.eq.s32.totalorder %s13, 0
      %p94 = por %p92, %p93
      %p95 = scmp.ne.s32.totalorder %s87, %s89
      %p96 = scmp.eq.s32.totalorder %s18, 1
      %p97 = por %p95, %p96
      %p98 = scmp.ne.s32.totalorder %s89, %s90
      %p99 = scmp.eq.s32.totalorder %s18, 0
      %p100 = por %p98, %p99
      %p101 = scmp.ne.s32.totalorder %s89, %s90
      %p102 = scmp.eq.s32.totalorder %s19, 1
      %p103 = por %p101, %p102
      %p105 = scmp.ne.s32.totalorder %s90, %s104
      %p106 = scmp.eq.s32.totalorder %s19, 0
      %p107 = por %p105, %p106
      %s109 = sadd.s32 %s108, 1
      %p112 = scmp.eq.s32.totalorder %s13, 1
      %p113 = scmp.ne.s32.totalorder %s108, %s110
      %p114 = scmp.eq.s32.totalorder %s13, 0
      %p115 = por %p113, %p114
      %p116 = scmp.ne.s32.totalorder %s108, %s110
      %p117 = scmp.eq.s32.totalorder %s18, 1
      %p118 = por %p116, %p117
      %p119 = scmp.ne.s32.totalorder %s110, %s111
      %p120 = scmp.eq.s32.totalorder %s18, 0
      %p121 = por %p119, %p120
      %p122 = scmp.ne.s32.totalorder %s110, %s111
      %p123 = scmp.eq.s32.totalorder %s19, 1
      %p124 = por %p122, %p123
      %p126 = scmp.ne.s32.totalorder %s111, %s125
      %p127 = scmp.eq.s32.totalorder %s19, 0
      %p128 = por %p126, %p127
      %s129 = ssub.s32 %s20, %s32
      %s130 = ssub.s32 %s21, %s28
      %s131 = sor.u32 %s129, %s130
      %p132 = scmp.eq.s32.totalorder %s131, 0
      %s134 = sadd.s32 %s133, 1
      %s135 = scalar_select %p132, %s133, %s134
      %p138 = pneg %p132
      %p139 = scmp.eq.s32.totalorder %s13, 1
      %p140 = por %p138, %p139
      %p141 = scmp.ne.s32.totalorder %s133, %s136
      %p142 = scmp.eq.s32.totalorder %s13, 0
      %p143 = por %p141, %p142
      %p144 = scmp.ne.s32.totalorder %s133, %s136
      %p145 = scmp.eq.s32.totalorder %s18, 1
      %p146 = por %p144, %p145
      %p147 = scmp.ne.s32.totalorder %s136, %s137
      %p148 = scmp.eq.s32.totalorder %s18, 0
      %p149 = por %p147, %p148
      %p150 = scmp.ne.s32.totalorder %s136, %s137
      %p151 = scmp.eq.s32.totalorder %s19, 1
      %p152 = por %p150, %p151
      %p154 = scmp.ne.s32.totalorder %s137, %s153
      %p155 = scmp.eq.s32.totalorder %s19, 0
      %p156 = por %p154, %p155
      %p157 = scmp.le.s32.totalorder 1, %s13
      %p158 = scmp.lt.s32.totalorder %s13, 3
      %p159 = pnand %p157, %p158
      %p160 = pneg %p159
      // Predicated region
      $region9: #{tpu_custom_call.1} parent=5 // pred_check
        _
      $region10: #{tpu_custom_call.1} parent=5 // pred_check_branch
        %162 = sbr.rel (%p159) target = $region12
      $region11: #{tpu_custom_call.1} parent=5 // pred_region
        %s163 = ssub.s32 %s13, 1
        // Predicated region
        $region13: #{tpu_custom_call.1} parent=11 // pred_check
          %p164 = pneg %p100
        $region14: #{tpu_custom_call.1} parent=11 // pred_check_branch
          %166 = sbr.rel (%p164) target = $region16
        $region15: #{tpu_custom_call.1} parent=11 // pred_region
          _
        $region16: #{tpu_custom_call.1} parent=11 // pred_fallthru
          _
        // Predicated region
        $region17: #{tpu_custom_call.1} parent=11 // pred_check
          %p167 = pneg %p121
        $region18: #{tpu_custom_call.1} parent=11 // pred_check_branch
          %169 = sbr.rel (%p167) target = $region20
        $region19: #{tpu_custom_call.1} parent=11 // pred_region
          _
        $region20: #{tpu_custom_call.1} parent=11 // pred_fallthru
          _
      $region12: #{tpu_custom_call.1} parent=5 // pred_fallthru
        _
      %p170 = scmp.lt.s32.totalorder %s13, 2
      // Predicated region
      $region21: #{tpu_custom_call.1} parent=5 // pred_check
        %p171 = pneg %p170
      $region22: #{tpu_custom_call.1} parent=5 // pred_check_branch
        %173 = sbr.rel (%p171) target = $region24
      $region23: #{tpu_custom_call.1} parent=5 // pred_region
        // Predicated region
        $region25: #{tpu_custom_call.1} parent=23 // pred_check
          %p174 = pneg %p45
        $region26: #{tpu_custom_call.1} parent=23 // pred_check_branch
          %176 = sbr.rel (%p174) target = $region28
        $region27: #{tpu_custom_call.1} parent=23 // pred_region
          %p177 = scmp.lt.s32.totalorder %s20, 1
          %s178 = scalar_select %p177, %s20, 1
          %s179 = smul.addr %s178, 2
          %s180 = smul.addr %s179, 4
          %s181 = scalar_lea.vmem %s0, %s180
        $region28: #{tpu_custom_call.1} parent=23 // pred_fallthru
          _
        // Predicated region
        $region29: #{tpu_custom_call.1} parent=23 // pred_check
          %p182 = pneg %p73
        $region30: #{tpu_custom_call.1} parent=23 // pred_check_branch
          %184 = sbr.rel (%p182) target = $region32
        $region31: #{tpu_custom_call.1} parent=23 // pred_region
          %s185 = smul.u32 2, %s21
          %p186 = scmp.lt.s32.totalorder %s20, 1
          %s187 = scalar_select %p186, %s20, 1
          %p188 = scmp.lt.s32.totalorder %s185, 1
          %s189 = scalar_select %p188, %s185, 1
          %s190 = smul.addr %s187, 8
          %s191 = sadd.s32 %s189, %s190
          %s192 = smul.addr %s191, 8
          %s193 = scalar_lea.vmem %s1, %s192
          %s194 = smul.u32 2, %s21
        $region32: #{tpu_custom_call.1} parent=23 // pred_fallthru
          _
      $region24: #{tpu_custom_call.1} parent=5 // pred_fallthru
        _
      %p195 = scmp.le.s32.totalorder 1, %s13
      %p196 = scmp.lt.s32.totalorder %s13, 3
      %p197 = pnand %p195, %p196
      %p198 = pneg %p197
      // Predicated region
      $region33: #{tpu_custom_call.1} parent=5 // pred_check
        _
      $region34: #{tpu_custom_call.1} parent=5 // pred_check_branch
        %200 = sbr.rel (%p197) target = $region36
      $region35: #{tpu_custom_call.1} parent=5 // pred_region
        %s201 = ssub.s32 %s13, 1
        %p202 = scmp.lt.s32.totalorder %s22, 1
        %s203 = scalar_select %p202, %s22, 1
        %s204 = smul.addr %s203, 2
        %s205 = smul.addr %s204, 4
        %s206 = scalar_lea.vmem %s0, %s205
        %p207 = pneg %p51
        %p208 = pneg %p48
        %s209 = smul.u32 2, %s23
        %p210 = scmp.lt.s32.totalorder %s22, 1
        %s211 = scalar_select %p210, %s22, 1
        %p212 = scmp.lt.s32.totalorder %s209, 1
        %s213 = scalar_select %p212, %s209, 1
        %s214 = smul.addr %s211, 8
        %s215 = sadd.s32 %s213, %s214
        %s216 = smul.addr %s215, 8
        %s217 = scalar_lea.vmem %s1, %s216
        %p218 = pneg %p79
        %p219 = pneg %p76
        %p220 = pneg %p100
        %p221 = pneg %p97
        %p222 = pneg %p121
        %p223 = pneg %p118
        %p224 = pneg %p149
        %p225 = pneg %p146
        %s226 = sand.u32 %s136, 1
        %s227 = scalar_lea.sflag [#allocation4], %s226
        %s228 = sand.u32 %s136, 1
        %s229 = smul.addr %s228, 16
        %s230 = scalar_lea.vmem [#allocation3], %s229
        %p231 = scmp.lt.s32.totalorder %s22, 1
        %s232 = scalar_select %p231, %s22, 1
        %s233 = smul.addr %s232, 2
        %s234 = smul.addr %s233, 4
        %s235 = scalar_lea.vmem %s0, %s234
        %s236 = smul.u32 2, %s23
        %p237 = scmp.lt.s32.totalorder %s22, 1
        %s238 = scalar_select %p237, %s22, 1
        %p239 = scmp.lt.s32.totalorder %s236, 1
        %s240 = scalar_select %p239, %s236, 1
        %s241 = smul.addr %s238, 8
        %s242 = sadd.s32 %s240, %s241
        %s243 = smul.addr %s242, 8
        %s244 = scalar_lea.vmem %s1, %s243
        %s245 = smul.u32 2, %s23
        %s246 = smul.u32 2, %s23
        %v247 = vld [vmem:[%s235] sm:$0xff]
        %v248 = vld [vmem:[%s244] sm:$0xff]
        %v249 = vld [vmem:[%s244 + $0x8] sm:$0xff]
        %v250 = vld [vmem:[%s244 + $0x10] sm:$0xff]
        %v251 = vld [vmem:[%s244 + $0x18] sm:$0xff]
        %v252 = vld [vmem:[%s244 + $0x20] sm:$0xff]
        %v253 = vld [vmem:[%s244 + $0x28] sm:$0xff]
        %v254 = vld [vmem:[%s244 + $0x30] sm:$0x7]
        %v255 = vld [vmem:[%s244 + $0x38] sm:$0x7]
        %s256 = smul.u32 %s23, 256
        %v257 = vlaneseq
        %v258 = vand.u32 %v257, 127
        %v259 = vadd.s32 %v258, 128
        %v260 = vstv %s256
        %v261 = vadd.s32 %v260, %v258
        %v262 = vadd.s32 %v260, %v259
        %v263 = vcvt.s32.f32 %v261
        %v264 = vcvt.s32.f32 %v262
        %v265 = vadd.f32 %v263, 0.5
        %v266 = vadd.f32 %v264, 0.5
        %v267 = vmul.f32 %v265, 0.0625
        %v268 = vmul.f32 %v266, 0.0625
        %v269 = vfloor.f32 %v267
        %v270 = vfloor.f32 %v268
        %v271 = vcvt.f32.s32.to.zero.pseudo %v269
        %v272 = vcvt.f32.s32.to.zero.pseudo %v270
        %v273 = vmul.u32 %v271, 16
        %v274 = vmul.u32 %v272, 16
        %v275 = vsub.s32 %v261, %v273
        %v276 = vsub.s32 %v262, %v274
        %v277 = vcvt.s32.f32 %v271
        %v278 = vcvt.s32.f32 %v272
        %v279 = vcvt.s32.f32 %v275
        %v280 = vcvt.s32.f32 %v276
        %v281 = vlaneseq
        %v282 = vshrl.u32 %v281, 7
        %v283 = vadd.s32 %v282, 8
        %v284 = vadd.f32 %v277, -1.0
        %v285 = vadd.f32 %v278, -1.0
        %v286 = vadd.f32 %v284, %v248
        %v287 = vadd.f32 %v285, %v249
        %v288 = vadd.f32 %v279, -1.0
        %v289 = vadd.f32 %v280, -1.0
        %v290 = vadd.f32 %v288, %v250
        %v291 = vadd.f32 %v289, %v251
        %vm292 = vcmp.gt.f32.partialorder %v286, -1.0
        %vm293 = vcmp.gt.f32.partialorder %v287, -1.0
        %vm294 = vcmp.lt.f32.partialorder %v286, 16.0
        %vm295 = vcmp.lt.f32.partialorder %v287, 16.0
        %vm296 = vmand %vm292, %vm294
        %vm297 = vmand %vm293, %vm295
        %vm298 = vcmp.gt.f32.partialorder %v290, -1.0
        %vm299 = vcmp.gt.f32.partialorder %v291, -1.0
        %v300 = vsel %vm298, 1, 0
        %v301 = vsel %vm299, 1, 0
        %v302 = vrot.slane %v300, 1
        %v303 = vrot.slane %v301, 1
        %vm304 = vcmp.ne.s32.totalorder %v302, 0
        %vm305 = vcmp.ne.s32.totalorder %v303, 0
        %vm306 = vmand %vm296, %vm304
        %vm307 = vmand %vm297, %vm305
        %vm308 = vcmp.lt.f32.partialorder %v290, 16.0
        %vm309 = vcmp.lt.f32.partialorder %v291, 16.0
        %v310 = vsel %vm308, 1, 0
        %v311 = vsel %vm309, 1, 0
        %v312 = vrot.slane %v310, 1
        %v313 = vrot.slane %v311, 1
        %vm314 = vcmp.ne.s32.totalorder %v312, 0
        %vm315 = vcmp.ne.s32.totalorder %v313, 0
        %vm316 = vmand %vm306, %vm314
        %vm317 = vmand %vm307, %vm315
        %v318 = vsel %vm316, 1, 0
        %v319 = vsel %vm317, 1, 0
        %v320 = vcvt.s32.f32 %v318
        %v321 = vcvt.s32.f32 %v319
        %v324 = vrot.slane %v320, 6
        %v325 = vrot.slane %v321, 6
        %v328 = vmul.f32 %v252, %v324
        %v329 = vmul.f32 %v253, %v325
        %v330 = vfloor.f32 %v286
        %v331 = vfloor.f32 %v287
        %v332 = vfloor.f32 %v290
        %v333 = vfloor.f32 %v291
        %v334 = vsub.f32 %v286, %v330
        %v335 = vsub.f32 %v287, %v331
        %v336 = vsub.f32 %v290, %v332
        %v337 = vsub.f32 %v291, %v333
        %v338 = vcvt.f32.s32.to.zero.pseudo %v330
        %v339 = vcvt.f32.s32.to.zero.pseudo %v331
        %v340 = vcvt.f32.s32.to.zero.pseudo %v332
        %v341 = vcvt.f32.s32.to.zero.pseudo %v333
        %v342 = vadd.s32 %v338, 1
        %v343 = vadd.s32 %v339, 1
        %v344 = vadd.s32 %v340, 1
        %v345 = vadd.s32 %v341, 1
        %v346 = vsub.f32 1.0, %v334
        %v347 = vsub.f32 1.0, %v335
        %vm348 = vcmp.ge.s32.totalorder %v338, 0
        %vm349 = vcmp.ge.s32.totalorder %v339, 0
        %vm350 = vcmp.le.s32.totalorder %v338, 15
        %vm351 = vcmp.le.s32.totalorder %v339, 15
        %vm352 = vmand %vm348, %vm350
        %vm353 = vmand %vm349, %vm351
        %v354 = vsel %vm352, 1, 0
        %v355 = vsel %vm353, 1, 0
        %v356 = vcvt.s32.f32 %v354
        %v357 = vcvt.s32.f32 %v355
        %v358 = vmul.f32 %v346, %v356
        %v359 = vmul.f32 %v347, %v357
        %v362 = vrot.slane %v328, 2
        %v363 = vrot.slane %v329, 2
        %v366 = vmul.f32 %v358, %v362
        %v367 = vmul.f32 %v359, %v363
        %vm368 = vcmp.ge.s32.totalorder %v342, 0
        %vm369 = vcmp.ge.s32.totalorder %v343, 0
        %vm370 = vcmp.le.s32.totalorder %v342, 15
        %vm371 = vcmp.le.s32.totalorder %v343, 15
        %vm372 = vmand %vm368, %vm370
        %vm373 = vmand %vm369, %vm371
        %v374 = vsel %vm372, 1, 0
        %v375 = vsel %vm373, 1, 0
        %v376 = vcvt.s32.f32 %v374
        %v377 = vcvt.s32.f32 %v375
        %v378 = vmul.f32 %v334, %v376
        %v379 = vmul.f32 %v335, %v377
        %v380 = vmul.f32 %v378, %v362
        %v381 = vmul.f32 %v379, %v363
        %v382 = vsub.f32 1.0, %v336
        %v383 = vsub.f32 1.0, %v337
        %vm384 = vcmp.ge.s32.totalorder %v340, 0
        %vm385 = vcmp.ge.s32.totalorder %v341, 0
        %vm386 = vcmp.le.s32.totalorder %v340, 15
        %vm387 = vcmp.le.s32.totalorder %v341, 15
        %vm388 = vmand %vm384, %vm386
        %vm389 = vmand %vm385, %vm387
        %v390 = vsel %vm388, 1, 0
        %v391 = vsel %vm389, 1, 0
        %v392 = vcvt.s32.f32 %v390
        %v393 = vcvt.s32.f32 %v391
        %v394 = vmul.f32 %v382, %v392
        %v395 = vmul.f32 %v383, %v393
        %vm396 = vcmp.ge.s32.totalorder %v344, 0
        %vm397 = vcmp.ge.s32.totalorder %v345, 0
        %vm398 = vcmp.le.s32.totalorder %v344, 15
        %vm399 = vcmp.le.s32.totalorder %v345, 15
        %vm400 = vmand %vm396, %vm398
        %vm401 = vmand %vm397, %vm399
        %v402 = vsel %vm400, 1, 0
        %v403 = vsel %vm401, 1, 0
        %v404 = vcvt.s32.f32 %v402
        %v405 = vcvt.s32.f32 %v403
        %v406 = vmul.f32 %v336, %v404
        %v407 = vmul.f32 %v337, %v405
        %vm408 = vcmp.gt.s32.totalorder %v338, 0
        %v409 = vsel %vm408, %v338, 0
        %vm410 = vcmp.gt.s32.totalorder %v339, 0
        %v411 = vsel %vm410, %v339, 0
        %vm412 = vcmp.lt.s32.totalorder %v409, 15
        %v413 = vsel %vm412, %v409, 15
        %vm414 = vcmp.lt.s32.totalorder %v411, 15
        %v415 = vsel %vm414, %v411, 15
        %vm416 = vcmp.gt.s32.totalorder %v342, 0
        %v417 = vsel %vm416, %v342, 0
        %vm418 = vcmp.gt.s32.totalorder %v343, 0
        %v419 = vsel %vm418, %v343, 0
        %vm420 = vcmp.lt.s32.totalorder %v417, 15
        %v421 = vsel %vm420, %v417, 15
        %vm422 = vcmp.lt.s32.totalorder %v419, 15
        %v423 = vsel %vm422, %v419, 15
        %vm424 = vcmp.gt.s32.totalorder %v340, 0
        %v425 = vsel %vm424, %v340, 0
        %vm426 = vcmp.gt.s32.totalorder %v341, 0
        %v427 = vsel %vm426, %v341, 0
        %vm428 = vcmp.lt.s32.totalorder %v425, 15
        %v429 = vsel %vm428, %v425, 15
        %vm430 = vcmp.lt.s32.totalorder %v427, 15
        %v431 = vsel %vm430, %v427, 15
        %vm432 = vcmp.gt.s32.totalorder %v344, 0
        %v433 = vsel %vm432, %v344, 0
        %vm434 = vcmp.gt.s32.totalorder %v345, 0
        %v435 = vsel %vm434, %v345, 0
        %vm436 = vcmp.lt.s32.totalorder %v433, 15
        %v437 = vsel %vm436, %v433, 15
        %vm438 = vcmp.lt.s32.totalorder %v435, 15
        %v439 = vsel %vm438, %v435, 15
        %v440 = vlaneseq
        %v441 = vshrl.u32 %v440, 7
        %v442 = vsub.s32 0, %v441
        %v443 = vrot.slane %v413, %v442
        %v444 = vlaneseq
        %v445 = vshrl.u32 %v444, 7
        %v446 = vsub.s32 0, %v445
        %v447 = vrot.slane %v415, %v446
        %vm448 = vcmp.eq.s32.totalorder %v282, %v443
        %vm449 = vcmp.eq.s32.totalorder %v282, %v447
        %vm450 = vcmp.eq.s32.totalorder %v283, %v443
        %vm451 = vcmp.eq.s32.totalorder %v283, %v447
        %v452 = vlaneseq
        %v453 = vshrl.u32 %v452, 7
        %v454 = vsub.s32 0, %v453
        %v455 = vrot.slane %v366, %v454
        %v456 = vlaneseq
        %v457 = vshrl.u32 %v456, 7
        %v458 = vsub.s32 0, %v457
        %v459 = vrot.slane %v367, %v458
        %v460 = vsel %vm448, %v455, 0.0
        %v461 = vsel %vm449, %v459, 0.0
        %v462 = vsel %vm450, %v455, 0.0
        %v463 = vsel %vm451, %v459, 0.0
        %v464 = vlaneseq
        %v465 = vshrl.u32 %v464, 7
        %v466 = vsub.s32 0, %v465
        %v467 = vrot.slane %v421, %v466
        %v468 = vlaneseq
        %v469 = vshrl.u32 %v468, 7
        %v470 = vsub.s32 0, %v469
        %v471 = vrot.slane %v423, %v470
        %vm472 = vcmp.eq.s32.totalorder %v282, %v467
        %vm473 = vcmp.eq.s32.totalorder %v282, %v471
        %vm474 = vcmp.eq.s32.totalorder %v283, %v467
        %vm475 = vcmp.eq.s32.totalorder %v283, %v471
        %v476 = vlaneseq
        %v477 = vshrl.u32 %v476, 7
        %v478 = vsub.s32 0, %v477
        %v479 = vrot.slane %v380, %v478
        %v480 = vlaneseq
        %v481 = vshrl.u32 %v480, 7
        %v482 = vsub.s32 0, %v481
        %v483 = vrot.slane %v381, %v482
        %v484 = vsel %vm472, %v479, 0.0
        %v485 = vsel %vm473, %v483, 0.0
        %v486 = vsel %vm474, %v479, 0.0
        %v487 = vsel %vm475, %v483, 0.0
        %v488 = vadd.f32 %v460, %v484
        %v489 = vadd.f32 %v461, %v485
        %v490 = vadd.f32 %v462, %v486
        %v491 = vadd.f32 %v463, %v487
        %v492 = vlaneseq
        %v493 = vshrl.u32 %v492, 7
        %v494 = vsub.s32 1, %v493
        %v495 = vrot.slane %v429, %v494
        %v496 = vlaneseq
        %v497 = vshrl.u32 %v496, 7
        %v498 = vsub.s32 1, %v497
        %v499 = vrot.slane %v431, %v498
        %vm500 = vcmp.eq.s32.totalorder %v282, %v495
        %vm501 = vcmp.eq.s32.totalorder %v282, %v499
        %vm502 = vcmp.eq.s32.totalorder %v283, %v495
        %vm503 = vcmp.eq.s32.totalorder %v283, %v499
        %v504 = vlaneseq
        %v505 = vshrl.u32 %v504, 7
        %v506 = vsub.s32 1, %v505
        %v507 = vrot.slane %v394, %v506
        %v508 = vlaneseq
        %v509 = vshrl.u32 %v508, 7
        %v510 = vsub.s32 1, %v509
        %v511 = vrot.slane %v395, %v510
        %v512 = vsel %vm500, %v507, 0.0
        %v513 = vsel %vm501, %v511, 0.0
        %v514 = vsel %vm502, %v507, 0.0
        %v515 = vsel %vm503, %v511, 0.0
        %v516 = vlaneseq
        %v517 = vshrl.u32 %v516, 7
        %v518 = vsub.s32 1, %v517
        %v519 = vrot.slane %v437, %v518
        %v520 = vlaneseq
        %v521 = vshrl.u32 %v520, 7
        %v522 = vsub.s32 1, %v521
        %v523 = vrot.slane %v439, %v522
        %vm524 = vcmp.eq.s32.totalorder %v282, %v519
        %vm525 = vcmp.eq.s32.totalorder %v282, %v523
        %vm526 = vcmp.eq.s32.totalorder %v283, %v519
        %vm527 = vcmp.eq.s32.totalorder %v283, %v523
        %v528 = vlaneseq
        %v529 = vshrl.u32 %v528, 7
        %v530 = vsub.s32 1, %v529
        %v531 = vrot.slane %v406, %v530
        %v532 = vlaneseq
        %v533 = vshrl.u32 %v532, 7
        %v534 = vsub.s32 1, %v533
        %v535 = vrot.slane %v407, %v534
        %v536 = vsel %vm524, %v531, 0.0
        %v537 = vsel %vm525, %v535, 0.0
        %v538 = vsel %vm526, %v531, 0.0
        %v539 = vsel %vm527, %v535, 0.0
        %v540 = vadd.f32 %v512, %v536
        %v541 = vadd.f32 %v513, %v537
        %v542 = vadd.f32 %v514, %v538
        %v543 = vadd.f32 %v515, %v539
        %v548 = vcombine.low %v488, %v489
        %v549 = vcombine.high %v488, %v489
        %v551 = vunpack.c.l.s4 1966171168
        %v552 = vunpack.c.0.s8 %v551
        %v553 = vlaneseq
        %v554 = vshrl.u32 %v553, 7
        %v555 = vsub.s32 %v552, %v554
        %v556 = vrot.slane %v548, %v555
        %v558 = vunpack.c.l.s4 1966171168
        %v559 = vunpack.c.0.s8 %v558
        %v560 = vlaneseq
        %v561 = vshrl.u32 %v560, 7
        %v562 = vsub.s32 %v559, %v561
        %v563 = vrot.slane %v549, %v562
        %v564 = vcombine.high %v556, %v556
        %v565 = vcombine.high %v563, %v563
        %v567 = vunpack.c.l.s4 1966171168
        %v568 = vunpack.c.0.s8 %v567
        %v569 = vlaneseq
        %v570 = vshrl.u32 %v569, 7
        %v571 = vsub.s32 %v568, %v570
        %v572 = vrot.slane %v556, %v571
        %v574 = vunpack.c.l.s4 1966171168
        %v575 = vunpack.c.0.s8 %v574
        %v576 = vlaneseq
        %v577 = vshrl.u32 %v576, 7
        %v578 = vsub.s32 %v575, %v577
        %v579 = vrot.slane %v563, %v578
        %v581 = vunpack.c.l.s4 1966171168
        %v582 = vunpack.c.0.s8 %v581
        %v583 = vlaneseq
        %v584 = vshrl.u32 %v583, 7
        %v585 = vsub.s32 %v582, %v584
        %v586 = vrot.slane %v564, %v585
        %v588 = vunpack.c.l.s4 1966171168
        %v589 = vunpack.c.0.s8 %v588
        %v590 = vlaneseq
        %v591 = vshrl.u32 %v590, 7
        %v592 = vsub.s32 %v589, %v591
        %v593 = vrot.slane %v565, %v592
        %v594 = vcombine.high %v572, %v572
        %v595 = vcombine.high %v579, %v579
        %v596 = vcombine.high %v586, %v586
        %v597 = vcombine.high %v593, %v593
        %v598 = vcombine.low %v490, %v491
        %v599 = vcombine.high %v490, %v491
        %v601 = vunpack.c.l.s4 1966171168
        %v602 = vunpack.c.0.s8 %v601
        %v603 = vlaneseq
        %v604 = vshrl.u32 %v603, 7
        %v605 = vsub.s32 %v602, %v604
        %v606 = vrot.slane %v598, %v605
        %v608 = vunpack.c.l.s4 1966171168
        %v609 = vunpack.c.0.s8 %v608
        %v610 = vlaneseq
        %v611 = vshrl.u32 %v610, 7
        %v612 = vsub.s32 %v609, %v611
        %v613 = vrot.slane %v599, %v612
        %v614 = vcombine.high %v606, %v606
        %v615 = vcombine.high %v613, %v613
        %v617 = vunpack.c.l.s4 1966171168
        %v618 = vunpack.c.0.s8 %v617
        %v619 = vlaneseq
        %v620 = vshrl.u32 %v619, 7
        %v621 = vsub.s32 %v618, %v620
        %v622 = vrot.slane %v606, %v621
        %v624 = vunpack.c.l.s4 1966171168
        %v625 = vunpack.c.0.s8 %v624
        %v626 = vlaneseq
        %v627 = vshrl.u32 %v626, 7
        %v628 = vsub.s32 %v625, %v627
        %v629 = vrot.slane %v613, %v628
        %v631 = vunpack.c.l.s4 1966171168
        %v632 = vunpack.c.0.s8 %v631
        %v633 = vlaneseq
        %v634 = vshrl.u32 %v633, 7
        %v635 = vsub.s32 %v632, %v634
        %v636 = vrot.slane %v614, %v635
        %v638 = vunpack.c.l.s4 1966171168
        %v639 = vunpack.c.0.s8 %v638
        %v640 = vlaneseq
        %v641 = vshrl.u32 %v640, 7
        %v642 = vsub.s32 %v639, %v641
        %v643 = vrot.slane %v615, %v642
        %v644 = vcombine.high %v622, %v622
        %v645 = vcombine.high %v629, %v629
        %v646 = vcombine.high %v636, %v636
        %v647 = vcombine.high %v643, %v643
        %v648 = vlaneseq
        %v649 = vshrl.u32 %v648, 7
        %v650 = vsub.s32 0, %v649
        %v651 = vrot.slane %v572, %v650
        %v652 = vlaneseq
        %v653 = vshrl.u32 %v652, 7
        %v654 = vsub.s32 1, %v653
        %v655 = vrot.slane %v572, %v654
        %v656 = vlaneseq
        %v657 = vshrl.u32 %v656, 7
        %v658 = vsub.s32 0, %v657
        %v659 = vrot.slane %v586, %v658
        %v660 = vlaneseq
        %v661 = vshrl.u32 %v660, 7
        %v662 = vsub.s32 1, %v661
        %v663 = vrot.slane %v586, %v662
        %v664 = vlaneseq
        %v665 = vshrl.u32 %v664, 7
        %v666 = vsub.s32 0, %v665
        %v667 = vrot.slane %v594, %v666
        %v668 = vlaneseq
        %v669 = vshrl.u32 %v668, 7
        %v670 = vsub.s32 1, %v669
        %v671 = vrot.slane %v594, %v670
        %v672 = vlaneseq
        %v673 = vshrl.u32 %v672, 7
        %v674 = vsub.s32 0, %v673
        %v675 = vrot.slane %v596, %v674
        %v676 = vlaneseq
        %v677 = vshrl.u32 %v676, 7
        %v678 = vsub.s32 1, %v677
        %v679 = vrot.slane %v596, %v678
        %v680 = vlaneseq
        %v681 = vshrl.u32 %v680, 7
        %v682 = vsub.s32 0, %v681
        %v683 = vrot.slane %v579, %v682
        %v684 = vlaneseq
        %v685 = vshrl.u32 %v684, 7
        %v686 = vsub.s32 1, %v685
        %v687 = vrot.slane %v579, %v686
        %v688 = vlaneseq
        %v689 = vshrl.u32 %v688, 7
        %v690 = vsub.s32 0, %v689
        %v691 = vrot.slane %v593, %v690
        %v692 = vlaneseq
        %v693 = vshrl.u32 %v692, 7
        %v694 = vsub.s32 1, %v693
        %v695 = vrot.slane %v593, %v694
        %v696 = vlaneseq
        %v697 = vshrl.u32 %v696, 7
        %v698 = vsub.s32 0, %v697
        %v699 = vrot.slane %v595, %v698
        %v700 = vlaneseq
        %v701 = vshrl.u32 %v700, 7
        %v702 = vsub.s32 1, %v701
        %v703 = vrot.slane %v595, %v702
        %v704 = vlaneseq
        %v705 = vshrl.u32 %v704, 7
        %v706 = vsub.s32 0, %v705
        %v707 = vrot.slane %v597, %v706
        %v708 = vlaneseq
        %v709 = vshrl.u32 %v708, 7
        %v710 = vsub.s32 1, %v709
        %v711 = vrot.slane %v597, %v710
        %v712 = vlaneseq
        %v713 = vshrl.u32 %v712, 7
        %v714 = vsub.s32 0, %v713
        %v715 = vrot.slane %v622, %v714
        %v716 = vlaneseq
        %v717 = vshrl.u32 %v716, 7
        %v718 = vsub.s32 1, %v717
        %v719 = vrot.slane %v622, %v718
        %v720 = vlaneseq
        %v721 = vshrl.u32 %v720, 7
        %v722 = vsub.s32 0, %v721
        %v723 = vrot.slane %v636, %v722
        %v724 = vlaneseq
        %v725 = vshrl.u32 %v724, 7
        %v726 = vsub.s32 1, %v725
        %v727 = vrot.slane %v636, %v726
        %v728 = vlaneseq
        %v729 = vshrl.u32 %v728, 7
        %v730 = vsub.s32 0, %v729
        %v731 = vrot.slane %v644, %v730
        %v732 = vlaneseq
        %v733 = vshrl.u32 %v732, 7
        %v734 = vsub.s32 1, %v733
        %v735 = vrot.slane %v644, %v734
        %v736 = vlaneseq
        %v737 = vshrl.u32 %v736, 7
        %v738 = vsub.s32 0, %v737
        %v739 = vrot.slane %v646, %v738
        %v740 = vlaneseq
        %v741 = vshrl.u32 %v740, 7
        %v742 = vsub.s32 1, %v741
        %v743 = vrot.slane %v646, %v742
        %v744 = vlaneseq
        %v745 = vshrl.u32 %v744, 7
        %v746 = vsub.s32 0, %v745
        %v747 = vrot.slane %v629, %v746
        %v748 = vlaneseq
        %v749 = vshrl.u32 %v748, 7
        %v750 = vsub.s32 1, %v749
        %v751 = vrot.slane %v629, %v750
        %v752 = vlaneseq
        %v753 = vshrl.u32 %v752, 7
        %v754 = vsub.s32 0, %v753
        %v755 = vrot.slane %v643, %v754
        %v756 = vlaneseq
        %v757 = vshrl.u32 %v756, 7
        %v758 = vsub.s32 1, %v757
        %v759 = vrot.slane %v643, %v758
        %v760 = vlaneseq
        %v761 = vshrl.u32 %v760, 7
        %v762 = vsub.s32 0, %v761
        %v763 = vrot.slane %v645, %v762
        %v764 = vlaneseq
        %v765 = vshrl.u32 %v764, 7
        %v766 = vsub.s32 1, %v765
        %v767 = vrot.slane %v645, %v766
        %v768 = vlaneseq
        %v769 = vshrl.u32 %v768, 7
        %v770 = vsub.s32 0, %v769
        %v771 = vrot.slane %v647, %v770
        %v772 = vlaneseq
        %v773 = vshrl.u32 %v772, 7
        %v774 = vsub.s32 1, %v773
        %v775 = vrot.slane %v647, %v774
        %v808 = vmul.f32 %v651, %v540
        %v809 = vmul.f32 %v655, %v541
        %v810 = vmul.f32 %v651, %v542
        %v811 = vmul.f32 %v655, %v543
        %v812 = vmul.f32 %v659, %v540
        %v813 = vmul.f32 %v663, %v541
        %v814 = vmul.f32 %v659, %v542
        %v815 = vmul.f32 %v663, %v543
        %v816 = vmul.f32 %v667, %v540
        %v817 = vmul.f32 %v671, %v541
        %v818 = vmul.f32 %v667, %v542
        %v819 = vmul.f32 %v671, %v543
        %v820 = vmul.f32 %v675, %v540
        %v821 = vmul.f32 %v679, %v541
        %v822 = vmul.f32 %v675, %v542
        %v823 = vmul.f32 %v679, %v543
        %v824 = vmul.f32 %v683, %v540
        %v825 = vmul.f32 %v687, %v541
        %v826 = vmul.f32 %v683, %v542
        %v827 = vmul.f32 %v687, %v543
        %v828 = vmul.f32 %v691, %v540
        %v829 = vmul.f32 %v695, %v541
        %v830 = vmul.f32 %v691, %v542
        %v831 = vmul.f32 %v695, %v543
        %v832 = vmul.f32 %v699, %v540
        %v833 = vmul.f32 %v703, %v541
        %v834 = vmul.f32 %v699, %v542
        %v835 = vmul.f32 %v703, %v543
        %v836 = vmul.f32 %v707, %v540
        %v837 = vmul.f32 %v711, %v541
        %v838 = vmul.f32 %v707, %v542
        %v839 = vmul.f32 %v711, %v543
        %v840 = vmul.f32 %v715, %v540
        %v841 = vmul.f32 %v719, %v541
        %v842 = vmul.f32 %v715, %v542
        %v843 = vmul.f32 %v719, %v543
        %v844 = vmul.f32 %v723, %v540
        %v845 = vmul.f32 %v727, %v541
        %v846 = vmul.f32 %v723, %v542
        %v847 = vmul.f32 %v727, %v543
        %v848 = vmul.f32 %v731, %v540
        %v849 = vmul.f32 %v735, %v541
        %v850 = vmul.f32 %v731, %v542
        %v851 = vmul.f32 %v735, %v543
        %v852 = vmul.f32 %v739, %v540
        %v853 = vmul.f32 %v743, %v541
        %v854 = vmul.f32 %v739, %v542
        %v855 = vmul.f32 %v743, %v543
        %v856 = vmul.f32 %v747, %v540
        %v857 = vmul.f32 %v751, %v541
        %v858 = vmul.f32 %v747, %v542
        %v859 = vmul.f32 %v751, %v543
        %v860 = vmul.f32 %v755, %v540
        %v861 = vmul.f32 %v759, %v541
        %v862 = vmul.f32 %v755, %v542
        %v863 = vmul.f32 %v759, %v543
        %v864 = vmul.f32 %v763, %v540
        %v865 = vmul.f32 %v767, %v541
        %v866 = vmul.f32 %v763, %v542
        %v867 = vmul.f32 %v767, %v543
        %v868 = vmul.f32 %v771, %v540
        %v869 = vmul.f32 %v775, %v541
        %v870 = vmul.f32 %v771, %v542
        %v871 = vmul.f32 %v775, %v543
        %v873 = vcombine.high %v247, %v247
        %875 = vmatprep.subr.mxu0 %v809
        %876 = vmatpush1.msra.mxu0 %v808
        %877 = vmatprep.subr.mxu0 %v811
        %878 = vmatpush1.msra.mxu0 %v810
        %879 = vmatprep.subr.mxu0 %v813
        %880 = vmatpush1.msra.mxu0 %v812
        %881 = vmatprep.subr.mxu0 %v815
        %882 = vmatpush1.msra.mxu0 %v814
        %883 = vmatprep.subr.mxu0 %v817
        %884 = vmatpush1.msra.mxu0 %v816
        %885 = vmatprep.subr.mxu0 %v819
        %886 = vmatpush1.msra.mxu0 %v818
        %887 = vmatprep.subr.mxu0 %v821
        %888 = vmatpush1.msra.mxu0 %v820
        %889 = vmatprep.subr.mxu0 %v823
        %890 = vmatpush1.msra.mxu0 %v822
        %891 = vmatprep.subr.mxu0 %v825
        %892 = vmatpush1.msra.mxu0 %v824
        %893 = vmatprep.subr.mxu0 %v827
        %894 = vmatpush1.msra.mxu0 %v826
        %895 = vmatprep.subr.mxu0 %v829
        %896 = vmatpush1.msra.mxu0 %v828
        %897 = vmatprep.subr.mxu0 %v831
        %898 = vmatpush1.msra.mxu0 %v830
        %899 = vmatprep.subr.mxu0 %v833
        %900 = vmatpush1.msra.mxu0 %v832
        %901 = vmatprep.subr.mxu0 %v835
        %902 = vmatpush1.msra.mxu0 %v834
        %903 = vmatprep.subr.mxu0 %v837
        %904 = vmatpush1.msra.mxu0 %v836
        %905 = vmatprep.subr.mxu0 %v839
        %906 = vmatpush1.msra.mxu0 %v838
        %907 = vmatprep.subr.mxu0 %v841
        %908 = vmatpush1.msra.mxu0 %v840
        %909 = vmatprep.subr.mxu0 %v843
        %910 = vmatpush1.msra.mxu0 %v842
        %911 = vmatprep.subr.mxu0 %v845
        %912 = vmatpush1.msra.mxu0 %v844
        %913 = vmatprep.subr.mxu0 %v847
        %914 = vmatpush1.msra.mxu0 %v846
        %915 = vmatprep.subr.mxu0 %v849
        %916 = vmatpush1.msra.mxu0 %v848
        %917 = vmatprep.subr.mxu0 %v851
        %918 = vmatpush1.msra.mxu0 %v850
        %919 = vmatprep.subr.mxu0 %v853
        %920 = vmatpush1.msra.mxu0 %v852
        %921 = vmatprep.subr.mxu0 %v855
        %922 = vmatpush1.msra.mxu0 %v854
        %923 = vmatprep.subr.mxu0 %v857
        %924 = vmatpush1.msra.mxu0 %v856
        %925 = vmatprep.subr.mxu0 %v859
        %926 = vmatpush1.msra.mxu0 %v858
        %927 = vmatprep.subr.mxu0 %v861
        %928 = vmatpush1.msra.mxu0 %v860
        %929 = vmatprep.subr.mxu0 %v863
        %930 = vmatpush1.msra.mxu0 %v862
        %931 = vmatprep.subr.mxu0 %v865
        %932 = vmatpush1.msra.mxu0 %v864
        %933 = vmatprep.subr.mxu0 %v867
        %934 = vmatpush1.msra.mxu0 %v866
        %935 = vmatprep.subr.mxu0 %v869
        %936 = vmatpush1.msra.mxu0 %v868
        %937 = vmatprep.subr.mxu0 %v871
        %938 = vmatpush1.msra.mxu0 %v870
        %939 = vmatprep.mubr.f32.mxu0 %v873
        %940 = vmatmul.mubr.f32.gmra.mrb[0].mxu0 %v247
        %v941 = vpop.f32.mrb[0].mxu0
        %v942 = vadd.f32 0.0, %v941
        %v943 = vpop.f32.mrb[0].mxu0
        %v944 = vadd.f32 0.0, %v943
        %945 = vdwg.mxu0
        %946 = vst [vmem:[#allocation2] sm:$0xf] %v942
        %947 = vst [vmem:[#allocation2 + $0x8] sm:$0xf] %v944
        %v948 = vadd.f32 %v279, 0.0
        %v949 = vadd.f32 %v280, 0.0
        %v950 = vadd.f32 %v948, %v250
        %v951 = vadd.f32 %v949, %v251
        %vm952 = vcmp.gt.f32.partialorder %v950, -1.0
        %vm953 = vcmp.gt.f32.partialorder %v951, -1.0
        %v954 = vsel %vm952, 1, 0
        %v955 = vsel %vm953, 1, 0
        %v956 = vrot.slane %v954, 1
        %v957 = vrot.slane %v955, 1
        %vm958 = vcmp.ne.s32.totalorder %v956, 0
        %vm959 = vcmp.ne.s32.totalorder %v957, 0
        %vm960 = vmand %vm296, %vm958
        %vm961 = vmand %vm297, %vm959
        %vm962 = vcmp.lt.f32.partialorder %v950, 16.0
        %vm963 = vcmp.lt.f32.partialorder %v951, 16.0
        %v964 = vsel %vm962, 1, 0
        %v965 = vsel %vm963, 1, 0
        %v966 = vrot.slane %v964, 1
        %v967 = vrot.slane %v965, 1
        %vm968 = vcmp.ne.s32.totalorder %v966, 0
        %vm969 = vcmp.ne.s32.totalorder %v967, 0
        %vm970 = vmand %vm960, %vm968
        %vm971 = vmand %vm961, %vm969
        %v972 = vsel %vm970, 1, 0
        %v973 = vsel %vm971, 1, 0
        %v974 = vcvt.s32.f32 %v972
        %v975 = vcvt.s32.f32 %v973
        %v978 = vrot.slane %v974, 6
        %v979 = vrot.slane %v975, 6
        %v982 = vmul.f32 %v252, %v978
        %v983 = vmul.f32 %v253, %v979
        %v984 = vfloor.f32 %v950
        %v985 = vfloor.f32 %v951
        %v986 = vsub.f32 %v950, %v984
        %v987 = vsub.f32 %v951, %v985
        %v988 = vcvt.f32.s32.to.zero.pseudo %v984
        %v989 = vcvt.f32.s32.to.zero.pseudo %v985
        %v990 = vadd.s32 %v988, 1
        %v991 = vadd.s32 %v989, 1
        %v994 = vrot.slane %v982, 2
        %v995 = vrot.slane %v983, 2
        %v998 = vmul.f32 %v358, %v994
        %v999 = vmul.f32 %v359, %v995
        %v1000 = vmul.f32 %v378, %v994
        %v1001 = vmul.f32 %v379, %v995
        %v1002 = vsub.f32 1.0, %v986
        %v1003 = vsub.f32 1.0, %v987
        %vm1004 = vcmp.ge.s32.totalorder %v988, 0
        %vm1005 = vcmp.ge.s32.totalorder %v989, 0
        %vm1006 = vcmp.le.s32.totalorder %v988, 15
        %vm1007 = vcmp.le.s32.totalorder %v989, 15
        %vm1008 = vmand %vm1004, %vm1006
        %vm1009 = vmand %vm1005, %vm1007
        %v1010 = vsel %vm1008, 1, 0
        %v1011 = vsel %vm1009, 1, 0
        %v1012 = vcvt.s32.f32 %v1010
        %v1013 = vcvt.s32.f32 %v1011
        %v1014 = vmul.f32 %v1002, %v1012
        %v1015 = vmul.f32 %v1003, %v1013
        %vm1016 = vcmp.ge.s32.totalorder %v990, 0
        %vm1017 = vcmp.ge.s32.totalorder %v991, 0
        %vm1018 = vcmp.le.s32.totalorder %v990, 15
        %vm1019 = vcmp.le.s32.totalorder %v991, 15
        %vm1020 = vmand %vm1016, %vm1018
        %vm1021 = vmand %vm1017, %vm1019
        %v1022 = vsel %vm1020, 1, 0
        %v1023 = vsel %vm1021, 1, 0
        %v1024 = vcvt.s32.f32 %v1022
        %v1025 = vcvt.s32.f32 %v1023
        %v1026 = vmul.f32 %v986, %v1024
        %v1027 = vmul.f32 %v987, %v1025
        %vm1028 = vcmp.gt.s32.totalorder %v988, 0
        %v1029 = vsel %vm1028, %v988, 0
        %vm1030 = vcmp.gt.s32.totalorder %v989, 0
        %v1031 = vsel %vm1030, %v989, 0
        %vm1032 = vcmp.lt.s32.totalorder %v1029, 15
        %v1033 = vsel %vm1032, %v1029, 15
        %vm1034 = vcmp.lt.s32.totalorder %v1031, 15
        %v1035 = vsel %vm1034, %v1031, 15
        %vm1036 = vcmp.gt.s32.totalorder %v990, 0
        %v1037 = vsel %vm1036, %v990, 0
        %vm1038 = vcmp.gt.s32.totalorder %v991, 0
        %v1039 = vsel %vm1038, %v991, 0
        %vm1040 = vcmp.lt.s32.totalorder %v1037, 15
        %v1041 = vsel %vm1040, %v1037, 15
        %vm1042 = vcmp.lt.s32.totalorder %v1039, 15
        %v1043 = vsel %vm1042, %v1039, 15
        %v1044 = vlaneseq
        %v1045 = vshrl.u32 %v1044, 7
        %v1046 = vsub.s32 1, %v1045
        %v1047 = vrot.slane %v413, %v1046
        %v1048 = vlaneseq
        %v1049 = vshrl.u32 %v1048, 7
        %v1050 = vsub.s32 1, %v1049
        %v1051 = vrot.slane %v415, %v1050
        %vm1052 = vcmp.eq.s32.totalorder %v282, %v1047
        %vm1053 = vcmp.eq.s32.totalorder %v282, %v1051
        %vm1054 = vcmp.eq.s32.totalorder %v283, %v1047
        %vm1055 = vcmp.eq.s32.totalorder %v283, %v1051
        %v1056 = vlaneseq
        %v1057 = vshrl.u32 %v1056, 7
        %v1058 = vsub.s32 1, %v1057
        %v1059 = vrot.slane %v998, %v1058
        %v1060 = vlaneseq
        %v1061 = vshrl.u32 %v1060, 7
        %v1062 = vsub.s32 1, %v1061
        %v1063 = vrot.slane %v999, %v1062
        %v1064 = vsel %vm1052, %v1059, 0.0
        %v1065 = vsel %vm1053, %v1063, 0.0
        %v1066 = vsel %vm1054, %v1059, 0.0
        %v1067 = vsel %vm1055, %v1063, 0.0
        %v1068 = vlaneseq
        %v1069 = vshrl.u32 %v1068, 7
        %v1070 = vsub.s32 1, %v1069
        %v1071 = vrot.slane %v421, %v1070
        %v1072 = vlaneseq
        %v1073 = vshrl.u32 %v1072, 7
        %v1074 = vsub.s32 1, %v1073
        %v1075 = vrot.slane %v423, %v1074
        %vm1076 = vcmp.eq.s32.totalorder %v282, %v1071
        %vm1077 = vcmp.eq.s32.totalorder %v282, %v1075
        %vm1078 = vcmp.eq.s32.totalorder %v283, %v1071
        %vm1079 = vcmp.eq.s32.totalorder %v283, %v1075
        %v1080 = vlaneseq
        %v1081 = vshrl.u32 %v1080, 7
        %v1082 = vsub.s32 1, %v1081
        %v1083 = vrot.slane %v1000, %v1082
        %v1084 = vlaneseq
        %v1085 = vshrl.u32 %v1084, 7
        %v1086 = vsub.s32 1, %v1085
        %v1087 = vrot.slane %v1001, %v1086
        %v1088 = vsel %vm1076, %v1083, 0.0
        %v1089 = vsel %vm1077, %v1087, 0.0
        %v1090 = vsel %vm1078, %v1083, 0.0
        %v1091 = vsel %vm1079, %v1087, 0.0
        %v1092 = vadd.f32 %v1064, %v1088
        %v1093 = vadd.f32 %v1065, %v1089
        %v1094 = vadd.f32 %v1066, %v1090
        %v1095 = vadd.f32 %v1067, %v1091
        %v1096 = vlaneseq
        %v1097 = vshrl.u32 %v1096, 7
        %v1098 = vsub.s32 2, %v1097
        %v1099 = vrot.slane %v1033, %v1098
        %v1100 = vlaneseq
        %v1101 = vshrl.u32 %v1100, 7
        %v1102 = vsub.s32 2, %v1101
        %v1103 = vrot.slane %v1035, %v1102
        %vm1104 = vcmp.eq.s32.totalorder %v282, %v1099
        %vm1105 = vcmp.eq.s32.totalorder %v282, %v1103
        %vm1106 = vcmp.eq.s32.totalorder %v283, %v1099
        %vm1107 = vcmp.eq.s32.totalorder %v283, %v1103
        %v1108 = vlaneseq
        %v1109 = vshrl.u32 %v1108, 7
        %v1110 = vsub.s32 2, %v1109
        %v1111 = vrot.slane %v1014, %v1110
        %v1112 = vlaneseq
        %v1113 = vshrl.u32 %v1112, 7
        %v1114 = vsub.s32 2, %v1113
        %v1115 = vrot.slane %v1015, %v1114
        %v1116 = vsel %vm1104, %v1111, 0.0
        %v1117 = vsel %vm1105, %v1115, 0.0
        %v1118 = vsel %vm1106, %v1111, 0.0
        %v1119 = vsel %vm1107, %v1115, 0.0
        %v1120 = vlaneseq
        %v1121 = vshrl.u32 %v1120, 7
        %v1122 = vsub.s32 2, %v1121
        %v1123 = vrot.slane %v1041, %v1122
        %v1124 = vlaneseq
        %v1125 = vshrl.u32 %v1124, 7
        %v1126 = vsub.s32 2, %v1125
        %v1127 = vrot.slane %v1043, %v1126
        %vm1128 = vcmp.eq.s32.totalorder %v282, %v1123
        %vm1129 = vcmp.eq.s32.totalorder %v282, %v1127
        %vm1130 = vcmp.eq.s32.totalorder %v283, %v1123
        %vm1131 = vcmp.eq.s32.totalorder %v283, %v1127
        %v1132 = vlaneseq
        %v1133 = vshrl.u32 %v1132, 7
        %v1134 = vsub.s32 2, %v1133
        %v1135 = vrot.slane %v1026, %v1134
        %v1136 = vlaneseq
        %v1137 = vshrl.u32 %v1136, 7
        %v1138 = vsub.s32 2, %v1137
        %v1139 = vrot.slane %v1027, %v1138
        %v1140 = vsel %vm1128, %v1135, 0.0
        %v1141 = vsel %vm1129, %v1139, 0.0
        %v1142 = vsel %vm1130, %v1135, 0.0
        %v1143 = vsel %vm1131, %v1139, 0.0
        %v1144 = vadd.f32 %v1116, %v1140
        %v1145 = vadd.f32 %v1117, %v1141
        %v1146 = vadd.f32 %v1118, %v1142
        %v1147 = vadd.f32 %v1119, %v1143
        %v1152 = vcombine.low %v1092, %v1093
        %v1153 = vcombine.high %v1092, %v1093
        %v1155 = vunpack.c.l.s4 1966171168
        %v1156 = vunpack.c.0.s8 %v1155
        %v1157 = vlaneseq
        %v1158 = vshrl.u32 %v1157, 7
        %v1159 = vsub.s32 %v1156, %v1158
        %v1160 = vrot.slane %v1152, %v1159
        %v1162 = vunpack.c.l.s4 1966171168
        %v1163 = vunpack.c.0.s8 %v1162
        %v1164 = vlaneseq
        %v1165 = vshrl.u32 %v1164, 7
        %v1166 = vsub.s32 %v1163, %v1165
        %v1167 = vrot.slane %v1153, %v1166
        %v1168 = vcombine.high %v1160, %v1160
        %v1169 = vcombine.high %v1167, %v1167
        %v1171 = vunpack.c.l.s4 1966171168
        %v1172 = vunpack.c.0.s8 %v1171
        %v1173 = vlaneseq
        %v1174 = vshrl.u32 %v1173, 7
        %v1175 = vsub.s32 %v1172, %v1174
        %v1176 = vrot.slane %v1160, %v1175
        %v1178 = vunpack.c.l.s4 1966171168
        %v1179 = vunpack.c.0.s8 %v1178
        %v1180 = vlaneseq
        %v1181 = vshrl.u32 %v1180, 7
        %v1182 = vsub.s32 %v1179, %v1181
        %v1183 = vrot.slane %v1167, %v1182
        %v1185 = vunpack.c.l.s4 1966171168
        %v1186 = vunpack.c.0.s8 %v1185
        %v1187 = vlaneseq
        %v1188 = vshrl.u32 %v1187, 7
        %v1189 = vsub.s32 %v1186, %v1188
        %v1190 = vrot.slane %v1168, %v1189
        %v1192 = vunpack.c.l.s4 1966171168
        %v1193 = vunpack.c.0.s8 %v1192
        %v1194 = vlaneseq
        %v1195 = vshrl.u32 %v1194, 7
        %v1196 = vsub.s32 %v1193, %v1195
        %v1197 = vrot.slane %v1169, %v1196
        %v1198 = vcombine.high %v1176, %v1176
        %v1199 = vcombine.high %v1183, %v1183
        %v1200 = vcombine.high %v1190, %v1190
        %v1201 = vcombine.high %v1197, %v1197
        %v1202 = vcombine.low %v1094, %v1095
        %v1203 = vcombine.high %v1094, %v1095
        %v1205 = vunpack.c.l.s4 1966171168
        %v1206 = vunpack.c.0.s8 %v1205
        %v1207 = vlaneseq
        %v1208 = vshrl.u32 %v1207, 7
        %v1209 = vsub.s32 %v1206, %v1208
        %v1210 = vrot.slane %v1202, %v1209
        %v1212 = vunpack.c.l.s4 1966171168
        %v1213 = vunpack.c.0.s8 %v1212
        %v1214 = vlaneseq
        %v1215 = vshrl.u32 %v1214, 7
        %v1216 = vsub.s32 %v1213, %v1215
        %v1217 = vrot.slane %v1203, %v1216
        %v1218 = vcombine.high %v1210, %v1210
        %v1219 = vcombine.high %v1217, %v1217
        %v1221 = vunpack.c.l.s4 1966171168
        %v1222 = vunpack.c.0.s8 %v1221
        %v1223 = vlaneseq
        %v1224 = vshrl.u32 %v1223, 7
        %v1225 = vsub.s32 %v1222, %v1224
        %v1226 = vrot.slane %v1210, %v1225
        %v1228 = vunpack.c.l.s4 1966171168
        %v1229 = vunpack.c.0.s8 %v1228
        %v1230 = vlaneseq
        %v1231 = vshrl.u32 %v1230, 7
        %v1232 = vsub.s32 %v1229, %v1231
        %v1233 = vrot.slane %v1217, %v1232
        %v1235 = vunpack.c.l.s4 1966171168
        %v1236 = vunpack.c.0.s8 %v1235
        %v1237 = vlaneseq
        %v1238 = vshrl.u32 %v1237, 7
        %v1239 = vsub.s32 %v1236, %v1238
        %v1240 = vrot.slane %v1218, %v1239
        %v1242 = vunpack.c.l.s4 1966171168
        %v1243 = vunpack.c.0.s8 %v1242
        %v1244 = vlaneseq
        %v1245 = vshrl.u32 %v1244, 7
        %v1246 = vsub.s32 %v1243, %v1245
        %v1247 = vrot.slane %v1219, %v1246
        %v1248 = vcombine.high %v1226, %v1226
        %v1249 = vcombine.high %v1233, %v1233
        %v1250 = vcombine.high %v1240, %v1240
        %v1251 = vcombine.high %v1247, %v1247
        %v1252 = vlaneseq
        %v1253 = vshrl.u32 %v1252, 7
        %v1254 = vsub.s32 0, %v1253
        %v1255 = vrot.slane %v1176, %v1254
        %v1256 = vlaneseq
        %v1257 = vshrl.u32 %v1256, 7
        %v1258 = vsub.s32 1, %v1257
        %v1259 = vrot.slane %v1176, %v1258
        %v1260 = vlaneseq
        %v1261 = vshrl.u32 %v1260, 7
        %v1262 = vsub.s32 0, %v1261
        %v1263 = vrot.slane %v1190, %v1262
        %v1264 = vlaneseq
        %v1265 = vshrl.u32 %v1264, 7
        %v1266 = vsub.s32 1, %v1265
        %v1267 = vrot.slane %v1190, %v1266
        %v1268 = vlaneseq
        %v1269 = vshrl.u32 %v1268, 7
        %v1270 = vsub.s32 0, %v1269
        %v1271 = vrot.slane %v1198, %v1270
        %v1272 = vlaneseq
        %v1273 = vshrl.u32 %v1272, 7
        %v1274 = vsub.s32 1, %v1273
        %v1275 = vrot.slane %v1198, %v1274
        %v1276 = vlaneseq
        %v1277 = vshrl.u32 %v1276, 7
        %v1278 = vsub.s32 0, %v1277
        %v1279 = vrot.slane %v1200, %v1278
        %v1280 = vlaneseq
        %v1281 = vshrl.u32 %v1280, 7
        %v1282 = vsub.s32 1, %v1281
        %v1283 = vrot.slane %v1200, %v1282
        %v1284 = vlaneseq
        %v1285 = vshrl.u32 %v1284, 7
        %v1286 = vsub.s32 0, %v1285
        %v1287 = vrot.slane %v1183, %v1286
        %v1288 = vlaneseq
        %v1289 = vshrl.u32 %v1288, 7
        %v1290 = vsub.s32 1, %v1289
        %v1291 = vrot.slane %v1183, %v1290
        %v1292 = vlaneseq
        %v1293 = vshrl.u32 %v1292, 7
        %v1294 = vsub.s32 0, %v1293
        %v1295 = vrot.slane %v1197, %v1294
        %v1296 = vlaneseq
        %v1297 = vshrl.u32 %v1296, 7
        %v1298 = vsub.s32 1, %v1297
        %v1299 = vrot.slane %v1197, %v1298
        %v1300 = vlaneseq
        %v1301 = vshrl.u32 %v1300, 7
        %v1302 = vsub.s32 0, %v1301
        %v1303 = vrot.slane %v1199, %v1302
        %v1304 = vlaneseq
        %v1305 = vshrl.u32 %v1304, 7
        %v1306 = vsub.s32 1, %v1305
        %v1307 = vrot.slane %v1199, %v1306
        %v1308 = vlaneseq
        %v1309 = vshrl.u32 %v1308, 7
        %v1310 = vsub.s32 0, %v1309
        %v1311 = vrot.slane %v1201, %v1310
        %v1312 = vlaneseq
        %v1313 = vshrl.u32 %v1312, 7
        %v1314 = vsub.s32 1, %v1313
        %v1315 = vrot.slane %v1201, %v1314
        %v1316 = vlaneseq
        %v1317 = vshrl.u32 %v1316, 7
        %v1318 = vsub.s32 0, %v1317
        %v1319 = vrot.slane %v1226, %v1318
        %v1320 = vlaneseq
        %v1321 = vshrl.u32 %v1320, 7
        %v1322 = vsub.s32 1, %v1321
        %v1323 = vrot.slane %v1226, %v1322
        %v1324 = vlaneseq
        %v1325 = vshrl.u32 %v1324, 7
        %v1326 = vsub.s32 0, %v1325
        %v1327 = vrot.slane %v1240, %v1326
        %v1328 = vlaneseq
        %v1329 = vshrl.u32 %v1328, 7
        %v1330 = vsub.s32 1, %v1329
        %v1331 = vrot.slane %v1240, %v1330
        %v1332 = vlaneseq
        %v1333 = vshrl.u32 %v1332, 7
        %v1334 = vsub.s32 0, %v1333
        %v1335 = vrot.slane %v1248, %v1334
        %v1336 = vlaneseq
        %v1337 = vshrl.u32 %v1336, 7
        %v1338 = vsub.s32 1, %v1337
        %v1339 = vrot.slane %v1248, %v1338
        %v1340 = vlaneseq
        %v1341 = vshrl.u32 %v1340, 7
        %v1342 = vsub.s32 0, %v1341
        %v1343 = vrot.slane %v1250, %v1342
        %v1344 = vlaneseq
        %v1345 = vshrl.u32 %v1344, 7
        %v1346 = vsub.s32 1, %v1345
        %v1347 = vrot.slane %v1250, %v1346
        %v1348 = vlaneseq
        %v1349 = vshrl.u32 %v1348, 7
        %v1350 = vsub.s32 0, %v1349
        %v1351 = vrot.slane %v1233, %v1350
        %v1352 = vlaneseq
        %v1353 = vshrl.u32 %v1352, 7
        %v1354 = vsub.s32 1, %v1353
        %v1355 = vrot.slane %v1233, %v1354
        %v1356 = vlaneseq
        %v1357 = vshrl.u32 %v1356, 7
        %v1358 = vsub.s32 0, %v1357
        %v1359 = vrot.slane %v1247, %v1358
        %v1360 = vlaneseq
        %v1361 = vshrl.u32 %v1360, 7
        %v1362 = vsub.s32 1, %v1361
        %v1363 = vrot.slane %v1247, %v1362
        %v1364 = vlaneseq
        %v1365 = vshrl.u32 %v1364, 7
        %v1366 = vsub.s32 0, %v1365
        %v1367 = vrot.slane %v1249, %v1366
        %v1368 = vlaneseq
        %v1369 = vshrl.u32 %v1368, 7
        %v1370 = vsub.s32 1, %v1369
        %v1371 = vrot.slane %v1249, %v1370
        %v1372 = vlaneseq
        %v1373 = vshrl.u32 %v1372, 7
        %v1374 = vsub.s32 0, %v1373
        %v1375 = vrot.slane %v1251, %v1374
        %v1376 = vlaneseq
        %v1377 = vshrl.u32 %v1376, 7
        %v1378 = vsub.s32 1, %v1377
        %v1379 = vrot.slane %v1251, %v1378
        %v1412 = vmul.f32 %v1255, %v1144
        %v1413 = vmul.f32 %v1259, %v1145
        %v1414 = vmul.f32 %v1255, %v1146
        %v1415 = vmul.f32 %v1259, %v1147
        %v1416 = vmul.f32 %v1263, %v1144
        %v1417 = vmul.f32 %v1267, %v1145
        %v1418 = vmul.f32 %v1263, %v1146
        %v1419 = vmul.f32 %v1267, %v1147
        %v1420 = vmul.f32 %v1271, %v1144
        %v1421 = vmul.f32 %v1275, %v1145
        %v1422 = vmul.f32 %v1271, %v1146
        %v1423 = vmul.f32 %v1275, %v1147
        %v1424 = vmul.f32 %v1279, %v1144
        %v1425 = vmul.f32 %v1283, %v1145
        %v1426 = vmul.f32 %v1279, %v1146
        %v1427 = vmul.f32 %v1283, %v1147
        %v1428 = vmul.f32 %v1287, %v1144
        %v1429 = vmul.f32 %v1291, %v1145
        %v1430 = vmul.f32 %v1287, %v1146
        %v1431 = vmul.f32 %v1291, %v1147
        %v1432 = vmul.f32 %v1295, %v1144
        %v1433 = vmul.f32 %v1299, %v1145
        %v1434 = vmul.f32 %v1295, %v1146
        %v1435 = vmul.f32 %v1299, %v1147
        %v1436 = vmul.f32 %v1303, %v1144
        %v1437 = vmul.f32 %v1307, %v1145
        %v1438 = vmul.f32 %v1303, %v1146
        %v1439 = vmul.f32 %v1307, %v1147
        %v1440 = vmul.f32 %v1311, %v1144
        %v1441 = vmul.f32 %v1315, %v1145
        %v1442 = vmul.f32 %v1311, %v1146
        %v1443 = vmul.f32 %v1315, %v1147
        %v1444 = vmul.f32 %v1319, %v1144
        %v1445 = vmul.f32 %v1323, %v1145
        %v1446 = vmul.f32 %v1319, %v1146
        %v1447 = vmul.f32 %v1323, %v1147
        %v1448 = vmul.f32 %v1327, %v1144
        %v1449 = vmul.f32 %v1331, %v1145
        %v1450 = vmul.f32 %v1327, %v1146
        %v1451 = vmul.f32 %v1331, %v1147
        %v1452 = vmul.f32 %v1335, %v1144
        %v1453 = vmul.f32 %v1339, %v1145
        %v1454 = vmul.f32 %v1335, %v1146
        %v1455 = vmul.f32 %v1339, %v1147
        %v1456 = vmul.f32 %v1343, %v1144
        %v1457 = vmul.f32 %v1347, %v1145
        %v1458 = vmul.f32 %v1343, %v1146
        %v1459 = vmul.f32 %v1347, %v1147
        %v1460 = vmul.f32 %v1351, %v1144
        %v1461 = vmul.f32 %v1355, %v1145
        %v1462 = vmul.f32 %v1351, %v1146
        %v1463 = vmul.f32 %v1355, %v1147
        %v1464 = vmul.f32 %v1359, %v1144
        %v1465 = vmul.f32 %v1363, %v1145
        %v1466 = vmul.f32 %v1359, %v1146
        %v1467 = vmul.f32 %v1363, %v1147
        %v1468 = vmul.f32 %v1367, %v1144
        %v1469 = vmul.f32 %v1371, %v1145
        %v1470 = vmul.f32 %v1367, %v1146
        %v1471 = vmul.f32 %v1371, %v1147
        %v1472 = vmul.f32 %v1375, %v1144
        %v1473 = vmul.f32 %v1379, %v1145
        %v1474 = vmul.f32 %v1375, %v1146
        %v1475 = vmul.f32 %v1379, %v1147
        %1476 = vmatprep.subr.mxu0 %v1413
        %1477 = vmatpush1.msra.mxu0 %v1412
        %1478 = vmatprep.subr.mxu0 %v1415
        %1479 = vmatpush1.msra.mxu0 %v1414
        %1480 = vmatprep.subr.mxu0 %v1417
        %1481 = vmatpush1.msra.mxu0 %v1416
        %1482 = vmatprep.subr.mxu0 %v1419
        %1483 = vmatpush1.msra.mxu0 %v1418
        %1484 = vmatprep.subr.mxu0 %v1421
        %1485 = vmatpush1.msra.mxu0 %v1420
        %1486 = vmatprep.subr.mxu0 %v1423
        %1487 = vmatpush1.msra.mxu0 %v1422
        %1488 = vmatprep.subr.mxu0 %v1425
        %1489 = vmatpush1.msra.mxu0 %v1424
        %1490 = vmatprep.subr.mxu0 %v1427
        %1491 = vmatpush1.msra.mxu0 %v1426
        %1492 = vmatprep.subr.mxu0 %v1429
        %1493 = vmatpush1.msra.mxu0 %v1428
        %1494 = vmatprep.subr.mxu0 %v1431
        %1495 = vmatpush1.msra.mxu0 %v1430
        %1496 = vmatprep.subr.mxu0 %v1433
        %1497 = vmatpush1.msra.mxu0 %v1432
        %1498 = vmatprep.subr.mxu0 %v1435
        %1499 = vmatpush1.msra.mxu0 %v1434
        %1500 = vmatprep.subr.mxu0 %v1437
        %1501 = vmatpush1.msra.mxu0 %v1436
        %1502 = vmatprep.subr.mxu0 %v1439
        %1503 = vmatpush1.msra.mxu0 %v1438
        %1504 = vmatprep.subr.mxu0 %v1441
        %1505 = vmatpush1.msra.mxu0 %v1440
        %1506 = vmatprep.subr.mxu0 %v1443
        %1507 = vmatpush1.msra.mxu0 %v1442
        %1508 = vmatprep.subr.mxu0 %v1445
        %1509 = vmatpush1.msra.mxu0 %v1444
        %1510 = vmatprep.subr.mxu0 %v1447
        %1511 = vmatpush1.msra.mxu0 %v1446
        %1512 = vmatprep.subr.mxu0 %v1449
        %1513 = vmatpush1.msra.mxu0 %v1448
        %1514 = vmatprep.subr.mxu0 %v1451
        %1515 = vmatpush1.msra.mxu0 %v1450
        %1516 = vmatprep.subr.mxu0 %v1453
        %1517 = vmatpush1.msra.mxu0 %v1452
        %1518 = vmatprep.subr.mxu0 %v1455
        %1519 = vmatpush1.msra.mxu0 %v1454
        %1520 = vmatprep.subr.mxu0 %v1457
        %1521 = vmatpush1.msra.mxu0 %v1456
        %1522 = vmatprep.subr.mxu0 %v1459
        %1523 = vmatpush1.msra.mxu0 %v1458
        %1524 = vmatprep.subr.mxu0 %v1461
        %1525 = vmatpush1.msra.mxu0 %v1460
        %1526 = vmatprep.subr.mxu0 %v1463
        %1527 = vmatpush1.msra.mxu0 %v1462
        %1528 = vmatprep.subr.mxu0 %v1465
        %1529 = vmatpush1.msra.mxu0 %v1464
        %1530 = vmatprep.subr.mxu0 %v1467
        %1531 = vmatpush1.msra.mxu0 %v1466
        %1532 = vmatprep.subr.mxu0 %v1469
        %1533 = vmatpush1.msra.mxu0 %v1468
        %1534 = vmatprep.subr.mxu0 %v1471
        %1535 = vmatpush1.msra.mxu0 %v1470
        %1536 = vmatprep.subr.mxu0 %v1473
        %1537 = vmatpush1.msra.mxu0 %v1472
        %1538 = vmatprep.subr.mxu0 %v1475
        %1539 = vmatpush1.msra.mxu0 %v1474
        %1540 = vmatprep.mubr.f32.mxu0 %v873
        %1541 = vmatmul.mubr.f32.gmra.mrb[0].mxu0 %v247
        %v1542 = vpop.f32.mrb[0].mxu0
        %v1543 = vadd.f32 0.0, %v1542
        %v1544 = vpop.f32.mrb[0].mxu0
        %v1545 = vadd.f32 0.0, %v1544
        %1546 = vdwg.mxu0
        %v1549 = vrot.slane %v1543, 4
        %v1550 = vrot.slane %v1545, 4
        %1553 = vst [vmem:[#allocation2] sm:$0xf0] %v1549
        %1554 = vst [vmem:[#allocation2 + $0x8] sm:$0xf0] %v1550
        %v1555 = vadd.f32 %v279, 1.0
        %v1556 = vadd.f32 %v280, 1.0
        %v1557 = vadd.f32 %v1555, %v250
        %v1558 = vadd.f32 %v1556, %v251
        %vm1559 = vcmp.gt.f32.partialorder %v1557, -1.0
        %vm1560 = vcmp.gt.f32.partialorder %v1558, -1.0
        %v1561 = vsel %vm1559, 1, 0
        %v1562 = vsel %vm1560, 1, 0
        %v1563 = vrot.slane %v1561, 1
        %v1564 = vrot.slane %v1562, 1
        %vm1565 = vcmp.ne.s32.totalorder %v1563, 0
        %vm1566 = vcmp.ne.s32.totalorder %v1564, 0
        %vm1567 = vmand %vm296, %vm1565
        %vm1568 = vmand %vm297, %vm1566
        %vm1569 = vcmp.lt.f32.partialorder %v1557, 16.0
        %vm1570 = vcmp.lt.f32.partialorder %v1558, 16.0
        %v1571 = vsel %vm1569, 1, 0
        %v1572 = vsel %vm1570, 1, 0
        %v1573 = vrot.slane %v1571, 1
        %v1574 = vrot.slane %v1572, 1
        %vm1575 = vcmp.ne.s32.totalorder %v1573, 0
        %vm1576 = vcmp.ne.s32.totalorder %v1574, 0
        %vm1577 = vmand %vm1567, %vm1575
        %vm1578 = vmand %vm1568, %vm1576
        %v1579 = vsel %vm1577, 1, 0
        %v1580 = vsel %vm1578, 1, 0
        %v1581 = vcvt.s32.f32 %v1579
        %v1582 = vcvt.s32.f32 %v1580
        %v1585 = vrot.slane %v1581, 6
        %v1586 = vrot.slane %v1582, 6
        %v1589 = vmul.f32 %v252, %v1585
        %v1590 = vmul.f32 %v253, %v1586
        %v1591 = vfloor.f32 %v1557
        %v1592 = vfloor.f32 %v1558
        %v1593 = vsub.f32 %v1557, %v1591
        %v1594 = vsub.f32 %v1558, %v1592
        %v1595 = vcvt.f32.s32.to.zero.pseudo %v1591
        %v1596 = vcvt.f32.s32.to.zero.pseudo %v1592
        %v1597 = vadd.s32 %v1595, 1
        %v1598 = vadd.s32 %v1596, 1
        %v1601 = vrot.slane %v1589, 2
        %v1602 = vrot.slane %v1590, 2
        %v1605 = vmul.f32 %v358, %v1601
        %v1606 = vmul.f32 %v359, %v1602
        %v1607 = vmul.f32 %v378, %v1601
        %v1608 = vmul.f32 %v379, %v1602
        %v1609 = vsub.f32 1.0, %v1593
        %v1610 = vsub.f32 1.0, %v1594
        %vm1611 = vcmp.ge.s32.totalorder %v1595, 0
        %vm1612 = vcmp.ge.s32.totalorder %v1596, 0
        %vm1613 = vcmp.le.s32.totalorder %v1595, 15
        %vm1614 = vcmp.le.s32.totalorder %v1596, 15
        %vm1615 = vmand %vm1611, %vm1613
        %vm1616 = vmand %vm1612, %vm1614
        %v1617 = vsel %vm1615, 1, 0
        %v1618 = vsel %vm1616, 1, 0
        %v1619 = vcvt.s32.f32 %v1617
        %v1620 = vcvt.s32.f32 %v1618
        %v1621 = vmul.f32 %v1609, %v1619
        %v1622 = vmul.f32 %v1610, %v1620
        %vm1623 = vcmp.ge.s32.totalorder %v1597, 0
        %vm1624 = vcmp.ge.s32.totalorder %v1598, 0
        %vm1625 = vcmp.le.s32.totalorder %v1597, 15
        %vm1626 = vcmp.le.s32.totalorder %v1598, 15
        %vm1627 = vmand %vm1623, %vm1625
        %vm1628 = vmand %vm1624, %vm1626
        %v1629 = vsel %vm1627, 1, 0
        %v1630 = vsel %vm1628, 1, 0
        %v1631 = vcvt.s32.f32 %v1629
        %v1632 = vcvt.s32.f32 %v1630
        %v1633 = vmul.f32 %v1593, %v1631
        %v1634 = vmul.f32 %v1594, %v1632
        %vm1635 = vcmp.gt.s32.totalorder %v1595, 0
        %v1636 = vsel %vm1635, %v1595, 0
        %vm1637 = vcmp.gt.s32.totalorder %v1596, 0
        %v1638 = vsel %vm1637, %v1596, 0
        %vm1639 = vcmp.lt.s32.totalorder %v1636, 15
        %v1640 = vsel %vm1639, %v1636, 15
        %vm1641 = vcmp.lt.s32.totalorder %v1638, 15
        %v1642 = vsel %vm1641, %v1638, 15
        %vm1643 = vcmp.gt.s32.totalorder %v1597, 0
        %v1644 = vsel %vm1643, %v1597, 0
        %vm1645 = vcmp.gt.s32.totalorder %v1598, 0
        %v1646 = vsel %vm1645, %v1598, 0
        %vm1647 = vcmp.lt.s32.totalorder %v1644, 15
        %v1648 = vsel %vm1647, %v1644, 15
        %vm1649 = vcmp.lt.s32.totalorder %v1646, 15
        %v1650 = vsel %vm1649, %v1646, 15
        %v1651 = vlaneseq
        %v1652 = vshrl.u32 %v1651, 7
        %v1653 = vsub.s32 2, %v1652
        %v1654 = vrot.slane %v413, %v1653
        %v1655 = vlaneseq
        %v1656 = vshrl.u32 %v1655, 7
        %v1657 = vsub.s32 2, %v1656
        %v1658 = vrot.slane %v415, %v1657
        %vm1659 = vcmp.eq.s32.totalorder %v282, %v1654
        %vm1660 = vcmp.eq.s32.totalorder %v282, %v1658
        %vm1661 = vcmp.eq.s32.totalorder %v283, %v1654
        %vm1662 = vcmp.eq.s32.totalorder %v283, %v1658
        %v1663 = vlaneseq
        %v1664 = vshrl.u32 %v1663, 7
        %v1665 = vsub.s32 2, %v1664
        %v1666 = vrot.slane %v1605, %v1665
        %v1667 = vlaneseq
        %v1668 = vshrl.u32 %v1667, 7
        %v1669 = vsub.s32 2, %v1668
        %v1670 = vrot.slane %v1606, %v1669
        %v1671 = vsel %vm1659, %v1666, 0.0
        %v1672 = vsel %vm1660, %v1670, 0.0
        %v1673 = vsel %vm1661, %v1666, 0.0
        %v1674 = vsel %vm1662, %v1670, 0.0
        %v1675 = vlaneseq
        %v1676 = vshrl.u32 %v1675, 7
        %v1677 = vsub.s32 2, %v1676
        %v1678 = vrot.slane %v421, %v1677
        %v1679 = vlaneseq
        %v1680 = vshrl.u32 %v1679, 7
        %v1681 = vsub.s32 2, %v1680
        %v1682 = vrot.slane %v423, %v1681
        %vm1683 = vcmp.eq.s32.totalorder %v282, %v1678
        %vm1684 = vcmp.eq.s32.totalorder %v282, %v1682
        %vm1685 = vcmp.eq.s32.totalorder %v283, %v1678
        %vm1686 = vcmp.eq.s32.totalorder %v283, %v1682
        %v1687 = vlaneseq
        %v1688 = vshrl.u32 %v1687, 7
        %v1689 = vsub.s32 2, %v1688
        %v1690 = vrot.slane %v1607, %v1689
        %v1691 = vlaneseq
        %v1692 = vshrl.u32 %v1691, 7
        %v1693 = vsub.s32 2, %v1692
        %v1694 = vrot.slane %v1608, %v1693
        %v1695 = vsel %vm1683, %v1690, 0.0
        %v1696 = vsel %vm1684, %v1694, 0.0
        %v1697 = vsel %vm1685, %v1690, 0.0
        %v1698 = vsel %vm1686, %v1694, 0.0
        %v1699 = vadd.f32 %v1671, %v1695
        %v1700 = vadd.f32 %v1672, %v1696
        %v1701 = vadd.f32 %v1673, %v1697
        %v1702 = vadd.f32 %v1674, %v1698
        %v1703 = vlaneseq
        %v1704 = vshrl.u32 %v1703, 7
        %v1705 = vsub.s32 3, %v1704
        %v1706 = vrot.slane %v1640, %v1705
        %v1707 = vlaneseq
        %v1708 = vshrl.u32 %v1707, 7
        %v1709 = vsub.s32 3, %v1708
        %v1710 = vrot.slane %v1642, %v1709
        %vm1711 = vcmp.eq.s32.totalorder %v282, %v1706
        %vm1712 = vcmp.eq.s32.totalorder %v282, %v1710
        %vm1713 = vcmp.eq.s32.totalorder %v283, %v1706
        %vm1714 = vcmp.eq.s32.totalorder %v283, %v1710
        %v1715 = vlaneseq
        %v1716 = vshrl.u32 %v1715, 7
        %v1717 = vsub.s32 3, %v1716
        %v1718 = vrot.slane %v1621, %v1717
        %v1719 = vlaneseq
        %v1720 = vshrl.u32 %v1719, 7
        %v1721 = vsub.s32 3, %v1720
        %v1722 = vrot.slane %v1622, %v1721
        %v1723 = vsel %vm1711, %v1718, 0.0
        %v1724 = vsel %vm1712, %v1722, 0.0
        %v1725 = vsel %vm1713, %v1718, 0.0
        %v1726 = vsel %vm1714, %v1722, 0.0
        %v1727 = vlaneseq
        %v1728 = vshrl.u32 %v1727, 7
        %v1729 = vsub.s32 3, %v1728
        %v1730 = vrot.slane %v1648, %v1729
        %v1731 = vlaneseq
        %v1732 = vshrl.u32 %v1731, 7
        %v1733 = vsub.s32 3, %v1732
        %v1734 = vrot.slane %v1650, %v1733
        %vm1735 = vcmp.eq.s32.totalorder %v282, %v1730
        %vm1736 = vcmp.eq.s32.totalorder %v282, %v1734
        %vm1737 = vcmp.eq.s32.totalorder %v283, %v1730
        %vm1738 = vcmp.eq.s32.totalorder %v283, %v1734
        %v1739 = vlaneseq
        %v1740 = vshrl.u32 %v1739, 7
        %v1741 = vsub.s32 3, %v1740
        %v1742 = vrot.slane %v1633, %v1741
        %v1743 = vlaneseq
        %v1744 = vshrl.u32 %v1743, 7
        %v1745 = vsub.s32 3, %v1744
        %v1746 = vrot.slane %v1634, %v1745
        %v1747 = vsel %vm1735, %v1742, 0.0
        %v1748 = vsel %vm1736, %v1746, 0.0
        %v1749 = vsel %vm1737, %v1742, 0.0
        %v1750 = vsel %vm1738, %v1746, 0.0
        %v1751 = vadd.f32 %v1723, %v1747
        %v1752 = vadd.f32 %v1724, %v1748
        %v1753 = vadd.f32 %v1725, %v1749
        %v1754 = vadd.f32 %v1726, %v1750
        %v1759 = vcombine.low %v1699, %v1700
        %v1760 = vcombine.high %v1699, %v1700
        %v1762 = vunpack.c.l.s4 1966171168
        %v1763 = vunpack.c.0.s8 %v1762
        %v1764 = vlaneseq
        %v1765 = vshrl.u32 %v1764, 7
        %v1766 = vsub.s32 %v1763, %v1765
        %v1767 = vrot.slane %v1759, %v1766
        %v1769 = vunpack.c.l.s4 1966171168
        %v1770 = vunpack.c.0.s8 %v1769
        %v1771 = vlaneseq
        %v1772 = vshrl.u32 %v1771, 7
        %v1773 = vsub.s32 %v1770, %v1772
        %v1774 = vrot.slane %v1760, %v1773
        %v1775 = vcombine.high %v1767, %v1767
        %v1776 = vcombine.high %v1774, %v1774
        %v1778 = vunpack.c.l.s4 1966171168
        %v1779 = vunpack.c.0.s8 %v1778
        %v1780 = vlaneseq
        %v1781 = vshrl.u32 %v1780, 7
        %v1782 = vsub.s32 %v1779, %v1781
        %v1783 = vrot.slane %v1767, %v1782
        %v1785 = vunpack.c.l.s4 1966171168
        %v1786 = vunpack.c.0.s8 %v1785
        %v1787 = vlaneseq
        %v1788 = vshrl.u32 %v1787, 7
        %v1789 = vsub.s32 %v1786, %v1788
        %v1790 = vrot.slane %v1774, %v1789
        %v1792 = vunpack.c.l.s4 1966171168
        %v1793 = vunpack.c.0.s8 %v1792
        %v1794 = vlaneseq
        %v1795 = vshrl.u32 %v1794, 7
        %v1796 = vsub.s32 %v1793, %v1795
        %v1797 = vrot.slane %v1775, %v1796
        %v1799 = vunpack.c.l.s4 1966171168
        %v1800 = vunpack.c.0.s8 %v1799
        %v1801 = vlaneseq
        %v1802 = vshrl.u32 %v1801, 7
        %v1803 = vsub.s32 %v1800, %v1802
        %v1804 = vrot.slane %v1776, %v1803
        %v1805 = vcombine.high %v1783, %v1783
        %v1806 = vcombine.high %v1790, %v1790
        %v1807 = vcombine.high %v1797, %v1797
        %v1808 = vcombine.high %v1804, %v1804
        %v1809 = vcombine.low %v1701, %v1702
        %v1810 = vcombine.high %v1701, %v1702
        %v1812 = vunpack.c.l.s4 1966171168
        %v1813 = vunpack.c.0.s8 %v1812
        %v1814 = vlaneseq
        %v1815 = vshrl.u32 %v1814, 7
        %v1816 = vsub.s32 %v1813, %v1815
        %v1817 = vrot.slane %v1809, %v1816
        %v1819 = vunpack.c.l.s4 1966171168
        %v1820 = vunpack.c.0.s8 %v1819
        %v1821 = vlaneseq
        %v1822 = vshrl.u32 %v1821, 7
        %v1823 = vsub.s32 %v1820, %v1822
        %v1824 = vrot.slane %v1810, %v1823
        %v1825 = vcombine.high %v1817, %v1817
        %v1826 = vcombine.high %v1824, %v1824
        %v1828 = vunpack.c.l.s4 1966171168
        %v1829 = vunpack.c.0.s8 %v1828
        %v1830 = vlaneseq
        %v1831 = vshrl.u32 %v1830, 7
        %v1832 = vsub.s32 %v1829, %v1831
        %v1833 = vrot.slane %v1817, %v1832
        %v1835 = vunpack.c.l.s4 1966171168
        %v1836 = vunpack.c.0.s8 %v1835
        %v1837 = vlaneseq
        %v1838 = vshrl.u32 %v1837, 7
        %v1839 = vsub.s32 %v1836, %v1838
        %v1840 = vrot.slane %v1824, %v1839
        %v1842 = vunpack.c.l.s4 1966171168
        %v1843 = vunpack.c.0.s8 %v1842
        %v1844 = vlaneseq
        %v1845 = vshrl.u32 %v1844, 7
        %v1846 = vsub.s32 %v1843, %v1845
        %v1847 = vrot.slane %v1825, %v1846
        %v1849 = vunpack.c.l.s4 1966171168
        %v1850 = vunpack.c.0.s8 %v1849
        %v1851 = vlaneseq
        %v1852 = vshrl.u32 %v1851, 7
        %v1853 = vsub.s32 %v1850, %v1852
        %v1854 = vrot.slane %v1826, %v1853
        %v1855 = vcombine.high %v1833, %v1833
        %v1856 = vcombine.high %v1840, %v1840
        %v1857 = vcombine.high %v1847, %v1847
        %v1858 = vcombine.high %v1854, %v1854
        %v1859 = vlaneseq
        %v1860 = vshrl.u32 %v1859, 7
        %v1861 = vsub.s32 0, %v1860
        %v1862 = vrot.slane %v1783, %v1861
        %v1863 = vlaneseq
        %v1864 = vshrl.u32 %v1863, 7
        %v1865 = vsub.s32 1, %v1864
        %v1866 = vrot.slane %v1783, %v1865
        %v1867 = vlaneseq
        %v1868 = vshrl.u32 %v1867, 7
        %v1869 = vsub.s32 0, %v1868
        %v1870 = vrot.slane %v1797, %v1869
        %v1871 = vlaneseq
        %v1872 = vshrl.u32 %v1871, 7
        %v1873 = vsub.s32 1, %v1872
        %v1874 = vrot.slane %v1797, %v1873
        %v1875 = vlaneseq
        %v1876 = vshrl.u32 %v1875, 7
        %v1877 = vsub.s32 0, %v1876
        %v1878 = vrot.slane %v1805, %v1877
        %v1879 = vlaneseq
        %v1880 = vshrl.u32 %v1879, 7
        %v1881 = vsub.s32 1, %v1880
        %v1882 = vrot.slane %v1805, %v1881
        %v1883 = vlaneseq
        %v1884 = vshrl.u32 %v1883, 7
        %v1885 = vsub.s32 0, %v1884
        %v1886 = vrot.slane %v1807, %v1885
        %v1887 = vlaneseq
        %v1888 = vshrl.u32 %v1887, 7
        %v1889 = vsub.s32 1, %v1888
        %v1890 = vrot.slane %v1807, %v1889
        %v1891 = vlaneseq
        %v1892 = vshrl.u32 %v1891, 7
        %v1893 = vsub.s32 0, %v1892
        %v1894 = vrot.slane %v1790, %v1893
        %v1895 = vlaneseq
        %v1896 = vshrl.u32 %v1895, 7
        %v1897 = vsub.s32 1, %v1896
        %v1898 = vrot.slane %v1790, %v1897
        %v1899 = vlaneseq
        %v1900 = vshrl.u32 %v1899, 7
        %v1901 = vsub.s32 0, %v1900
        %v1902 = vrot.slane %v1804, %v1901
        %v1903 = vlaneseq
        %v1904 = vshrl.u32 %v1903, 7
        %v1905 = vsub.s32 1, %v1904
        %v1906 = vrot.slane %v1804, %v1905
        %v1907 = vlaneseq
        %v1908 = vshrl.u32 %v1907, 7
        %v1909 = vsub.s32 0, %v1908
        %v1910 = vrot.slane %v1806, %v1909
        %v1911 = vlaneseq
        %v1912 = vshrl.u32 %v1911, 7
        %v1913 = vsub.s32 1, %v1912
        %v1914 = vrot.slane %v1806, %v1913
        %v1915 = vlaneseq
        %v1916 = vshrl.u32 %v1915, 7
        %v1917 = vsub.s32 0, %v1916
        %v1918 = vrot.slane %v1808, %v1917
        %v1919 = vlaneseq
        %v1920 = vshrl.u32 %v1919, 7
        %v1921 = vsub.s32 1, %v1920
        %v1922 = vrot.slane %v1808, %v1921
        %v1923 = vlaneseq
        %v1924 = vshrl.u32 %v1923, 7
        %v1925 = vsub.s32 0, %v1924
        %v1926 = vrot.slane %v1833, %v1925
        %v1927 = vlaneseq
        %v1928 = vshrl.u32 %v1927, 7
        %v1929 = vsub.s32 1, %v1928
        %v1930 = vrot.slane %v1833, %v1929
        %v1931 = vlaneseq
        %v1932 = vshrl.u32 %v1931, 7
        %v1933 = vsub.s32 0, %v1932
        %v1934 = vrot.slane %v1847, %v1933
        %v1935 = vlaneseq
        %v1936 = vshrl.u32 %v1935, 7
        %v1937 = vsub.s32 1, %v1936
        %v1938 = vrot.slane %v1847, %v1937
        %v1939 = vlaneseq
        %v1940 = vshrl.u32 %v1939, 7
        %v1941 = vsub.s32 0, %v1940
        %v1942 = vrot.slane %v1855, %v1941
        %v1943 = vlaneseq
        %v1944 = vshrl.u32 %v1943, 7
        %v1945 = vsub.s32 1, %v1944
        %v1946 = vrot.slane %v1855, %v1945
        %v1947 = vlaneseq
        %v1948 = vshrl.u32 %v1947, 7
        %v1949 = vsub.s32 0, %v1948
        %v1950 = vrot.slane %v1857, %v1949
        %v1951 = vlaneseq
        %v1952 = vshrl.u32 %v1951, 7
        %v1953 = vsub.s32 1, %v1952
        %v1954 = vrot.slane %v1857, %v1953
        %v1955 = vlaneseq
        %v1956 = vshrl.u32 %v1955, 7
        %v1957 = vsub.s32 0, %v1956
        %v1958 = vrot.slane %v1840, %v1957
        %v1959 = vlaneseq
        %v1960 = vshrl.u32 %v1959, 7
        %v1961 = vsub.s32 1, %v1960
        %v1962 = vrot.slane %v1840, %v1961
        %v1963 = vlaneseq
        %v1964 = vshrl.u32 %v1963, 7
        %v1965 = vsub.s32 0, %v1964
        %v1966 = vrot.slane %v1854, %v1965
        %v1967 = vlaneseq
        %v1968 = vshrl.u32 %v1967, 7
        %v1969 = vsub.s32 1, %v1968
        %v1970 = vrot.slane %v1854, %v1969
        %v1971 = vlaneseq
        %v1972 = vshrl.u32 %v1971, 7
        %v1973 = vsub.s32 0, %v1972
        %v1974 = vrot.slane %v1856, %v1973
        %v1975 = vlaneseq
        %v1976 = vshrl.u32 %v1975, 7
        %v1977 = vsub.s32 1, %v1976
        %v1978 = vrot.slane %v1856, %v1977
        %v1979 = vlaneseq
        %v1980 = vshrl.u32 %v1979, 7
        %v1981 = vsub.s32 0, %v1980
        %v1982 = vrot.slane %v1858, %v1981
        %v1983 = vlaneseq
        %v1984 = vshrl.u32 %v1983, 7
        %v1985 = vsub.s32 1, %v1984
        %v1986 = vrot.slane %v1858, %v1985
        %v2019 = vmul.f32 %v1862, %v1751
        %v2020 = vmul.f32 %v1866, %v1752
        %v2021 = vmul.f32 %v1862, %v1753
        %v2022 = vmul.f32 %v1866, %v1754
        %v2023 = vmul.f32 %v1870, %v1751
        %v2024 = vmul.f32 %v1874, %v1752
        %v2025 = vmul.f32 %v1870, %v1753
        %v2026 = vmul.f32 %v1874, %v1754
        %v2027 = vmul.f32 %v1878, %v1751
        %v2028 = vmul.f32 %v1882, %v1752
        %v2029 = vmul.f32 %v1878, %v1753
        %v2030 = vmul.f32 %v1882, %v1754
        %v2031 = vmul.f32 %v1886, %v1751
        %v2032 = vmul.f32 %v1890, %v1752
        %v2033 = vmul.f32 %v1886, %v1753
        %v2034 = vmul.f32 %v1890, %v1754
        %v2035 = vmul.f32 %v1894, %v1751
        %v2036 = vmul.f32 %v1898, %v1752
        %v2037 = vmul.f32 %v1894, %v1753
        %v2038 = vmul.f32 %v1898, %v1754
        %v2039 = vmul.f32 %v1902, %v1751
        %v2040 = vmul.f32 %v1906, %v1752
        %v2041 = vmul.f32 %v1902, %v1753
        %v2042 = vmul.f32 %v1906, %v1754
        %v2043 = vmul.f32 %v1910, %v1751
        %v2044 = vmul.f32 %v1914, %v1752
        %v2045 = vmul.f32 %v1910, %v1753
        %v2046 = vmul.f32 %v1914, %v1754
        %v2047 = vmul.f32 %v1918, %v1751
        %v2048 = vmul.f32 %v1922, %v1752
        %v2049 = vmul.f32 %v1918, %v1753
        %v2050 = vmul.f32 %v1922, %v1754
        %v2051 = vmul.f32 %v1926, %v1751
        %v2052 = vmul.f32 %v1930, %v1752
        %v2053 = vmul.f32 %v1926, %v1753
        %v2054 = vmul.f32 %v1930, %v1754
        %v2055 = vmul.f32 %v1934, %v1751
        %v2056 = vmul.f32 %v1938, %v1752
        %v2057 = vmul.f32 %v1934, %v1753
        %v2058 = vmul.f32 %v1938, %v1754
        %v2059 = vmul.f32 %v1942, %v1751
        %v2060 = vmul.f32 %v1946, %v1752
        %v2061 = vmul.f32 %v1942, %v1753
        %v2062 = vmul.f32 %v1946, %v1754
        %v2063 = vmul.f32 %v1950, %v1751
        %v2064 = vmul.f32 %v1954, %v1752
        %v2065 = vmul.f32 %v1950, %v1753
        %v2066 = vmul.f32 %v1954, %v1754
        %v2067 = vmul.f32 %v1958, %v1751
        %v2068 = vmul.f32 %v1962, %v1752
        %v2069 = vmul.f32 %v1958, %v1753
        %v2070 = vmul.f32 %v1962, %v1754
        %v2071 = vmul.f32 %v1966, %v1751
        %v2072 = vmul.f32 %v1970, %v1752
        %v2073 = vmul.f32 %v1966, %v1753
        %v2074 = vmul.f32 %v1970, %v1754
        %v2075 = vmul.f32 %v1974, %v1751
        %v2076 = vmul.f32 %v1978, %v1752
        %v2077 = vmul.f32 %v1974, %v1753
        %v2078 = vmul.f32 %v1978, %v1754
        %v2079 = vmul.f32 %v1982, %v1751
        %v2080 = vmul.f32 %v1986, %v1752
        %v2081 = vmul.f32 %v1982, %v1753
        %v2082 = vmul.f32 %v1986, %v1754
        %2083 = vmatprep.subr.mxu0 %v2020
        %2084 = vmatpush1.msra.mxu0 %v2019
        %2085 = vmatprep.subr.mxu0 %v2022
        %2086 = vmatpush1.msra.mxu0 %v2021
        %2087 = vmatprep.subr.mxu0 %v2024
        %2088 = vmatpush1.msra.mxu0 %v2023
        %2089 = vmatprep.subr.mxu0 %v2026
        %2090 = vmatpush1.msra.mxu0 %v2025
        %2091 = vmatprep.subr.mxu0 %v2028
        %2092 = vmatpush1.msra.mxu0 %v2027
        %2093 = vmatprep.subr.mxu0 %v2030
        %2094 = vmatpush1.msra.mxu0 %v2029
        %2095 = vmatprep.subr.mxu0 %v2032
        %2096 = vmatpush1.msra.mxu0 %v2031
        %2097 = vmatprep.subr.mxu0 %v2034
        %2098 = vmatpush1.msra.mxu0 %v2033
        %2099 = vmatprep.subr.mxu0 %v2036
        %2100 = vmatpush1.msra.mxu0 %v2035
        %2101 = vmatprep.subr.mxu0 %v2038
        %2102 = vmatpush1.msra.mxu0 %v2037
        %2103 = vmatprep.subr.mxu0 %v2040
        %2104 = vmatpush1.msra.mxu0 %v2039
        %2105 = vmatprep.subr.mxu0 %v2042
        %2106 = vmatpush1.msra.mxu0 %v2041
        %2107 = vmatprep.subr.mxu0 %v2044
        %2108 = vmatpush1.msra.mxu0 %v2043
        %2109 = vmatprep.subr.mxu0 %v2046
        %2110 = vmatpush1.msra.mxu0 %v2045
        %2111 = vmatprep.subr.mxu0 %v2048
        %2112 = vmatpush1.msra.mxu0 %v2047
        %2113 = vmatprep.subr.mxu0 %v2050
        %2114 = vmatpush1.msra.mxu0 %v2049
        %2115 = vmatprep.subr.mxu0 %v2052
        %2116 = vmatpush1.msra.mxu0 %v2051
        %2117 = vmatprep.subr.mxu0 %v2054
        %2118 = vmatpush1.msra.mxu0 %v2053
        %2119 = vmatprep.subr.mxu0 %v2056
        %2120 = vmatpush1.msra.mxu0 %v2055
        %2121 = vmatprep.subr.mxu0 %v2058
        %2122 = vmatpush1.msra.mxu0 %v2057
        %2123 = vmatprep.subr.mxu0 %v2060
        %2124 = vmatpush1.msra.mxu0 %v2059
        %2125 = vmatprep.subr.mxu0 %v2062
        %2126 = vmatpush1.msra.mxu0 %v2061
        %2127 = vmatprep.subr.mxu0 %v2064
        %2128 = vmatpush1.msra.mxu0 %v2063
        %2129 = vmatprep.subr.mxu0 %v2066
        %2130 = vmatpush1.msra.mxu0 %v2065
        %2131 = vmatprep.subr.mxu0 %v2068
        %2132 = vmatpush1.msra.mxu0 %v2067
        %2133 = vmatprep.subr.mxu0 %v2070
        %2134 = vmatpush1.msra.mxu0 %v2069
        %2135 = vmatprep.subr.mxu0 %v2072
        %2136 = vmatpush1.msra.mxu0 %v2071
        %2137 = vmatprep.subr.mxu0 %v2074
        %2138 = vmatpush1.msra.mxu0 %v2073
        %2139 = vmatprep.subr.mxu0 %v2076
        %2140 = vmatpush1.msra.mxu0 %v2075
        %2141 = vmatprep.subr.mxu0 %v2078
        %2142 = vmatpush1.msra.mxu0 %v2077
        %2143 = vmatprep.subr.mxu0 %v2080
        %2144 = vmatpush1.msra.mxu0 %v2079
        %2145 = vmatprep.subr.mxu0 %v2082
        %2146 = vmatpush1.msra.mxu0 %v2081
        %2147 = vmatprep.mubr.f32.mxu0 %v873
        %2148 = vmatmul.mubr.f32.gmra.mrb[0].mxu0 %v247
        %v2149 = vpop.f32.mrb[0].mxu0
        %v2150 = vadd.f32 0.0, %v2149
        %v2151 = vpop.f32.mrb[0].mxu0
        %v2152 = vadd.f32 0.0, %v2151
        %2153 = vdwg.mxu0
        %2154 = vst [vmem:[#allocation2 + $0x10] sm:$0xf] %v2150
        %2155 = vst [vmem:[#allocation2 + $0x18] sm:$0xf] %v2152
        %v2156 = vadd.f32 %v277, 0.0
        %v2157 = vadd.f32 %v278, 0.0
        %v2158 = vadd.f32 %v2156, %v248
        %v2159 = vadd.f32 %v2157, %v249
        %vm2160 = vcmp.gt.f32.partialorder %v2158, -1.0
        %vm2161 = vcmp.gt.f32.partialorder %v2159, -1.0
        %vm2162 = vcmp.lt.f32.partialorder %v2158, 16.0
        %vm2163 = vcmp.lt.f32.partialorder %v2159, 16.0
        %vm2164 = vmand %vm2160, %vm2162
        %vm2165 = vmand %vm2161, %vm2163
        %vm2166 = vmand %vm2164, %vm304
        %vm2167 = vmand %vm2165, %vm305
        %vm2168 = vmand %vm2166, %vm314
        %vm2169 = vmand %vm2167, %vm315
        %v2170 = vsel %vm2168, 1, 0
        %v2171 = vsel %vm2169, 1, 0
        %v2172 = vcvt.s32.f32 %v2170
        %v2173 = vcvt.s32.f32 %v2171
        %v2176 = vrot.slane %v2172, 6
        %v2177 = vrot.slane %v2173, 6
        %v2180 = vmul.f32 %v252, %v2176
        %v2181 = vmul.f32 %v253, %v2177
        %v2182 = vfloor.f32 %v2158
        %v2183 = vfloor.f32 %v2159
        %v2184 = vsub.f32 %v2158, %v2182
        %v2185 = vsub.f32 %v2159, %v2183
        %v2186 = vcvt.f32.s32.to.zero.pseudo %v2182
        %v2187 = vcvt.f32.s32.to.zero.pseudo %v2183
        %v2188 = vadd.s32 %v2186, 1
        %v2189 = vadd.s32 %v2187, 1
        %v2190 = vsub.f32 1.0, %v2184
        %v2191 = vsub.f32 1.0, %v2185
        %vm2192 = vcmp.ge.s32.totalorder %v2186, 0
        %vm2193 = vcmp.ge.s32.totalorder %v2187, 0
        %vm2194 = vcmp.le.s32.totalorder %v2186, 15
        %vm2195 = vcmp.le.s32.totalorder %v2187, 15
        %vm2196 = vmand %vm2192, %vm2194
        %vm2197 = vmand %vm2193, %vm2195
        %v2198 = vsel %vm2196, 1, 0
        %v2199 = vsel %vm2197, 1, 0
        %v2200 = vcvt.s32.f32 %v2198
        %v2201 = vcvt.s32.f32 %v2199
        %v2202 = vmul.f32 %v2190, %v2200
        %v2203 = vmul.f32 %v2191, %v2201
        %v2206 = vrot.slane %v2180, 2
        %v2207 = vrot.slane %v2181, 2
        %v2210 = vmul.f32 %v2202, %v2206
        %v2211 = vmul.f32 %v2203, %v2207
        %vm2212 = vcmp.ge.s32.totalorder %v2188, 0
        %vm2213 = vcmp.ge.s32.totalorder %v2189, 0
        %vm2214 = vcmp.le.s32.totalorder %v2188, 15
        %vm2215 = vcmp.le.s32.totalorder %v2189, 15
        %vm2216 = vmand %vm2212, %vm2214
        %vm2217 = vmand %vm2213, %vm2215
        %v2218 = vsel %vm2216, 1, 0
        %v2219 = vsel %vm2217, 1, 0
        %v2220 = vcvt.s32.f32 %v2218
        %v2221 = vcvt.s32.f32 %v2219
        %v2222 = vmul.f32 %v2184, %v2220
        %v2223 = vmul.f32 %v2185, %v2221
        %v2224 = vmul.f32 %v2222, %v2206
        %v2225 = vmul.f32 %v2223, %v2207
        %vm2226 = vcmp.gt.s32.totalorder %v2186, 0
        %v2227 = vsel %vm2226, %v2186, 0
        %vm2228 = vcmp.gt.s32.totalorder %v2187, 0
        %v2229 = vsel %vm2228, %v2187, 0
        %vm2230 = vcmp.lt.s32.totalorder %v2227, 15
        %v2231 = vsel %vm2230, %v2227, 15
        %vm2232 = vcmp.lt.s32.totalorder %v2229, 15
        %v2233 = vsel %vm2232, %v2229, 15
        %vm2234 = vcmp.gt.s32.totalorder %v2188, 0
        %v2235 = vsel %vm2234, %v2188, 0
        %vm2236 = vcmp.gt.s32.totalorder %v2189, 0
        %v2237 = vsel %vm2236, %v2189, 0
        %vm2238 = vcmp.lt.s32.totalorder %v2235, 15
        %v2239 = vsel %vm2238, %v2235, 15
        %vm2240 = vcmp.lt.s32.totalorder %v2237, 15
        %v2241 = vsel %vm2240, %v2237, 15
        %v2242 = vlaneseq
        %v2243 = vshrl.u32 %v2242, 7
        %v2244 = vsub.s32 3, %v2243
        %v2245 = vrot.slane %v2231, %v2244
        %v2246 = vlaneseq
        %v2247 = vshrl.u32 %v2246, 7
        %v2248 = vsub.s32 3, %v2247
        %v2249 = vrot.slane %v2233, %v2248
        %vm2250 = vcmp.eq.s32.totalorder %v282, %v2245
        %vm2251 = vcmp.eq.s32.totalorder %v282, %v2249
        %vm2252 = vcmp.eq.s32.totalorder %v283, %v2245
        %vm2253 = vcmp.eq.s32.totalorder %v283, %v2249
        %v2254 = vlaneseq
        %v2255 = vshrl.u32 %v2254, 7
        %v2256 = vsub.s32 3, %v2255
        %v2257 = vrot.slane %v2210, %v2256
        %v2258 = vlaneseq
        %v2259 = vshrl.u32 %v2258, 7
        %v2260 = vsub.s32 3, %v2259
        %v2261 = vrot.slane %v2211, %v2260
        %v2262 = vsel %vm2250, %v2257, 0.0
        %v2263 = vsel %vm2251, %v2261, 0.0
        %v2264 = vsel %vm2252, %v2257, 0.0
        %v2265 = vsel %vm2253, %v2261, 0.0
        %v2266 = vlaneseq
        %v2267 = vshrl.u32 %v2266, 7
        %v2268 = vsub.s32 3, %v2267
        %v2269 = vrot.slane %v2239, %v2268
        %v2270 = vlaneseq
        %v2271 = vshrl.u32 %v2270, 7
        %v2272 = vsub.s32 3, %v2271
        %v2273 = vrot.slane %v2241, %v2272
        %vm2274 = vcmp.eq.s32.totalorder %v282, %v2269
        %vm2275 = vcmp.eq.s32.totalorder %v282, %v2273
        %vm2276 = vcmp.eq.s32.totalorder %v283, %v2269
        %vm2277 = vcmp.eq.s32.totalorder %v283, %v2273
        %v2278 = vlaneseq
        %v2279 = vshrl.u32 %v2278, 7
        %v2280 = vsub.s32 3, %v2279
        %v2281 = vrot.slane %v2224, %v2280
        %v2282 = vlaneseq
        %v2283 = vshrl.u32 %v2282, 7
        %v2284 = vsub.s32 3, %v2283
        %v2285 = vrot.slane %v2225, %v2284
        %v2286 = vsel %vm2274, %v2281, 0.0
        %v2287 = vsel %vm2275, %v2285, 0.0
        %v2288 = vsel %vm2276, %v2281, 0.0
        %v2289 = vsel %vm2277, %v2285, 0.0
        %v2290 = vadd.f32 %v2262, %v2286
        %v2291 = vadd.f32 %v2263, %v2287
        %v2292 = vadd.f32 %v2264, %v2288
        %v2293 = vadd.f32 %v2265, %v2289
        %v2294 = vlaneseq
        %v2295 = vshrl.u32 %v2294, 7
        %v2296 = vsub.s32 4, %v2295
        %v2297 = vrot.slane %v429, %v2296
        %v2298 = vlaneseq
        %v2299 = vshrl.u32 %v2298, 7
        %v2300 = vsub.s32 4, %v2299
        %v2301 = vrot.slane %v431, %v2300
        %vm2302 = vcmp.eq.s32.totalorder %v282, %v2297
        %vm2303 = vcmp.eq.s32.totalorder %v282, %v2301
        %vm2304 = vcmp.eq.s32.totalorder %v283, %v2297
        %vm2305 = vcmp.eq.s32.totalorder %v283, %v2301
        %v2306 = vlaneseq
        %v2307 = vshrl.u32 %v2306, 7
        %v2308 = vsub.s32 4, %v2307
        %v2309 = vrot.slane %v394, %v2308
        %v2310 = vlaneseq
        %v2311 = vshrl.u32 %v2310, 7
        %v2312 = vsub.s32 4, %v2311
        %v2313 = vrot.slane %v395, %v2312
        %v2314 = vsel %vm2302, %v2309, 0.0
        %v2315 = vsel %vm2303, %v2313, 0.0
        %v2316 = vsel %vm2304, %v2309, 0.0
        %v2317 = vsel %vm2305, %v2313, 0.0
        %v2318 = vlaneseq
        %v2319 = vshrl.u32 %v2318, 7
        %v2320 = vsub.s32 4, %v2319
        %v2321 = vrot.slane %v437, %v2320
        %v2322 = vlaneseq
        %v2323 = vshrl.u32 %v2322, 7
        %v2324 = vsub.s32 4, %v2323
        %v2325 = vrot.slane %v439, %v2324
        %vm2326 = vcmp.eq.s32.totalorder %v282, %v2321
        %vm2327 = vcmp.eq.s32.totalorder %v282, %v2325
        %vm2328 = vcmp.eq.s32.totalorder %v283, %v2321
        %vm2329 = vcmp.eq.s32.totalorder %v283, %v2325
        %v2330 = vlaneseq
        %v2331 = vshrl.u32 %v2330, 7
        %v2332 = vsub.s32 4, %v2331
        %v2333 = vrot.slane %v406, %v2332
        %v2334 = vlaneseq
        %v2335 = vshrl.u32 %v2334, 7
        %v2336 = vsub.s32 4, %v2335
        %v2337 = vrot.slane %v407, %v2336
        %v2338 = vsel %vm2326, %v2333, 0.0
        %v2339 = vsel %vm2327, %v2337, 0.0
        %v2340 = vsel %vm2328, %v2333, 0.0
        %v2341 = vsel %vm2329, %v2337, 0.0
        %v2342 = vadd.f32 %v2314, %v2338
        %v2343 = vadd.f32 %v2315, %v2339
        %v2344 = vadd.f32 %v2316, %v2340
        %v2345 = vadd.f32 %v2317, %v2341
        %v2350 = vcombine.low %v2290, %v2291
        %v2351 = vcombine.high %v2290, %v2291
        %v2353 = vunpack.c.l.s4 1966171168
        %v2354 = vunpack.c.0.s8 %v2353
        %v2355 = vlaneseq
        %v2356 = vshrl.u32 %v2355, 7
        %v2357 = vsub.s32 %v2354, %v2356
        %v2358 = vrot.slane %v2350, %v2357
        %v2360 = vunpack.c.l.s4 1966171168
        %v2361 = vunpack.c.0.s8 %v2360
        %v2362 = vlaneseq
        %v2363 = vshrl.u32 %v2362, 7
        %v2364 = vsub.s32 %v2361, %v2363
        %v2365 = vrot.slane %v2351, %v2364
        %v2366 = vcombine.high %v2358, %v2358
        %v2367 = vcombine.high %v2365, %v2365
        %v2369 = vunpack.c.l.s4 1966171168
        %v2370 = vunpack.c.0.s8 %v2369
        %v2371 = vlaneseq
        %v2372 = vshrl.u32 %v2371, 7
        %v2373 = vsub.s32 %v2370, %v2372
        %v2374 = vrot.slane %v2358, %v2373
        %v2376 = vunpack.c.l.s4 1966171168
        %v2377 = vunpack.c.0.s8 %v2376
        %v2378 = vlaneseq
        %v2379 = vshrl.u32 %v2378, 7
        %v2380 = vsub.s32 %v2377, %v2379
        %v2381 = vrot.slane %v2365, %v2380
        %v2383 = vunpack.c.l.s4 1966171168
        %v2384 = vunpack.c.0.s8 %v2383
        %v2385 = vlaneseq
        %v2386 = vshrl.u32 %v2385, 7
        %v2387 = vsub.s32 %v2384, %v2386
        %v2388 = vrot.slane %v2366, %v2387
        %v2390 = vunpack.c.l.s4 1966171168
        %v2391 = vunpack.c.0.s8 %v2390
        %v2392 = vlaneseq
        %v2393 = vshrl.u32 %v2392, 7
        %v2394 = vsub.s32 %v2391, %v2393
        %v2395 = vrot.slane %v2367, %v2394
        %v2396 = vcombine.high %v2374, %v2374
        %v2397 = vcombine.high %v2381, %v2381
        %v2398 = vcombine.high %v2388, %v2388
        %v2399 = vcombine.high %v2395, %v2395
        %v2400 = vcombine.low %v2292, %v2293
        %v2401 = vcombine.high %v2292, %v2293
        %v2403 = vunpack.c.l.s4 1966171168
        %v2404 = vunpack.c.0.s8 %v2403
        %v2405 = vlaneseq
        %v2406 = vshrl.u32 %v2405, 7
        %v2407 = vsub.s32 %v2404, %v2406
        %v2408 = vrot.slane %v2400, %v2407
        %v2410 = vunpack.c.l.s4 1966171168
        %v2411 = vunpack.c.0.s8 %v2410
        %v2412 = vlaneseq
        %v2413 = vshrl.u32 %v2412, 7
        %v2414 = vsub.s32 %v2411, %v2413
        %v2415 = vrot.slane %v2401, %v2414
        %v2416 = vcombine.high %v2408, %v2408
        %v2417 = vcombine.high %v2415, %v2415
        %v2419 = vunpack.c.l.s4 1966171168
        %v2420 = vunpack.c.0.s8 %v2419
        %v2421 = vlaneseq
        %v2422 = vshrl.u32 %v2421, 7
        %v2423 = vsub.s32 %v2420, %v2422
        %v2424 = vrot.slane %v2408, %v2423
        %v2426 = vunpack.c.l.s4 1966171168
        %v2427 = vunpack.c.0.s8 %v2426
        %v2428 = vlaneseq
        %v2429 = vshrl.u32 %v2428, 7
        %v2430 = vsub.s32 %v2427, %v2429
        %v2431 = vrot.slane %v2415, %v2430
        %v2433 = vunpack.c.l.s4 1966171168
        %v2434 = vunpack.c.0.s8 %v2433
        %v2435 = vlaneseq
        %v2436 = vshrl.u32 %v2435, 7
        %v2437 = vsub.s32 %v2434, %v2436
        %v2438 = vrot.slane %v2416, %v2437
        %v2440 = vunpack.c.l.s4 1966171168
        %v2441 = vunpack.c.0.s8 %v2440
        %v2442 = vlaneseq
        %v2443 = vshrl.u32 %v2442, 7
        %v2444 = vsub.s32 %v2441, %v2443
        %v2445 = vrot.slane %v2417, %v2444
        %v2446 = vcombine.high %v2424, %v2424
        %v2447 = vcombine.high %v2431, %v2431
        %v2448 = vcombine.high %v2438, %v2438
        %v2449 = vcombine.high %v2445, %v2445
        %v2450 = vlaneseq
        %v2451 = vshrl.u32 %v2450, 7
        %v2452 = vsub.s32 0, %v2451
        %v2453 = vrot.slane %v2374, %v2452
        %v2454 = vlaneseq
        %v2455 = vshrl.u32 %v2454, 7
        %v2456 = vsub.s32 1, %v2455
        %v2457 = vrot.slane %v2374, %v2456
        %v2458 = vlaneseq
        %v2459 = vshrl.u32 %v2458, 7
        %v2460 = vsub.s32 0, %v2459
        %v2461 = vrot.slane %v2388, %v2460
        %v2462 = vlaneseq
        %v2463 = vshrl.u32 %v2462, 7
        %v2464 = vsub.s32 1, %v2463
        %v2465 = vrot.slane %v2388, %v2464
        %v2466 = vlaneseq
        %v2467 = vshrl.u32 %v2466, 7
        %v2468 = vsub.s32 0, %v2467
        %v2469 = vrot.slane %v2396, %v2468
        %v2470 = vlaneseq
        %v2471 = vshrl.u32 %v2470, 7
        %v2472 = vsub.s32 1, %v2471
        %v2473 = vrot.slane %v2396, %v2472
        %v2474 = vlaneseq
        %v2475 = vshrl.u32 %v2474, 7
        %v2476 = vsub.s32 0, %v2475
        %v2477 = vrot.slane %v2398, %v2476
        %v2478 = vlaneseq
        %v2479 = vshrl.u32 %v2478, 7
        %v2480 = vsub.s32 1, %v2479
        %v2481 = vrot.slane %v2398, %v2480
        %v2482 = vlaneseq
        %v2483 = vshrl.u32 %v2482, 7
        %v2484 = vsub.s32 0, %v2483
        %v2485 = vrot.slane %v2381, %v2484
        %v2486 = vlaneseq
        %v2487 = vshrl.u32 %v2486, 7
        %v2488 = vsub.s32 1, %v2487
        %v2489 = vrot.slane %v2381, %v2488
        %v2490 = vlaneseq
        %v2491 = vshrl.u32 %v2490, 7
        %v2492 = vsub.s32 0, %v2491
        %v2493 = vrot.slane %v2395, %v2492
        %v2494 = vlaneseq
        %v2495 = vshrl.u32 %v2494, 7
        %v2496 = vsub.s32 1, %v2495
        %v2497 = vrot.slane %v2395, %v2496
        %v2498 = vlaneseq
        %v2499 = vshrl.u32 %v2498, 7
        %v2500 = vsub.s32 0, %v2499
        %v2501 = vrot.slane %v2397, %v2500
        %v2502 = vlaneseq
        %v2503 = vshrl.u32 %v2502, 7
        %v2504 = vsub.s32 1, %v2503
        %v2505 = vrot.slane %v2397, %v2504
        %v2506 = vlaneseq
        %v2507 = vshrl.u32 %v2506, 7
        %v2508 = vsub.s32 0, %v2507
        %v2509 = vrot.slane %v2399, %v2508
        %v2510 = vlaneseq
        %v2511 = vshrl.u32 %v2510, 7
        %v2512 = vsub.s32 1, %v2511
        %v2513 = vrot.slane %v2399, %v2512
        %v2514 = vlaneseq
        %v2515 = vshrl.u32 %v2514, 7
        %v2516 = vsub.s32 0, %v2515
        %v2517 = vrot.slane %v2424, %v2516
        %v2518 = vlaneseq
        %v2519 = vshrl.u32 %v2518, 7
        %v2520 = vsub.s32 1, %v2519
        %v2521 = vrot.slane %v2424, %v2520
        %v2522 = vlaneseq
        %v2523 = vshrl.u32 %v2522, 7
        %v2524 = vsub.s32 0, %v2523
        %v2525 = vrot.slane %v2438, %v2524
        %v2526 = vlaneseq
        %v2527 = vshrl.u32 %v2526, 7
        %v2528 = vsub.s32 1, %v2527
        %v2529 = vrot.slane %v2438, %v2528
        %v2530 = vlaneseq
        %v2531 = vshrl.u32 %v2530, 7
        %v2532 = vsub.s32 0, %v2531
        %v2533 = vrot.slane %v2446, %v2532
        %v2534 = vlaneseq
        %v2535 = vshrl.u32 %v2534, 7
        %v2536 = vsub.s32 1, %v2535
        %v2537 = vrot.slane %v2446, %v2536
        %v2538 = vlaneseq
        %v2539 = vshrl.u32 %v2538, 7
        %v2540 = vsub.s32 0, %v2539
        %v2541 = vrot.slane %v2448, %v2540
        %v2542 = vlaneseq
        %v2543 = vshrl.u32 %v2542, 7
        %v2544 = vsub.s32 1, %v2543
        %v2545 = vrot.slane %v2448, %v2544
        %v2546 = vlaneseq
        %v2547 = vshrl.u32 %v2546, 7
        %v2548 = vsub.s32 0, %v2547
        %v2549 = vrot.slane %v2431, %v2548
        %v2550 = vlaneseq
        %v2551 = vshrl.u32 %v2550, 7
        %v2552 = vsub.s32 1, %v2551
        %v2553 = vrot.slane %v2431, %v2552
        %v2554 = vlaneseq
        %v2555 = vshrl.u32 %v2554, 7
        %v2556 = vsub.s32 0, %v2555
        %v2557 = vrot.slane %v2445, %v2556
        %v2558 = vlaneseq
        %v2559 = vshrl.u32 %v2558, 7
        %v2560 = vsub.s32 1, %v2559
        %v2561 = vrot.slane %v2445, %v2560
        %v2562 = vlaneseq
        %v2563 = vshrl.u32 %v2562, 7
        %v2564 = vsub.s32 0, %v2563
        %v2565 = vrot.slane %v2447, %v2564
        %v2566 = vlaneseq
        %v2567 = vshrl.u32 %v2566, 7
        %v2568 = vsub.s32 1, %v2567
        %v2569 = vrot.slane %v2447, %v2568
        %v2570 = vlaneseq
        %v2571 = vshrl.u32 %v2570, 7
        %v2572 = vsub.s32 0, %v2571
        %v2573 = vrot.slane %v2449, %v2572
        %v2574 = vlaneseq
        %v2575 = vshrl.u32 %v2574, 7
        %v2576 = vsub.s32 1, %v2575
        %v2577 = vrot.slane %v2449, %v2576
        %v2610 = vmul.f32 %v2453, %v2342
        %v2611 = vmul.f32 %v2457, %v2343
        %v2612 = vmul.f32 %v2453, %v2344
        %v2613 = vmul.f32 %v2457, %v2345
        %v2614 = vmul.f32 %v2461, %v2342
        %v2615 = vmul.f32 %v2465, %v2343
        %v2616 = vmul.f32 %v2461, %v2344
        %v2617 = vmul.f32 %v2465, %v2345
        %v2618 = vmul.f32 %v2469, %v2342
        %v2619 = vmul.f32 %v2473, %v2343
        %v2620 = vmul.f32 %v2469, %v2344
        %v2621 = vmul.f32 %v2473, %v2345
        %v2622 = vmul.f32 %v2477, %v2342
        %v2623 = vmul.f32 %v2481, %v2343
        %v2624 = vmul.f32 %v2477, %v2344
        %v2625 = vmul.f32 %v2481, %v2345
        %v2626 = vmul.f32 %v2485, %v2342
        %v2627 = vmul.f32 %v2489, %v2343
        %v2628 = vmul.f32 %v2485, %v2344
        %v2629 = vmul.f32 %v2489, %v2345
        %v2630 = vmul.f32 %v2493, %v2342
        %v2631 = vmul.f32 %v2497, %v2343
        %v2632 = vmul.f32 %v2493, %v2344
        %v2633 = vmul.f32 %v2497, %v2345
        %v2634 = vmul.f32 %v2501, %v2342
        %v2635 = vmul.f32 %v2505, %v2343
        %v2636 = vmul.f32 %v2501, %v2344
        %v2637 = vmul.f32 %v2505, %v2345
        %v2638 = vmul.f32 %v2509, %v2342
        %v2639 = vmul.f32 %v2513, %v2343
        %v2640 = vmul.f32 %v2509, %v2344
        %v2641 = vmul.f32 %v2513, %v2345
        %v2642 = vmul.f32 %v2517, %v2342
        %v2643 = vmul.f32 %v2521, %v2343
        %v2644 = vmul.f32 %v2517, %v2344
        %v2645 = vmul.f32 %v2521, %v2345
        %v2646 = vmul.f32 %v2525, %v2342
        %v2647 = vmul.f32 %v2529, %v2343
        %v2648 = vmul.f32 %v2525, %v2344
        %v2649 = vmul.f32 %v2529, %v2345
        %v2650 = vmul.f32 %v2533, %v2342
        %v2651 = vmul.f32 %v2537, %v2343
        %v2652 = vmul.f32 %v2533, %v2344
        %v2653 = vmul.f32 %v2537, %v2345
        %v2654 = vmul.f32 %v2541, %v2342
        %v2655 = vmul.f32 %v2545, %v2343
        %v2656 = vmul.f32 %v2541, %v2344
        %v2657 = vmul.f32 %v2545, %v2345
        %v2658 = vmul.f32 %v2549, %v2342
        %v2659 = vmul.f32 %v2553, %v2343
        %v2660 = vmul.f32 %v2549, %v2344
        %v2661 = vmul.f32 %v2553, %v2345
        %v2662 = vmul.f32 %v2557, %v2342
        %v2663 = vmul.f32 %v2561, %v2343
        %v2664 = vmul.f32 %v2557, %v2344
        %v2665 = vmul.f32 %v2561, %v2345
        %v2666 = vmul.f32 %v2565, %v2342
        %v2667 = vmul.f32 %v2569, %v2343
        %v2668 = vmul.f32 %v2565, %v2344
        %v2669 = vmul.f32 %v2569, %v2345
        %v2670 = vmul.f32 %v2573, %v2342
        %v2671 = vmul.f32 %v2577, %v2343
        %v2672 = vmul.f32 %v2573, %v2344
        %v2673 = vmul.f32 %v2577, %v2345
        %2674 = vmatprep.subr.mxu0 %v2611
        %2675 = vmatpush1.msra.mxu0 %v2610
        %2676 = vmatprep.subr.mxu0 %v2613
        %2677 = vmatpush1.msra.mxu0 %v2612
        %2678 = vmatprep.subr.mxu0 %v2615
        %2679 = vmatpush1.msra.mxu0 %v2614
        %2680 = vmatprep.subr.mxu0 %v2617
        %2681 = vmatpush1.msra.mxu0 %v2616
        %2682 = vmatprep.subr.mxu0 %v2619
        %2683 = vmatpush1.msra.mxu0 %v2618
        %2684 = vmatprep.subr.mxu0 %v2621
        %2685 = vmatpush1.msra.mxu0 %v2620
        %2686 = vmatprep.subr.mxu0 %v2623
        %2687 = vmatpush1.msra.mxu0 %v2622
        %2688 = vmatprep.subr.mxu0 %v2625
        %2689 = vmatpush1.msra.mxu0 %v2624
        %2690 = vmatprep.subr.mxu0 %v2627
        %2691 = vmatpush1.msra.mxu0 %v2626
        %2692 = vmatprep.subr.mxu0 %v2629
        %2693 = vmatpush1.msra.mxu0 %v2628
        %2694 = vmatprep.subr.mxu0 %v2631
        %2695 = vmatpush1.msra.mxu0 %v2630
        %2696 = vmatprep.subr.mxu0 %v2633
        %2697 = vmatpush1.msra.mxu0 %v2632
        %2698 = vmatprep.subr.mxu0 %v2635
        %2699 = vmatpush1.msra.mxu0 %v2634
        %2700 = vmatprep.subr.mxu0 %v2637
        %2701 = vmatpush1.msra.mxu0 %v2636
        %2702 = vmatprep.subr.mxu0 %v2639
        %2703 = vmatpush1.msra.mxu0 %v2638
        %2704 = vmatprep.subr.mxu0 %v2641
        %2705 = vmatpush1.msra.mxu0 %v2640
        %2706 = vmatprep.subr.mxu0 %v2643
        %2707 = vmatpush1.msra.mxu0 %v2642
        %2708 = vmatprep.subr.mxu0 %v2645
        %2709 = vmatpush1.msra.mxu0 %v2644
        %2710 = vmatprep.subr.mxu0 %v2647
        %2711 = vmatpush1.msra.mxu0 %v2646
        %2712 = vmatprep.subr.mxu0 %v2649
        %2713 = vmatpush1.msra.mxu0 %v2648
        %2714 = vmatprep.subr.mxu0 %v2651
        %2715 = vmatpush1.msra.mxu0 %v2650
        %2716 = vmatprep.subr.mxu0 %v2653
        %2717 = vmatpush1.msra.mxu0 %v2652
        %2718 = vmatprep.subr.mxu0 %v2655
        %2719 = vmatpush1.msra.mxu0 %v2654
        %2720 = vmatprep.subr.mxu0 %v2657
        %2721 = vmatpush1.msra.mxu0 %v2656
        %2722 = vmatprep.subr.mxu0 %v2659
        %2723 = vmatpush1.msra.mxu0 %v2658
        %2724 = vmatprep.subr.mxu0 %v2661
        %2725 = vmatpush1.msra.mxu0 %v2660
        %2726 = vmatprep.subr.mxu0 %v2663
        %2727 = vmatpush1.msra.mxu0 %v2662
        %2728 = vmatprep.subr.mxu0 %v2665
        %2729 = vmatpush1.msra.mxu0 %v2664
        %2730 = vmatprep.subr.mxu0 %v2667
        %2731 = vmatpush1.msra.mxu0 %v2666
        %2732 = vmatprep.subr.mxu0 %v2669
        %2733 = vmatpush1.msra.mxu0 %v2668
        %2734 = vmatprep.subr.mxu0 %v2671
        %2735 = vmatpush1.msra.mxu0 %v2670
        %2736 = vmatprep.subr.mxu0 %v2673
        %2737 = vmatpush1.msra.mxu0 %v2672
        %2738 = vmatprep.mubr.f32.mxu0 %v873
        %2739 = vmatmul.mubr.f32.gmra.mrb[0].mxu0 %v247
        %v2740 = vpop.f32.mrb[0].mxu0
        %v2741 = vadd.f32 0.0, %v2740
        %v2742 = vpop.f32.mrb[0].mxu0
        %v2743 = vadd.f32 0.0, %v2742
        %2744 = vdwg.mxu0
        %v2747 = vrot.slane %v2741, 4
        %v2748 = vrot.slane %v2743, 4
        %2751 = vst [vmem:[#allocation2 + $0x10] sm:$0xf0] %v2747
        %2752 = vst [vmem:[#allocation2 + $0x18] sm:$0xf0] %v2748
        %vm2753 = vmand %vm2164, %vm958
        %vm2754 = vmand %vm2165, %vm959
        %vm2755 = vmand %vm2753, %vm968
        %vm2756 = vmand %vm2754, %vm969
        %v2757 = vsel %vm2755, 1, 0
        %v2758 = vsel %vm2756, 1, 0
        %v2759 = vcvt.s32.f32 %v2757
        %v2760 = vcvt.s32.f32 %v2758
        %v2763 = vrot.slane %v2759, 6
        %v2764 = vrot.slane %v2760, 6
        %v2767 = vmul.f32 %v252, %v2763
        %v2768 = vmul.f32 %v253, %v2764
        %v2771 = vrot.slane %v2767, 2
        %v2772 = vrot.slane %v2768, 2
        %v2775 = vmul.f32 %v2202, %v2771
        %v2776 = vmul.f32 %v2203, %v2772
        %v2777 = vmul.f32 %v2222, %v2771
        %v2778 = vmul.f32 %v2223, %v2772
        %v2779 = vlaneseq
        %v2780 = vshrl.u32 %v2779, 7
        %v2781 = vsub.s32 4, %v2780
        %v2782 = vrot.slane %v2231, %v2781
        %v2783 = vlaneseq
        %v2784 = vshrl.u32 %v2783, 7
        %v2785 = vsub.s32 4, %v2784
        %v2786 = vrot.slane %v2233, %v2785
        %vm2787 = vcmp.eq.s32.totalorder %v282, %v2782
        %vm2788 = vcmp.eq.s32.totalorder %v282, %v2786
        %vm2789 = vcmp.eq.s32.totalorder %v283, %v2782
        %vm2790 = vcmp.eq.s32.totalorder %v283, %v2786
        %v2791 = vlaneseq
        %v2792 = vshrl.u32 %v2791, 7
        %v2793 = vsub.s32 4, %v2792
        %v2794 = vrot.slane %v2775, %v2793
        %v2795 = vlaneseq
        %v2796 = vshrl.u32 %v2795, 7
        %v2797 = vsub.s32 4, %v2796
        %v2798 = vrot.slane %v2776, %v2797
        %v2799 = vsel %vm2787, %v2794, 0.0
        %v2800 = vsel %vm2788, %v2798, 0.0
        %v2801 = vsel %vm2789, %v2794, 0.0
        %v2802 = vsel %vm2790, %v2798, 0.0
        %v2803 = vlaneseq
        %v2804 = vshrl.u32 %v2803, 7
        %v2805 = vsub.s32 4, %v2804
        %v2806 = vrot.slane %v2239, %v2805
        %v2807 = vlaneseq
        %v2808 = vshrl.u32 %v2807, 7
        %v2809 = vsub.s32 4, %v2808
        %v2810 = vrot.slane %v2241, %v2809
        %vm2811 = vcmp.eq.s32.totalorder %v282, %v2806
        %vm2812 = vcmp.eq.s32.totalorder %v282, %v2810
        %vm2813 = vcmp.eq.s32.totalorder %v283, %v2806
        %vm2814 = vcmp.eq.s32.totalorder %v283, %v2810
        %v2815 = vlaneseq
        %v2816 = vshrl.u32 %v2815, 7
        %v2817 = vsub.s32 4, %v2816
        %v2818 = vrot.slane %v2777, %v2817
        %v2819 = vlaneseq
        %v2820 = vshrl.u32 %v2819, 7
        %v2821 = vsub.s32 4, %v2820
        %v2822 = vrot.slane %v2778, %v2821
        %v2823 = vsel %vm2811, %v2818, 0.0
        %v2824 = vsel %vm2812, %v2822, 0.0
        %v2825 = vsel %vm2813, %v2818, 0.0
        %v2826 = vsel %vm2814, %v2822, 0.0
        %v2827 = vadd.f32 %v2799, %v2823
        %v2828 = vadd.f32 %v2800, %v2824
        %v2829 = vadd.f32 %v2801, %v2825
        %v2830 = vadd.f32 %v2802, %v2826
        %v2831 = vlaneseq
        %v2832 = vshrl.u32 %v2831, 7
        %v2833 = vsub.s32 5, %v2832
        %v2834 = vrot.slane %v1033, %v2833
        %v2835 = vlaneseq
        %v2836 = vshrl.u32 %v2835, 7
        %v2837 = vsub.s32 5, %v2836
        %v2838 = vrot.slane %v1035, %v2837
        %vm2839 = vcmp.eq.s32.totalorder %v282, %v2834
        %vm2840 = vcmp.eq.s32.totalorder %v282, %v2838
        %vm2841 = vcmp.eq.s32.totalorder %v283, %v2834
        %vm2842 = vcmp.eq.s32.totalorder %v283, %v2838
        %v2843 = vlaneseq
        %v2844 = vshrl.u32 %v2843, 7
        %v2845 = vsub.s32 5, %v2844
        %v2846 = vrot.slane %v1014, %v2845
        %v2847 = vlaneseq
        %v2848 = vshrl.u32 %v2847, 7
        %v2849 = vsub.s32 5, %v2848
        %v2850 = vrot.slane %v1015, %v2849
        %v2851 = vsel %vm2839, %v2846, 0.0
        %v2852 = vsel %vm2840, %v2850, 0.0
        %v2853 = vsel %vm2841, %v2846, 0.0
        %v2854 = vsel %vm2842, %v2850, 0.0
        %v2855 = vlaneseq
        %v2856 = vshrl.u32 %v2855, 7
        %v2857 = vsub.s32 5, %v2856
        %v2858 = vrot.slane %v1041, %v2857
        %v2859 = vlaneseq
        %v2860 = vshrl.u32 %v2859, 7
        %v2861 = vsub.s32 5, %v2860
        %v2862 = vrot.slane %v1043, %v2861
        %vm2863 = vcmp.eq.s32.totalorder %v282, %v2858
        %vm2864 = vcmp.eq.s32.totalorder %v282, %v2862
        %vm2865 = vcmp.eq.s32.totalorder %v283, %v2858
        %vm2866 = vcmp.eq.s32.totalorder %v283, %v2862
        %v2867 = vlaneseq
        %v2868 = vshrl.u32 %v2867, 7
        %v2869 = vsub.s32 5, %v2868
        %v2870 = vrot.slane %v1026, %v2869
        %v2871 = vlaneseq
        %v2872 = vshrl.u32 %v2871, 7
        %v2873 = vsub.s32 5, %v2872
        %v2874 = vrot.slane %v1027, %v2873
        %v2875 = vsel %vm2863, %v2870, 0.0
        %v2876 = vsel %vm2864, %v2874, 0.0
        %v2877 = vsel %vm2865, %v2870, 0.0
        %v2878 = vsel %vm2866, %v2874, 0.0
        %v2879 = vadd.f32 %v2851, %v2875
        %v2880 = vadd.f32 %v2852, %v2876
        %v2881 = vadd.f32 %v2853, %v2877
        %v2882 = vadd.f32 %v2854, %v2878
        %v2887 = vcombine.low %v2827, %v2828
        %v2888 = vcombine.high %v2827, %v2828
        %v2890 = vunpack.c.l.s4 1966171168
        %v2891 = vunpack.c.0.s8 %v2890
        %v2892 = vlaneseq
        %v2893 = vshrl.u32 %v2892, 7
        %v2894 = vsub.s32 %v2891, %v2893
        %v2895 = vrot.slane %v2887, %v2894
        %v2897 = vunpack.c.l.s4 1966171168
        %v2898 = vunpack.c.0.s8 %v2897
        %v2899 = vlaneseq
        %v2900 = vshrl.u32 %v2899, 7
        %v2901 = vsub.s32 %v2898, %v2900
        %v2902 = vrot.slane %v2888, %v2901
        %v2903 = vcombine.high %v2895, %v2895
        %v2904 = vcombine.high %v2902, %v2902
        %v2906 = vunpack.c.l.s4 1966171168
        %v2907 = vunpack.c.0.s8 %v2906
        %v2908 = vlaneseq
        %v2909 = vshrl.u32 %v2908, 7
        %v2910 = vsub.s32 %v2907, %v2909
        %v2911 = vrot.slane %v2895, %v2910
        %v2913 = vunpack.c.l.s4 1966171168
        %v2914 = vunpack.c.0.s8 %v2913
        %v2915 = vlaneseq
        %v2916 = vshrl.u32 %v2915, 7
        %v2917 = vsub.s32 %v2914, %v2916
        %v2918 = vrot.slane %v2902, %v2917
        %v2920 = vunpack.c.l.s4 1966171168
        %v2921 = vunpack.c.0.s8 %v2920
        %v2922 = vlaneseq
        %v2923 = vshrl.u32 %v2922, 7
        %v2924 = vsub.s32 %v2921, %v2923
        %v2925 = vrot.slane %v2903, %v2924
        %v2927 = vunpack.c.l.s4 1966171168
        %v2928 = vunpack.c.0.s8 %v2927
        %v2929 = vlaneseq
        %v2930 = vshrl.u32 %v2929, 7
        %v2931 = vsub.s32 %v2928, %v2930
        %v2932 = vrot.slane %v2904, %v2931
        %v2933 = vcombine.high %v2911, %v2911
        %v2934 = vcombine.high %v2918, %v2918
        %v2935 = vcombine.high %v2925, %v2925
        %v2936 = vcombine.high %v2932, %v2932
        %v2937 = vcombine.low %v2829, %v2830
        %v2938 = vcombine.high %v2829, %v2830
        %v2940 = vunpack.c.l.s4 1966171168
        %v2941 = vunpack.c.0.s8 %v2940
        %v2942 = vlaneseq
        %v2943 = vshrl.u32 %v2942, 7
        %v2944 = vsub.s32 %v2941, %v2943
        %v2945 = vrot.slane %v2937, %v2944
        %v2947 = vunpack.c.l.s4 1966171168
        %v2948 = vunpack.c.0.s8 %v2947
        %v2949 = vlaneseq
        %v2950 = vshrl.u32 %v2949, 7
        %v2951 = vsub.s32 %v2948, %v2950
        %v2952 = vrot.slane %v2938, %v2951
        %v2953 = vcombine.high %v2945, %v2945
        %v2954 = vcombine.high %v2952, %v2952
        %v2956 = vunpack.c.l.s4 1966171168
        %v2957 = vunpack.c.0.s8 %v2956
        %v2958 = vlaneseq
        %v2959 = vshrl.u32 %v2958, 7
        %v2960 = vsub.s32 %v2957, %v2959
        %v2961 = vrot.slane %v2945, %v2960
        %v2963 = vunpack.c.l.s4 1966171168
        %v2964 = vunpack.c.0.s8 %v2963
        %v2965 = vlaneseq
        %v2966 = vshrl.u32 %v2965, 7
        %v2967 = vsub.s32 %v2964, %v2966
        %v2968 = vrot.slane %v2952, %v2967
        %v2970 = vunpack.c.l.s4 1966171168
        %v2971 = vunpack.c.0.s8 %v2970
        %v2972 = vlaneseq
        %v2973 = vshrl.u32 %v2972, 7
        %v2974 = vsub.s32 %v2971, %v2973
        %v2975 = vrot.slane %v2953, %v2974
        %v2977 = vunpack.c.l.s4 1966171168
        %v2978 = vunpack.c.0.s8 %v2977
        %v2979 = vlaneseq
        %v2980 = vshrl.u32 %v2979, 7
        %v2981 = vsub.s32 %v2978, %v2980
        %v2982 = vrot.slane %v2954, %v2981
        %v2983 = vcombine.high %v2961, %v2961
        %v2984 = vcombine.high %v2968, %v2968
        %v2985 = vcombine.high %v2975, %v2975
        %v2986 = vcombine.high %v2982, %v2982
        %v2987 = vlaneseq
        %v2988 = vshrl.u32 %v2987, 7
        %v2989 = vsub.s32 0, %v2988
        %v2990 = vrot.slane %v2911, %v2989
        %v2991 = vlaneseq
        %v2992 = vshrl.u32 %v2991, 7
        %v2993 = vsub.s32 1, %v2992
        %v2994 = vrot.slane %v2911, %v2993
        %v2995 = vlaneseq
        %v2996 = vshrl.u32 %v2995, 7
        %v2997 = vsub.s32 0, %v2996
        %v2998 = vrot.slane %v2925, %v2997
        %v2999 = vlaneseq
        %v3000 = vshrl.u32 %v2999, 7
        %v3001 = vsub.s32 1, %v3000
        %v3002 = vrot.slane %v2925, %v3001
        %v3003 = vlaneseq
        %v3004 = vshrl.u32 %v3003, 7
        %v3005 = vsub.s32 0, %v3004
        %v3006 = vrot.slane %v2933, %v3005
        %v3007 = vlaneseq
        %v3008 = vshrl.u32 %v3007, 7
        %v3009 = vsub.s32 1, %v3008
        %v3010 = vrot.slane %v2933, %v3009
        %v3011 = vlaneseq
        %v3012 = vshrl.u32 %v3011, 7
        %v3013 = vsub.s32 0, %v3012
        %v3014 = vrot.slane %v2935, %v3013
        %v3015 = vlaneseq
        %v3016 = vshrl.u32 %v3015, 7
        %v3017 = vsub.s32 1, %v3016
        %v3018 = vrot.slane %v2935, %v3017
        %v3019 = vlaneseq
        %v3020 = vshrl.u32 %v3019, 7
        %v3021 = vsub.s32 0, %v3020
        %v3022 = vrot.slane %v2918, %v3021
        %v3023 = vlaneseq
        %v3024 = vshrl.u32 %v3023, 7
        %v3025 = vsub.s32 1, %v3024
        %v3026 = vrot.slane %v2918, %v3025
        %v3027 = vlaneseq
        %v3028 = vshrl.u32 %v3027, 7
        %v3029 = vsub.s32 0, %v3028
        %v3030 = vrot.slane %v2932, %v3029
        %v3031 = vlaneseq
        %v3032 = vshrl.u32 %v3031, 7
        %v3033 = vsub.s32 1, %v3032
        %v3034 = vrot.slane %v2932, %v3033
        %v3035 = vlaneseq
        %v3036 = vshrl.u32 %v3035, 7
        %v3037 = vsub.s32 0, %v3036
        %v3038 = vrot.slane %v2934, %v3037
        %v3039 = vlaneseq
        %v3040 = vshrl.u32 %v3039, 7
        %v3041 = vsub.s32 1, %v3040
        %v3042 = vrot.slane %v2934, %v3041
        %v3043 = vlaneseq
        %v3044 = vshrl.u32 %v3043, 7
        %v3045 = vsub.s32 0, %v3044
        %v3046 = vrot.slane %v2936, %v3045
        %v3047 = vlaneseq
        %v3048 = vshrl.u32 %v3047, 7
        %v3049 = vsub.s32 1, %v3048
        %v3050 = vrot.slane %v2936, %v3049
        %v3051 = vlaneseq
        %v3052 = vshrl.u32 %v3051, 7
        %v3053 = vsub.s32 0, %v3052
        %v3054 = vrot.slane %v2961, %v3053
        %v3055 = vlaneseq
        %v3056 = vshrl.u32 %v3055, 7
        %v3057 = vsub.s32 1, %v3056
        %v3058 = vrot.slane %v2961, %v3057
        %v3059 = vlaneseq
        %v3060 = vshrl.u32 %v3059, 7
        %v3061 = vsub.s32 0, %v3060
        %v3062 = vrot.slane %v2975, %v3061
        %v3063 = vlaneseq
        %v3064 = vshrl.u32 %v3063, 7
        %v3065 = vsub.s32 1, %v3064
        %v3066 = vrot.slane %v2975, %v3065
        %v3067 = vlaneseq
        %v3068 = vshrl.u32 %v3067, 7
        %v3069 = vsub.s32 0, %v3068
        %v3070 = vrot.slane %v2983, %v3069
        %v3071 = vlaneseq
        %v3072 = vshrl.u32 %v3071, 7
        %v3073 = vsub.s32 1, %v3072
        %v3074 = vrot.slane %v2983, %v3073
        %v3075 = vlaneseq
        %v3076 = vshrl.u32 %v3075, 7
        %v3077 = vsub.s32 0, %v3076
        %v3078 = vrot.slane %v2985, %v3077
        %v3079 = vlaneseq
        %v3080 = vshrl.u32 %v3079, 7
        %v3081 = vsub.s32 1, %v3080
        %v3082 = vrot.slane %v2985, %v3081
        %v3083 = vlaneseq
        %v3084 = vshrl.u32 %v3083, 7
        %v3085 = vsub.s32 0, %v3084
        %v3086 = vrot.slane %v2968, %v3085
        %v3087 = vlaneseq
        %v3088 = vshrl.u32 %v3087, 7
        %v3089 = vsub.s32 1, %v3088
        %v3090 = vrot.slane %v2968, %v3089
        %v3091 = vlaneseq
        %v3092 = vshrl.u32 %v3091, 7
        %v3093 = vsub.s32 0, %v3092
        %v3094 = vrot.slane %v2982, %v3093
        %v3095 = vlaneseq
        %v3096 = vshrl.u32 %v3095, 7
        %v3097 = vsub.s32 1, %v3096
        %v3098 = vrot.slane %v2982, %v3097
        %v3099 = vlaneseq
        %v3100 = vshrl.u32 %v3099, 7
        %v3101 = vsub.s32 0, %v3100
        %v3102 = vrot.slane %v2984, %v3101
        %v3103 = vlaneseq
        %v3104 = vshrl.u32 %v3103, 7
        %v3105 = vsub.s32 1, %v3104
        %v3106 = vrot.slane %v2984, %v3105
        %v3107 = vlaneseq
        %v3108 = vshrl.u32 %v3107, 7
        %v3109 = vsub.s32 0, %v3108
        %v3110 = vrot.slane %v2986, %v3109
        %v3111 = vlaneseq
        %v3112 = vshrl.u32 %v3111, 7
        %v3113 = vsub.s32 1, %v3112
        %v3114 = vrot.slane %v2986, %v3113
        %v3147 = vmul.f32 %v2990, %v2879
        %v3148 = vmul.f32 %v2994, %v2880
        %v3149 = vmul.f32 %v2990, %v2881
        %v3150 = vmul.f32 %v2994, %v2882
        %v3151 = vmul.f32 %v2998, %v2879
        %v3152 = vmul.f32 %v3002, %v2880
        %v3153 = vmul.f32 %v2998, %v2881
        %v3154 = vmul.f32 %v3002, %v2882
        %v3155 = vmul.f32 %v3006, %v2879
        %v3156 = vmul.f32 %v3010, %v2880
        %v3157 = vmul.f32 %v3006, %v2881
        %v3158 = vmul.f32 %v3010, %v2882
        %v3159 = vmul.f32 %v3014, %v2879
        %v3160 = vmul.f32 %v3018, %v2880
        %v3161 = vmul.f32 %v3014, %v2881
        %v3162 = vmul.f32 %v3018, %v2882
        %v3163 = vmul.f32 %v3022, %v2879
        %v3164 = vmul.f32 %v3026, %v2880
        %v3165 = vmul.f32 %v3022, %v2881
        %v3166 = vmul.f32 %v3026, %v2882
        %v3167 = vmul.f32 %v3030, %v2879
        %v3168 = vmul.f32 %v3034, %v2880
        %v3169 = vmul.f32 %v3030, %v2881
        %v3170 = vmul.f32 %v3034, %v2882
        %v3171 = vmul.f32 %v3038, %v2879
        %v3172 = vmul.f32 %v3042, %v2880
        %v3173 = vmul.f32 %v3038, %v2881
        %v3174 = vmul.f32 %v3042, %v2882
        %v3175 = vmul.f32 %v3046, %v2879
        %v3176 = vmul.f32 %v3050, %v2880
        %v3177 = vmul.f32 %v3046, %v2881
        %v3178 = vmul.f32 %v3050, %v2882
        %v3179 = vmul.f32 %v3054, %v2879
        %v3180 = vmul.f32 %v3058, %v2880
        %v3181 = vmul.f32 %v3054, %v2881
        %v3182 = vmul.f32 %v3058, %v2882
        %v3183 = vmul.f32 %v3062, %v2879
        %v3184 = vmul.f32 %v3066, %v2880
        %v3185 = vmul.f32 %v3062, %v2881
        %v3186 = vmul.f32 %v3066, %v2882
        %v3187 = vmul.f32 %v3070, %v2879
        %v3188 = vmul.f32 %v3074, %v2880
        %v3189 = vmul.f32 %v3070, %v2881
        %v3190 = vmul.f32 %v3074, %v2882
        %v3191 = vmul.f32 %v3078, %v2879
        %v3192 = vmul.f32 %v3082, %v2880
        %v3193 = vmul.f32 %v3078, %v2881
        %v3194 = vmul.f32 %v3082, %v2882
        %v3195 = vmul.f32 %v3086, %v2879
        %v3196 = vmul.f32 %v3090, %v2880
        %v3197 = vmul.f32 %v3086, %v2881
        %v3198 = vmul.f32 %v3090, %v2882
        %v3199 = vmul.f32 %v3094, %v2879
        %v3200 = vmul.f32 %v3098, %v2880
        %v3201 = vmul.f32 %v3094, %v2881
        %v3202 = vmul.f32 %v3098, %v2882
        %v3203 = vmul.f32 %v3102, %v2879
        %v3204 = vmul.f32 %v3106, %v2880
        %v3205 = vmul.f32 %v3102, %v2881
        %v3206 = vmul.f32 %v3106, %v2882
        %v3207 = vmul.f32 %v3110, %v2879
        %v3208 = vmul.f32 %v3114, %v2880
        %v3209 = vmul.f32 %v3110, %v2881
        %v3210 = vmul.f32 %v3114, %v2882
        %3211 = vmatprep.subr.mxu0 %v3148
        %3212 = vmatpush1.msra.mxu0 %v3147
        %3213 = vmatprep.subr.mxu0 %v3150
        %3214 = vmatpush1.msra.mxu0 %v3149
        %3215 = vmatprep.subr.mxu0 %v3152
        %3216 = vmatpush1.msra.mxu0 %v3151
        %3217 = vmatprep.subr.mxu0 %v3154
        %3218 = vmatpush1.msra.mxu0 %v3153
        %3219 = vmatprep.subr.mxu0 %v3156
        %3220 = vmatpush1.msra.mxu0 %v3155
        %3221 = vmatprep.subr.mxu0 %v3158
        %3222 = vmatpush1.msra.mxu0 %v3157
        %3223 = vmatprep.subr.mxu0 %v3160
        %3224 = vmatpush1.msra.mxu0 %v3159
        %3225 = vmatprep.subr.mxu0 %v3162
        %3226 = vmatpush1.msra.mxu0 %v3161
        %3227 = vmatprep.subr.mxu0 %v3164
        %3228 = vmatpush1.msra.mxu0 %v3163
        %3229 = vmatprep.subr.mxu0 %v3166
        %3230 = vmatpush1.msra.mxu0 %v3165
        %3231 = vmatprep.subr.mxu0 %v3168
        %3232 = vmatpush1.msra.mxu0 %v3167
        %3233 = vmatprep.subr.mxu0 %v3170
        %3234 = vmatpush1.msra.mxu0 %v3169
        %3235 = vmatprep.subr.mxu0 %v3172
        %3236 = vmatpush1.msra.mxu0 %v3171
        %3237 = vmatprep.subr.mxu0 %v3174
        %3238 = vmatpush1.msra.mxu0 %v3173
        %3239 = vmatprep.subr.mxu0 %v3176
        %3240 = vmatpush1.msra.mxu0 %v3175
        %3241 = vmatprep.subr.mxu0 %v3178
        %3242 = vmatpush1.msra.mxu0 %v3177
        %3243 = vmatprep.subr.mxu0 %v3180
        %3244 = vmatpush1.msra.mxu0 %v3179
        %3245 = vmatprep.subr.mxu0 %v3182
        %3246 = vmatpush1.msra.mxu0 %v3181
        %3247 = vmatprep.subr.mxu0 %v3184
        %3248 = vmatpush1.msra.mxu0 %v3183
        %3249 = vmatprep.subr.mxu0 %v3186
        %3250 = vmatpush1.msra.mxu0 %v3185
        %3251 = vmatprep.subr.mxu0 %v3188
        %3252 = vmatpush1.msra.mxu0 %v3187
        %3253 = vmatprep.subr.mxu0 %v3190
        %3254 = vmatpush1.msra.mxu0 %v3189
        %3255 = vmatprep.subr.mxu0 %v3192
        %3256 = vmatpush1.msra.mxu0 %v3191
        %3257 = vmatprep.subr.mxu0 %v3194
        %3258 = vmatpush1.msra.mxu0 %v3193
        %3259 = vmatprep.subr.mxu0 %v3196
        %3260 = vmatpush1.msra.mxu0 %v3195
        %3261 = vmatprep.subr.mxu0 %v3198
        %3262 = vmatpush1.msra.mxu0 %v3197
        %3263 = vmatprep.subr.mxu0 %v3200
        %3264 = vmatpush1.msra.mxu0 %v3199
        %3265 = vmatprep.subr.mxu0 %v3202
        %3266 = vmatpush1.msra.mxu0 %v3201
        %3267 = vmatprep.subr.mxu0 %v3204
        %3268 = vmatpush1.msra.mxu0 %v3203
        %3269 = vmatprep.subr.mxu0 %v3206
        %3270 = vmatpush1.msra.mxu0 %v3205
        %3271 = vmatprep.subr.mxu0 %v3208
        %3272 = vmatpush1.msra.mxu0 %v3207
        %3273 = vmatprep.subr.mxu0 %v3210
        %3274 = vmatpush1.msra.mxu0 %v3209
        %3275 = vmatprep.mubr.f32.mxu0 %v873
        %3276 = vmatmul.mubr.f32.gmra.mrb[0].mxu0 %v247
        %v3277 = vpop.f32.mrb[0].mxu0
        %v3278 = vadd.f32 0.0, %v3277
        %v3279 = vpop.f32.mrb[0].mxu0
        %v3280 = vadd.f32 0.0, %v3279
        %3281 = vdwg.mxu0
        %3282 = vst [vmem:[#allocation2 + $0x20] sm:$0xf] %v3278
        %3283 = vst [vmem:[#allocation2 + $0x28] sm:$0xf] %v3280
        %vm3284 = vmand %vm2164, %vm1565
        %vm3285 = vmand %vm2165, %vm1566
        %vm3286 = vmand %vm3284, %vm1575
        %vm3287 = vmand %vm3285, %vm1576
        %v3288 = vsel %vm3286, 1, 0
        %v3289 = vsel %vm3287, 1, 0
        %v3290 = vcvt.s32.f32 %v3288
        %v3291 = vcvt.s32.f32 %v3289
        %v3294 = vrot.slane %v3290, 6
        %v3295 = vrot.slane %v3291, 6
        %v3298 = vmul.f32 %v252, %v3294
        %v3299 = vmul.f32 %v253, %v3295
        %v3302 = vrot.slane %v3298, 2
        %v3303 = vrot.slane %v3299, 2
        %v3306 = vmul.f32 %v2202, %v3302
        %v3307 = vmul.f32 %v2203, %v3303
        %v3308 = vmul.f32 %v2222, %v3302
        %v3309 = vmul.f32 %v2223, %v3303
        %v3310 = vlaneseq
        %v3311 = vshrl.u32 %v3310, 7
        %v3312 = vsub.s32 5, %v3311
        %v3313 = vrot.slane %v2231, %v3312
        %v3314 = vlaneseq
        %v3315 = vshrl.u32 %v3314, 7
        %v3316 = vsub.s32 5, %v3315
        %v3317 = vrot.slane %v2233, %v3316
        %vm3318 = vcmp.eq.s32.totalorder %v282, %v3313
        %vm3319 = vcmp.eq.s32.totalorder %v282, %v3317
        %vm3320 = vcmp.eq.s32.totalorder %v283, %v3313
        %vm3321 = vcmp.eq.s32.totalorder %v283, %v3317
        %v3322 = vlaneseq
        %v3323 = vshrl.u32 %v3322, 7
        %v3324 = vsub.s32 5, %v3323
        %v3325 = vrot.slane %v3306, %v3324
        %v3326 = vlaneseq
        %v3327 = vshrl.u32 %v3326, 7
        %v3328 = vsub.s32 5, %v3327
        %v3329 = vrot.slane %v3307, %v3328
        %v3330 = vsel %vm3318, %v3325, 0.0
        %v3331 = vsel %vm3319, %v3329, 0.0
        %v3332 = vsel %vm3320, %v3325, 0.0
        %v3333 = vsel %vm3321, %v3329, 0.0
        %v3334 = vlaneseq
        %v3335 = vshrl.u32 %v3334, 7
        %v3336 = vsub.s32 5, %v3335
        %v3337 = vrot.slane %v2239, %v3336
        %v3338 = vlaneseq
        %v3339 = vshrl.u32 %v3338, 7
        %v3340 = vsub.s32 5, %v3339
        %v3341 = vrot.slane %v2241, %v3340
        %vm3342 = vcmp.eq.s32.totalorder %v282, %v3337
        %vm3343 = vcmp.eq.s32.totalorder %v282, %v3341
        %vm3344 = vcmp.eq.s32.totalorder %v283, %v3337
        %vm3345 = vcmp.eq.s32.totalorder %v283, %v3341
        %v3346 = vlaneseq
        %v3347 = vshrl.u32 %v3346, 7
        %v3348 = vsub.s32 5, %v3347
        %v3349 = vrot.slane %v3308, %v3348
        %v3350 = vlaneseq
        %v3351 = vshrl.u32 %v3350, 7
        %v3352 = vsub.s32 5, %v3351
        %v3353 = vrot.slane %v3309, %v3352
        %v3354 = vsel %vm3342, %v3349, 0.0
        %v3355 = vsel %vm3343, %v3353, 0.0
        %v3356 = vsel %vm3344, %v3349, 0.0
        %v3357 = vsel %vm3345, %v3353, 0.0
        %v3358 = vadd.f32 %v3330, %v3354
        %v3359 = vadd.f32 %v3331, %v3355
        %v3360 = vadd.f32 %v3332, %v3356
        %v3361 = vadd.f32 %v3333, %v3357
        %v3362 = vlaneseq
        %v3363 = vshrl.u32 %v3362, 7
        %v3364 = vsub.s32 6, %v3363
        %v3365 = vrot.slane %v1640, %v3364
        %v3366 = vlaneseq
        %v3367 = vshrl.u32 %v3366, 7
        %v3368 = vsub.s32 6, %v3367
        %v3369 = vrot.slane %v1642, %v3368
        %vm3370 = vcmp.eq.s32.totalorder %v282, %v3365
        %vm3371 = vcmp.eq.s32.totalorder %v282, %v3369
        %vm3372 = vcmp.eq.s32.totalorder %v283, %v3365
        %vm3373 = vcmp.eq.s32.totalorder %v283, %v3369
        %v3374 = vlaneseq
        %v3375 = vshrl.u32 %v3374, 7
        %v3376 = vsub.s32 6, %v3375
        %v3377 = vrot.slane %v1621, %v3376
        %v3378 = vlaneseq
        %v3379 = vshrl.u32 %v3378, 7
        %v3380 = vsub.s32 6, %v3379
        %v3381 = vrot.slane %v1622, %v3380
        %v3382 = vsel %vm3370, %v3377, 0.0
        %v3383 = vsel %vm3371, %v3381, 0.0
        %v3384 = vsel %vm3372, %v3377, 0.0
        %v3385 = vsel %vm3373, %v3381, 0.0
        %v3386 = vlaneseq
        %v3387 = vshrl.u32 %v3386, 7
        %v3388 = vsub.s32 6, %v3387
        %v3389 = vrot.slane %v1648, %v3388
        %v3390 = vlaneseq
        %v3391 = vshrl.u32 %v3390, 7
        %v3392 = vsub.s32 6, %v3391
        %v3393 = vrot.slane %v1650, %v3392
        %vm3394 = vcmp.eq.s32.totalorder %v282, %v3389
        %vm3395 = vcmp.eq.s32.totalorder %v282, %v3393
        %vm3396 = vcmp.eq.s32.totalorder %v283, %v3389
        %vm3397 = vcmp.eq.s32.totalorder %v283, %v3393
        %v3398 = vlaneseq
        %v3399 = vshrl.u32 %v3398, 7
        %v3400 = vsub.s32 6, %v3399
        %v3401 = vrot.slane %v1633, %v3400
        %v3402 = vlaneseq
        %v3403 = vshrl.u32 %v3402, 7
        %v3404 = vsub.s32 6, %v3403
        %v3405 = vrot.slane %v1634, %v3404
        %v3406 = vsel %vm3394, %v3401, 0.0
        %v3407 = vsel %vm3395, %v3405, 0.0
        %v3408 = vsel %vm3396, %v3401, 0.0
        %v3409 = vsel %vm3397, %v3405, 0.0
        %v3410 = vadd.f32 %v3382, %v3406
        %v3411 = vadd.f32 %v3383, %v3407
        %v3412 = vadd.f32 %v3384, %v3408
        %v3413 = vadd.f32 %v3385, %v3409
        %v3418 = vcombine.low %v3358, %v3359
        %v3419 = vcombine.high %v3358, %v3359
        %v3421 = vunpack.c.l.s4 1966171168
        %v3422 = vunpack.c.0.s8 %v3421
        %v3423 = vlaneseq
        %v3424 = vshrl.u32 %v3423, 7
        %v3425 = vsub.s32 %v3422, %v3424
        %v3426 = vrot.slane %v3418, %v3425
        %v3428 = vunpack.c.l.s4 1966171168
        %v3429 = vunpack.c.0.s8 %v3428
        %v3430 = vlaneseq
        %v3431 = vshrl.u32 %v3430, 7
        %v3432 = vsub.s32 %v3429, %v3431
        %v3433 = vrot.slane %v3419, %v3432
        %v3434 = vcombine.high %v3426, %v3426
        %v3435 = vcombine.high %v3433, %v3433
        %v3437 = vunpack.c.l.s4 1966171168
        %v3438 = vunpack.c.0.s8 %v3437
        %v3439 = vlaneseq
        %v3440 = vshrl.u32 %v3439, 7
        %v3441 = vsub.s32 %v3438, %v3440
        %v3442 = vrot.slane %v3426, %v3441
        %v3444 = vunpack.c.l.s4 1966171168
        %v3445 = vunpack.c.0.s8 %v3444
        %v3446 = vlaneseq
        %v3447 = vshrl.u32 %v3446, 7
        %v3448 = vsub.s32 %v3445, %v3447
        %v3449 = vrot.slane %v3433, %v3448
        %v3451 = vunpack.c.l.s4 1966171168
        %v3452 = vunpack.c.0.s8 %v3451
        %v3453 = vlaneseq
        %v3454 = vshrl.u32 %v3453, 7
        %v3455 = vsub.s32 %v3452, %v3454
        %v3456 = vrot.slane %v3434, %v3455
        %v3458 = vunpack.c.l.s4 1966171168
        %v3459 = vunpack.c.0.s8 %v3458
        %v3460 = vlaneseq
        %v3461 = vshrl.u32 %v3460, 7
        %v3462 = vsub.s32 %v3459, %v3461
        %v3463 = vrot.slane %v3435, %v3462
        %v3464 = vcombine.high %v3442, %v3442
        %v3465 = vcombine.high %v3449, %v3449
        %v3466 = vcombine.high %v3456, %v3456
        %v3467 = vcombine.high %v3463, %v3463
        %v3468 = vcombine.low %v3360, %v3361
        %v3469 = vcombine.high %v3360, %v3361
        %v3471 = vunpack.c.l.s4 1966171168
        %v3472 = vunpack.c.0.s8 %v3471
        %v3473 = vlaneseq
        %v3474 = vshrl.u32 %v3473, 7
        %v3475 = vsub.s32 %v3472, %v3474
        %v3476 = vrot.slane %v3468, %v3475
        %v3478 = vunpack.c.l.s4 1966171168
        %v3479 = vunpack.c.0.s8 %v3478
        %v3480 = vlaneseq
        %v3481 = vshrl.u32 %v3480, 7
        %v3482 = vsub.s32 %v3479, %v3481
        %v3483 = vrot.slane %v3469, %v3482
        %v3484 = vcombine.high %v3476, %v3476
        %v3485 = vcombine.high %v3483, %v3483
        %v3487 = vunpack.c.l.s4 1966171168
        %v3488 = vunpack.c.0.s8 %v3487
        %v3489 = vlaneseq
        %v3490 = vshrl.u32 %v3489, 7
        %v3491 = vsub.s32 %v3488, %v3490
        %v3492 = vrot.slane %v3476, %v3491
        %v3494 = vunpack.c.l.s4 1966171168
        %v3495 = vunpack.c.0.s8 %v3494
        %v3496 = vlaneseq
        %v3497 = vshrl.u32 %v3496, 7
        %v3498 = vsub.s32 %v3495, %v3497
        %v3499 = vrot.slane %v3483, %v3498
        %v3501 = vunpack.c.l.s4 1966171168
        %v3502 = vunpack.c.0.s8 %v3501
        %v3503 = vlaneseq
        %v3504 = vshrl.u32 %v3503, 7
        %v3505 = vsub.s32 %v3502, %v3504
        %v3506 = vrot.slane %v3484, %v3505
        %v3508 = vunpack.c.l.s4 1966171168
        %v3509 = vunpack.c.0.s8 %v3508
        %v3510 = vlaneseq
        %v3511 = vshrl.u32 %v3510, 7
        %v3512 = vsub.s32 %v3509, %v3511
        %v3513 = vrot.slane %v3485, %v3512
        %v3514 = vcombine.high %v3492, %v3492
        %v3515 = vcombine.high %v3499, %v3499
        %v3516 = vcombine.high %v3506, %v3506
        %v3517 = vcombine.high %v3513, %v3513
        %v3518 = vlaneseq
        %v3519 = vshrl.u32 %v3518, 7
        %v3520 = vsub.s32 0, %v3519
        %v3521 = vrot.slane %v3442, %v3520
        %v3522 = vlaneseq
        %v3523 = vshrl.u32 %v3522, 7
        %v3524 = vsub.s32 1, %v3523
        %v3525 = vrot.slane %v3442, %v3524
        %v3526 = vlaneseq
        %v3527 = vshrl.u32 %v3526, 7
        %v3528 = vsub.s32 0, %v3527
        %v3529 = vrot.slane %v3456, %v3528
        %v3530 = vlaneseq
        %v3531 = vshrl.u32 %v3530, 7
        %v3532 = vsub.s32 1, %v3531
        %v3533 = vrot.slane %v3456, %v3532
        %v3534 = vlaneseq
        %v3535 = vshrl.u32 %v3534, 7
        %v3536 = vsub.s32 0, %v3535
        %v3537 = vrot.slane %v3464, %v3536
        %v3538 = vlaneseq
        %v3539 = vshrl.u32 %v3538, 7
        %v3540 = vsub.s32 1, %v3539
        %v3541 = vrot.slane %v3464, %v3540
        %v3542 = vlaneseq
        %v3543 = vshrl.u32 %v3542, 7
        %v3544 = vsub.s32 0, %v3543
        %v3545 = vrot.slane %v3466, %v3544
        %v3546 = vlaneseq
        %v3547 = vshrl.u32 %v3546, 7
        %v3548 = vsub.s32 1, %v3547
        %v3549 = vrot.slane %v3466, %v3548
        %v3550 = vlaneseq
        %v3551 = vshrl.u32 %v3550, 7
        %v3552 = vsub.s32 0, %v3551
        %v3553 = vrot.slane %v3449, %v3552
        %v3554 = vlaneseq
        %v3555 = vshrl.u32 %v3554, 7
        %v3556 = vsub.s32 1, %v3555
        %v3557 = vrot.slane %v3449, %v3556
        %v3558 = vlaneseq
        %v3559 = vshrl.u32 %v3558, 7
        %v3560 = vsub.s32 0, %v3559
        %v3561 = vrot.slane %v3463, %v3560
        %v3562 = vlaneseq
        %v3563 = vshrl.u32 %v3562, 7
        %v3564 = vsub.s32 1, %v3563
        %v3565 = vrot.slane %v3463, %v3564
        %v3566 = vlaneseq
        %v3567 = vshrl.u32 %v3566, 7
        %v3568 = vsub.s32 0, %v3567
        %v3569 = vrot.slane %v3465, %v3568
        %v3570 = vlaneseq
        %v3571 = vshrl.u32 %v3570, 7
        %v3572 = vsub.s32 1, %v3571
        %v3573 = vrot.slane %v3465, %v3572
        %v3574 = vlaneseq
        %v3575 = vshrl.u32 %v3574, 7
        %v3576 = vsub.s32 0, %v3575
        %v3577 = vrot.slane %v3467, %v3576
        %v3578 = vlaneseq
        %v3579 = vshrl.u32 %v3578, 7
        %v3580 = vsub.s32 1, %v3579
        %v3581 = vrot.slane %v3467, %v3580
        %v3582 = vlaneseq
        %v3583 = vshrl.u32 %v3582, 7
        %v3584 = vsub.s32 0, %v3583
        %v3585 = vrot.slane %v3492, %v3584
        %v3586 = vlaneseq
        %v3587 = vshrl.u32 %v3586, 7
        %v3588 = vsub.s32 1, %v3587
        %v3589 = vrot.slane %v3492, %v3588
        %v3590 = vlaneseq
        %v3591 = vshrl.u32 %v3590, 7
        %v3592 = vsub.s32 0, %v3591
        %v3593 = vrot.slane %v3506, %v3592
        %v3594 = vlaneseq
        %v3595 = vshrl.u32 %v3594, 7
        %v3596 = vsub.s32 1, %v3595
        %v3597 = vrot.slane %v3506, %v3596
        %v3598 = vlaneseq
        %v3599 = vshrl.u32 %v3598, 7
        %v3600 = vsub.s32 0, %v3599
        %v3601 = vrot.slane %v3514, %v3600
        %v3602 = vlaneseq
        %v3603 = vshrl.u32 %v3602, 7
        %v3604 = vsub.s32 1, %v3603
        %v3605 = vrot.slane %v3514, %v3604
        %v3606 = vlaneseq
        %v3607 = vshrl.u32 %v3606, 7
        %v3608 = vsub.s32 0, %v3607
        %v3609 = vrot.slane %v3516, %v3608
        %v3610 = vlaneseq
        %v3611 = vshrl.u32 %v3610, 7
        %v3612 = vsub.s32 1, %v3611
        %v3613 = vrot.slane %v3516, %v3612
        %v3614 = vlaneseq
        %v3615 = vshrl.u32 %v3614, 7
        %v3616 = vsub.s32 0, %v3615
        %v3617 = vrot.slane %v3499, %v3616
        %v3618 = vlaneseq
        %v3619 = vshrl.u32 %v3618, 7
        %v3620 = vsub.s32 1, %v3619
        %v3621 = vrot.slane %v3499, %v3620
        %v3622 = vlaneseq
        %v3623 = vshrl.u32 %v3622, 7
        %v3624 = vsub.s32 0, %v3623
        %v3625 = vrot.slane %v3513, %v3624
        %v3626 = vlaneseq
        %v3627 = vshrl.u32 %v3626, 7
        %v3628 = vsub.s32 1, %v3627
        %v3629 = vrot.slane %v3513, %v3628
        %v3630 = vlaneseq
        %v3631 = vshrl.u32 %v3630, 7
        %v3632 = vsub.s32 0, %v3631
        %v3633 = vrot.slane %v3515, %v3632
        %v3634 = vlaneseq
        %v3635 = vshrl.u32 %v3634, 7
        %v3636 = vsub.s32 1, %v3635
        %v3637 = vrot.slane %v3515, %v3636
        %v3638 = vlaneseq
        %v3639 = vshrl.u32 %v3638, 7
        %v3640 = vsub.s32 0, %v3639
        %v3641 = vrot.slane %v3517, %v3640
        %v3642 = vlaneseq
        %v3643 = vshrl.u32 %v3642, 7
        %v3644 = vsub.s32 1, %v3643
        %v3645 = vrot.slane %v3517, %v3644
        %v3678 = vmul.f32 %v3521, %v3410
        %v3679 = vmul.f32 %v3525, %v3411
        %v3680 = vmul.f32 %v3521, %v3412
        %v3681 = vmul.f32 %v3525, %v3413
        %v3682 = vmul.f32 %v3529, %v3410
        %v3683 = vmul.f32 %v3533, %v3411
        %v3684 = vmul.f32 %v3529, %v3412
        %v3685 = vmul.f32 %v3533, %v3413
        %v3686 = vmul.f32 %v3537, %v3410
        %v3687 = vmul.f32 %v3541, %v3411
        %v3688 = vmul.f32 %v3537, %v3412
        %v3689 = vmul.f32 %v3541, %v3413
        %v3690 = vmul.f32 %v3545, %v3410
        %v3691 = vmul.f32 %v3549, %v3411
        %v3692 = vmul.f32 %v3545, %v3412
        %v3693 = vmul.f32 %v3549, %v3413
        %v3694 = vmul.f32 %v3553, %v3410
        %v3695 = vmul.f32 %v3557, %v3411
        %v3696 = vmul.f32 %v3553, %v3412
        %v3697 = vmul.f32 %v3557, %v3413
        %v3698 = vmul.f32 %v3561, %v3410
        %v3699 = vmul.f32 %v3565, %v3411
        %v3700 = vmul.f32 %v3561, %v3412
        %v3701 = vmul.f32 %v3565, %v3413
        %v3702 = vmul.f32 %v3569, %v3410
        %v3703 = vmul.f32 %v3573, %v3411
        %v3704 = vmul.f32 %v3569, %v3412
        %v3705 = vmul.f32 %v3573, %v3413
        %v3706 = vmul.f32 %v3577, %v3410
        %v3707 = vmul.f32 %v3581, %v3411
        %v3708 = vmul.f32 %v3577, %v3412
        %v3709 = vmul.f32 %v3581, %v3413
        %v3710 = vmul.f32 %v3585, %v3410
        %v3711 = vmul.f32 %v3589, %v3411
        %v3712 = vmul.f32 %v3585, %v3412
        %v3713 = vmul.f32 %v3589, %v3413
        %v3714 = vmul.f32 %v3593, %v3410
        %v3715 = vmul.f32 %v3597, %v3411
        %v3716 = vmul.f32 %v3593, %v3412
        %v3717 = vmul.f32 %v3597, %v3413
        %v3718 = vmul.f32 %v3601, %v3410
        %v3719 = vmul.f32 %v3605, %v3411
        %v3720 = vmul.f32 %v3601, %v3412
        %v3721 = vmul.f32 %v3605, %v3413
        %v3722 = vmul.f32 %v3609, %v3410
        %v3723 = vmul.f32 %v3613, %v3411
        %v3724 = vmul.f32 %v3609, %v3412
        %v3725 = vmul.f32 %v3613, %v3413
        %v3726 = vmul.f32 %v3617, %v3410
        %v3727 = vmul.f32 %v3621, %v3411
        %v3728 = vmul.f32 %v3617, %v3412
        %v3729 = vmul.f32 %v3621, %v3413
        %v3730 = vmul.f32 %v3625, %v3410
        %v3731 = vmul.f32 %v3629, %v3411
        %v3732 = vmul.f32 %v3625, %v3412
        %v3733 = vmul.f32 %v3629, %v3413
        %v3734 = vmul.f32 %v3633, %v3410
        %v3735 = vmul.f32 %v3637, %v3411
        %v3736 = vmul.f32 %v3633, %v3412
        %v3737 = vmul.f32 %v3637, %v3413
        %v3738 = vmul.f32 %v3641, %v3410
        %v3739 = vmul.f32 %v3645, %v3411
        %v3740 = vmul.f32 %v3641, %v3412
        %v3741 = vmul.f32 %v3645, %v3413
        %3742 = vmatprep.subr.mxu0 %v3679
        %3743 = vmatpush1.msra.mxu0 %v3678
        %3744 = vmatprep.subr.mxu0 %v3681
        %3745 = vmatpush1.msra.mxu0 %v3680
        %3746 = vmatprep.subr.mxu0 %v3683
        %3747 = vmatpush1.msra.mxu0 %v3682
        %3748 = vmatprep.subr.mxu0 %v3685
        %3749 = vmatpush1.msra.mxu0 %v3684
        %3750 = vmatprep.subr.mxu0 %v3687
        %3751 = vmatpush1.msra.mxu0 %v3686
        %3752 = vmatprep.subr.mxu0 %v3689
        %3753 = vmatpush1.msra.mxu0 %v3688
        %3754 = vmatprep.subr.mxu0 %v3691
        %3755 = vmatpush1.msra.mxu0 %v3690
        %3756 = vmatprep.subr.mxu0 %v3693
        %3757 = vmatpush1.msra.mxu0 %v3692
        %3758 = vmatprep.subr.mxu0 %v3695
        %3759 = vmatpush1.msra.mxu0 %v3694
        %3760 = vmatprep.subr.mxu0 %v3697
        %3761 = vmatpush1.msra.mxu0 %v3696
        %3762 = vmatprep.subr.mxu0 %v3699
        %3763 = vmatpush1.msra.mxu0 %v3698
        %3764 = vmatprep.subr.mxu0 %v3701
        %3765 = vmatpush1.msra.mxu0 %v3700
        %3766 = vmatprep.subr.mxu0 %v3703
        %3767 = vmatpush1.msra.mxu0 %v3702
        %3768 = vmatprep.subr.mxu0 %v3705
        %3769 = vmatpush1.msra.mxu0 %v3704
        %3770 = vmatprep.subr.mxu0 %v3707
        %3771 = vmatpush1.msra.mxu0 %v3706
        %3772 = vmatprep.subr.mxu0 %v3709
        %3773 = vmatpush1.msra.mxu0 %v3708
        %3774 = vmatprep.subr.mxu0 %v3711
        %3775 = vmatpush1.msra.mxu0 %v3710
        %3776 = vmatprep.subr.mxu0 %v3713
        %3777 = vmatpush1.msra.mxu0 %v3712
        %3778 = vmatprep.subr.mxu0 %v3715
        %3779 = vmatpush1.msra.mxu0 %v3714
        %3780 = vmatprep.subr.mxu0 %v3717
        %3781 = vmatpush1.msra.mxu0 %v3716
        %3782 = vmatprep.subr.mxu0 %v3719
        %3783 = vmatpush1.msra.mxu0 %v3718
        %3784 = vmatprep.subr.mxu0 %v3721
        %3785 = vmatpush1.msra.mxu0 %v3720
        %3786 = vmatprep.subr.mxu0 %v3723
        %3787 = vmatpush1.msra.mxu0 %v3722
        %3788 = vmatprep.subr.mxu0 %v3725
        %3789 = vmatpush1.msra.mxu0 %v3724
        %3790 = vmatprep.subr.mxu0 %v3727
        %3791 = vmatpush1.msra.mxu0 %v3726
        %3792 = vmatprep.subr.mxu0 %v3729
        %3793 = vmatpush1.msra.mxu0 %v3728
        %3794 = vmatprep.subr.mxu0 %v3731
        %3795 = vmatpush1.msra.mxu0 %v3730
        %3796 = vmatprep.subr.mxu0 %v3733
        %3797 = vmatpush1.msra.mxu0 %v3732
        %3798 = vmatprep.subr.mxu0 %v3735
        %3799 = vmatpush1.msra.mxu0 %v3734
        %3800 = vmatprep.subr.mxu0 %v3737
        %3801 = vmatpush1.msra.mxu0 %v3736
        %3802 = vmatprep.subr.mxu0 %v3739
        %3803 = vmatpush1.msra.mxu0 %v3738
        %3804 = vmatprep.subr.mxu0 %v3741
        %3805 = vmatpush1.msra.mxu0 %v3740
        %3806 = vmatprep.mubr.f32.mxu0 %v873
        %3807 = vmatmul.mubr.f32.gmra.mrb[0].mxu0 %v247
        %v3808 = vpop.f32.mrb[0].mxu0
        %v3809 = vadd.f32 0.0, %v3808
        %v3810 = vpop.f32.mrb[0].mxu0
        %v3811 = vadd.f32 0.0, %v3810
        %3812 = vdwg.mxu0
        %v3815 = vrot.slane %v3809, 4
        %v3816 = vrot.slane %v3811, 4
        %3819 = vst [vmem:[#allocation2 + $0x20] sm:$0xf0] %v3815
        %3820 = vst [vmem:[#allocation2 + $0x28] sm:$0xf0] %v3816
        %v3821 = vadd.f32 %v277, 1.0
        %v3822 = vadd.f32 %v278, 1.0
        %v3823 = vadd.f32 %v3821, %v248
        %v3824 = vadd.f32 %v3822, %v249
        %vm3825 = vcmp.gt.f32.partialorder %v3823, -1.0
        %vm3826 = vcmp.gt.f32.partialorder %v3824, -1.0
        %vm3827 = vcmp.lt.f32.partialorder %v3823, 16.0
        %vm3828 = vcmp.lt.f32.partialorder %v3824, 16.0
        %vm3829 = vmand %vm3825, %vm3827
        %vm3830 = vmand %vm3826, %vm3828
        %vm3831 = vmand %vm3829, %vm304
        %vm3832 = vmand %vm3830, %vm305
        %vm3833 = vmand %vm3831, %vm314
        %vm3834 = vmand %vm3832, %vm315
        %v3835 = vsel %vm3833, 1, 0
        %v3836 = vsel %vm3834, 1, 0
        %v3837 = vcvt.s32.f32 %v3835
        %v3838 = vcvt.s32.f32 %v3836
        %v3841 = vrot.slane %v3837, 6
        %v3842 = vrot.slane %v3838, 6
        %v3845 = vmul.f32 %v254, %v3841
        %v3846 = vmul.f32 %v255, %v3842
        %v3847 = vfloor.f32 %v3823
        %v3848 = vfloor.f32 %v3824
        %v3849 = vsub.f32 %v3823, %v3847
        %v3850 = vsub.f32 %v3824, %v3848
        %v3851 = vcvt.f32.s32.to.zero.pseudo %v3847
        %v3852 = vcvt.f32.s32.to.zero.pseudo %v3848
        %v3853 = vadd.s32 %v3851, 1
        %v3854 = vadd.s32 %v3852, 1
        %v3855 = vsub.f32 1.0, %v3849
        %v3856 = vsub.f32 1.0, %v3850
        %vm3857 = vcmp.ge.s32.totalorder %v3851, 0
        %vm3858 = vcmp.ge.s32.totalorder %v3852, 0
        %vm3859 = vcmp.le.s32.totalorder %v3851, 15
        %vm3860 = vcmp.le.s32.totalorder %v3852, 15
        %vm3861 = vmand %vm3857, %vm3859
        %vm3862 = vmand %vm3858, %vm3860
        %v3863 = vsel %vm3861, 1, 0
        %v3864 = vsel %vm3862, 1, 0
        %v3865 = vcvt.s32.f32 %v3863
        %v3866 = vcvt.s32.f32 %v3864
        %v3867 = vmul.f32 %v3855, %v3865
        %v3868 = vmul.f32 %v3856, %v3866
        %v3871 = vrot.slane %v3845, 2
        %v3872 = vrot.slane %v3846, 2
        %v3875 = vmul.f32 %v3867, %v3871
        %v3876 = vmul.f32 %v3868, %v3872
        %vm3877 = vcmp.ge.s32.totalorder %v3853, 0
        %vm3878 = vcmp.ge.s32.totalorder %v3854, 0
        %vm3879 = vcmp.le.s32.totalorder %v3853, 15
        %vm3880 = vcmp.le.s32.totalorder %v3854, 15
        %vm3881 = vmand %vm3877, %vm3879
        %vm3882 = vmand %vm3878, %vm3880
        %v3883 = vsel %vm3881, 1, 0
        %v3884 = vsel %vm3882, 1, 0
        %v3885 = vcvt.s32.f32 %v3883
        %v3886 = vcvt.s32.f32 %v3884
        %v3887 = vmul.f32 %v3849, %v3885
        %v3888 = vmul.f32 %v3850, %v3886
        %v3889 = vmul.f32 %v3887, %v3871
        %v3890 = vmul.f32 %v3888, %v3872
        %vm3891 = vcmp.gt.s32.totalorder %v3851, 0
        %v3892 = vsel %vm3891, %v3851, 0
        %vm3893 = vcmp.gt.s32.totalorder %v3852, 0
        %v3894 = vsel %vm3893, %v3852, 0
        %vm3895 = vcmp.lt.s32.totalorder %v3892, 15
        %v3896 = vsel %vm3895, %v3892, 15
        %vm3897 = vcmp.lt.s32.totalorder %v3894, 15
        %v3898 = vsel %vm3897, %v3894, 15
        %vm3899 = vcmp.gt.s32.totalorder %v3853, 0
        %v3900 = vsel %vm3899, %v3853, 0
        %vm3901 = vcmp.gt.s32.totalorder %v3854, 0
        %v3902 = vsel %vm3901, %v3854, 0
        %vm3903 = vcmp.lt.s32.totalorder %v3900, 15
        %v3904 = vsel %vm3903, %v3900, 15
        %vm3905 = vcmp.lt.s32.totalorder %v3902, 15
        %v3906 = vsel %vm3905, %v3902, 15
        %v3907 = vlaneseq
        %v3908 = vshrl.u32 %v3907, 7
        %v3909 = vsub.s32 6, %v3908
        %v3910 = vrot.slane %v3896, %v3909
        %v3911 = vlaneseq
        %v3912 = vshrl.u32 %v3911, 7
        %v3913 = vsub.s32 6, %v3912
        %v3914 = vrot.slane %v3898, %v3913
        %vm3915 = vcmp.eq.s32.totalorder %v282, %v3910
        %vm3916 = vcmp.eq.s32.totalorder %v282, %v3914
        %vm3917 = vcmp.eq.s32.totalorder %v283, %v3910
        %vm3918 = vcmp.eq.s32.totalorder %v283, %v3914
        %v3919 = vlaneseq
        %v3920 = vshrl.u32 %v3919, 7
        %v3921 = vsub.s32 6, %v3920
        %v3922 = vrot.slane %v3875, %v3921
        %v3923 = vlaneseq
        %v3924 = vshrl.u32 %v3923, 7
        %v3925 = vsub.s32 6, %v3924
        %v3926 = vrot.slane %v3876, %v3925
        %v3927 = vsel %vm3915, %v3922, 0.0
        %v3928 = vsel %vm3916, %v3926, 0.0
        %v3929 = vsel %vm3917, %v3922, 0.0
        %v3930 = vsel %vm3918, %v3926, 0.0
        %v3931 = vlaneseq
        %v3932 = vshrl.u32 %v3931, 7
        %v3933 = vsub.s32 6, %v3932
        %v3934 = vrot.slane %v3904, %v3933
        %v3935 = vlaneseq
        %v3936 = vshrl.u32 %v3935, 7
        %v3937 = vsub.s32 6, %v3936
        %v3938 = vrot.slane %v3906, %v3937
        %vm3939 = vcmp.eq.s32.totalorder %v282, %v3934
        %vm3940 = vcmp.eq.s32.totalorder %v282, %v3938
        %vm3941 = vcmp.eq.s32.totalorder %v283, %v3934
        %vm3942 = vcmp.eq.s32.totalorder %v283, %v3938
        %v3943 = vlaneseq
        %v3944 = vshrl.u32 %v3943, 7
        %v3945 = vsub.s32 6, %v3944
        %v3946 = vrot.slane %v3889, %v3945
        %v3947 = vlaneseq
        %v3948 = vshrl.u32 %v3947, 7
        %v3949 = vsub.s32 6, %v3948
        %v3950 = vrot.slane %v3890, %v3949
        %v3951 = vsel %vm3939, %v3946, 0.0
        %v3952 = vsel %vm3940, %v3950, 0.0
        %v3953 = vsel %vm3941, %v3946, 0.0
        %v3954 = vsel %vm3942, %v3950, 0.0
        %v3955 = vadd.f32 %v3927, %v3951
        %v3956 = vadd.f32 %v3928, %v3952
        %v3957 = vadd.f32 %v3929, %v3953
        %v3958 = vadd.f32 %v3930, %v3954
        %v3959 = vlaneseq
        %v3960 = vshrl.u32 %v3959, 7
        %v3961 = vsub.s32 7, %v3960
        %v3962 = vrot.slane %v429, %v3961
        %v3963 = vlaneseq
        %v3964 = vshrl.u32 %v3963, 7
        %v3965 = vsub.s32 7, %v3964
        %v3966 = vrot.slane %v431, %v3965
        %vm3967 = vcmp.eq.s32.totalorder %v282, %v3962
        %vm3968 = vcmp.eq.s32.totalorder %v282, %v3966
        %vm3969 = vcmp.eq.s32.totalorder %v283, %v3962
        %vm3970 = vcmp.eq.s32.totalorder %v283, %v3966
        %v3971 = vlaneseq
        %v3972 = vshrl.u32 %v3971, 7
        %v3973 = vsub.s32 7, %v3972
        %v3974 = vrot.slane %v394, %v3973
        %v3975 = vlaneseq
        %v3976 = vshrl.u32 %v3975, 7
        %v3977 = vsub.s32 7, %v3976
        %v3978 = vrot.slane %v395, %v3977
        %v3979 = vsel %vm3967, %v3974, 0.0
        %v3980 = vsel %vm3968, %v3978, 0.0
        %v3981 = vsel %vm3969, %v3974, 0.0
        %v3982 = vsel %vm3970, %v3978, 0.0
        %v3983 = vlaneseq
        %v3984 = vshrl.u32 %v3983, 7
        %v3985 = vsub.s32 7, %v3984
        %v3986 = vrot.slane %v437, %v3985
        %v3987 = vlaneseq
        %v3988 = vshrl.u32 %v3987, 7
        %v3989 = vsub.s32 7, %v3988
        %v3990 = vrot.slane %v439, %v3989
        %vm3991 = vcmp.eq.s32.totalorder %v282, %v3986
        %vm3992 = vcmp.eq.s32.totalorder %v282, %v3990
        %vm3993 = vcmp.eq.s32.totalorder %v283, %v3986
        %vm3994 = vcmp.eq.s32.totalorder %v283, %v3990
        %v3995 = vlaneseq
        %v3996 = vshrl.u32 %v3995, 7
        %v3997 = vsub.s32 7, %v3996
        %v3998 = vrot.slane %v406, %v3997
        %v3999 = vlaneseq
        %v4000 = vshrl.u32 %v3999, 7
        %v4001 = vsub.s32 7, %v4000
        %v4002 = vrot.slane %v407, %v4001
        %v4003 = vsel %vm3991, %v3998, 0.0
        %v4004 = vsel %vm3992, %v4002, 0.0
        %v4005 = vsel %vm3993, %v3998, 0.0
        %v4006 = vsel %vm3994, %v4002, 0.0
        %v4007 = vadd.f32 %v3979, %v4003
        %v4008 = vadd.f32 %v3980, %v4004
        %v4009 = vadd.f32 %v3981, %v4005
        %v4010 = vadd.f32 %v3982, %v4006
        %v4015 = vcombine.low %v3955, %v3956
        %v4016 = vcombine.high %v3955, %v3956
        %v4018 = vunpack.c.l.s4 1966171168
        %v4019 = vunpack.c.0.s8 %v4018
        %v4020 = vlaneseq
        %v4021 = vshrl.u32 %v4020, 7
        %v4022 = vsub.s32 %v4019, %v4021
        %v4023 = vrot.slane %v4015, %v4022
        %v4025 = vunpack.c.l.s4 1966171168
        %v4026 = vunpack.c.0.s8 %v4025
        %v4027 = vlaneseq
        %v4028 = vshrl.u32 %v4027, 7
        %v4029 = vsub.s32 %v4026, %v4028
        %v4030 = vrot.slane %v4016, %v4029
        %v4031 = vcombine.high %v4023, %v4023
        %v4032 = vcombine.high %v4030, %v4030
        %v4034 = vunpack.c.l.s4 1966171168
        %v4035 = vunpack.c.0.s8 %v4034
        %v4036 = vlaneseq
        %v4037 = vshrl.u32 %v4036, 7
        %v4038 = vsub.s32 %v4035, %v4037
        %v4039 = vrot.slane %v4023, %v4038
        %v4041 = vunpack.c.l.s4 1966171168
        %v4042 = vunpack.c.0.s8 %v4041
        %v4043 = vlaneseq
        %v4044 = vshrl.u32 %v4043, 7
        %v4045 = vsub.s32 %v4042, %v4044
        %v4046 = vrot.slane %v4030, %v4045
        %v4048 = vunpack.c.l.s4 1966171168
        %v4049 = vunpack.c.0.s8 %v4048
        %v4050 = vlaneseq
        %v4051 = vshrl.u32 %v4050, 7
        %v4052 = vsub.s32 %v4049, %v4051
        %v4053 = vrot.slane %v4031, %v4052
        %v4055 = vunpack.c.l.s4 1966171168
        %v4056 = vunpack.c.0.s8 %v4055
        %v4057 = vlaneseq
        %v4058 = vshrl.u32 %v4057, 7
        %v4059 = vsub.s32 %v4056, %v4058
        %v4060 = vrot.slane %v4032, %v4059
        %v4061 = vcombine.high %v4039, %v4039
        %v4062 = vcombine.high %v4046, %v4046
        %v4063 = vcombine.high %v4053, %v4053
        %v4064 = vcombine.high %v4060, %v4060
        %v4065 = vcombine.low %v3957, %v3958
        %v4066 = vcombine.high %v3957, %v3958
        %v4068 = vunpack.c.l.s4 1966171168
        %v4069 = vunpack.c.0.s8 %v4068
        %v4070 = vlaneseq
        %v4071 = vshrl.u32 %v4070, 7
        %v4072 = vsub.s32 %v4069, %v4071
        %v4073 = vrot.slane %v4065, %v4072
        %v4075 = vunpack.c.l.s4 1966171168
        %v4076 = vunpack.c.0.s8 %v4075
        %v4077 = vlaneseq
        %v4078 = vshrl.u32 %v4077, 7
        %v4079 = vsub.s32 %v4076, %v4078
        %v4080 = vrot.slane %v4066, %v4079
        %v4081 = vcombine.high %v4073, %v4073
        %v4082 = vcombine.high %v4080, %v4080
        %v4084 = vunpack.c.l.s4 1966171168
        %v4085 = vunpack.c.0.s8 %v4084
        %v4086 = vlaneseq
        %v4087 = vshrl.u32 %v4086, 7
        %v4088 = vsub.s32 %v4085, %v4087
        %v4089 = vrot.slane %v4073, %v4088
        %v4091 = vunpack.c.l.s4 1966171168
        %v4092 = vunpack.c.0.s8 %v4091
        %v4093 = vlaneseq
        %v4094 = vshrl.u32 %v4093, 7
        %v4095 = vsub.s32 %v4092, %v4094
        %v4096 = vrot.slane %v4080, %v4095
        %v4098 = vunpack.c.l.s4 1966171168
        %v4099 = vunpack.c.0.s8 %v4098
        %v4100 = vlaneseq
        %v4101 = vshrl.u32 %v4100, 7
        %v4102 = vsub.s32 %v4099, %v4101
        %v4103 = vrot.slane %v4081, %v4102
        %v4105 = vunpack.c.l.s4 1966171168
        %v4106 = vunpack.c.0.s8 %v4105
        %v4107 = vlaneseq
        %v4108 = vshrl.u32 %v4107, 7
        %v4109 = vsub.s32 %v4106, %v4108
        %v4110 = vrot.slane %v4082, %v4109
        %v4111 = vcombine.high %v4089, %v4089
        %v4112 = vcombine.high %v4096, %v4096
        %v4113 = vcombine.high %v4103, %v4103
        %v4114 = vcombine.high %v4110, %v4110
        %v4115 = vlaneseq
        %v4116 = vshrl.u32 %v4115, 7
        %v4117 = vsub.s32 0, %v4116
        %v4118 = vrot.slane %v4039, %v4117
        %v4119 = vlaneseq
        %v4120 = vshrl.u32 %v4119, 7
        %v4121 = vsub.s32 1, %v4120
        %v4122 = vrot.slane %v4039, %v4121
        %v4123 = vlaneseq
        %v4124 = vshrl.u32 %v4123, 7
        %v4125 = vsub.s32 0, %v4124
        %v4126 = vrot.slane %v4053, %v4125
        %v4127 = vlaneseq
        %v4128 = vshrl.u32 %v4127, 7
        %v4129 = vsub.s32 1, %v4128
        %v4130 = vrot.slane %v4053, %v4129
        %v4131 = vlaneseq
        %v4132 = vshrl.u32 %v4131, 7
        %v4133 = vsub.s32 0, %v4132
        %v4134 = vrot.slane %v4061, %v4133
        %v4135 = vlaneseq
        %v4136 = vshrl.u32 %v4135, 7
        %v4137 = vsub.s32 1, %v4136
        %v4138 = vrot.slane %v4061, %v4137
        %v4139 = vlaneseq
        %v4140 = vshrl.u32 %v4139, 7
        %v4141 = vsub.s32 0, %v4140
        %v4142 = vrot.slane %v4063, %v4141
        %v4143 = vlaneseq
        %v4144 = vshrl.u32 %v4143, 7
        %v4145 = vsub.s32 1, %v4144
        %v4146 = vrot.slane %v4063, %v4145
        %v4147 = vlaneseq
        %v4148 = vshrl.u32 %v4147, 7
        %v4149 = vsub.s32 0, %v4148
        %v4150 = vrot.slane %v4046, %v4149
        %v4151 = vlaneseq
        %v4152 = vshrl.u32 %v4151, 7
        %v4153 = vsub.s32 1, %v4152
        %v4154 = vrot.slane %v4046, %v4153
        %v4155 = vlaneseq
        %v4156 = vshrl.u32 %v4155, 7
        %v4157 = vsub.s32 0, %v4156
        %v4158 = vrot.slane %v4060, %v4157
        %v4159 = vlaneseq
        %v4160 = vshrl.u32 %v4159, 7
        %v4161 = vsub.s32 1, %v4160
        %v4162 = vrot.slane %v4060, %v4161
        %v4163 = vlaneseq
        %v4164 = vshrl.u32 %v4163, 7
        %v4165 = vsub.s32 0, %v4164
        %v4166 = vrot.slane %v4062, %v4165
        %v4167 = vlaneseq
        %v4168 = vshrl.u32 %v4167, 7
        %v4169 = vsub.s32 1, %v4168
        %v4170 = vrot.slane %v4062, %v4169
        %v4171 = vlaneseq
        %v4172 = vshrl.u32 %v4171, 7
        %v4173 = vsub.s32 0, %v4172
        %v4174 = vrot.slane %v4064, %v4173
        %v4175 = vlaneseq
        %v4176 = vshrl.u32 %v4175, 7
        %v4177 = vsub.s32 1, %v4176
        %v4178 = vrot.slane %v4064, %v4177
        %v4179 = vlaneseq
        %v4180 = vshrl.u32 %v4179, 7
        %v4181 = vsub.s32 0, %v4180
        %v4182 = vrot.slane %v4089, %v4181
        %v4183 = vlaneseq
        %v4184 = vshrl.u32 %v4183, 7
        %v4185 = vsub.s32 1, %v4184
        %v4186 = vrot.slane %v4089, %v4185
        %v4187 = vlaneseq
        %v4188 = vshrl.u32 %v4187, 7
        %v4189 = vsub.s32 0, %v4188
        %v4190 = vrot.slane %v4103, %v4189
        %v4191 = vlaneseq
        %v4192 = vshrl.u32 %v4191, 7
        %v4193 = vsub.s32 1, %v4192
        %v4194 = vrot.slane %v4103, %v4193
        %v4195 = vlaneseq
        %v4196 = vshrl.u32 %v4195, 7
        %v4197 = vsub.s32 0, %v4196
        %v4198 = vrot.slane %v4111, %v4197
        %v4199 = vlaneseq
        %v4200 = vshrl.u32 %v4199, 7
        %v4201 = vsub.s32 1, %v4200
        %v4202 = vrot.slane %v4111, %v4201
        %v4203 = vlaneseq
        %v4204 = vshrl.u32 %v4203, 7
        %v4205 = vsub.s32 0, %v4204
        %v4206 = vrot.slane %v4113, %v4205
        %v4207 = vlaneseq
        %v4208 = vshrl.u32 %v4207, 7
        %v4209 = vsub.s32 1, %v4208
        %v4210 = vrot.slane %v4113, %v4209
        %v4211 = vlaneseq
        %v4212 = vshrl.u32 %v4211, 7
        %v4213 = vsub.s32 0, %v4212
        %v4214 = vrot.slane %v4096, %v4213
        %v4215 = vlaneseq
        %v4216 = vshrl.u32 %v4215, 7
        %v4217 = vsub.s32 1, %v4216
        %v4218 = vrot.slane %v4096, %v4217
        %v4219 = vlaneseq
        %v4220 = vshrl.u32 %v4219, 7
        %v4221 = vsub.s32 0, %v4220
        %v4222 = vrot.slane %v4110, %v4221
        %v4223 = vlaneseq
        %v4224 = vshrl.u32 %v4223, 7
        %v4225 = vsub.s32 1, %v4224
        %v4226 = vrot.slane %v4110, %v4225
        %v4227 = vlaneseq
        %v4228 = vshrl.u32 %v4227, 7
        %v4229 = vsub.s32 0, %v4228
        %v4230 = vrot.slane %v4112, %v4229
        %v4231 = vlaneseq
        %v4232 = vshrl.u32 %v4231, 7
        %v4233 = vsub.s32 1, %v4232
        %v4234 = vrot.slane %v4112, %v4233
        %v4235 = vlaneseq
        %v4236 = vshrl.u32 %v4235, 7
        %v4237 = vsub.s32 0, %v4236
        %v4238 = vrot.slane %v4114, %v4237
        %v4239 = vlaneseq
        %v4240 = vshrl.u32 %v4239, 7
        %v4241 = vsub.s32 1, %v4240
        %v4242 = vrot.slane %v4114, %v4241
        %v4275 = vmul.f32 %v4118, %v4007
        %v4276 = vmul.f32 %v4122, %v4008
        %v4277 = vmul.f32 %v4118, %v4009
        %v4278 = vmul.f32 %v4122, %v4010
        %v4279 = vmul.f32 %v4126, %v4007
        %v4280 = vmul.f32 %v4130, %v4008
        %v4281 = vmul.f32 %v4126, %v4009
        %v4282 = vmul.f32 %v4130, %v4010
        %v4283 = vmul.f32 %v4134, %v4007
        %v4284 = vmul.f32 %v4138, %v4008
        %v4285 = vmul.f32 %v4134, %v4009
        %v4286 = vmul.f32 %v4138, %v4010
        %v4287 = vmul.f32 %v4142, %v4007
        %v4288 = vmul.f32 %v4146, %v4008
        %v4289 = vmul.f32 %v4142, %v4009
        %v4290 = vmul.f32 %v4146, %v4010
        %v4291 = vmul.f32 %v4150, %v4007
        %v4292 = vmul.f32 %v4154, %v4008
        %v4293 = vmul.f32 %v4150, %v4009
        %v4294 = vmul.f32 %v4154, %v4010
        %v4295 = vmul.f32 %v4158, %v4007
        %v4296 = vmul.f32 %v4162, %v4008
        %v4297 = vmul.f32 %v4158, %v4009
        %v4298 = vmul.f32 %v4162, %v4010
        %v4299 = vmul.f32 %v4166, %v4007
        %v4300 = vmul.f32 %v4170, %v4008
        %v4301 = vmul.f32 %v4166, %v4009
        %v4302 = vmul.f32 %v4170, %v4010
        %v4303 = vmul.f32 %v4174, %v4007
        %v4304 = vmul.f32 %v4178, %v4008
        %v4305 = vmul.f32 %v4174, %v4009
        %v4306 = vmul.f32 %v4178, %v4010
        %v4307 = vmul.f32 %v4182, %v4007
        %v4308 = vmul.f32 %v4186, %v4008
        %v4309 = vmul.f32 %v4182, %v4009
        %v4310 = vmul.f32 %v4186, %v4010
        %v4311 = vmul.f32 %v4190, %v4007
        %v4312 = vmul.f32 %v4194, %v4008
        %v4313 = vmul.f32 %v4190, %v4009
        %v4314 = vmul.f32 %v4194, %v4010
        %v4315 = vmul.f32 %v4198, %v4007
        %v4316 = vmul.f32 %v4202, %v4008
        %v4317 = vmul.f32 %v4198, %v4009
        %v4318 = vmul.f32 %v4202, %v4010
        %v4319 = vmul.f32 %v4206, %v4007
        %v4320 = vmul.f32 %v4210, %v4008
        %v4321 = vmul.f32 %v4206, %v4009
        %v4322 = vmul.f32 %v4210, %v4010
        %v4323 = vmul.f32 %v4214, %v4007
        %v4324 = vmul.f32 %v4218, %v4008
        %v4325 = vmul.f32 %v4214, %v4009
        %v4326 = vmul.f32 %v4218, %v4010
        %v4327 = vmul.f32 %v4222, %v4007
        %v4328 = vmul.f32 %v4226, %v4008
        %v4329 = vmul.f32 %v4222, %v4009
        %v4330 = vmul.f32 %v4226, %v4010
        %v4331 = vmul.f32 %v4230, %v4007
        %v4332 = vmul.f32 %v4234, %v4008
        %v4333 = vmul.f32 %v4230, %v4009
        %v4334 = vmul.f32 %v4234, %v4010
        %v4335 = vmul.f32 %v4238, %v4007
        %v4336 = vmul.f32 %v4242, %v4008
        %v4337 = vmul.f32 %v4238, %v4009
        %v4338 = vmul.f32 %v4242, %v4010
        %4339 = vmatprep.subr.mxu0 %v4276
        %4340 = vmatpush1.msra.mxu0 %v4275
        %4341 = vmatprep.subr.mxu0 %v4278
        %4342 = vmatpush1.msra.mxu0 %v4277
        %4343 = vmatprep.subr.mxu0 %v4280
        %4344 = vmatpush1.msra.mxu0 %v4279
        %4345 = vmatprep.subr.mxu0 %v4282
        %4346 = vmatpush1.msra.mxu0 %v4281
        %4347 = vmatprep.subr.mxu0 %v4284
        %4348 = vmatpush1.msra.mxu0 %v4283
        %4349 = vmatprep.subr.mxu0 %v4286
        %4350 = vmatpush1.msra.mxu0 %v4285
        %4351 = vmatprep.subr.mxu0 %v4288
        %4352 = vmatpush1.msra.mxu0 %v4287
        %4353 = vmatprep.subr.mxu0 %v4290
        %4354 = vmatpush1.msra.mxu0 %v4289
        %4355 = vmatprep.subr.mxu0 %v4292
        %4356 = vmatpush1.msra.mxu0 %v4291
        %4357 = vmatprep.subr.mxu0 %v4294
        %4358 = vmatpush1.msra.mxu0 %v4293
        %4359 = vmatprep.subr.mxu0 %v4296
        %4360 = vmatpush1.msra.mxu0 %v4295
        %4361 = vmatprep.subr.mxu0 %v4298
        %4362 = vmatpush1.msra.mxu0 %v4297
        %4363 = vmatprep.subr.mxu0 %v4300
        %4364 = vmatpush1.msra.mxu0 %v4299
        %4365 = vmatprep.subr.mxu0 %v4302
        %4366 = vmatpush1.msra.mxu0 %v4301
        %4367 = vmatprep.subr.mxu0 %v4304
        %4368 = vmatpush1.msra.mxu0 %v4303
        %4369 = vmatprep.subr.mxu0 %v4306
        %4370 = vmatpush1.msra.mxu0 %v4305
        %4371 = vmatprep.subr.mxu0 %v4308
        %4372 = vmatpush1.msra.mxu0 %v4307
        %4373 = vmatprep.subr.mxu0 %v4310
        %4374 = vmatpush1.msra.mxu0 %v4309
        %4375 = vmatprep.subr.mxu0 %v4312
        %4376 = vmatpush1.msra.mxu0 %v4311
        %4377 = vmatprep.subr.mxu0 %v4314
        %4378 = vmatpush1.msra.mxu0 %v4313
        %4379 = vmatprep.subr.mxu0 %v4316
        %4380 = vmatpush1.msra.mxu0 %v4315
        %4381 = vmatprep.subr.mxu0 %v4318
        %4382 = vmatpush1.msra.mxu0 %v4317
        %4383 = vmatprep.subr.mxu0 %v4320
        %4384 = vmatpush1.msra.mxu0 %v4319
        %4385 = vmatprep.subr.mxu0 %v4322
        %4386 = vmatpush1.msra.mxu0 %v4321
        %4387 = vmatprep.subr.mxu0 %v4324
        %4388 = vmatpush1.msra.mxu0 %v4323
        %4389 = vmatprep.subr.mxu0 %v4326
        %4390 = vmatpush1.msra.mxu0 %v4325
        %4391 = vmatprep.subr.mxu0 %v4328
        %4392 = vmatpush1.msra.mxu0 %v4327
        %4393 = vmatprep.subr.mxu0 %v4330
        %4394 = vmatpush1.msra.mxu0 %v4329
        %4395 = vmatprep.subr.mxu0 %v4332
        %4396 = vmatpush1.msra.mxu0 %v4331
        %4397 = vmatprep.subr.mxu0 %v4334
        %4398 = vmatpush1.msra.mxu0 %v4333
        %4399 = vmatprep.subr.mxu0 %v4336
        %4400 = vmatpush1.msra.mxu0 %v4335
        %4401 = vmatprep.subr.mxu0 %v4338
        %4402 = vmatpush1.msra.mxu0 %v4337
        %4403 = vmatprep.mubr.f32.mxu0 %v873
        %4404 = vmatmul.mubr.f32.gmra.mrb[0].mxu0 %v247
        %v4405 = vpop.f32.mrb[0].mxu0
        %v4406 = vadd.f32 0.0, %v4405
        %v4407 = vpop.f32.mrb[0].mxu0
        %v4408 = vadd.f32 0.0, %v4407
        %4409 = vdwg.mxu0
        %4410 = vst [vmem:[#allocation2 + $0x30] sm:$0xf] %v4406
        %4411 = vst [vmem:[#allocation2 + $0x38] sm:$0xf] %v4408
        %v4412 = vadd.f32 %v948, %v252
        %v4413 = vadd.f32 %v949, %v253
        %vm4414 = vcmp.gt.f32.partialorder %v4412, -1.0
        %vm4415 = vcmp.gt.f32.partialorder %v4413, -1.0
        %v4416 = vsel %vm4414, 1, 0
        %v4417 = vsel %vm4415, 1, 0
        %v4418 = vrot.slane %v4416, 1
        %v4419 = vrot.slane %v4417, 1
        %vm4420 = vcmp.ne.s32.totalorder %v4418, 0
        %vm4421 = vcmp.ne.s32.totalorder %v4419, 0
        %vm4422 = vmand %vm3829, %vm4420
        %vm4423 = vmand %vm3830, %vm4421
        %vm4424 = vcmp.lt.f32.partialorder %v4412, 16.0
        %vm4425 = vcmp.lt.f32.partialorder %v4413, 16.0
        %v4426 = vsel %vm4424, 1, 0
        %v4427 = vsel %vm4425, 1, 0
        %v4428 = vrot.slane %v4426, 1
        %v4429 = vrot.slane %v4427, 1
        %vm4430 = vcmp.ne.s32.totalorder %v4428, 0
        %vm4431 = vcmp.ne.s32.totalorder %v4429, 0
        %vm4432 = vmand %vm4422, %vm4430
        %vm4433 = vmand %vm4423, %vm4431
        %v4434 = vsel %vm4432, 1, 0
        %v4435 = vsel %vm4433, 1, 0
        %v4436 = vcvt.s32.f32 %v4434
        %v4437 = vcvt.s32.f32 %v4435
        %v4440 = vrot.slane %v4436, 6
        %v4441 = vrot.slane %v4437, 6
        %v4444 = vmul.f32 %v254, %v4440
        %v4445 = vmul.f32 %v255, %v4441
        %v4446 = vfloor.f32 %v4412
        %v4447 = vfloor.f32 %v4413
        %v4448 = vsub.f32 %v4412, %v4446
        %v4449 = vsub.f32 %v4413, %v4447
        %v4450 = vcvt.f32.s32.to.zero.pseudo %v4446
        %v4451 = vcvt.f32.s32.to.zero.pseudo %v4447
        %v4452 = vadd.s32 %v4450, 1
        %v4453 = vadd.s32 %v4451, 1
        %v4456 = vrot.slane %v4444, 2
        %v4457 = vrot.slane %v4445, 2
        %v4460 = vmul.f32 %v3867, %v4456
        %v4461 = vmul.f32 %v3868, %v4457
        %v4462 = vmul.f32 %v3887, %v4456
        %v4463 = vmul.f32 %v3888, %v4457
        %v4464 = vsub.f32 1.0, %v4448
        %v4465 = vsub.f32 1.0, %v4449
        %vm4466 = vcmp.ge.s32.totalorder %v4450, 0
        %vm4467 = vcmp.ge.s32.totalorder %v4451, 0
        %vm4468 = vcmp.le.s32.totalorder %v4450, 15
        %vm4469 = vcmp.le.s32.totalorder %v4451, 15
        %vm4470 = vmand %vm4466, %vm4468
        %vm4471 = vmand %vm4467, %vm4469
        %v4472 = vsel %vm4470, 1, 0
        %v4473 = vsel %vm4471, 1, 0
        %v4474 = vcvt.s32.f32 %v4472
        %v4475 = vcvt.s32.f32 %v4473
        %v4476 = vmul.f32 %v4464, %v4474
        %v4477 = vmul.f32 %v4465, %v4475
        %vm4478 = vcmp.ge.s32.totalorder %v4452, 0
        %vm4479 = vcmp.ge.s32.totalorder %v4453, 0
        %vm4480 = vcmp.le.s32.totalorder %v4452, 15
        %vm4481 = vcmp.le.s32.totalorder %v4453, 15
        %vm4482 = vmand %vm4478, %vm4480
        %vm4483 = vmand %vm4479, %vm4481
        %v4484 = vsel %vm4482, 1, 0
        %v4485 = vsel %vm4483, 1, 0
        %v4486 = vcvt.s32.f32 %v4484
        %v4487 = vcvt.s32.f32 %v4485
        %v4488 = vmul.f32 %v4448, %v4486
        %v4489 = vmul.f32 %v4449, %v4487
        %vm4490 = vcmp.gt.s32.totalorder %v4450, 0
        %v4491 = vsel %vm4490, %v4450, 0
        %vm4492 = vcmp.gt.s32.totalorder %v4451, 0
        %v4493 = vsel %vm4492, %v4451, 0
        %vm4494 = vcmp.lt.s32.totalorder %v4491, 15
        %v4495 = vsel %vm4494, %v4491, 15
        %vm4496 = vcmp.lt.s32.totalorder %v4493, 15
        %v4497 = vsel %vm4496, %v4493, 15
        %vm4498 = vcmp.gt.s32.totalorder %v4452, 0
        %v4499 = vsel %vm4498, %v4452, 0
        %vm4500 = vcmp.gt.s32.totalorder %v4453, 0
        %v4501 = vsel %vm4500, %v4453, 0
        %vm4502 = vcmp.lt.s32.totalorder %v4499, 15
        %v4503 = vsel %vm4502, %v4499, 15
        %vm4504 = vcmp.lt.s32.totalorder %v4501, 15
        %v4505 = vsel %vm4504, %v4501, 15
        %v4506 = vlaneseq
        %v4507 = vshrl.u32 %v4506, 7
        %v4508 = vsub.s32 7, %v4507
        %v4509 = vrot.slane %v3896, %v4508
        %v4510 = vlaneseq
        %v4511 = vshrl.u32 %v4510, 7
        %v4512 = vsub.s32 7, %v4511
        %v4513 = vrot.slane %v3898, %v4512
        %vm4514 = vcmp.eq.s32.totalorder %v282, %v4509
        %vm4515 = vcmp.eq.s32.totalorder %v282, %v4513
        %vm4516 = vcmp.eq.s32.totalorder %v283, %v4509
        %vm4517 = vcmp.eq.s32.totalorder %v283, %v4513
        %v4518 = vlaneseq
        %v4519 = vshrl.u32 %v4518, 7
        %v4520 = vsub.s32 7, %v4519
        %v4521 = vrot.slane %v4460, %v4520
        %v4522 = vlaneseq
        %v4523 = vshrl.u32 %v4522, 7
        %v4524 = vsub.s32 7, %v4523
        %v4525 = vrot.slane %v4461, %v4524
        %v4526 = vsel %vm4514, %v4521, 0.0
        %v4527 = vsel %vm4515, %v4525, 0.0
        %v4528 = vsel %vm4516, %v4521, 0.0
        %v4529 = vsel %vm4517, %v4525, 0.0
        %v4530 = vlaneseq
        %v4531 = vshrl.u32 %v4530, 7
        %v4532 = vsub.s32 7, %v4531
        %v4533 = vrot.slane %v3904, %v4532
        %v4534 = vlaneseq
        %v4535 = vshrl.u32 %v4534, 7
        %v4536 = vsub.s32 7, %v4535
        %v4537 = vrot.slane %v3906, %v4536
        %vm4538 = vcmp.eq.s32.totalorder %v282, %v4533
        %vm4539 = vcmp.eq.s32.totalorder %v282, %v4537
        %vm4540 = vcmp.eq.s32.totalorder %v283, %v4533
        %vm4541 = vcmp.eq.s32.totalorder %v283, %v4537
        %v4542 = vlaneseq
        %v4543 = vshrl.u32 %v4542, 7
        %v4544 = vsub.s32 7, %v4543
        %v4545 = vrot.slane %v4462, %v4544
        %v4546 = vlaneseq
        %v4547 = vshrl.u32 %v4546, 7
        %v4548 = vsub.s32 7, %v4547
        %v4549 = vrot.slane %v4463, %v4548
        %v4550 = vsel %vm4538, %v4545, 0.0
        %v4551 = vsel %vm4539, %v4549, 0.0
        %v4552 = vsel %vm4540, %v4545, 0.0
        %v4553 = vsel %vm4541, %v4549, 0.0
        %v4554 = vadd.f32 %v4526, %v4550
        %v4555 = vadd.f32 %v4527, %v4551
        %v4556 = vadd.f32 %v4528, %v4552
        %v4557 = vadd.f32 %v4529, %v4553
        %v4558 = vlaneseq
        %v4559 = vshrl.u32 %v4558, 7
        %v4560 = vsub.s32 0, %v4559
        %v4561 = vrot.slane %v4495, %v4560
        %v4562 = vlaneseq
        %v4563 = vshrl.u32 %v4562, 7
        %v4564 = vsub.s32 0, %v4563
        %v4565 = vrot.slane %v4497, %v4564
        %vm4566 = vcmp.eq.s32.totalorder %v282, %v4561
        %vm4567 = vcmp.eq.s32.totalorder %v282, %v4565
        %vm4568 = vcmp.eq.s32.totalorder %v283, %v4561
        %vm4569 = vcmp.eq.s32.totalorder %v283, %v4565
        %v4570 = vlaneseq
        %v4571 = vshrl.u32 %v4570, 7
        %v4572 = vsub.s32 0, %v4571
        %v4573 = vrot.slane %v4476, %v4572
        %v4574 = vlaneseq
        %v4575 = vshrl.u32 %v4574, 7
        %v4576 = vsub.s32 0, %v4575
        %v4577 = vrot.slane %v4477, %v4576
        %v4578 = vsel %vm4566, %v4573, 0.0
        %v4579 = vsel %vm4567, %v4577, 0.0
        %v4580 = vsel %vm4568, %v4573, 0.0
        %v4581 = vsel %vm4569, %v4577, 0.0
        %v4582 = vlaneseq
        %v4583 = vshrl.u32 %v4582, 7
        %v4584 = vsub.s32 0, %v4583
        %v4585 = vrot.slane %v4503, %v4584
        %v4586 = vlaneseq
        %v4587 = vshrl.u32 %v4586, 7
        %v4588 = vsub.s32 0, %v4587
        %v4589 = vrot.slane %v4505, %v4588
        %vm4590 = vcmp.eq.s32.totalorder %v282, %v4585
        %vm4591 = vcmp.eq.s32.totalorder %v282, %v4589
        %vm4592 = vcmp.eq.s32.totalorder %v283, %v4585
        %vm4593 = vcmp.eq.s32.totalorder %v283, %v4589
        %v4594 = vlaneseq
        %v4595 = vshrl.u32 %v4594, 7
        %v4596 = vsub.s32 0, %v4595
        %v4597 = vrot.slane %v4488, %v4596
        %v4598 = vlaneseq
        %v4599 = vshrl.u32 %v4598, 7
        %v4600 = vsub.s32 0, %v4599
        %v4601 = vrot.slane %v4489, %v4600
        %v4602 = vsel %vm4590, %v4597, 0.0
        %v4603 = vsel %vm4591, %v4601, 0.0
        %v4604 = vsel %vm4592, %v4597, 0.0
        %v4605 = vsel %vm4593, %v4601, 0.0
        %v4606 = vadd.f32 %v4578, %v4602
        %v4607 = vadd.f32 %v4579, %v4603
        %v4608 = vadd.f32 %v4580, %v4604
        %v4609 = vadd.f32 %v4581, %v4605
        %v4614 = vcombine.low %v4554, %v4555
        %v4615 = vcombine.high %v4554, %v4555
        %v4617 = vunpack.c.l.s4 1966171168
        %v4618 = vunpack.c.0.s8 %v4617
        %v4619 = vlaneseq
        %v4620 = vshrl.u32 %v4619, 7
        %v4621 = vsub.s32 %v4618, %v4620
        %v4622 = vrot.slane %v4614, %v4621
        %v4624 = vunpack.c.l.s4 1966171168
        %v4625 = vunpack.c.0.s8 %v4624
        %v4626 = vlaneseq
        %v4627 = vshrl.u32 %v4626, 7
        %v4628 = vsub.s32 %v4625, %v4627
        %v4629 = vrot.slane %v4615, %v4628
        %v4630 = vcombine.high %v4622, %v4622
        %v4631 = vcombine.high %v4629, %v4629
        %v4633 = vunpack.c.l.s4 1966171168
        %v4634 = vunpack.c.0.s8 %v4633
        %v4635 = vlaneseq
        %v4636 = vshrl.u32 %v4635, 7
        %v4637 = vsub.s32 %v4634, %v4636
        %v4638 = vrot.slane %v4622, %v4637
        %v4640 = vunpack.c.l.s4 1966171168
        %v4641 = vunpack.c.0.s8 %v4640
        %v4642 = vlaneseq
        %v4643 = vshrl.u32 %v4642, 7
        %v4644 = vsub.s32 %v4641, %v4643
        %v4645 = vrot.slane %v4629, %v4644
        %v4647 = vunpack.c.l.s4 1966171168
        %v4648 = vunpack.c.0.s8 %v4647
        %v4649 = vlaneseq
        %v4650 = vshrl.u32 %v4649, 7
        %v4651 = vsub.s32 %v4648, %v4650
        %v4652 = vrot.slane %v4630, %v4651
        %v4654 = vunpack.c.l.s4 1966171168
        %v4655 = vunpack.c.0.s8 %v4654
        %v4656 = vlaneseq
        %v4657 = vshrl.u32 %v4656, 7
        %v4658 = vsub.s32 %v4655, %v4657
        %v4659 = vrot.slane %v4631, %v4658
        %v4660 = vcombine.high %v4638, %v4638
        %v4661 = vcombine.high %v4645, %v4645
        %v4662 = vcombine.high %v4652, %v4652
        %v4663 = vcombine.high %v4659, %v4659
        %v4664 = vcombine.low %v4556, %v4557
        %v4665 = vcombine.high %v4556, %v4557
        %v4667 = vunpack.c.l.s4 1966171168
        %v4668 = vunpack.c.0.s8 %v4667
        %v4669 = vlaneseq
        %v4670 = vshrl.u32 %v4669, 7
        %v4671 = vsub.s32 %v4668, %v4670
        %v4672 = vrot.slane %v4664, %v4671
        %v4674 = vunpack.c.l.s4 1966171168
        %v4675 = vunpack.c.0.s8 %v4674
        %v4676 = vlaneseq
        %v4677 = vshrl.u32 %v4676, 7
        %v4678 = vsub.s32 %v4675, %v4677
        %v4679 = vrot.slane %v4665, %v4678
        %v4680 = vcombine.high %v4672, %v4672
        %v4681 = vcombine.high %v4679, %v4679
        %v4683 = vunpack.c.l.s4 1966171168
        %v4684 = vunpack.c.0.s8 %v4683
        %v4685 = vlaneseq
        %v4686 = vshrl.u32 %v4685, 7
        %v4687 = vsub.s32 %v4684, %v4686
        %v4688 = vrot.slane %v4672, %v4687
        %v4690 = vunpack.c.l.s4 1966171168
        %v4691 = vunpack.c.0.s8 %v4690
        %v4692 = vlaneseq
        %v4693 = vshrl.u32 %v4692, 7
        %v4694 = vsub.s32 %v4691, %v4693
        %v4695 = vrot.slane %v4679, %v4694
        %v4697 = vunpack.c.l.s4 1966171168
        %v4698 = vunpack.c.0.s8 %v4697
        %v4699 = vlaneseq
        %v4700 = vshrl.u32 %v4699, 7
        %v4701 = vsub.s32 %v4698, %v4700
        %v4702 = vrot.slane %v4680, %v4701
        %v4704 = vunpack.c.l.s4 1966171168
        %v4705 = vunpack.c.0.s8 %v4704
        %v4706 = vlaneseq
        %v4707 = vshrl.u32 %v4706, 7
        %v4708 = vsub.s32 %v4705, %v4707
        %v4709 = vrot.slane %v4681, %v4708
        %v4710 = vcombine.high %v4688, %v4688
        %v4711 = vcombine.high %v4695, %v4695
        %v4712 = vcombine.high %v4702, %v4702
        %v4713 = vcombine.high %v4709, %v4709
        %v4714 = vlaneseq
        %v4715 = vshrl.u32 %v4714, 7
        %v4716 = vsub.s32 0, %v4715
        %v4717 = vrot.slane %v4638, %v4716
        %v4718 = vlaneseq
        %v4719 = vshrl.u32 %v4718, 7
        %v4720 = vsub.s32 1, %v4719
        %v4721 = vrot.slane %v4638, %v4720
        %v4722 = vlaneseq
        %v4723 = vshrl.u32 %v4722, 7
        %v4724 = vsub.s32 0, %v4723
        %v4725 = vrot.slane %v4652, %v4724
        %v4726 = vlaneseq
        %v4727 = vshrl.u32 %v4726, 7
        %v4728 = vsub.s32 1, %v4727
        %v4729 = vrot.slane %v4652, %v4728
        %v4730 = vlaneseq
        %v4731 = vshrl.u32 %v4730, 7
        %v4732 = vsub.s32 0, %v4731
        %v4733 = vrot.slane %v4660, %v4732
        %v4734 = vlaneseq
        %v4735 = vshrl.u32 %v4734, 7
        %v4736 = vsub.s32 1, %v4735
        %v4737 = vrot.slane %v4660, %v4736
        %v4738 = vlaneseq
        %v4739 = vshrl.u32 %v4738, 7
        %v4740 = vsub.s32 0, %v4739
        %v4741 = vrot.slane %v4662, %v4740
        %v4742 = vlaneseq
        %v4743 = vshrl.u32 %v4742, 7
        %v4744 = vsub.s32 1, %v4743
        %v4745 = vrot.slane %v4662, %v4744
        %v4746 = vlaneseq
        %v4747 = vshrl.u32 %v4746, 7
        %v4748 = vsub.s32 0, %v4747
        %v4749 = vrot.slane %v4645, %v4748
        %v4750 = vlaneseq
        %v4751 = vshrl.u32 %v4750, 7
        %v4752 = vsub.s32 1, %v4751
        %v4753 = vrot.slane %v4645, %v4752
        %v4754 = vlaneseq
        %v4755 = vshrl.u32 %v4754, 7
        %v4756 = vsub.s32 0, %v4755
        %v4757 = vrot.slane %v4659, %v4756
        %v4758 = vlaneseq
        %v4759 = vshrl.u32 %v4758, 7
        %v4760 = vsub.s32 1, %v4759
        %v4761 = vrot.slane %v4659, %v4760
        %v4762 = vlaneseq
        %v4763 = vshrl.u32 %v4762, 7
        %v4764 = vsub.s32 0, %v4763
        %v4765 = vrot.slane %v4661, %v4764
        %v4766 = vlaneseq
        %v4767 = vshrl.u32 %v4766, 7
        %v4768 = vsub.s32 1, %v4767
        %v4769 = vrot.slane %v4661, %v4768
        %v4770 = vlaneseq
        %v4771 = vshrl.u32 %v4770, 7
        %v4772 = vsub.s32 0, %v4771
        %v4773 = vrot.slane %v4663, %v4772
        %v4774 = vlaneseq
        %v4775 = vshrl.u32 %v4774, 7
        %v4776 = vsub.s32 1, %v4775
        %v4777 = vrot.slane %v4663, %v4776
        %v4778 = vlaneseq
        %v4779 = vshrl.u32 %v4778, 7
        %v4780 = vsub.s32 0, %v4779
        %v4781 = vrot.slane %v4688, %v4780
        %v4782 = vlaneseq
        %v4783 = vshrl.u32 %v4782, 7
        %v4784 = vsub.s32 1, %v4783
        %v4785 = vrot.slane %v4688, %v4784
        %v4786 = vlaneseq
        %v4787 = vshrl.u32 %v4786, 7
        %v4788 = vsub.s32 0, %v4787
        %v4789 = vrot.slane %v4702, %v4788
        %v4790 = vlaneseq
        %v4791 = vshrl.u32 %v4790, 7
        %v4792 = vsub.s32 1, %v4791
        %v4793 = vrot.slane %v4702, %v4792
        %v4794 = vlaneseq
        %v4795 = vshrl.u32 %v4794, 7
        %v4796 = vsub.s32 0, %v4795
        %v4797 = vrot.slane %v4710, %v4796
        %v4798 = vlaneseq
        %v4799 = vshrl.u32 %v4798, 7
        %v4800 = vsub.s32 1, %v4799
        %v4801 = vrot.slane %v4710, %v4800
        %v4802 = vlaneseq
        %v4803 = vshrl.u32 %v4802, 7
        %v4804 = vsub.s32 0, %v4803
        %v4805 = vrot.slane %v4712, %v4804
        %v4806 = vlaneseq
        %v4807 = vshrl.u32 %v4806, 7
        %v4808 = vsub.s32 1, %v4807
        %v4809 = vrot.slane %v4712, %v4808
        %v4810 = vlaneseq
        %v4811 = vshrl.u32 %v4810, 7
        %v4812 = vsub.s32 0, %v4811
        %v4813 = vrot.slane %v4695, %v4812
        %v4814 = vlaneseq
        %v4815 = vshrl.u32 %v4814, 7
        %v4816 = vsub.s32 1, %v4815
        %v4817 = vrot.slane %v4695, %v4816
        %v4818 = vlaneseq
        %v4819 = vshrl.u32 %v4818, 7
        %v4820 = vsub.s32 0, %v4819
        %v4821 = vrot.slane %v4709, %v4820
        %v4822 = vlaneseq
        %v4823 = vshrl.u32 %v4822, 7
        %v4824 = vsub.s32 1, %v4823
        %v4825 = vrot.slane %v4709, %v4824
        %v4826 = vlaneseq
        %v4827 = vshrl.u32 %v4826, 7
        %v4828 = vsub.s32 0, %v4827
        %v4829 = vrot.slane %v4711, %v4828
        %v4830 = vlaneseq
        %v4831 = vshrl.u32 %v4830, 7
        %v4832 = vsub.s32 1, %v4831
        %v4833 = vrot.slane %v4711, %v4832
        %v4834 = vlaneseq
        %v4835 = vshrl.u32 %v4834, 7
        %v4836 = vsub.s32 0, %v4835
        %v4837 = vrot.slane %v4713, %v4836
        %v4838 = vlaneseq
        %v4839 = vshrl.u32 %v4838, 7
        %v4840 = vsub.s32 1, %v4839
        %v4841 = vrot.slane %v4713, %v4840
        %v4874 = vmul.f32 %v4717, %v4606
        %v4875 = vmul.f32 %v4721, %v4607
        %v4876 = vmul.f32 %v4717, %v4608
        %v4877 = vmul.f32 %v4721, %v4609
        %v4878 = vmul.f32 %v4725, %v4606
        %v4879 = vmul.f32 %v4729, %v4607
        %v4880 = vmul.f32 %v4725, %v4608
        %v4881 = vmul.f32 %v4729, %v4609
        %v4882 = vmul.f32 %v4733, %v4606
        %v4883 = vmul.f32 %v4737, %v4607
        %v4884 = vmul.f32 %v4733, %v4608
        %v4885 = vmul.f32 %v4737, %v4609
        %v4886 = vmul.f32 %v4741, %v4606
        %v4887 = vmul.f32 %v4745, %v4607
        %v4888 = vmul.f32 %v4741, %v4608
        %v4889 = vmul.f32 %v4745, %v4609
        %v4890 = vmul.f32 %v4749, %v4606
        %v4891 = vmul.f32 %v4753, %v4607
        %v4892 = vmul.f32 %v4749, %v4608
        %v4893 = vmul.f32 %v4753, %v4609
        %v4894 = vmul.f32 %v4757, %v4606
        %v4895 = vmul.f32 %v4761, %v4607
        %v4896 = vmul.f32 %v4757, %v4608
        %v4897 = vmul.f32 %v4761, %v4609
        %v4898 = vmul.f32 %v4765, %v4606
        %v4899 = vmul.f32 %v4769, %v4607
        %v4900 = vmul.f32 %v4765, %v4608
        %v4901 = vmul.f32 %v4769, %v4609
        %v4902 = vmul.f32 %v4773, %v4606
        %v4903 = vmul.f32 %v4777, %v4607
        %v4904 = vmul.f32 %v4773, %v4608
        %v4905 = vmul.f32 %v4777, %v4609
        %v4906 = vmul.f32 %v4781, %v4606
        %v4907 = vmul.f32 %v4785, %v4607
        %v4908 = vmul.f32 %v4781, %v4608
        %v4909 = vmul.f32 %v4785, %v4609
        %v4910 = vmul.f32 %v4789, %v4606
        %v4911 = vmul.f32 %v4793, %v4607
        %v4912 = vmul.f32 %v4789, %v4608
        %v4913 = vmul.f32 %v4793, %v4609
        %v4914 = vmul.f32 %v4797, %v4606
        %v4915 = vmul.f32 %v4801, %v4607
        %v4916 = vmul.f32 %v4797, %v4608
        %v4917 = vmul.f32 %v4801, %v4609
        %v4918 = vmul.f32 %v4805, %v4606
        %v4919 = vmul.f32 %v4809, %v4607
        %v4920 = vmul.f32 %v4805, %v4608
        %v4921 = vmul.f32 %v4809, %v4609
        %v4922 = vmul.f32 %v4813, %v4606
        %v4923 = vmul.f32 %v4817, %v4607
        %v4924 = vmul.f32 %v4813, %v4608
        %v4925 = vmul.f32 %v4817, %v4609
        %v4926 = vmul.f32 %v4821, %v4606
        %v4927 = vmul.f32 %v4825, %v4607
        %v4928 = vmul.f32 %v4821, %v4608
        %v4929 = vmul.f32 %v4825, %v4609
        %v4930 = vmul.f32 %v4829, %v4606
        %v4931 = vmul.f32 %v4833, %v4607
        %v4932 = vmul.f32 %v4829, %v4608
        %v4933 = vmul.f32 %v4833, %v4609
        %v4934 = vmul.f32 %v4837, %v4606
        %v4935 = vmul.f32 %v4841, %v4607
        %v4936 = vmul.f32 %v4837, %v4608
        %v4937 = vmul.f32 %v4841, %v4609
        %4938 = vmatprep.subr.mxu0 %v4875
        %4939 = vmatpush1.msra.mxu0 %v4874
        %4940 = vmatprep.subr.mxu0 %v4877
        %4941 = vmatpush1.msra.mxu0 %v4876
        %4942 = vmatprep.subr.mxu0 %v4879
        %4943 = vmatpush1.msra.mxu0 %v4878
        %4944 = vmatprep.subr.mxu0 %v4881
        %4945 = vmatpush1.msra.mxu0 %v4880
        %4946 = vmatprep.subr.mxu0 %v4883
        %4947 = vmatpush1.msra.mxu0 %v4882
        %4948 = vmatprep.subr.mxu0 %v4885
        %4949 = vmatpush1.msra.mxu0 %v4884
        %4950 = vmatprep.subr.mxu0 %v4887
        %4951 = vmatpush1.msra.mxu0 %v4886
        %4952 = vmatprep.subr.mxu0 %v4889
        %4953 = vmatpush1.msra.mxu0 %v4888
        %4954 = vmatprep.subr.mxu0 %v4891
        %4955 = vmatpush1.msra.mxu0 %v4890
        %4956 = vmatprep.subr.mxu0 %v4893
        %4957 = vmatpush1.msra.mxu0 %v4892
        %4958 = vmatprep.subr.mxu0 %v4895
        %4959 = vmatpush1.msra.mxu0 %v4894
        %4960 = vmatprep.subr.mxu0 %v4897
        %4961 = vmatpush1.msra.mxu0 %v4896
        %4962 = vmatprep.subr.mxu0 %v4899
        %4963 = vmatpush1.msra.mxu0 %v4898
        %4964 = vmatprep.subr.mxu0 %v4901
        %4965 = vmatpush1.msra.mxu0 %v4900
        %4966 = vmatprep.subr.mxu0 %v4903
        %4967 = vmatpush1.msra.mxu0 %v4902
        %4968 = vmatprep.subr.mxu0 %v4905
        %4969 = vmatpush1.msra.mxu0 %v4904
        %4970 = vmatprep.subr.mxu0 %v4907
        %4971 = vmatpush1.msra.mxu0 %v4906
        %4972 = vmatprep.subr.mxu0 %v4909
        %4973 = vmatpush1.msra.mxu0 %v4908
        %4974 = vmatprep.subr.mxu0 %v4911
        %4975 = vmatpush1.msra.mxu0 %v4910
        %4976 = vmatprep.subr.mxu0 %v4913
        %4977 = vmatpush1.msra.mxu0 %v4912
        %4978 = vmatprep.subr.mxu0 %v4915
        %4979 = vmatpush1.msra.mxu0 %v4914
        %4980 = vmatprep.subr.mxu0 %v4917
        %4981 = vmatpush1.msra.mxu0 %v4916
        %4982 = vmatprep.subr.mxu0 %v4919
        %4983 = vmatpush1.msra.mxu0 %v4918
        %4984 = vmatprep.subr.mxu0 %v4921
        %4985 = vmatpush1.msra.mxu0 %v4920
        %4986 = vmatprep.subr.mxu0 %v4923
        %4987 = vmatpush1.msra.mxu0 %v4922
        %4988 = vmatprep.subr.mxu0 %v4925
        %4989 = vmatpush1.msra.mxu0 %v4924
        %4990 = vmatprep.subr.mxu0 %v4927
        %4991 = vmatpush1.msra.mxu0 %v4926
        %4992 = vmatprep.subr.mxu0 %v4929
        %4993 = vmatpush1.msra.mxu0 %v4928
        %4994 = vmatprep.subr.mxu0 %v4931
        %4995 = vmatpush1.msra.mxu0 %v4930
        %4996 = vmatprep.subr.mxu0 %v4933
        %4997 = vmatpush1.msra.mxu0 %v4932
        %4998 = vmatprep.subr.mxu0 %v4935
        %4999 = vmatpush1.msra.mxu0 %v4934
        %5000 = vmatprep.subr.mxu0 %v4937
        %5001 = vmatpush1.msra.mxu0 %v4936
        %5002 = vmatprep.mubr.f32.mxu0 %v873
        %5003 = vmatmul.mubr.f32.gmra.mrb[0].mxu0 %v247
        %v5004 = vpop.f32.mrb[0].mxu0
        %v5005 = vadd.f32 0.0, %v5004
        %v5006 = vpop.f32.mrb[0].mxu0
        %v5007 = vadd.f32 0.0, %v5006
        %5008 = vdwg.mxu0
        %v5011 = vrot.slane %v5005, 4
        %v5012 = vrot.slane %v5007, 4
        %5015 = vst [vmem:[#allocation2 + $0x30] sm:$0xf0] %v5011
        %5016 = vst [vmem:[#allocation2 + $0x38] sm:$0xf0] %v5012
        %v5017 = vadd.f32 %v3821, %v250
        %v5018 = vadd.f32 %v3822, %v251
        %v5019 = vadd.f32 %v1555, %v252
        %v5020 = vadd.f32 %v1556, %v253
        %vm5021 = vcmp.gt.f32.partialorder %v5017, -1.0
        %vm5022 = vcmp.gt.f32.partialorder %v5018, -1.0
        %vm5023 = vcmp.lt.f32.partialorder %v5017, 16.0
        %vm5024 = vcmp.lt.f32.partialorder %v5018, 16.0
        %vm5025 = vmand %vm5021, %vm5023
        %vm5026 = vmand %vm5022, %vm5024
        %vm5027 = vcmp.gt.f32.partialorder %v5019, -1.0
        %vm5028 = vcmp.gt.f32.partialorder %v5020, -1.0
        %v5029 = vsel %vm5027, 1, 0
        %v5030 = vsel %vm5028, 1, 0
        %v5031 = vrot.slane %v5029, 1
        %v5032 = vrot.slane %v5030, 1
        %vm5033 = vcmp.ne.s32.totalorder %v5031, 0
        %vm5034 = vcmp.ne.s32.totalorder %v5032, 0
        %vm5035 = vmand %vm5025, %vm5033
        %vm5036 = vmand %vm5026, %vm5034
        %vm5037 = vcmp.lt.f32.partialorder %v5019, 16.0
        %vm5038 = vcmp.lt.f32.partialorder %v5020, 16.0
        %v5039 = vsel %vm5037, 1, 0
        %v5040 = vsel %vm5038, 1, 0
        %v5041 = vrot.slane %v5039, 1
        %v5042 = vrot.slane %v5040, 1
        %vm5043 = vcmp.ne.s32.totalorder %v5041, 0
        %vm5044 = vcmp.ne.s32.totalorder %v5042, 0
        %vm5045 = vmand %vm5035, %vm5043
        %vm5046 = vmand %vm5036, %vm5044
        %v5047 = vsel %vm5045, 1, 0
        %v5048 = vsel %vm5046, 1, 0
        %v5049 = vcvt.s32.f32 %v5047
        %v5050 = vcvt.s32.f32 %v5048
        %v5053 = vrot.slane %v5049, 6
        %v5054 = vrot.slane %v5050, 6
        %v5057 = vmul.f32 %v254, %v5053
        %v5058 = vmul.f32 %v255, %v5054
        %v5059 = vfloor.f32 %v5017
        %v5060 = vfloor.f32 %v5018
        %v5061 = vfloor.f32 %v5019
        %v5062 = vfloor.f32 %v5020
        %v5063 = vsub.f32 %v5017, %v5059
        %v5064 = vsub.f32 %v5018, %v5060
        %v5065 = vsub.f32 %v5019, %v5061
        %v5066 = vsub.f32 %v5020, %v5062
        %v5067 = vcvt.f32.s32.to.zero.pseudo %v5059
        %v5068 = vcvt.f32.s32.to.zero.pseudo %v5060
        %v5069 = vcvt.f32.s32.to.zero.pseudo %v5061
        %v5070 = vcvt.f32.s32.to.zero.pseudo %v5062
        %v5071 = vadd.s32 %v5067, 1
        %v5072 = vadd.s32 %v5068, 1
        %v5073 = vadd.s32 %v5069, 1
        %v5074 = vadd.s32 %v5070, 1
        %v5075 = vsub.f32 1.0, %v5063
        %v5076 = vsub.f32 1.0, %v5064
        %vm5077 = vcmp.ge.s32.totalorder %v5067, 0
        %vm5078 = vcmp.ge.s32.totalorder %v5068, 0
        %vm5079 = vcmp.le.s32.totalorder %v5067, 15
        %vm5080 = vcmp.le.s32.totalorder %v5068, 15
        %vm5081 = vmand %vm5077, %vm5079
        %vm5082 = vmand %vm5078, %vm5080
        %v5083 = vsel %vm5081, 1, 0
        %v5084 = vsel %vm5082, 1, 0
        %v5085 = vcvt.s32.f32 %v5083
        %v5086 = vcvt.s32.f32 %v5084
        %v5087 = vmul.f32 %v5075, %v5085
        %v5088 = vmul.f32 %v5076, %v5086
        %v5091 = vrot.slane %v5057, 2
        %v5092 = vrot.slane %v5058, 2
        %v5095 = vmul.f32 %v5087, %v5091
        %v5096 = vmul.f32 %v5088, %v5092
        %vm5097 = vcmp.ge.s32.totalorder %v5071, 0
        %vm5098 = vcmp.ge.s32.totalorder %v5072, 0
        %vm5099 = vcmp.le.s32.totalorder %v5071, 15
        %vm5100 = vcmp.le.s32.totalorder %v5072, 15
        %vm5101 = vmand %vm5097, %vm5099
        %vm5102 = vmand %vm5098, %vm5100
        %v5103 = vsel %vm5101, 1, 0
        %v5104 = vsel %vm5102, 1, 0
        %v5105 = vcvt.s32.f32 %v5103
        %v5106 = vcvt.s32.f32 %v5104
        %v5107 = vmul.f32 %v5063, %v5105
        %v5108 = vmul.f32 %v5064, %v5106
        %v5109 = vmul.f32 %v5107, %v5091
        %v5110 = vmul.f32 %v5108, %v5092
        %v5111 = vsub.f32 1.0, %v5065
        %v5112 = vsub.f32 1.0, %v5066
        %vm5113 = vcmp.ge.s32.totalorder %v5069, 0
        %vm5114 = vcmp.ge.s32.totalorder %v5070, 0
        %vm5115 = vcmp.le.s32.totalorder %v5069, 15
        %vm5116 = vcmp.le.s32.totalorder %v5070, 15
        %vm5117 = vmand %vm5113, %vm5115
        %vm5118 = vmand %vm5114, %vm5116
        %v5119 = vsel %vm5117, 1, 0
        %v5120 = vsel %vm5118, 1, 0
        %v5121 = vcvt.s32.f32 %v5119
        %v5122 = vcvt.s32.f32 %v5120
        %v5123 = vmul.f32 %v5111, %v5121
        %v5124 = vmul.f32 %v5112, %v5122
        %vm5125 = vcmp.ge.s32.totalorder %v5073, 0
        %vm5126 = vcmp.ge.s32.totalorder %v5074, 0
        %vm5127 = vcmp.le.s32.totalorder %v5073, 15
        %vm5128 = vcmp.le.s32.totalorder %v5074, 15
        %vm5129 = vmand %vm5125, %vm5127
        %vm5130 = vmand %vm5126, %vm5128
        %v5131 = vsel %vm5129, 1, 0
        %v5132 = vsel %vm5130, 1, 0
        %v5133 = vcvt.s32.f32 %v5131
        %v5134 = vcvt.s32.f32 %v5132
        %v5135 = vmul.f32 %v5065, %v5133
        %v5136 = vmul.f32 %v5066, %v5134
        %vm5137 = vcmp.gt.s32.totalorder %v5067, 0
        %v5138 = vsel %vm5137, %v5067, 0
        %vm5139 = vcmp.gt.s32.totalorder %v5068, 0
        %v5140 = vsel %vm5139, %v5068, 0
        %vm5141 = vcmp.lt.s32.totalorder %v5138, 15
        %v5142 = vsel %vm5141, %v5138, 15
        %vm5143 = vcmp.lt.s32.totalorder %v5140, 15
        %v5144 = vsel %vm5143, %v5140, 15
        %vm5145 = vcmp.gt.s32.totalorder %v5071, 0
        %v5146 = vsel %vm5145, %v5071, 0
        %vm5147 = vcmp.gt.s32.totalorder %v5072, 0
        %v5148 = vsel %vm5147, %v5072, 0
        %vm5149 = vcmp.lt.s32.totalorder %v5146, 15
        %v5150 = vsel %vm5149, %v5146, 15
        %vm5151 = vcmp.lt.s32.totalorder %v5148, 15
        %v5152 = vsel %vm5151, %v5148, 15
        %vm5153 = vcmp.gt.s32.totalorder %v5069, 0
        %v5154 = vsel %vm5153, %v5069, 0
        %vm5155 = vcmp.gt.s32.totalorder %v5070, 0
        %v5156 = vsel %vm5155, %v5070, 0
        %vm5157 = vcmp.lt.s32.totalorder %v5154, 15
        %v5158 = vsel %vm5157, %v5154, 15
        %vm5159 = vcmp.lt.s32.totalorder %v5156, 15
        %v5160 = vsel %vm5159, %v5156, 15
        %vm5161 = vcmp.gt.s32.totalorder %v5073, 0
        %v5162 = vsel %vm5161, %v5073, 0
        %vm5163 = vcmp.gt.s32.totalorder %v5074, 0
        %v5164 = vsel %vm5163, %v5074, 0
        %vm5165 = vcmp.lt.s32.totalorder %v5162, 15
        %v5166 = vsel %vm5165, %v5162, 15
        %vm5167 = vcmp.lt.s32.totalorder %v5164, 15
        %v5168 = vsel %vm5167, %v5164, 15
        %v5169 = vlaneseq
        %v5170 = vshrl.u32 %v5169, 7
        %v5171 = vsub.s32 0, %v5170
        %v5172 = vrot.slane %v5142, %v5171
        %v5173 = vlaneseq
        %v5174 = vshrl.u32 %v5173, 7
        %v5175 = vsub.s32 0, %v5174
        %v5176 = vrot.slane %v5144, %v5175
        %vm5177 = vcmp.eq.s32.totalorder %v282, %v5172
        %vm5178 = vcmp.eq.s32.totalorder %v282, %v5176
        %vm5179 = vcmp.eq.s32.totalorder %v283, %v5172
        %vm5180 = vcmp.eq.s32.totalorder %v283, %v5176
        %v5181 = vlaneseq
        %v5182 = vshrl.u32 %v5181, 7
        %v5183 = vsub.s32 0, %v5182
        %v5184 = vrot.slane %v5095, %v5183
        %v5185 = vlaneseq
        %v5186 = vshrl.u32 %v5185, 7
        %v5187 = vsub.s32 0, %v5186
        %v5188 = vrot.slane %v5096, %v5187
        %v5189 = vsel %vm5177, %v5184, 0.0
        %v5190 = vsel %vm5178, %v5188, 0.0
        %v5191 = vsel %vm5179, %v5184, 0.0
        %v5192 = vsel %vm5180, %v5188, 0.0
        %v5193 = vlaneseq
        %v5194 = vshrl.u32 %v5193, 7
        %v5195 = vsub.s32 0, %v5194
        %v5196 = vrot.slane %v5150, %v5195
        %v5197 = vlaneseq
        %v5198 = vshrl.u32 %v5197, 7
        %v5199 = vsub.s32 0, %v5198
        %v5200 = vrot.slane %v5152, %v5199
        %vm5201 = vcmp.eq.s32.totalorder %v282, %v5196
        %vm5202 = vcmp.eq.s32.totalorder %v282, %v5200
        %vm5203 = vcmp.eq.s32.totalorder %v283, %v5196
        %vm5204 = vcmp.eq.s32.totalorder %v283, %v5200
        %v5205 = vlaneseq
        %v5206 = vshrl.u32 %v5205, 7
        %v5207 = vsub.s32 0, %v5206
        %v5208 = vrot.slane %v5109, %v5207
        %v5209 = vlaneseq
        %v5210 = vshrl.u32 %v5209, 7
        %v5211 = vsub.s32 0, %v5210
        %v5212 = vrot.slane %v5110, %v5211
        %v5213 = vsel %vm5201, %v5208, 0.0
        %v5214 = vsel %vm5202, %v5212, 0.0
        %v5215 = vsel %vm5203, %v5208, 0.0
        %v5216 = vsel %vm5204, %v5212, 0.0
        %v5217 = vadd.f32 %v5189, %v5213
        %v5218 = vadd.f32 %v5190, %v5214
        %v5219 = vadd.f32 %v5191, %v5215
        %v5220 = vadd.f32 %v5192, %v5216
        %v5221 = vlaneseq
        %v5222 = vshrl.u32 %v5221, 7
        %v5223 = vsub.s32 1, %v5222
        %v5224 = vrot.slane %v5158, %v5223
        %v5225 = vlaneseq
        %v5226 = vshrl.u32 %v5225, 7
        %v5227 = vsub.s32 1, %v5226
        %v5228 = vrot.slane %v5160, %v5227
        %vm5229 = vcmp.eq.s32.totalorder %v282, %v5224
        %vm5230 = vcmp.eq.s32.totalorder %v282, %v5228
        %vm5231 = vcmp.eq.s32.totalorder %v283, %v5224
        %vm5232 = vcmp.eq.s32.totalorder %v283, %v5228
        %v5233 = vlaneseq
        %v5234 = vshrl.u32 %v5233, 7
        %v5235 = vsub.s32 1, %v5234
        %v5236 = vrot.slane %v5123, %v5235
        %v5237 = vlaneseq
        %v5238 = vshrl.u32 %v5237, 7
        %v5239 = vsub.s32 1, %v5238
        %v5240 = vrot.slane %v5124, %v5239
        %v5241 = vsel %vm5229, %v5236, 0.0
        %v5242 = vsel %vm5230, %v5240, 0.0
        %v5243 = vsel %vm5231, %v5236, 0.0
        %v5244 = vsel %vm5232, %v5240, 0.0
        %v5245 = vlaneseq
        %v5246 = vshrl.u32 %v5245, 7
        %v5247 = vsub.s32 1, %v5246
        %v5248 = vrot.slane %v5166, %v5247
        %v5249 = vlaneseq
        %v5250 = vshrl.u32 %v5249, 7
        %v5251 = vsub.s32 1, %v5250
        %v5252 = vrot.slane %v5168, %v5251
        %vm5253 = vcmp.eq.s32.totalorder %v282, %v5248
        %vm5254 = vcmp.eq.s32.totalorder %v282, %v5252
        %vm5255 = vcmp.eq.s32.totalorder %v283, %v5248
        %vm5256 = vcmp.eq.s32.totalorder %v283, %v5252
        %v5257 = vlaneseq
        %v5258 = vshrl.u32 %v5257, 7
        %v5259 = vsub.s32 1, %v5258
        %v5260 = vrot.slane %v5135, %v5259
        %v5261 = vlaneseq
        %v5262 = vshrl.u32 %v5261, 7
        %v5263 = vsub.s32 1, %v5262
        %v5264 = vrot.slane %v5136, %v5263
        %v5265 = vsel %vm5253, %v5260, 0.0
        %v5266 = vsel %vm5254, %v5264, 0.0
        %v5267 = vsel %vm5255, %v5260, 0.0
        %v5268 = vsel %vm5256, %v5264, 0.0
        %v5269 = vadd.f32 %v5241, %v5265
        %v5270 = vadd.f32 %v5242, %v5266
        %v5271 = vadd.f32 %v5243, %v5267
        %v5272 = vadd.f32 %v5244, %v5268
        %v5277 = vcombine.low %v5217, %v5218
        %v5278 = vcombine.high %v5217, %v5218
        %v5280 = vunpack.c.l.s4 1966171168
        %v5281 = vunpack.c.0.s8 %v5280
        %v5282 = vlaneseq
        %v5283 = vshrl.u32 %v5282, 7
        %v5284 = vsub.s32 %v5281, %v5283
        %v5285 = vrot.slane %v5277, %v5284
        %v5287 = vunpack.c.l.s4 1966171168
        %v5288 = vunpack.c.0.s8 %v5287
        %v5289 = vlaneseq
        %v5290 = vshrl.u32 %v5289, 7
        %v5291 = vsub.s32 %v5288, %v5290
        %v5292 = vrot.slane %v5278, %v5291
        %v5293 = vcombine.high %v5285, %v5285
        %v5294 = vcombine.high %v5292, %v5292
        %v5296 = vunpack.c.l.s4 1966171168
        %v5297 = vunpack.c.0.s8 %v5296
        %v5298 = vlaneseq
        %v5299 = vshrl.u32 %v5298, 7
        %v5300 = vsub.s32 %v5297, %v5299
        %v5301 = vrot.slane %v5285, %v5300
        %v5303 = vunpack.c.l.s4 1966171168
        %v5304 = vunpack.c.0.s8 %v5303
        %v5305 = vlaneseq
        %v5306 = vshrl.u32 %v5305, 7
        %v5307 = vsub.s32 %v5304, %v5306
        %v5308 = vrot.slane %v5292, %v5307
        %v5310 = vunpack.c.l.s4 1966171168
        %v5311 = vunpack.c.0.s8 %v5310
        %v5312 = vlaneseq
        %v5313 = vshrl.u32 %v5312, 7
        %v5314 = vsub.s32 %v5311, %v5313
        %v5315 = vrot.slane %v5293, %v5314
        %v5317 = vunpack.c.l.s4 1966171168
        %v5318 = vunpack.c.0.s8 %v5317
        %v5319 = vlaneseq
        %v5320 = vshrl.u32 %v5319, 7
        %v5321 = vsub.s32 %v5318, %v5320
        %v5322 = vrot.slane %v5294, %v5321
        %v5323 = vcombine.high %v5301, %v5301
        %v5324 = vcombine.high %v5308, %v5308
        %v5325 = vcombine.high %v5315, %v5315
        %v5326 = vcombine.high %v5322, %v5322
        %v5327 = vcombine.low %v5219, %v5220
        %v5328 = vcombine.high %v5219, %v5220
        %v5330 = vunpack.c.l.s4 1966171168
        %v5331 = vunpack.c.0.s8 %v5330
        %v5332 = vlaneseq
        %v5333 = vshrl.u32 %v5332, 7
        %v5334 = vsub.s32 %v5331, %v5333
        %v5335 = vrot.slane %v5327, %v5334
        %v5337 = vunpack.c.l.s4 1966171168
        %v5338 = vunpack.c.0.s8 %v5337
        %v5339 = vlaneseq
        %v5340 = vshrl.u32 %v5339, 7
        %v5341 = vsub.s32 %v5338, %v5340
        %v5342 = vrot.slane %v5328, %v5341
        %v5343 = vcombine.high %v5335, %v5335
        %v5344 = vcombine.high %v5342, %v5342
        %v5346 = vunpack.c.l.s4 1966171168
        %v5347 = vunpack.c.0.s8 %v5346
        %v5348 = vlaneseq
        %v5349 = vshrl.u32 %v5348, 7
        %v5350 = vsub.s32 %v5347, %v5349
        %v5351 = vrot.slane %v5335, %v5350
        %v5353 = vunpack.c.l.s4 1966171168
        %v5354 = vunpack.c.0.s8 %v5353
        %v5355 = vlaneseq
        %v5356 = vshrl.u32 %v5355, 7
        %v5357 = vsub.s32 %v5354, %v5356
        %v5358 = vrot.slane %v5342, %v5357
        %v5360 = vunpack.c.l.s4 1966171168
        %v5361 = vunpack.c.0.s8 %v5360
        %v5362 = vlaneseq
        %v5363 = vshrl.u32 %v5362, 7
        %v5364 = vsub.s32 %v5361, %v5363
        %v5365 = vrot.slane %v5343, %v5364
        %v5367 = vunpack.c.l.s4 1966171168
        %v5368 = vunpack.c.0.s8 %v5367
        %v5369 = vlaneseq
        %v5370 = vshrl.u32 %v5369, 7
        %v5371 = vsub.s32 %v5368, %v5370
        %v5372 = vrot.slane %v5344, %v5371
        %v5373 = vcombine.high %v5351, %v5351
        %v5374 = vcombine.high %v5358, %v5358
        %v5375 = vcombine.high %v5365, %v5365
        %v5376 = vcombine.high %v5372, %v5372
        %v5377 = vlaneseq
        %v5378 = vshrl.u32 %v5377, 7
        %v5379 = vsub.s32 0, %v5378
        %v5380 = vrot.slane %v5301, %v5379
        %v5381 = vlaneseq
        %v5382 = vshrl.u32 %v5381, 7
        %v5383 = vsub.s32 1, %v5382
        %v5384 = vrot.slane %v5301, %v5383
        %v5385 = vlaneseq
        %v5386 = vshrl.u32 %v5385, 7
        %v5387 = vsub.s32 0, %v5386
        %v5388 = vrot.slane %v5315, %v5387
        %v5389 = vlaneseq
        %v5390 = vshrl.u32 %v5389, 7
        %v5391 = vsub.s32 1, %v5390
        %v5392 = vrot.slane %v5315, %v5391
        %v5393 = vlaneseq
        %v5394 = vshrl.u32 %v5393, 7
        %v5395 = vsub.s32 0, %v5394
        %v5396 = vrot.slane %v5323, %v5395
        %v5397 = vlaneseq
        %v5398 = vshrl.u32 %v5397, 7
        %v5399 = vsub.s32 1, %v5398
        %v5400 = vrot.slane %v5323, %v5399
        %v5401 = vlaneseq
        %v5402 = vshrl.u32 %v5401, 7
        %v5403 = vsub.s32 0, %v5402
        %v5404 = vrot.slane %v5325, %v5403
        %v5405 = vlaneseq
        %v5406 = vshrl.u32 %v5405, 7
        %v5407 = vsub.s32 1, %v5406
        %v5408 = vrot.slane %v5325, %v5407
        %v5409 = vlaneseq
        %v5410 = vshrl.u32 %v5409, 7
        %v5411 = vsub.s32 0, %v5410
        %v5412 = vrot.slane %v5308, %v5411
        %v5413 = vlaneseq
        %v5414 = vshrl.u32 %v5413, 7
        %v5415 = vsub.s32 1, %v5414
        %v5416 = vrot.slane %v5308, %v5415
        %v5417 = vlaneseq
        %v5418 = vshrl.u32 %v5417, 7
        %v5419 = vsub.s32 0, %v5418
        %v5420 = vrot.slane %v5322, %v5419
        %v5421 = vlaneseq
        %v5422 = vshrl.u32 %v5421, 7
        %v5423 = vsub.s32 1, %v5422
        %v5424 = vrot.slane %v5322, %v5423
        %v5425 = vlaneseq
        %v5426 = vshrl.u32 %v5425, 7
        %v5427 = vsub.s32 0, %v5426
        %v5428 = vrot.slane %v5324, %v5427
        %v5429 = vlaneseq
        %v5430 = vshrl.u32 %v5429, 7
        %v5431 = vsub.s32 1, %v5430
        %v5432 = vrot.slane %v5324, %v5431
        %v5433 = vlaneseq
        %v5434 = vshrl.u32 %v5433, 7
        %v5435 = vsub.s32 0, %v5434
        %v5436 = vrot.slane %v5326, %v5435
        %v5437 = vlaneseq
        %v5438 = vshrl.u32 %v5437, 7
        %v5439 = vsub.s32 1, %v5438
        %v5440 = vrot.slane %v5326, %v5439
        %v5441 = vlaneseq
        %v5442 = vshrl.u32 %v5441, 7
        %v5443 = vsub.s32 0, %v5442
        %v5444 = vrot.slane %v5351, %v5443
        %v5445 = vlaneseq
        %v5446 = vshrl.u32 %v5445, 7
        %v5447 = vsub.s32 1, %v5446
        %v5448 = vrot.slane %v5351, %v5447
        %v5449 = vlaneseq
        %v5450 = vshrl.u32 %v5449, 7
        %v5451 = vsub.s32 0, %v5450
        %v5452 = vrot.slane %v5365, %v5451
        %v5453 = vlaneseq
        %v5454 = vshrl.u32 %v5453, 7
        %v5455 = vsub.s32 1, %v5454
        %v5456 = vrot.slane %v5365, %v5455
        %v5457 = vlaneseq
        %v5458 = vshrl.u32 %v5457, 7
        %v5459 = vsub.s32 0, %v5458
        %v5460 = vrot.slane %v5373, %v5459
        %v5461 = vlaneseq
        %v5462 = vshrl.u32 %v5461, 7
        %v5463 = vsub.s32 1, %v5462
        %v5464 = vrot.slane %v5373, %v5463
        %v5465 = vlaneseq
        %v5466 = vshrl.u32 %v5465, 7
        %v5467 = vsub.s32 0, %v5466
        %v5468 = vrot.slane %v5375, %v5467
        %v5469 = vlaneseq
        %v5470 = vshrl.u32 %v5469, 7
        %v5471 = vsub.s32 1, %v5470
        %v5472 = vrot.slane %v5375, %v5471
        %v5473 = vlaneseq
        %v5474 = vshrl.u32 %v5473, 7
        %v5475 = vsub.s32 0, %v5474
        %v5476 = vrot.slane %v5358, %v5475
        %v5477 = vlaneseq
        %v5478 = vshrl.u32 %v5477, 7
        %v5479 = vsub.s32 1, %v5478
        %v5480 = vrot.slane %v5358, %v5479
        %v5481 = vlaneseq
        %v5482 = vshrl.u32 %v5481, 7
        %v5483 = vsub.s32 0, %v5482
        %v5484 = vrot.slane %v5372, %v5483
        %v5485 = vlaneseq
        %v5486 = vshrl.u32 %v5485, 7
        %v5487 = vsub.s32 1, %v5486
        %v5488 = vrot.slane %v5372, %v5487
        %v5489 = vlaneseq
        %v5490 = vshrl.u32 %v5489, 7
        %v5491 = vsub.s32 0, %v5490
        %v5492 = vrot.slane %v5374, %v5491
        %v5493 = vlaneseq
        %v5494 = vshrl.u32 %v5493, 7
        %v5495 = vsub.s32 1, %v5494
        %v5496 = vrot.slane %v5374, %v5495
        %v5497 = vlaneseq
        %v5498 = vshrl.u32 %v5497, 7
        %v5499 = vsub.s32 0, %v5498
        %v5500 = vrot.slane %v5376, %v5499
        %v5501 = vlaneseq
        %v5502 = vshrl.u32 %v5501, 7
        %v5503 = vsub.s32 1, %v5502
        %v5504 = vrot.slane %v5376, %v5503
        %v5537 = vmul.f32 %v5380, %v5269
        %v5538 = vmul.f32 %v5384, %v5270
        %v5539 = vmul.f32 %v5380, %v5271
        %v5540 = vmul.f32 %v5384, %v5272
        %v5541 = vmul.f32 %v5388, %v5269
        %v5542 = vmul.f32 %v5392, %v5270
        %v5543 = vmul.f32 %v5388, %v5271
        %v5544 = vmul.f32 %v5392, %v5272
        %v5545 = vmul.f32 %v5396, %v5269
        %v5546 = vmul.f32 %v5400, %v5270
        %v5547 = vmul.f32 %v5396, %v5271
        %v5548 = vmul.f32 %v5400, %v5272
        %v5549 = vmul.f32 %v5404, %v5269
        %v5550 = vmul.f32 %v5408, %v5270
        %v5551 = vmul.f32 %v5404, %v5271
        %v5552 = vmul.f32 %v5408, %v5272
        %v5553 = vmul.f32 %v5412, %v5269
        %v5554 = vmul.f32 %v5416, %v5270
        %v5555 = vmul.f32 %v5412, %v5271
        %v5556 = vmul.f32 %v5416, %v5272
        %v5557 = vmul.f32 %v5420, %v5269
        %v5558 = vmul.f32 %v5424, %v5270
        %v5559 = vmul.f32 %v5420, %v5271
        %v5560 = vmul.f32 %v5424, %v5272
        %v5561 = vmul.f32 %v5428, %v5269
        %v5562 = vmul.f32 %v5432, %v5270
        %v5563 = vmul.f32 %v5428, %v5271
        %v5564 = vmul.f32 %v5432, %v5272
        %v5565 = vmul.f32 %v5436, %v5269
        %v5566 = vmul.f32 %v5440, %v5270
        %v5567 = vmul.f32 %v5436, %v5271
        %v5568 = vmul.f32 %v5440, %v5272
        %v5569 = vmul.f32 %v5444, %v5269
        %v5570 = vmul.f32 %v5448, %v5270
        %v5571 = vmul.f32 %v5444, %v5271
        %v5572 = vmul.f32 %v5448, %v5272
        %v5573 = vmul.f32 %v5452, %v5269
        %v5574 = vmul.f32 %v5456, %v5270
        %v5575 = vmul.f32 %v5452, %v5271
        %v5576 = vmul.f32 %v5456, %v5272
        %v5577 = vmul.f32 %v5460, %v5269
        %v5578 = vmul.f32 %v5464, %v5270
        %v5579 = vmul.f32 %v5460, %v5271
        %v5580 = vmul.f32 %v5464, %v5272
        %v5581 = vmul.f32 %v5468, %v5269
        %v5582 = vmul.f32 %v5472, %v5270
        %v5583 = vmul.f32 %v5468, %v5271
        %v5584 = vmul.f32 %v5472, %v5272
        %v5585 = vmul.f32 %v5476, %v5269
        %v5586 = vmul.f32 %v5480, %v5270
        %v5587 = vmul.f32 %v5476, %v5271
        %v5588 = vmul.f32 %v5480, %v5272
        %v5589 = vmul.f32 %v5484, %v5269
        %v5590 = vmul.f32 %v5488, %v5270
        %v5591 = vmul.f32 %v5484, %v5271
        %v5592 = vmul.f32 %v5488, %v5272
        %v5593 = vmul.f32 %v5492, %v5269
        %v5594 = vmul.f32 %v5496, %v5270
        %v5595 = vmul.f32 %v5492, %v5271
        %v5596 = vmul.f32 %v5496, %v5272
        %v5597 = vmul.f32 %v5500, %v5269
        %v5598 = vmul.f32 %v5504, %v5270
        %v5599 = vmul.f32 %v5500, %v5271
        %v5600 = vmul.f32 %v5504, %v5272
        %5601 = vmatprep.subr.mxu0 %v5538
        %5602 = vmatpush1.msra.mxu0 %v5537
        %5603 = vmatprep.subr.mxu0 %v5540
        %5604 = vmatpush1.msra.mxu0 %v5539
        %5605 = vmatprep.subr.mxu0 %v5542
        %5606 = vmatpush1.msra.mxu0 %v5541
        %5607 = vmatprep.subr.mxu0 %v5544
        %5608 = vmatpush1.msra.mxu0 %v5543
        %5609 = vmatprep.subr.mxu0 %v5546
        %5610 = vmatpush1.msra.mxu0 %v5545
        %5611 = vmatprep.subr.mxu0 %v5548
        %5612 = vmatpush1.msra.mxu0 %v5547
        %5613 = vmatprep.subr.mxu0 %v5550
        %5614 = vmatpush1.msra.mxu0 %v5549
        %5615 = vmatprep.subr.mxu0 %v5552
        %5616 = vmatpush1.msra.mxu0 %v5551
        %5617 = vmatprep.subr.mxu0 %v5554
        %5618 = vmatpush1.msra.mxu0 %v5553
        %5619 = vmatprep.subr.mxu0 %v5556
        %5620 = vmatpush1.msra.mxu0 %v5555
        %5621 = vmatprep.subr.mxu0 %v5558
        %5622 = vmatpush1.msra.mxu0 %v5557
        %5623 = vmatprep.subr.mxu0 %v5560
        %5624 = vmatpush1.msra.mxu0 %v5559
        %5625 = vmatprep.subr.mxu0 %v5562
        %5626 = vmatpush1.msra.mxu0 %v5561
        %5627 = vmatprep.subr.mxu0 %v5564
        %5628 = vmatpush1.msra.mxu0 %v5563
        %5629 = vmatprep.subr.mxu0 %v5566
        %5630 = vmatpush1.msra.mxu0 %v5565
        %5631 = vmatprep.subr.mxu0 %v5568
        %5632 = vmatpush1.msra.mxu0 %v5567
        %5633 = vmatprep.subr.mxu0 %v5570
        %5634 = vmatpush1.msra.mxu0 %v5569
        %5635 = vmatprep.subr.mxu0 %v5572
        %5636 = vmatpush1.msra.mxu0 %v5571
        %5637 = vmatprep.subr.mxu0 %v5574
        %5638 = vmatpush1.msra.mxu0 %v5573
        %5639 = vmatprep.subr.mxu0 %v5576
        %5640 = vmatpush1.msra.mxu0 %v5575
        %5641 = vmatprep.subr.mxu0 %v5578
        %5642 = vmatpush1.msra.mxu0 %v5577
        %5643 = vmatprep.subr.mxu0 %v5580
        %5644 = vmatpush1.msra.mxu0 %v5579
        %5645 = vmatprep.subr.mxu0 %v5582
        %5646 = vmatpush1.msra.mxu0 %v5581
        %5647 = vmatprep.subr.mxu0 %v5584
        %5648 = vmatpush1.msra.mxu0 %v5583
        %5649 = vmatprep.subr.mxu0 %v5586
        %5650 = vmatpush1.msra.mxu0 %v5585
        %5651 = vmatprep.subr.mxu0 %v5588
        %5652 = vmatpush1.msra.mxu0 %v5587
        %5653 = vmatprep.subr.mxu0 %v5590
        %5654 = vmatpush1.msra.mxu0 %v5589
        %5655 = vmatprep.subr.mxu0 %v5592
        %5656 = vmatpush1.msra.mxu0 %v5591
        %5657 = vmatprep.subr.mxu0 %v5594
        %5658 = vmatpush1.msra.mxu0 %v5593
        %5659 = vmatprep.subr.mxu0 %v5596
        %5660 = vmatpush1.msra.mxu0 %v5595
        %5661 = vmatprep.subr.mxu0 %v5598
        %5662 = vmatpush1.msra.mxu0 %v5597
        %5663 = vmatprep.subr.mxu0 %v5600
        %5664 = vmatpush1.msra.mxu0 %v5599
        %5665 = vmatprep.mubr.f32.mxu0 %v873
        %5666 = vmatmul.mubr.f32.gmra.mrb[0].mxu0 %v247
        %v5667 = vpop.f32.mrb[0].mxu0
        %v5668 = vadd.f32 0.0, %v5667
        %v5669 = vpop.f32.mrb[0].mxu0
        %v5670 = vadd.f32 0.0, %v5669
        %5671 = vdwg.mxu0
        %5672 = vst [vmem:[#allocation2 + $0x40] sm:$0xf] %v5668
        %5673 = vst [vmem:[#allocation2 + $0x48] sm:$0xf] %v5670
        %v5674 = vld [vmem:[%s2] sm:$0xff]
        %v5675 = vld [vmem:[#allocation2] sm:$0xff]
        %v5676 = vld [vmem:[#allocation2 + $0x8] sm:$0xff]
        %v5677 = vld [vmem:[#allocation2 + $0x10] sm:$0xff]
        %v5678 = vld [vmem:[#allocation2 + $0x18] sm:$0xff]
        %v5679 = vld [vmem:[#allocation2 + $0x20] sm:$0xff]
        %v5680 = vld [vmem:[#allocation2 + $0x28] sm:$0xff]
        %v5681 = vld [vmem:[#allocation2 + $0x30] sm:$0xff]
        %v5682 = vld [vmem:[#allocation2 + $0x38] sm:$0xff]
        %v5683 = vld [vmem:[#allocation2 + $0x40] sm:$0xf]
        %v5684 = vld [vmem:[#allocation2 + $0x48] sm:$0xf]
        %v5685 = vld [vmem:[%s3] sm:$0xff]
        %5687 = vset.pattern.permute.xlu0 0
        %5688 = vperm.xlu0 %5687, %v5685
        %v5689 = vpop.permute.xlu0 %5688
        %vm5691 = vcmask 293888
        %v5693 = vsel %vm5691, %v5674, 0
        %vm5695 = vcmask 1043456
        %v5697 = vsel %vm5695, %v5683, 0
        %v5700 = vsel %vm5695, %v5684, 0
        %5702 = vmatprep.subr.mxu0 %v5676
        %5703 = vmatpush1.msra.mxu0 %v5675
        %5704 = vmatprep.subr.mxu0 %v5678
        %5705 = vmatpush1.msra.mxu0 %v5677
        %5706 = vmatprep.subr.mxu0 %v5680
        %5707 = vmatpush1.msra.mxu0 %v5679
        %5708 = vmatprep.subr.mxu0 %v5682
        %5709 = vmatpush1.msra.mxu0 %v5681
        %5710 = vmatprep.subr.mxu0 %v5700
        %5711 = vmatpush1.msra.mxu0 %v5697
        %5712 = vmatprep.subr.mxu0 0.0
        %5713 = vmatpush1.msra.mxu0 0.0
        %5714 = vmatprep.subr.mxu0 0.0
        %5715 = vmatpush1.msra.mxu0 0.0
        %5716 = vmatprep.subr.mxu0 0.0
        %5717 = vmatpush1.msra.mxu0 0.0
        %5718 = vmatprep.subr.mxu0 0.0
        %5719 = vmatpush1.msra.mxu0 0.0
        %5720 = vmatprep.subr.mxu0 0.0
        %5721 = vmatpush1.msra.mxu0 0.0
        %5722 = vmatprep.subr.mxu0 0.0
        %5723 = vmatpush1.msra.mxu0 0.0
        %5724 = vmatprep.subr.mxu0 0.0
        %5725 = vmatpush1.msra.mxu0 0.0
        %5726 = vmatprep.subr.mxu0 0.0
        %5727 = vmatpush1.msra.mxu0 0.0
        %5728 = vmatprep.subr.mxu0 0.0
        %5729 = vmatpush1.msra.mxu0 0.0
        %5730 = vmatprep.subr.mxu0 0.0
        %5731 = vmatpush1.msra.mxu0 0.0
        %5732 = vmatprep.subr.mxu0 0.0
        %5733 = vmatpush1.msra.mxu0 0.0
        %5734 = vmatprep.subr.mxu0 0.0
        %5735 = vmatpush1.msra.mxu0 0.0
        %5736 = vmatprep.subr.mxu0 0.0
        %5737 = vmatpush1.msra.mxu0 0.0
        %5738 = vmatprep.subr.mxu0 0.0
        %5739 = vmatpush1.msra.mxu0 0.0
        %5740 = vmatprep.subr.mxu0 0.0
        %5741 = vmatpush1.msra.mxu0 0.0
        %5742 = vmatprep.subr.mxu0 0.0
        %5743 = vmatpush1.msra.mxu0 0.0
        %5744 = vmatprep.subr.mxu0 0.0
        %5745 = vmatpush1.msra.mxu0 0.0
        %5746 = vmatprep.subr.mxu0 0.0
        %5747 = vmatpush1.msra.mxu0 0.0
        %5748 = vmatprep.subr.mxu0 0.0
        %5749 = vmatpush1.msra.mxu0 0.0
        %5750 = vmatprep.subr.mxu0 0.0
        %5751 = vmatpush1.msra.mxu0 0.0
        %5752 = vmatprep.subr.mxu0 0.0
        %5753 = vmatpush1.msra.mxu0 0.0
        %5754 = vmatprep.subr.mxu0 0.0
        %5755 = vmatpush1.msra.mxu0 0.0
        %5756 = vmatprep.subr.mxu0 0.0
        %5757 = vmatpush1.msra.mxu0 0.0
        %5758 = vmatprep.subr.mxu0 0.0
        %5759 = vmatpush1.msra.mxu0 0.0
        %5760 = vmatprep.subr.mxu0 0.0
        %5761 = vmatpush1.msra.mxu0 0.0
        %5762 = vmatprep.subr.mxu0 0.0
        %5763 = vmatpush1.msra.mxu0 0.0
        %5764 = vmatprep.subr.mxu0 0.0
        %5765 = vmatpush1.msra.mxu0 0.0
        %5766 = vmatprep.mubr.f32.mxu0 0.0
        %5767 = vmatmul.mubr.f32.gmra.mrb[0].mxu0 %v5693
        %v5768 = vpop.f32.mrb[0].mxu0
        %v5769 = vadd.f32 %v5689, %v5768
        %v5770 = vpop.f32.mrb[0].mxu0
        %v5771 = vadd.f32 %v5689, %v5770
        %5772 = vdwg.mxu0
        %v5773 = vmax.f32 %v5769, 0.0
        %v5774 = vmax.f32 %v5771, 0.0
        %v5775 = vmin.f32 %v5773, 6.0
        %v5776 = vmin.f32 %v5774, 6.0
        %5777 = vst [vmem:[%s230] sm:$0xff] %v5775
        %5778 = vst [vmem:[%s230 + $0x8] sm:$0xff] %v5776
        %s5779 = sand.u32 %s136, 1
        %s5780 = scalar_lea.sflag [#allocation4], %s5779
        %s5781 = sand.u32 %s136, 1
        %s5782 = smul.addr %s5781, 16
        %s5783 = scalar_lea.vmem [#allocation3], %s5782
        // Predicated region
        $region37: #{tpu_custom_call.1} parent=35 // pred_check
          %p5784 = pneg %p146
        $region38: #{tpu_custom_call.1} parent=35 // pred_check_branch
          %5786 = sbr.rel (%p5784) target = $region40
        $region39: #{tpu_custom_call.1} parent=35 // pred_region
          %s5787 = smul.u32 2, %s23
          %s5789 = ssub.s32 256, 256
          %5790 = vsyncadd %s5780, %s5789
          %s5791 = smul.addr %s22, 2
          %s5792 = sadd.s32 %s5787, %s5791
          %s5793 = smul.addr %s5792, 128
          %s5794 = scalar_lea.hbm %s4, %s5793
          %s5796 = sshll.u32 %s5783, 4
          %s5797 = int_to_ptr.vmem [resolvable:$true] %s5796
          %5799 = dma.vmem_to_hbm [thread:$0]  %s5797, 256, %s5794, %s5780
        $region40: #{tpu_custom_call.1} parent=35 // pred_fallthru
          _
      $region36: #{tpu_custom_call.1} parent=5 // pred_fallthru
        _
      %p5800 = scmp.le.s32.totalorder 2, %s13
      // Predicated region
      $region41: #{tpu_custom_call.1} parent=5 // pred_check
        %p5801 = pneg %p5800
      $region42: #{tpu_custom_call.1} parent=5 // pred_check_branch
        %5803 = sbr.rel (%p5801) target = $region44
      $region43: #{tpu_custom_call.1} parent=5 // pred_region
        %s5804 = ssub.s32 %s13, 2
        // Predicated region
        $region45: #{tpu_custom_call.1} parent=43 // pred_check
          %p5805 = pneg %p152
        $region46: #{tpu_custom_call.1} parent=43 // pred_check_branch
          %5807 = sbr.rel (%p5805) target = $region48
        $region47: #{tpu_custom_call.1} parent=43 // pred_region
          %s5808 = sand.u32 %s137, 1
          %s5809 = scalar_lea.sflag [#allocation4], %s5808
          %s5810 = sand.u32 %s137, 1
          %s5811 = smul.addr %s5810, 16
          %s5812 = scalar_lea.vmem [#allocation3], %s5811
          %5813 = dma.done %s5809, 256
        $region48: #{tpu_custom_call.1} parent=43 // pred_fallthru
          _
      $region44: #{tpu_custom_call.1} parent=5 // pred_fallthru
        _
    $region6: #{tpu_custom_call.1} parent=1 // loop_footer
      %s17 = sadd.s32 1, %s13
    $region7: #{tpu_custom_call.1} parent=1 // loop_footer_branch
      %12 = sbr.rel target = $region3
    $region8: #{tpu_custom_call.1} parent=1 // loop_exit
      _
    %5814 = vsyncpa [#allocation4], 1
    %s5815 = scalar_lea.sflag [#allocation4], 1
    %5816 = vsyncpa %s5815, 1

</llo_original>
